<compile_context>
chip_gen: v5e
topology: v5e:2x2
jax: 0.10.0
libtpu: 0.0.40
codegen_flags: <defaults>
</compile_context>

<pallas_src>
import jax
import jax.numpy as jnp
from jax import lax
from jax.experimental import pallas as pl
from jax.experimental.pallas import tpu as pltpu


MXU_DTYPE = jnp.bfloat16   # MXU operand dtype (per perf review); accum is f32
BN_EPS = 1e-5


# ----------------------------------------------------------------------------
# Kernel: whole forward pass for one batch element.
# ----------------------------------------------------------------------------
def _make_kernel(nc, mxu_dtype):
    PAD = 8  # >= max conv half-width (5); keeps the sublane zero-pad aligned

    def shifted_concat(x, k):
        # im2col for a "same"-padded width-k conv along time (sublane axis).
        # Zero-pad + k static slices == pltpu.roll(+/-off) + iota mask, but with
        # unambiguous semantics; no (T,T) shift matrices anywhere.
        t, c = x.shape
        hw = (k - 1) // 2
        z = jnp.zeros((PAD, c), jnp.float32)
        xp = jnp.concatenate([z, x, z], axis=0)                 # (t + 2*PAD, c)
        taps = [xp[PAD - hw + j: PAD - hw + j + t, :] for j in range(k)]
        return jnp.concatenate(taps, axis=1)                    # (t, k*c)

    def conv(x, k, w_ref, b_ref):
        # Fused-tap conv: one (T, k*Cin) @ (k*Cin, Cout) MXU matmul, bf16 in,
        # f32 accumulation, f32 bias (BN already folded in).
        xc = shifted_concat(x, k).astype(mxu_dtype)
        return jnp.dot(xc, w_ref[...],
                       preferred_element_type=jnp.float32) + b_ref[...]

    def mish(v):
        return v * jnp.tanh(jnp.log(1.0 + jnp.exp(v)))

    def sigmoid(v):
        return 1.0 / (1.0 + jnp.exp(-v))

    def softmax_row(v):
        m = jnp.max(v, axis=-1, keepdims=True)
        e = jnp.exp(v - m)
        return e * pl.reciprocal(jnp.sum(e, axis=-1, keepdims=True), approx=True)

    def kernel(x_ref, xf1_ref, xf2_ref, xf3_ref,
               wa1, ba1, wa2, ba2, wa3, ba3,
               w10, b10, w11, b11, w12, b12, w13, b13,
               w2, b2, w3, b3,
               wfc, bfc,
               wac1, bac1, wl1, bl1,
               wac2, bac2, wl2, bl2,
               wac3, bac3, wl3, bl3,
               o_ref):
        x = x_ref[...].astype(jnp.float32)                       # (T, Cin)

        # attention gates: Conv1d(Cin->1, k=11) + sigmoid
        a1 = sigmoid(conv(xf1_ref[...].astype(jnp.float32), 11, wa1, ba1))  # (T, 1)
        a2 = sigmoid(conv(xf2_ref[...].astype(jnp.float32), 11, wa2, ba2))
        a3 = sigmoid(conv(xf3_ref[...].astype(jnp.float32), 11, wa3, ba3))

        # gated conv tower (BN folded into weights), mish activations
        x0 = mish(conv(x,       7, w10, b10))                    # (T, 32)
        x1 = mish(conv(x0 * a1, 7, w11, b11))
        x2 = mish(conv(x1 * a2, 7, w12, b12))
        x3 = mish(conv(x2 * a3, 7, w13, b13))

        xcat = jnp.concatenate([x0, x1, x2, x3], axis=1)         # (T, 128)
        h2 = mish(conv(xcat, 5, w2, b2))                         # (T, 256)
        h3 = mish(conv(h2, 3, w3, b3))                           # (T, 128)

        # GAP -> FC -> softmax
        g = jnp.mean(h3, axis=0, keepdims=True)                  # (1, 128)
        logits = jnp.dot(g.astype(mxu_dtype), wfc[...],
                         preferred_element_type=jnp.float32) + bfc[...]
        out_main = softmax_row(logits)                           # (1, nc)

        lane = lax.broadcasted_iota(jnp.int32, (1, nc), 1)

        def att_classifier(a, wac, bac, wl, bl):
            # Conv1d(1->16, k=11) + ReLU, then Flatten (torch is channel-major)
            # + Linear via the reordered weight wl[cls, t, c] = W[cls, c*T + t].
            h = jnp.maximum(conv(a, 11, wac, bac), 0.0)          # (T, 16)
            y = bl[...]                                          # (1, nc)
            for cls in range(nc):
                s = jnp.sum(h * wl[cls], axis=1, keepdims=True)  # (T, 1)
                s = jnp.sum(s, axis=0, keepdims=True)            # (1, 1)
                y = y + jnp.where(lane == cls, s, 0.0)
            return softmax_row(y)

        y1 = att_classifier(a1, wac1, bac1, wl1, bl1)
        y2 = att_classifier(a2, wac2, bac2, wl2, bl2)
        y3 = att_classifier(a3, wac3, bac3, wl3, bl3)

        o_ref[...] = jnp.concatenate([y1, y2, y3, out_main],
                                     axis=0).astype(o_ref.dtype)  # (4, nc)

    return kernel


# ----------------------------------------------------------------------------
# Wrapper: weight preparation (transpose / tap-concat / BN fold) + pallas_call
# ----------------------------------------------------------------------------
def _conv_weight_cat(w):
    """(Cout, Cin, K) torch-layout conv weight -> (K*Cin, Cout) fused-tap matrix."""
    cout, cin, k = w.shape
    return jnp.transpose(w, (2, 1, 0)).reshape(k * cin, cout)


def _fold_bn(conv_p, bn_p, eps=BN_EPS):
    s = bn_p['gamma'] / jnp.sqrt(bn_p['var'] + eps)
    w = conv_p['w'] * s[:, None, None]
    b = (conv_p['b'] - bn_p['mean']) * s + bn_p['beta']
    return w, b


def classification_model(x, xfft, params):
    """x: (N, T, Cin), xfft: (N, 3, T, Cin) -> (4, N, num_classes)."""
    N, T, cin = x.shape
    nc = params['fc']['w'].shape[0]

    def wprep(w):
        return w.astype(MXU_DTYPE)

    def row(b):
        return b.reshape(1, -1).astype(jnp.float32)

    inputs = [x, xfft[:, 0], xfft[:, 1], xfft[:, 2]]
    for p in params['att']:
        inputs += [wprep(_conv_weight_cat(p['w'])), row(p['b'])]
    for cp, bp in zip(params['conv1'], params['bn1']):
        w, b = _fold_bn(cp, bp)
        inputs += [wprep(_conv_weight_cat(w)), row(b)]
    w, b = _fold_bn(params['conv2'], params['bn2'])
    inputs += [wprep(_conv_weight_cat(w)), row(b)]
    w, b = _fold_bn(params['conv3'], params['bn3'])
    inputs += [wprep(_conv_weight_cat(w)), row(b)]
    inputs += [wprep(params['fc']['w'].T), row(params['fc']['b'])]
    for p in params['att_cls']:
        wl = jnp.transpose(p['lw'].reshape(nc, 16, T), (0, 2, 1))  # (nc, T, 16)
        inputs += [wprep(_conv_weight_cat(p['cw'])), row(p['cb']),
                   wl.astype(jnp.float32), row(p['lb'])]

    batch_spec = pl.BlockSpec((None, T, cin), lambda b: (b, 0, 0))
    in_specs = [batch_spec] * 4
    for a in inputs[4:]:
        # weights: full-shape blocks, constant index_map -> resident in VMEM
        in_specs.append(pl.BlockSpec(a.shape, lambda b, _r=a.ndim: (0,) * _r))

    out = pl.pallas_call(
        _make_kernel(nc, MXU_DTYPE),
        out_shape=jax.ShapeDtypeStruct((N, 4, nc), jnp.float32),
        grid=(N,),
        in_specs=in_specs,
        out_specs=pl.BlockSpec((None, 4, nc), lambda b: (b, 0, 0)),
        compiler_params=pltpu.CompilerParams(
            dimension_semantics=("parallel",)),
    )(*inputs)
    return jnp.transpose(out, (1, 0, 2))                          # (4, N, nc)


# ----------------------------------------------------------------------------
# Pure-JAX reference (mirrors the PyTorch forward, NCW internally, f32).
# ----------------------------------------------------------------------------
def ref_classification_model(x, xfft, params, eps=BN_EPS):
    xt = jnp.transpose(x, (0, 2, 1))             # (N, Cin, T)
    xf = jnp.transpose(xfft, (0, 1, 3, 2))       # (N, 3, Cin, T)

    def conv1d(v, w, b, pad):
        y = lax.conv_general_dilated(v, w, (1,), [(pad, pad)],
                                     dimension_numbers=('NCH', 'OIH', 'NCH'))
        return y + b[None, :, None]

    def bn(v, p):
        s = p['gamma'] / jnp.sqrt(p['var'] + eps)
        return (v - p['mean'][None, :, None]) * s[None, :, None] \
            + p['beta'][None, :, None]

    def mish(v):
        return v * jnp.tanh(jnp.log(1.0 + jnp.exp(v)))

    def sigmoid(v):
        return 1.0 / (1.0 + jnp.exp(-v))

    a = [sigmoid(conv1d(xf[:, i], params['att'][i]['w'], params['att'][i]['b'], 5))
         for i in range(3)]                       # each (N, 1, T)

    feats = []
    gates = [None, a[0], a[1], a[2]]
    for i in range(4):
        inp = xt if i == 0 else feats[-1] * gates[i]
        hid = conv1d(inp, params['conv1'][i]['w'], params['conv1'][i]['b'], 3)
        feats.append(mish(bn(hid, params['bn1'][i])))
    z = jnp.concatenate(feats, axis=1)            # (N, 128, T)
    z = mish(bn(conv1d(z, params['conv2']['w'], params['conv2']['b'], 2),
                params['bn2']))
    z = mish(bn(conv1d(z, params['conv3']['w'], params['conv3']['b'], 1),
                params['bn3']))
    g = jnp.mean(z, axis=2)                       # (N, 128)
    logits = g @ params['fc']['w'].T + params['fc']['b']
    out_main = jax.nn.softmax(logits, axis=1)

    outs = []
    for i in range(3):
        p = params['att_cls'][i]
        h = jax.nn.relu(conv1d(a[i], p['cw'], p['cb'], 5))        # (N, 16, T)
        flat = h.reshape(h.shape[0], -1)                          # (N, 16*T)
        outs.append(jax.nn.softmax(flat @ p['lw'].T + p['lb'], axis=1))
    return jnp.stack(outs + [out_main], axis=0)                   # (4, N, nc)


# ----------------------------------------------------------------------------
# Deterministic parameter init
# ----------------------------------------------------------------------------
def init_params(key, cin, nc, T):
    keys = iter(jax.random.split(key, 80))

    def nrm(shape, scale=0.1):
        return (scale * jax.random.normal(next(keys), shape)).astype(jnp.float32)

    def conv_p(cout, cin_, k):
        return dict(w=nrm((cout, cin_, k)), b=nrm((cout,)))

    def bn_p(c):
        return dict(gamma=1.0 + nrm((c,)), beta=nrm((c,)), mean=nrm((c,)),
                    var=1.0 + jnp.abs(nrm((c,))))

    return dict(
        att=[conv_p(1, cin, 11) for _ in range(3)],
        conv1=[conv_p(32, cin, 7)] + [conv_p(32, 32, 7) for _ in range(3)],
        bn1=[bn_p(32) for _ in range(4)],
        conv2=conv_p(256, 128, 5), bn2=bn_p(256),
        conv3=conv_p(128, 256, 3), bn3=bn_p(128),
        fc=dict(w=nrm((nc, 128)), b=nrm((nc,))),
        att_cls=[dict(cw=nrm((16, 1, 11)), cb=nrm((16,)),
                      lw=nrm((nc, 16 * T)), lb=nrm((nc,))) for _ in range(3)],
    )


if __name__ == "__main__":
    N, CIN, T, NC = 2, 4, 16, 8           # batch, input_channels, seq_len, classes

    key = jax.random.PRNGKey(0)
    kx, kf, kp = jax.random.split(key, 3)
    x = jax.random.normal(kx, (N, T, CIN), dtype=jnp.float32)
    xfft = jax.random.normal(kf, (N, 3, T, CIN), dtype=jnp.float32)
    params = init_params(kp, CIN, NC, T)

    out = jax.block_until_ready(classification_model(x, xfft, params))
    ref = ref_classification_model(x, xfft, params)

    assert out.shape == (4, N, NC), out.shape
    err = float(jnp.max(jnp.abs(out - ref)))
    # bf16 MXU operands (per perf review) -> loose tolerance vs f32 reference
    assert err < 2e-2, f"max abs err {err}"
    print("KERNEL_OK")
</pallas_src>

<mosaic_0001>
module attributes {stable_mosaic.version = 11 : i64} {
  func.func @kernel(%arg0: i32, %arg1: memref<1x16x4xf32, #tpu.memory_space<vmem>>, %arg2: memref<1x16x4xf32, #tpu.memory_space<vmem>>, %arg3: memref<1x16x4xf32, #tpu.memory_space<vmem>>, %arg4: memref<1x16x4xf32, #tpu.memory_space<vmem>>, %arg5: memref<44x1xbf16, #tpu.memory_space<vmem>>, %arg6: memref<1x1xf32, #tpu.memory_space<vmem>>, %arg7: memref<44x1xbf16, #tpu.memory_space<vmem>>, %arg8: memref<1x1xf32, #tpu.memory_space<vmem>>, %arg9: memref<44x1xbf16, #tpu.memory_space<vmem>>, %arg10: memref<1x1xf32, #tpu.memory_space<vmem>>, %arg11: memref<28x32xbf16, #tpu.memory_space<vmem>>, %arg12: memref<1x32xf32, #tpu.memory_space<vmem>>, %arg13: memref<224x32xbf16, #tpu.memory_space<vmem>>, %arg14: memref<1x32xf32, #tpu.memory_space<vmem>>, %arg15: memref<224x32xbf16, #tpu.memory_space<vmem>>, %arg16: memref<1x32xf32, #tpu.memory_space<vmem>>, %arg17: memref<224x32xbf16, #tpu.memory_space<vmem>>, %arg18: memref<1x32xf32, #tpu.memory_space<vmem>>, %arg19: memref<640x256xbf16, #tpu.memory_space<vmem>>, %arg20: memref<1x256xf32, #tpu.memory_space<vmem>>, %arg21: memref<768x128xbf16, #tpu.memory_space<vmem>>, %arg22: memref<1x128xf32, #tpu.memory_space<vmem>>, %arg23: memref<128x8xbf16, #tpu.memory_space<vmem>>, %arg24: memref<1x8xf32, #tpu.memory_space<vmem>>, %arg25: memref<11x16xbf16, #tpu.memory_space<vmem>>, %arg26: memref<1x16xf32, #tpu.memory_space<vmem>>, %arg27: memref<8x16x16xf32, #tpu.memory_space<vmem>>, %arg28: memref<1x8xf32, #tpu.memory_space<vmem>>, %arg29: memref<11x16xbf16, #tpu.memory_space<vmem>>, %arg30: memref<1x16xf32, #tpu.memory_space<vmem>>, %arg31: memref<8x16x16xf32, #tpu.memory_space<vmem>>, %arg32: memref<1x8xf32, #tpu.memory_space<vmem>>, %arg33: memref<11x16xbf16, #tpu.memory_space<vmem>>, %arg34: memref<1x16xf32, #tpu.memory_space<vmem>>, %arg35: memref<8x16x16xf32, #tpu.memory_space<vmem>>, %arg36: memref<1x8xf32, #tpu.memory_space<vmem>>, %arg37: memref<1x4x8xf32, #tpu.memory_space<vmem>>) attributes {dimension_semantics = [#tpu.dimension_semantics<parallel>], iteration_bounds = array<i64: 2>, scalar_prefetch = 0 : i64, scratch_operands = 0 : i64, tpu.core_type = #tpu.core_type<tc>, window_params = [{transform_indices = @transform_0, window_bounds = array<i64: 1, 16, 4>}, {transform_indices = @transform_1, window_bounds = array<i64: 1, 16, 4>}, {transform_indices = @transform_2, window_bounds = array<i64: 1, 16, 4>}, {transform_indices = @transform_3, window_bounds = array<i64: 1, 16, 4>}, {pipeline_mode = #tpu.pipeline_mode<synchronous>, transform_indices = @transform_4, window_bounds = array<i64: 44, 1>}, {pipeline_mode = #tpu.pipeline_mode<synchronous>, transform_indices = @transform_5, window_bounds = array<i64: 1, 1>}, {pipeline_mode = #tpu.pipeline_mode<synchronous>, transform_indices = @transform_6, window_bounds = array<i64: 44, 1>}, {pipeline_mode = #tpu.pipeline_mode<synchronous>, transform_indices = @transform_7, window_bounds = array<i64: 1, 1>}, {pipeline_mode = #tpu.pipeline_mode<synchronous>, transform_indices = @transform_8, window_bounds = array<i64: 44, 1>}, {pipeline_mode = #tpu.pipeline_mode<synchronous>, transform_indices = @transform_9, window_bounds = array<i64: 1, 1>}, {pipeline_mode = #tpu.pipeline_mode<synchronous>, transform_indices = @transform_10, window_bounds = array<i64: 28, 32>}, {pipeline_mode = #tpu.pipeline_mode<synchronous>, transform_indices = @transform_11, window_bounds = array<i64: 1, 32>}, {pipeline_mode = #tpu.pipeline_mode<synchronous>, transform_indices = @transform_12, window_bounds = array<i64: 224, 32>}, {pipeline_mode = #tpu.pipeline_mode<synchronous>, transform_indices = @transform_13, window_bounds = array<i64: 1, 32>}, {pipeline_mode = #tpu.pipeline_mode<synchronous>, transform_indices = @transform_14, window_bounds = array<i64: 224, 32>}, {pipeline_mode = #tpu.pipeline_mode<synchronous>, transform_indices = @transform_15, window_bounds = array<i64: 1, 32>}, {pipeline_mode = #tpu.pipeline_mode<synchronous>, transform_indices = @transform_16, window_bounds = array<i64: 224, 32>}, {pipeline_mode = #tpu.pipeline_mode<synchronous>, transform_indices = @transform_17, window_bounds = array<i64: 1, 32>}, {pipeline_mode = #tpu.pipeline_mode<synchronous>, transform_indices = @transform_18, window_bounds = array<i64: 640, 256>}, {pipeline_mode = #tpu.pipeline_mode<synchronous>, transform_indices = @transform_19, window_bounds = array<i64: 1, 256>}, {pipeline_mode = #tpu.pipeline_mode<synchronous>, transform_indices = @transform_20, window_bounds = array<i64: 768, 128>}, {pipeline_mode = #tpu.pipeline_mode<synchronous>, transform_indices = @transform_21, window_bounds = array<i64: 1, 128>}, {pipeline_mode = #tpu.pipeline_mode<synchronous>, transform_indices = @transform_22, window_bounds = array<i64: 128, 8>}, {pipeline_mode = #tpu.pipeline_mode<synchronous>, transform_indices = @transform_23, window_bounds = array<i64: 1, 8>}, {pipeline_mode = #tpu.pipeline_mode<synchronous>, transform_indices = @transform_24, window_bounds = array<i64: 11, 16>}, {pipeline_mode = #tpu.pipeline_mode<synchronous>, transform_indices = @transform_25, window_bounds = array<i64: 1, 16>}, {pipeline_mode = #tpu.pipeline_mode<synchronous>, transform_indices = @transform_26, window_bounds = array<i64: 8, 16, 16>}, {pipeline_mode = #tpu.pipeline_mode<synchronous>, transform_indices = @transform_27, window_bounds = array<i64: 1, 8>}, {pipeline_mode = #tpu.pipeline_mode<synchronous>, transform_indices = @transform_28, window_bounds = array<i64: 11, 16>}, {pipeline_mode = #tpu.pipeline_mode<synchronous>, transform_indices = @transform_29, window_bounds = array<i64: 1, 16>}, {pipeline_mode = #tpu.pipeline_mode<synchronous>, transform_indices = @transform_30, window_bounds = array<i64: 8, 16, 16>}, {pipeline_mode = #tpu.pipeline_mode<synchronous>, transform_indices = @transform_31, window_bounds = array<i64: 1, 8>}, {pipeline_mode = #tpu.pipeline_mode<synchronous>, transform_indices = @transform_32, window_bounds = array<i64: 11, 16>}, {pipeline_mode = #tpu.pipeline_mode<synchronous>, transform_indices = @transform_33, window_bounds = array<i64: 1, 16>}, {pipeline_mode = #tpu.pipeline_mode<synchronous>, transform_indices = @transform_34, window_bounds = array<i64: 8, 16, 16>}, {pipeline_mode = #tpu.pipeline_mode<synchronous>, transform_indices = @transform_35, window_bounds = array<i64: 1, 8>}, {transform_indices = @transform_36, window_bounds = array<i64: 1, 4, 8>}]} {
    %c0 = arith.constant 0 : index
    %c0_0 = arith.constant 0 : index
    %c0_1 = arith.constant 0 : index
    %0 = vector.load %arg1[%c0, %c0_0, %c0_1] : memref<1x16x4xf32, #tpu.memory_space<vmem>>, vector<1x16x4xf32>
    %1 = vector.shape_cast %0 : vector<1x16x4xf32> to vector<16x4xf32>
    %c0_2 = arith.constant 0 : index
    %c0_3 = arith.constant 0 : index
    %c0_4 = arith.constant 0 : index
    %2 = vector.load %arg2[%c0_2, %c0_3, %c0_4] : memref<1x16x4xf32, #tpu.memory_space<vmem>>, vector<1x16x4xf32>
    %3 = vector.shape_cast %2 : vector<1x16x4xf32> to vector<16x4xf32>
    %cst = arith.constant 0.000000e+00 : f32
    %4 = vector.broadcast %cst : f32 to vector<8x4xf32>
    %5 = tpu.concatenate %4, %3, %4 in 0 : vector<8x4xf32>, vector<16x4xf32>, vector<8x4xf32> -> vector<32x4xf32>
    %6 = vector.extract_strided_slice %5 {offsets = [3, 0], sizes = [16, 4], strides = [1, 1]} : vector<32x4xf32> to vector<16x4xf32>
    %7 = vector.extract_strided_slice %5 {offsets = [4, 0], sizes = [16, 4], strides = [1, 1]} : vector<32x4xf32> to vector<16x4xf32>
    %8 = vector.extract_strided_slice %5 {offsets = [5, 0], sizes = [16, 4], strides = [1, 1]} : vector<32x4xf32> to vector<16x4xf32>
    %9 = vector.extract_strided_slice %5 {offsets = [6, 0], sizes = [16, 4], strides = [1, 1]} : vector<32x4xf32> to vector<16x4xf32>
    %10 = vector.extract_strided_slice %5 {offsets = [7, 0], sizes = [16, 4], strides = [1, 1]} : vector<32x4xf32> to vector<16x4xf32>
    %11 = vector.extract_strided_slice %5 {offsets = [8, 0], sizes = [16, 4], strides = [1, 1]} : vector<32x4xf32> to vector<16x4xf32>
    %12 = vector.extract_strided_slice %5 {offsets = [9, 0], sizes = [16, 4], strides = [1, 1]} : vector<32x4xf32> to vector<16x4xf32>
    %13 = vector.extract_strided_slice %5 {offsets = [10, 0], sizes = [16, 4], strides = [1, 1]} : vector<32x4xf32> to vector<16x4xf32>
    %14 = vector.extract_strided_slice %5 {offsets = [11, 0], sizes = [16, 4], strides = [1, 1]} : vector<32x4xf32> to vector<16x4xf32>
    %15 = vector.extract_strided_slice %5 {offsets = [12, 0], sizes = [16, 4], strides = [1, 1]} : vector<32x4xf32> to vector<16x4xf32>
    %16 = vector.extract_strided_slice %5 {offsets = [13, 0], sizes = [16, 4], strides = [1, 1]} : vector<32x4xf32> to vector<16x4xf32>
    %17 = tpu.concatenate %6, %7, %8, %9, %10, %11, %12, %13, %14, %15, %16 in 1 : vector<16x4xf32>, vector<16x4xf32>, vector<16x4xf32>, vector<16x4xf32>, vector<16x4xf32>, vector<16x4xf32>, vector<16x4xf32>, vector<16x4xf32>, vector<16x4xf32>, vector<16x4xf32>, vector<16x4xf32> -> vector<16x44xf32>
    %18 = arith.truncf %17 : vector<16x44xf32> to vector<16x44xbf16>
    %c0_5 = arith.constant 0 : index
    %c0_6 = arith.constant 0 : index
    %19 = vector.load %arg5[%c0_5, %c0_6] : memref<44x1xbf16, #tpu.memory_space<vmem>>, vector<44x1xbf16>
    %cst_7 = arith.constant dense<0.000000e+00> : vector<16x1xf32>
    %20 = tpu.matmul %18, %19, %cst_7 {dimension_numbers = #tpu.dot_dimension_numbers<[1], [0], [0], [1], [0, 0, 1, 1], [], []>} : vector<16x44xbf16>, vector<44x1xbf16>, vector<16x1xf32> -> vector<16x1xf32>
    %c0_8 = arith.constant 0 : index
    %c0_9 = arith.constant 0 : index
    %21 = vector.load %arg6[%c0_8, %c0_9] : memref<1x1xf32, #tpu.memory_space<vmem>>, vector<1x1xf32>
    %22 = vector.broadcast %21 : vector<1x1xf32> to vector<16x1xf32>
    %23 = arith.addf %20, %22 : vector<16x1xf32>
    %cst_10 = arith.constant 0.000000e+00 : f32
    %24 = vector.broadcast %cst_10 : f32 to vector<16x1xf32>
    %25 = arith.subf %24, %23 : vector<16x1xf32>
    %26 = math.exp %25 : vector<16x1xf32>
    %cst_11 = arith.constant 1.000000e+00 : f32
    %27 = vector.broadcast %cst_11 : f32 to vector<16x1xf32>
    %28 = arith.addf %27, %26 : vector<16x1xf32>
    %cst_12 = arith.constant 1.000000e+00 : f32
    %29 = vector.broadcast %cst_12 : f32 to vector<16x1xf32>
    %30 = arith.divf %29, %28 : vector<16x1xf32>
    %c0_13 = arith.constant 0 : index
    %c0_14 = arith.constant 0 : index
    %c0_15 = arith.constant 0 : index
    %31 = vector.load %arg3[%c0_13, %c0_14, %c0_15] : memref<1x16x4xf32, #tpu.memory_space<vmem>>, vector<1x16x4xf32>
    %32 = vector.shape_cast %31 : vector<1x16x4xf32> to vector<16x4xf32>
    %cst_16 = arith.constant 0.000000e+00 : f32
    %33 = vector.broadcast %cst_16 : f32 to vector<8x4xf32>
    %34 = tpu.concatenate %33, %32, %33 in 0 : vector<8x4xf32>, vector<16x4xf32>, vector<8x4xf32> -> vector<32x4xf32>
    %35 = vector.extract_strided_slice %34 {offsets = [3, 0], sizes = [16, 4], strides = [1, 1]} : vector<32x4xf32> to vector<16x4xf32>
    %36 = vector.extract_strided_slice %34 {offsets = [4, 0], sizes = [16, 4], strides = [1, 1]} : vector<32x4xf32> to vector<16x4xf32>
    %37 = vector.extract_strided_slice %34 {offsets = [5, 0], sizes = [16, 4], strides = [1, 1]} : vector<32x4xf32> to vector<16x4xf32>
    %38 = vector.extract_strided_slice %34 {offsets = [6, 0], sizes = [16, 4], strides = [1, 1]} : vector<32x4xf32> to vector<16x4xf32>
    %39 = vector.extract_strided_slice %34 {offsets = [7, 0], sizes = [16, 4], strides = [1, 1]} : vector<32x4xf32> to vector<16x4xf32>
    %40 = vector.extract_strided_slice %34 {offsets = [8, 0], sizes = [16, 4], strides = [1, 1]} : vector<32x4xf32> to vector<16x4xf32>
    %41 = vector.extract_strided_slice %34 {offsets = [9, 0], sizes = [16, 4], strides = [1, 1]} : vector<32x4xf32> to vector<16x4xf32>
    %42 = vector.extract_strided_slice %34 {offsets = [10, 0], sizes = [16, 4], strides = [1, 1]} : vector<32x4xf32> to vector<16x4xf32>
    %43 = vector.extract_strided_slice %34 {offsets = [11, 0], sizes = [16, 4], strides = [1, 1]} : vector<32x4xf32> to vector<16x4xf32>
    %44 = vector.extract_strided_slice %34 {offsets = [12, 0], sizes = [16, 4], strides = [1, 1]} : vector<32x4xf32> to vector<16x4xf32>
    %45 = vector.extract_strided_slice %34 {offsets = [13, 0], sizes = [16, 4], strides = [1, 1]} : vector<32x4xf32> to vector<16x4xf32>
    %46 = tpu.concatenate %35, %36, %37, %38, %39, %40, %41, %42, %43, %44, %45 in 1 : vector<16x4xf32>, vector<16x4xf32>, vector<16x4xf32>, vector<16x4xf32>, vector<16x4xf32>, vector<16x4xf32>, vector<16x4xf32>, vector<16x4xf32>, vector<16x4xf32>, vector<16x4xf32>, vector<16x4xf32> -> vector<16x44xf32>
    %47 = arith.truncf %46 : vector<16x44xf32> to vector<16x44xbf16>
    %c0_17 = arith.constant 0 : index
    %c0_18 = arith.constant 0 : index
    %48 = vector.load %arg7[%c0_17, %c0_18] : memref<44x1xbf16, #tpu.memory_space<vmem>>, vector<44x1xbf16>
    %cst_19 = arith.constant dense<0.000000e+00> : vector<16x1xf32>
    %49 = tpu.matmul %47, %48, %cst_19 {dimension_numbers = #tpu.dot_dimension_numbers<[1], [0], [0], [1], [0, 0, 1, 1], [], []>} : vector<16x44xbf16>, vector<44x1xbf16>, vector<16x1xf32> -> vector<16x1xf32>
    %c0_20 = arith.constant 0 : index
    %c0_21 = arith.constant 0 : index
    %50 = vector.load %arg8[%c0_20, %c0_21] : memref<1x1xf32, #tpu.memory_space<vmem>>, vector<1x1xf32>
    %51 = vector.broadcast %50 : vector<1x1xf32> to vector<16x1xf32>
    %52 = arith.addf %49, %51 : vector<16x1xf32>
    %cst_22 = arith.constant 0.000000e+00 : f32
    %53 = vector.broadcast %cst_22 : f32 to vector<16x1xf32>
    %54 = arith.subf %53, %52 : vector<16x1xf32>
    %55 = math.exp %54 : vector<16x1xf32>
    %cst_23 = arith.constant 1.000000e+00 : f32
    %56 = vector.broadcast %cst_23 : f32 to vector<16x1xf32>
    %57 = arith.addf %56, %55 : vector<16x1xf32>
    %cst_24 = arith.constant 1.000000e+00 : f32
    %58 = vector.broadcast %cst_24 : f32 to vector<16x1xf32>
    %59 = arith.divf %58, %57 : vector<16x1xf32>
    %c0_25 = arith.constant 0 : index
    %c0_26 = arith.constant 0 : index
    %c0_27 = arith.constant 0 : index
    %60 = vector.load %arg4[%c0_25, %c0_26, %c0_27] : memref<1x16x4xf32, #tpu.memory_space<vmem>>, vector<1x16x4xf32>
    %61 = vector.shape_cast %60 : vector<1x16x4xf32> to vector<16x4xf32>
    %cst_28 = arith.constant 0.000000e+00 : f32
    %62 = vector.broadcast %cst_28 : f32 to vector<8x4xf32>
    %63 = tpu.concatenate %62, %61, %62 in 0 : vector<8x4xf32>, vector<16x4xf32>, vector<8x4xf32> -> vector<32x4xf32>
    %64 = vector.extract_strided_slice %63 {offsets = [3, 0], sizes = [16, 4], strides = [1, 1]} : vector<32x4xf32> to vector<16x4xf32>
    %65 = vector.extract_strided_slice %63 {offsets = [4, 0], sizes = [16, 4], strides = [1, 1]} : vector<32x4xf32> to vector<16x4xf32>
    %66 = vector.extract_strided_slice %63 {offsets = [5, 0], sizes = [16, 4], strides = [1, 1]} : vector<32x4xf32> to vector<16x4xf32>
    %67 = vector.extract_strided_slice %63 {offsets = [6, 0], sizes = [16, 4], strides = [1, 1]} : vector<32x4xf32> to vector<16x4xf32>
    %68 = vector.extract_strided_slice %63 {offsets = [7, 0], sizes = [16, 4], strides = [1, 1]} : vector<32x4xf32> to vector<16x4xf32>
    %69 = vector.extract_strided_slice %63 {offsets = [8, 0], sizes = [16, 4], strides = [1, 1]} : vector<32x4xf32> to vector<16x4xf32>
    %70 = vector.extract_strided_slice %63 {offsets = [9, 0], sizes = [16, 4], strides = [1, 1]} : vector<32x4xf32> to vector<16x4xf32>
    %71 = vector.extract_strided_slice %63 {offsets = [10, 0], sizes = [16, 4], strides = [1, 1]} : vector<32x4xf32> to vector<16x4xf32>
    %72 = vector.extract_strided_slice %63 {offsets = [11, 0], sizes = [16, 4], strides = [1, 1]} : vector<32x4xf32> to vector<16x4xf32>
    %73 = vector.extract_strided_slice %63 {offsets = [12, 0], sizes = [16, 4], strides = [1, 1]} : vector<32x4xf32> to vector<16x4xf32>
    %74 = vector.extract_strided_slice %63 {offsets = [13, 0], sizes = [16, 4], strides = [1, 1]} : vector<32x4xf32> to vector<16x4xf32>
    %75 = tpu.concatenate %64, %65, %66, %67, %68, %69, %70, %71, %72, %73, %74 in 1 : vector<16x4xf32>, vector<16x4xf32>, vector<16x4xf32>, vector<16x4xf32>, vector<16x4xf32>, vector<16x4xf32>, vector<16x4xf32>, vector<16x4xf32>, vector<16x4xf32>, vector<16x4xf32>, vector<16x4xf32> -> vector<16x44xf32>
    %76 = arith.truncf %75 : vector<16x44xf32> to vector<16x44xbf16>
    %c0_29 = arith.constant 0 : index
    %c0_30 = arith.constant 0 : index
    %77 = vector.load %arg9[%c0_29, %c0_30] : memref<44x1xbf16, #tpu.memory_space<vmem>>, vector<44x1xbf16>
    %cst_31 = arith.constant dense<0.000000e+00> : vector<16x1xf32>
    %78 = tpu.matmul %76, %77, %cst_31 {dimension_numbers = #tpu.dot_dimension_numbers<[1], [0], [0], [1], [0, 0, 1, 1], [], []>} : vector<16x44xbf16>, vector<44x1xbf16>, vector<16x1xf32> -> vector<16x1xf32>
    %c0_32 = arith.constant 0 : index
    %c0_33 = arith.constant 0 : index
    %79 = vector.load %arg10[%c0_32, %c0_33] : memref<1x1xf32, #tpu.memory_space<vmem>>, vector<1x1xf32>
    %80 = vector.broadcast %79 : vector<1x1xf32> to vector<16x1xf32>
    %81 = arith.addf %78, %80 : vector<16x1xf32>
    %cst_34 = arith.constant 0.000000e+00 : f32
    %82 = vector.broadcast %cst_34 : f32 to vector<16x1xf32>
    %83 = arith.subf %82, %81 : vector<16x1xf32>
    %84 = math.exp %83 : vector<16x1xf32>
    %cst_35 = arith.constant 1.000000e+00 : f32
    %85 = vector.broadcast %cst_35 : f32 to vector<16x1xf32>
    %86 = arith.addf %85, %84 : vector<16x1xf32>
    %cst_36 = arith.constant 1.000000e+00 : f32
    %87 = vector.broadcast %cst_36 : f32 to vector<16x1xf32>
    %88 = arith.divf %87, %86 : vector<16x1xf32>
    %cst_37 = arith.constant 0.000000e+00 : f32
    %89 = vector.broadcast %cst_37 : f32 to vector<8x4xf32>
    %90 = tpu.concatenate %89, %1, %89 in 0 : vector<8x4xf32>, vector<16x4xf32>, vector<8x4xf32> -> vector<32x4xf32>
    %91 = vector.extract_strided_slice %90 {offsets = [5, 0], sizes = [16, 4], strides = [1, 1]} : vector<32x4xf32> to vector<16x4xf32>
    %92 = vector.extract_strided_slice %90 {offsets = [6, 0], sizes = [16, 4], strides = [1, 1]} : vector<32x4xf32> to vector<16x4xf32>
    %93 = vector.extract_strided_slice %90 {offsets = [7, 0], sizes = [16, 4], strides = [1, 1]} : vector<32x4xf32> to vector<16x4xf32>
    %94 = vector.extract_strided_slice %90 {offsets = [8, 0], sizes = [16, 4], strides = [1, 1]} : vector<32x4xf32> to vector<16x4xf32>
    %95 = vector.extract_strided_slice %90 {offsets = [9, 0], sizes = [16, 4], strides = [1, 1]} : vector<32x4xf32> to vector<16x4xf32>
    %96 = vector.extract_strided_slice %90 {offsets = [10, 0], sizes = [16, 4], strides = [1, 1]} : vector<32x4xf32> to vector<16x4xf32>
    %97 = vector.extract_strided_slice %90 {offsets = [11, 0], sizes = [16, 4], strides = [1, 1]} : vector<32x4xf32> to vector<16x4xf32>
    %98 = tpu.concatenate %91, %92, %93, %94, %95, %96, %97 in 1 : vector<16x4xf32>, vector<16x4xf32>, vector<16x4xf32>, vector<16x4xf32>, vector<16x4xf32>, vector<16x4xf32>, vector<16x4xf32> -> vector<16x28xf32>
    %99 = arith.truncf %98 : vector<16x28xf32> to vector<16x28xbf16>
    %c0_38 = arith.constant 0 : index
    %c0_39 = arith.constant 0 : index
    %100 = vector.load %arg11[%c0_38, %c0_39] : memref<28x32xbf16, #tpu.memory_space<vmem>>, vector<28x32xbf16>
    %cst_40 = arith.constant dense<0.000000e+00> : vector<16x32xf32>
    %101 = tpu.matmul %99, %100, %cst_40 {dimension_numbers = #tpu.dot_dimension_numbers<[1], [0], [0], [1], [0, 0, 1, 1], [], []>} : vector<16x28xbf16>, vector<28x32xbf16>, vector<16x32xf32> -> vector<16x32xf32>
    %c0_41 = arith.constant 0 : index
    %c0_42 = arith.constant 0 : index
    %102 = vector.load %arg12[%c0_41, %c0_42] : memref<1x32xf32, #tpu.memory_space<vmem>>, vector<1x32xf32>
    %103 = vector.broadcast %102 : vector<1x32xf32> to vector<16x32xf32>
    %104 = arith.addf %101, %103 : vector<16x32xf32>
    %105 = math.exp %104 : vector<16x32xf32>
    %cst_43 = arith.constant 1.000000e+00 : f32
    %106 = vector.broadcast %cst_43 : f32 to vector<16x32xf32>
    %107 = arith.addf %106, %105 : vector<16x32xf32>
    %108 = math.log %107 : vector<16x32xf32>
    %109 = math.tanh %108 : vector<16x32xf32>
    %110 = arith.mulf %104, %109 : vector<16x32xf32>
    %111 = vector.broadcast %30 : vector<16x1xf32> to vector<16x32xf32>
    %112 = arith.mulf %110, %111 : vector<16x32xf32>
    %cst_44 = arith.constant 0.000000e+00 : f32
    %113 = vector.broadcast %cst_44 : f32 to vector<8x32xf32>
    %114 = tpu.concatenate %113, %112, %113 in 0 : vector<8x32xf32>, vector<16x32xf32>, vector<8x32xf32> -> vector<32x32xf32>
    %115 = vector.extract_strided_slice %114 {offsets = [5, 0], sizes = [16, 32], strides = [1, 1]} : vector<32x32xf32> to vector<16x32xf32>
    %116 = vector.extract_strided_slice %114 {offsets = [6, 0], sizes = [16, 32], strides = [1, 1]} : vector<32x32xf32> to vector<16x32xf32>
    %117 = vector.extract_strided_slice %114 {offsets = [7, 0], sizes = [16, 32], strides = [1, 1]} : vector<32x32xf32> to vector<16x32xf32>
    %118 = vector.extract_strided_slice %114 {offsets = [8, 0], sizes = [16, 32], strides = [1, 1]} : vector<32x32xf32> to vector<16x32xf32>
    %119 = vector.extract_strided_slice %114 {offsets = [9, 0], sizes = [16, 32], strides = [1, 1]} : vector<32x32xf32> to vector<16x32xf32>
    %120 = vector.extract_strided_slice %114 {offsets = [10, 0], sizes = [16, 32], strides = [1, 1]} : vector<32x32xf32> to vector<16x32xf32>
    %121 = vector.extract_strided_slice %114 {offsets = [11, 0], sizes = [16, 32], strides = [1, 1]} : vector<32x32xf32> to vector<16x32xf32>
    %122 = tpu.concatenate %115, %116, %117, %118, %119, %120, %121 in 1 : vector<16x32xf32>, vector<16x32xf32>, vector<16x32xf32>, vector<16x32xf32>, vector<16x32xf32>, vector<16x32xf32>, vector<16x32xf32> -> vector<16x224xf32>
    %123 = arith.truncf %122 : vector<16x224xf32> to vector<16x224xbf16>
    %c0_45 = arith.constant 0 : index
    %c0_46 = arith.constant 0 : index
    %124 = vector.load %arg13[%c0_45, %c0_46] : memref<224x32xbf16, #tpu.memory_space<vmem>>, vector<224x32xbf16>
    %cst_47 = arith.constant dense<0.000000e+00> : vector<16x32xf32>
    %125 = tpu.matmul %123, %124, %cst_47 {dimension_numbers = #tpu.dot_dimension_numbers<[1], [0], [0], [1], [0, 0, 1, 1], [], []>} : vector<16x224xbf16>, vector<224x32xbf16>, vector<16x32xf32> -> vector<16x32xf32>
    %c0_48 = arith.constant 0 : index
    %c0_49 = arith.constant 0 : index
    %126 = vector.load %arg14[%c0_48, %c0_49] : memref<1x32xf32, #tpu.memory_space<vmem>>, vector<1x32xf32>
    %127 = vector.broadcast %126 : vector<1x32xf32> to vector<16x32xf32>
    %128 = arith.addf %125, %127 : vector<16x32xf32>
    %129 = math.exp %128 : vector<16x32xf32>
    %cst_50 = arith.constant 1.000000e+00 : f32
    %130 = vector.broadcast %cst_50 : f32 to vector<16x32xf32>
    %131 = arith.addf %130, %129 : vector<16x32xf32>
    %132 = math.log %131 : vector<16x32xf32>
    %133 = math.tanh %132 : vector<16x32xf32>
    %134 = arith.mulf %128, %133 : vector<16x32xf32>
    %135 = vector.broadcast %59 : vector<16x1xf32> to vector<16x32xf32>
    %136 = arith.mulf %134, %135 : vector<16x32xf32>
    %cst_51 = arith.constant 0.000000e+00 : f32
    %137 = vector.broadcast %cst_51 : f32 to vector<8x32xf32>
    %138 = tpu.concatenate %137, %136, %137 in 0 : vector<8x32xf32>, vector<16x32xf32>, vector<8x32xf32> -> vector<32x32xf32>
    %139 = vector.extract_strided_slice %138 {offsets = [5, 0], sizes = [16, 32], strides = [1, 1]} : vector<32x32xf32> to vector<16x32xf32>
    %140 = vector.extract_strided_slice %138 {offsets = [6, 0], sizes = [16, 32], strides = [1, 1]} : vector<32x32xf32> to vector<16x32xf32>
    %141 = vector.extract_strided_slice %138 {offsets = [7, 0], sizes = [16, 32], strides = [1, 1]} : vector<32x32xf32> to vector<16x32xf32>
    %142 = vector.extract_strided_slice %138 {offsets = [8, 0], sizes = [16, 32], strides = [1, 1]} : vector<32x32xf32> to vector<16x32xf32>
    %143 = vector.extract_strided_slice %138 {offsets = [9, 0], sizes = [16, 32], strides = [1, 1]} : vector<32x32xf32> to vector<16x32xf32>
    %144 = vector.extract_strided_slice %138 {offsets = [10, 0], sizes = [16, 32], strides = [1, 1]} : vector<32x32xf32> to vector<16x32xf32>
    %145 = vector.extract_strided_slice %138 {offsets = [11, 0], sizes = [16, 32], strides = [1, 1]} : vector<32x32xf32> to vector<16x32xf32>
    %146 = tpu.concatenate %139, %140, %141, %142, %143, %144, %145 in 1 : vector<16x32xf32>, vector<16x32xf32>, vector<16x32xf32>, vector<16x32xf32>, vector<16x32xf32>, vector<16x32xf32>, vector<16x32xf32> -> vector<16x224xf32>
    %147 = arith.truncf %146 : vector<16x224xf32> to vector<16x224xbf16>
    %c0_52 = arith.constant 0 : index
    %c0_53 = arith.constant 0 : index
    %148 = vector.load %arg15[%c0_52, %c0_53] : memref<224x32xbf16, #tpu.memory_space<vmem>>, vector<224x32xbf16>
    %cst_54 = arith.constant dense<0.000000e+00> : vector<16x32xf32>
    %149 = tpu.matmul %147, %148, %cst_54 {dimension_numbers = #tpu.dot_dimension_numbers<[1], [0], [0], [1], [0, 0, 1, 1], [], []>} : vector<16x224xbf16>, vector<224x32xbf16>, vector<16x32xf32> -> vector<16x32xf32>
    %c0_55 = arith.constant 0 : index
    %c0_56 = arith.constant 0 : index
    %150 = vector.load %arg16[%c0_55, %c0_56] : memref<1x32xf32, #tpu.memory_space<vmem>>, vector<1x32xf32>
    %151 = vector.broadcast %150 : vector<1x32xf32> to vector<16x32xf32>
    %152 = arith.addf %149, %151 : vector<16x32xf32>
    %153 = math.exp %152 : vector<16x32xf32>
    %cst_57 = arith.constant 1.000000e+00 : f32
    %154 = vector.broadcast %cst_57 : f32 to vector<16x32xf32>
    %155 = arith.addf %154, %153 : vector<16x32xf32>
    %156 = math.log %155 : vector<16x32xf32>
    %157 = math.tanh %156 : vector<16x32xf32>
    %158 = arith.mulf %152, %157 : vector<16x32xf32>
    %159 = vector.broadcast %88 : vector<16x1xf32> to vector<16x32xf32>
    %160 = arith.mulf %158, %159 : vector<16x32xf32>
    %cst_58 = arith.constant 0.000000e+00 : f32
    %161 = vector.broadcast %cst_58 : f32 to vector<8x32xf32>
    %162 = tpu.concatenate %161, %160, %161 in 0 : vector<8x32xf32>, vector<16x32xf32>, vector<8x32xf32> -> vector<32x32xf32>
    %163 = vector.extract_strided_slice %162 {offsets = [5, 0], sizes = [16, 32], strides = [1, 1]} : vector<32x32xf32> to vector<16x32xf32>
    %164 = vector.extract_strided_slice %162 {offsets = [6, 0], sizes = [16, 32], strides = [1, 1]} : vector<32x32xf32> to vector<16x32xf32>
    %165 = vector.extract_strided_slice %162 {offsets = [7, 0], sizes = [16, 32], strides = [1, 1]} : vector<32x32xf32> to vector<16x32xf32>
    %166 = vector.extract_strided_slice %162 {offsets = [8, 0], sizes = [16, 32], strides = [1, 1]} : vector<32x32xf32> to vector<16x32xf32>
    %167 = vector.extract_strided_slice %162 {offsets = [9, 0], sizes = [16, 32], strides = [1, 1]} : vector<32x32xf32> to vector<16x32xf32>
    %168 = vector.extract_strided_slice %162 {offsets = [10, 0], sizes = [16, 32], strides = [1, 1]} : vector<32x32xf32> to vector<16x32xf32>
    %169 = vector.extract_strided_slice %162 {offsets = [11, 0], sizes = [16, 32], strides = [1, 1]} : vector<32x32xf32> to vector<16x32xf32>
    %170 = tpu.concatenate %163, %164, %165, %166, %167, %168, %169 in 1 : vector<16x32xf32>, vector<16x32xf32>, vector<16x32xf32>, vector<16x32xf32>, vector<16x32xf32>, vector<16x32xf32>, vector<16x32xf32> -> vector<16x224xf32>
    %171 = arith.truncf %170 : vector<16x224xf32> to vector<16x224xbf16>
    %c0_59 = arith.constant 0 : index
    %c0_60 = arith.constant 0 : index
    %172 = vector.load %arg17[%c0_59, %c0_60] : memref<224x32xbf16, #tpu.memory_space<vmem>>, vector<224x32xbf16>
    %cst_61 = arith.constant dense<0.000000e+00> : vector<16x32xf32>
    %173 = tpu.matmul %171, %172, %cst_61 {dimension_numbers = #tpu.dot_dimension_numbers<[1], [0], [0], [1], [0, 0, 1, 1], [], []>} : vector<16x224xbf16>, vector<224x32xbf16>, vector<16x32xf32> -> vector<16x32xf32>
    %c0_62 = arith.constant 0 : index
    %c0_63 = arith.constant 0 : index
    %174 = vector.load %arg18[%c0_62, %c0_63] : memref<1x32xf32, #tpu.memory_space<vmem>>, vector<1x32xf32>
    %175 = vector.broadcast %174 : vector<1x32xf32> to vector<16x32xf32>
    %176 = arith.addf %173, %175 : vector<16x32xf32>
    %177 = math.exp %176 : vector<16x32xf32>
    %cst_64 = arith.constant 1.000000e+00 : f32
    %178 = vector.broadcast %cst_64 : f32 to vector<16x32xf32>
    %179 = arith.addf %178, %177 : vector<16x32xf32>
    %180 = math.log %179 : vector<16x32xf32>
    %181 = math.tanh %180 : vector<16x32xf32>
    %182 = arith.mulf %176, %181 : vector<16x32xf32>
    %183 = tpu.concatenate %110, %134, %158, %182 in 1 : vector<16x32xf32>, vector<16x32xf32>, vector<16x32xf32>, vector<16x32xf32> -> vector<16x128xf32>
    %cst_65 = arith.constant 0.000000e+00 : f32
    %184 = vector.broadcast %cst_65 : f32 to vector<8x128xf32>
    %185 = tpu.concatenate %184, %183, %184 in 0 : vector<8x128xf32>, vector<16x128xf32>, vector<8x128xf32> -> vector<32x128xf32>
    %186 = vector.extract_strided_slice %185 {offsets = [6, 0], sizes = [16, 128], strides = [1, 1]} : vector<32x128xf32> to vector<16x128xf32>
    %187 = vector.extract_strided_slice %185 {offsets = [7, 0], sizes = [16, 128], strides = [1, 1]} : vector<32x128xf32> to vector<16x128xf32>
    %188 = vector.extract_strided_slice %185 {offsets = [8, 0], sizes = [16, 128], strides = [1, 1]} : vector<32x128xf32> to vector<16x128xf32>
    %189 = vector.extract_strided_slice %185 {offsets = [9, 0], sizes = [16, 128], strides = [1, 1]} : vector<32x128xf32> to vector<16x128xf32>
    %190 = vector.extract_strided_slice %185 {offsets = [10, 0], sizes = [16, 128], strides = [1, 1]} : vector<32x128xf32> to vector<16x128xf32>
    %191 = tpu.concatenate %186, %187, %188, %189, %190 in 1 : vector<16x128xf32>, vector<16x128xf32>, vector<16x128xf32>, vector<16x128xf32>, vector<16x128xf32> -> vector<16x640xf32>
    %192 = arith.truncf %191 : vector<16x640xf32> to vector<16x640xbf16>
    %c0_66 = arith.constant 0 : index
    %c0_67 = arith.constant 0 : index
    %193 = vector.load %arg19[%c0_66, %c0_67] : memref<640x256xbf16, #tpu.memory_space<vmem>>, vector<640x256xbf16>
    %cst_68 = arith.constant dense<0.000000e+00> : vector<16x256xf32>
    %194 = tpu.matmul %192, %193, %cst_68 {dimension_numbers = #tpu.dot_dimension_numbers<[1], [0], [0], [1], [0, 0, 1, 1], [], []>} : vector<16x640xbf16>, vector<640x256xbf16>, vector<16x256xf32> -> vector<16x256xf32>
    %c0_69 = arith.constant 0 : index
    %c0_70 = arith.constant 0 : index
    %195 = vector.load %arg20[%c0_69, %c0_70] : memref<1x256xf32, #tpu.memory_space<vmem>>, vector<1x256xf32>
    %196 = vector.broadcast %195 : vector<1x256xf32> to vector<16x256xf32>
    %197 = arith.addf %194, %196 : vector<16x256xf32>
    %198 = math.exp %197 : vector<16x256xf32>
    %cst_71 = arith.constant 1.000000e+00 : f32
    %199 = vector.broadcast %cst_71 : f32 to vector<16x256xf32>
    %200 = arith.addf %199, %198 : vector<16x256xf32>
    %201 = math.log %200 : vector<16x256xf32>
    %202 = math.tanh %201 : vector<16x256xf32>
    %203 = arith.mulf %197, %202 : vector<16x256xf32>
    %cst_72 = arith.constant 0.000000e+00 : f32
    %204 = vector.broadcast %cst_72 : f32 to vector<8x256xf32>
    %205 = tpu.concatenate %204, %203, %204 in 0 : vector<8x256xf32>, vector<16x256xf32>, vector<8x256xf32> -> vector<32x256xf32>
    %206 = vector.extract_strided_slice %205 {offsets = [7, 0], sizes = [16, 256], strides = [1, 1]} : vector<32x256xf32> to vector<16x256xf32>
    %207 = vector.extract_strided_slice %205 {offsets = [8, 0], sizes = [16, 256], strides = [1, 1]} : vector<32x256xf32> to vector<16x256xf32>
    %208 = vector.extract_strided_slice %205 {offsets = [9, 0], sizes = [16, 256], strides = [1, 1]} : vector<32x256xf32> to vector<16x256xf32>
    %209 = tpu.concatenate %206, %207, %208 in 1 : vector<16x256xf32>, vector<16x256xf32>, vector<16x256xf32> -> vector<16x768xf32>
    %210 = arith.truncf %209 : vector<16x768xf32> to vector<16x768xbf16>
    %c0_73 = arith.constant 0 : index
    %c0_74 = arith.constant 0 : index
    %211 = vector.load %arg21[%c0_73, %c0_74] : memref<768x128xbf16, #tpu.memory_space<vmem>>, vector<768x128xbf16>
    %cst_75 = arith.constant dense<0.000000e+00> : vector<16x128xf32>
    %212 = tpu.matmul %210, %211, %cst_75 {dimension_numbers = #tpu.dot_dimension_numbers<[1], [0], [0], [1], [0, 0, 1, 1], [], []>} : vector<16x768xbf16>, vector<768x128xbf16>, vector<16x128xf32> -> vector<16x128xf32>
    %c0_76 = arith.constant 0 : index
    %c0_77 = arith.constant 0 : index
    %213 = vector.load %arg22[%c0_76, %c0_77] : memref<1x128xf32, #tpu.memory_space<vmem>>, vector<1x128xf32>
    %214 = vector.broadcast %213 : vector<1x128xf32> to vector<16x128xf32>
    %215 = arith.addf %212, %214 : vector<16x128xf32>
    %216 = math.exp %215 : vector<16x128xf32>
    %cst_78 = arith.constant 1.000000e+00 : f32
    %217 = vector.broadcast %cst_78 : f32 to vector<16x128xf32>
    %218 = arith.addf %217, %216 : vector<16x128xf32>
    %219 = math.log %218 : vector<16x128xf32>
    %220 = math.tanh %219 : vector<16x128xf32>
    %221 = arith.mulf %215, %220 : vector<16x128xf32>
    %cst_79 = arith.constant dense<0.000000e+00> : vector<128xf32>
    %222 = vector.multi_reduction <add>, %221, %cst_79 [0] : vector<16x128xf32> to vector<128xf32>
    %223 = vector.shape_cast %222 : vector<128xf32> to vector<1x128xf32>
    %cst_80 = arith.constant 1.600000e+01 : f32
    %224 = vector.broadcast %cst_80 : f32 to vector<1x128xf32>
    %225 = arith.divf %223, %224 : vector<1x128xf32>
    %226 = arith.truncf %225 : vector<1x128xf32> to vector<1x128xbf16>
    %c0_81 = arith.constant 0 : index
    %c0_82 = arith.constant 0 : index
    %227 = vector.load %arg23[%c0_81, %c0_82] : memref<128x8xbf16, #tpu.memory_space<vmem>>, vector<128x8xbf16>
    %cst_83 = arith.constant dense<0.000000e+00> : vector<1x8xf32>
    %228 = tpu.matmul %226, %227, %cst_83 {dimension_numbers = #tpu.dot_dimension_numbers<[1], [0], [0], [1], [0, 0, 1, 1], [], []>} : vector<1x128xbf16>, vector<128x8xbf16>, vector<1x8xf32> -> vector<1x8xf32>
    %c0_84 = arith.constant 0 : index
    %c0_85 = arith.constant 0 : index
    %229 = vector.load %arg24[%c0_84, %c0_85] : memref<1x8xf32, #tpu.memory_space<vmem>>, vector<1x8xf32>
    %230 = arith.addf %228, %229 : vector<1x8xf32>
    %cst_86 = arith.constant dense<0xFF800000> : vector<1xf32>
    %231 = vector.multi_reduction <maximumf>, %230, %cst_86 [1] : vector<1x8xf32> to vector<1xf32>
    %232 = vector.shape_cast %231 : vector<1xf32> to vector<1x1xf32>
    %233 = vector.broadcast %232 : vector<1x1xf32> to vector<1x8xf32>
    %234 = arith.subf %230, %233 : vector<1x8xf32>
    %235 = math.exp %234 : vector<1x8xf32>
    %cst_87 = arith.constant dense<0.000000e+00> : vector<1xf32>
    %236 = vector.multi_reduction <add>, %235, %cst_87 [1] : vector<1x8xf32> to vector<1xf32>
    %237 = vector.shape_cast %236 : vector<1xf32> to vector<1x1xf32>
    %238 = tpu.reciprocal %237 {approx = true} : vector<1x1xf32> -> vector<1x1xf32>
    %239 = vector.broadcast %238 : vector<1x1xf32> to vector<1x8xf32>
    %240 = arith.mulf %235, %239 : vector<1x8xf32>
    %241 = tpu.iota {dimensions = array<i32: 1>} : vector<1x8xi32>
    %cst_88 = arith.constant 0.000000e+00 : f32
    %242 = vector.broadcast %cst_88 : f32 to vector<8x1xf32>
    %243 = tpu.concatenate %242, %30, %242 in 0 : vector<8x1xf32>, vector<16x1xf32>, vector<8x1xf32> -> vector<32x1xf32>
    %244 = vector.extract_strided_slice %243 {offsets = [3, 0], sizes = [16, 1], strides = [1, 1]} : vector<32x1xf32> to vector<16x1xf32>
    %245 = vector.extract_strided_slice %243 {offsets = [4, 0], sizes = [16, 1], strides = [1, 1]} : vector<32x1xf32> to vector<16x1xf32>
    %246 = vector.extract_strided_slice %243 {offsets = [5, 0], sizes = [16, 1], strides = [1, 1]} : vector<32x1xf32> to vector<16x1xf32>
    %247 = vector.extract_strided_slice %243 {offsets = [6, 0], sizes = [16, 1], strides = [1, 1]} : vector<32x1xf32> to vector<16x1xf32>
    %248 = vector.extract_strided_slice %243 {offsets = [7, 0], sizes = [16, 1], strides = [1, 1]} : vector<32x1xf32> to vector<16x1xf32>
    %249 = vector.extract_strided_slice %243 {offsets = [8, 0], sizes = [16, 1], strides = [1, 1]} : vector<32x1xf32> to vector<16x1xf32>
    %250 = vector.extract_strided_slice %243 {offsets = [9, 0], sizes = [16, 1], strides = [1, 1]} : vector<32x1xf32> to vector<16x1xf32>
    %251 = vector.extract_strided_slice %243 {offsets = [10, 0], sizes = [16, 1], strides = [1, 1]} : vector<32x1xf32> to vector<16x1xf32>
    %252 = vector.extract_strided_slice %243 {offsets = [11, 0], sizes = [16, 1], strides = [1, 1]} : vector<32x1xf32> to vector<16x1xf32>
    %253 = vector.extract_strided_slice %243 {offsets = [12, 0], sizes = [16, 1], strides = [1, 1]} : vector<32x1xf32> to vector<16x1xf32>
    %254 = vector.extract_strided_slice %243 {offsets = [13, 0], sizes = [16, 1], strides = [1, 1]} : vector<32x1xf32> to vector<16x1xf32>
    %255 = tpu.concatenate %244, %245, %246, %247, %248, %249, %250, %251, %252, %253, %254 in 1 : vector<16x1xf32>, vector<16x1xf32>, vector<16x1xf32>, vector<16x1xf32>, vector<16x1xf32>, vector<16x1xf32>, vector<16x1xf32>, vector<16x1xf32>, vector<16x1xf32>, vector<16x1xf32>, vector<16x1xf32> -> vector<16x11xf32>
    %256 = arith.truncf %255 : vector<16x11xf32> to vector<16x11xbf16>
    %c0_89 = arith.constant 0 : index
    %c0_90 = arith.constant 0 : index
    %257 = vector.load %arg25[%c0_89, %c0_90] : memref<11x16xbf16, #tpu.memory_space<vmem>>, vector<11x16xbf16>
    %cst_91 = arith.constant dense<0.000000e+00> : vector<16x16xf32>
    %258 = tpu.matmul %256, %257, %cst_91 {dimension_numbers = #tpu.dot_dimension_numbers<[1], [0], [0], [1], [0, 0, 1, 1], [], []>} : vector<16x11xbf16>, vector<11x16xbf16>, vector<16x16xf32> -> vector<16x16xf32>
    %c0_92 = arith.constant 0 : index
    %c0_93 = arith.constant 0 : index
    %259 = vector.load %arg26[%c0_92, %c0_93] : memref<1x16xf32, #tpu.memory_space<vmem>>, vector<1x16xf32>
    %260 = vector.broadcast %259 : vector<1x16xf32> to vector<16x16xf32>
    %261 = arith.addf %258, %260 : vector<16x16xf32>
    %cst_94 = arith.constant 0.000000e+00 : f32
    %262 = vector.broadcast %cst_94 : f32 to vector<16x16xf32>
    %263 = arith.maximumf %261, %262 : vector<16x16xf32>
    %c0_95 = arith.constant 0 : index
    %c0_96 = arith.constant 0 : index
    %264 = vector.load %arg28[%c0_95, %c0_96] : memref<1x8xf32, #tpu.memory_space<vmem>>, vector<1x8xf32>
    %c0_97 = arith.constant 0 : index
    %c0_98 = arith.constant 0 : index
    %c0_99 = arith.constant 0 : index
    %265 = vector.load %arg27[%c0_97, %c0_98, %c0_99] : memref<8x16x16xf32, #tpu.memory_space<vmem>>, vector<1x16x16xf32>
    %266 = vector.shape_cast %265 : vector<1x16x16xf32> to vector<16x16xf32>
    %267 = arith.mulf %263, %266 : vector<16x16xf32>
    %cst_100 = arith.constant dense<0.000000e+00> : vector<16xf32>
    %268 = vector.multi_reduction <add>, %267, %cst_100 [1] : vector<16x16xf32> to vector<16xf32>
    %269 = vector.shape_cast %268 : vector<16xf32> to vector<16x1xf32>
    %cst_101 = arith.constant dense<0.000000e+00> : vector<1xf32>
    %270 = vector.multi_reduction <add>, %269, %cst_101 [0] : vector<16x1xf32> to vector<1xf32>
    %271 = vector.shape_cast %270 : vector<1xf32> to vector<1x1xf32>
    %c0_i32 = arith.constant 0 : i32
    %272 = vector.broadcast %c0_i32 : i32 to vector<1x8xi32>
    %273 = arith.cmpi eq, %241, %272 : vector<1x8xi32>
    %cst_102 = arith.constant 0.000000e+00 : f32
    %274 = vector.shape_cast %271 : vector<1x1xf32> to vector<1x1xf32>
    %275 = vector.broadcast %274 : vector<1x1xf32> to vector<1x8xf32>
    %276 = vector.broadcast %cst_102 : f32 to vector<1x8xf32>
    %277 = arith.select %273, %275, %276 : vector<1x8xi1>, vector<1x8xf32>
    %278 = arith.addf %264, %277 : vector<1x8xf32>
    %c1 = arith.constant 1 : index
    %c0_103 = arith.constant 0 : index
    %c0_104 = arith.constant 0 : index
    %279 = vector.load %arg27[%c1, %c0_103, %c0_104] : memref<8x16x16xf32, #tpu.memory_space<vmem>>, vector<1x16x16xf32>
    %280 = vector.shape_cast %279 : vector<1x16x16xf32> to vector<16x16xf32>
    %281 = arith.mulf %263, %280 : vector<16x16xf32>
    %cst_105 = arith.constant dense<0.000000e+00> : vector<16xf32>
    %282 = vector.multi_reduction <add>, %281, %cst_105 [1] : vector<16x16xf32> to vector<16xf32>
    %283 = vector.shape_cast %282 : vector<16xf32> to vector<16x1xf32>
    %cst_106 = arith.constant dense<0.000000e+00> : vector<1xf32>
    %284 = vector.multi_reduction <add>, %283, %cst_106 [0] : vector<16x1xf32> to vector<1xf32>
    %285 = vector.shape_cast %284 : vector<1xf32> to vector<1x1xf32>
    %c1_i32 = arith.constant 1 : i32
    %286 = vector.broadcast %c1_i32 : i32 to vector<1x8xi32>
    %287 = arith.cmpi eq, %241, %286 : vector<1x8xi32>
    %cst_107 = arith.constant 0.000000e+00 : f32
    %288 = vector.shape_cast %285 : vector<1x1xf32> to vector<1x1xf32>
    %289 = vector.broadcast %288 : vector<1x1xf32> to vector<1x8xf32>
    %290 = vector.broadcast %cst_107 : f32 to vector<1x8xf32>
    %291 = arith.select %287, %289, %290 : vector<1x8xi1>, vector<1x8xf32>
    %292 = arith.addf %278, %291 : vector<1x8xf32>
    %c2 = arith.constant 2 : index
    %c0_108 = arith.constant 0 : index
    %c0_109 = arith.constant 0 : index
    %293 = vector.load %arg27[%c2, %c0_108, %c0_109] : memref<8x16x16xf32, #tpu.memory_space<vmem>>, vector<1x16x16xf32>
    %294 = vector.shape_cast %293 : vector<1x16x16xf32> to vector<16x16xf32>
    %295 = arith.mulf %263, %294 : vector<16x16xf32>
    %cst_110 = arith.constant dense<0.000000e+00> : vector<16xf32>
    %296 = vector.multi_reduction <add>, %295, %cst_110 [1] : vector<16x16xf32> to vector<16xf32>
    %297 = vector.shape_cast %296 : vector<16xf32> to vector<16x1xf32>
    %cst_111 = arith.constant dense<0.000000e+00> : vector<1xf32>
    %298 = vector.multi_reduction <add>, %297, %cst_111 [0] : vector<16x1xf32> to vector<1xf32>
    %299 = vector.shape_cast %298 : vector<1xf32> to vector<1x1xf32>
    %c2_i32 = arith.constant 2 : i32
    %300 = vector.broadcast %c2_i32 : i32 to vector<1x8xi32>
    %301 = arith.cmpi eq, %241, %300 : vector<1x8xi32>
    %cst_112 = arith.constant 0.000000e+00 : f32
    %302 = vector.shape_cast %299 : vector<1x1xf32> to vector<1x1xf32>
    %303 = vector.broadcast %302 : vector<1x1xf32> to vector<1x8xf32>
    %304 = vector.broadcast %cst_112 : f32 to vector<1x8xf32>
    %305 = arith.select %301, %303, %304 : vector<1x8xi1>, vector<1x8xf32>
    %306 = arith.addf %292, %305 : vector<1x8xf32>
    %c3 = arith.constant 3 : index
    %c0_113 = arith.constant 0 : index
    %c0_114 = arith.constant 0 : index
    %307 = vector.load %arg27[%c3, %c0_113, %c0_114] : memref<8x16x16xf32, #tpu.memory_space<vmem>>, vector<1x16x16xf32>
    %308 = vector.shape_cast %307 : vector<1x16x16xf32> to vector<16x16xf32>
    %309 = arith.mulf %263, %308 : vector<16x16xf32>
    %cst_115 = arith.constant dense<0.000000e+00> : vector<16xf32>
    %310 = vector.multi_reduction <add>, %309, %cst_115 [1] : vector<16x16xf32> to vector<16xf32>
    %311 = vector.shape_cast %310 : vector<16xf32> to vector<16x1xf32>
    %cst_116 = arith.constant dense<0.000000e+00> : vector<1xf32>
    %312 = vector.multi_reduction <add>, %311, %cst_116 [0] : vector<16x1xf32> to vector<1xf32>
    %313 = vector.shape_cast %312 : vector<1xf32> to vector<1x1xf32>
    %c3_i32 = arith.constant 3 : i32
    %314 = vector.broadcast %c3_i32 : i32 to vector<1x8xi32>
    %315 = arith.cmpi eq, %241, %314 : vector<1x8xi32>
    %cst_117 = arith.constant 0.000000e+00 : f32
    %316 = vector.shape_cast %313 : vector<1x1xf32> to vector<1x1xf32>
    %317 = vector.broadcast %316 : vector<1x1xf32> to vector<1x8xf32>
    %318 = vector.broadcast %cst_117 : f32 to vector<1x8xf32>
    %319 = arith.select %315, %317, %318 : vector<1x8xi1>, vector<1x8xf32>
    %320 = arith.addf %306, %319 : vector<1x8xf32>
    %c4 = arith.constant 4 : index
    %c0_118 = arith.constant 0 : index
    %c0_119 = arith.constant 0 : index
    %321 = vector.load %arg27[%c4, %c0_118, %c0_119] : memref<8x16x16xf32, #tpu.memory_space<vmem>>, vector<1x16x16xf32>
    %322 = vector.shape_cast %321 : vector<1x16x16xf32> to vector<16x16xf32>
    %323 = arith.mulf %263, %322 : vector<16x16xf32>
    %cst_120 = arith.constant dense<0.000000e+00> : vector<16xf32>
    %324 = vector.multi_reduction <add>, %323, %cst_120 [1] : vector<16x16xf32> to vector<16xf32>
    %325 = vector.shape_cast %324 : vector<16xf32> to vector<16x1xf32>
    %cst_121 = arith.constant dense<0.000000e+00> : vector<1xf32>
    %326 = vector.multi_reduction <add>, %325, %cst_121 [0] : vector<16x1xf32> to vector<1xf32>
    %327 = vector.shape_cast %326 : vector<1xf32> to vector<1x1xf32>
    %c4_i32 = arith.constant 4 : i32
    %328 = vector.broadcast %c4_i32 : i32 to vector<1x8xi32>
    %329 = arith.cmpi eq, %241, %328 : vector<1x8xi32>
    %cst_122 = arith.constant 0.000000e+00 : f32
    %330 = vector.shape_cast %327 : vector<1x1xf32> to vector<1x1xf32>
    %331 = vector.broadcast %330 : vector<1x1xf32> to vector<1x8xf32>
    %332 = vector.broadcast %cst_122 : f32 to vector<1x8xf32>
    %333 = arith.select %329, %331, %332 : vector<1x8xi1>, vector<1x8xf32>
    %334 = arith.addf %320, %333 : vector<1x8xf32>
    %c5 = arith.constant 5 : index
    %c0_123 = arith.constant 0 : index
    %c0_124 = arith.constant 0 : index
    %335 = vector.load %arg27[%c5, %c0_123, %c0_124] : memref<8x16x16xf32, #tpu.memory_space<vmem>>, vector<1x16x16xf32>
    %336 = vector.shape_cast %335 : vector<1x16x16xf32> to vector<16x16xf32>
    %337 = arith.mulf %263, %336 : vector<16x16xf32>
    %cst_125 = arith.constant dense<0.000000e+00> : vector<16xf32>
    %338 = vector.multi_reduction <add>, %337, %cst_125 [1] : vector<16x16xf32> to vector<16xf32>
    %339 = vector.shape_cast %338 : vector<16xf32> to vector<16x1xf32>
    %cst_126 = arith.constant dense<0.000000e+00> : vector<1xf32>
    %340 = vector.multi_reduction <add>, %339, %cst_126 [0] : vector<16x1xf32> to vector<1xf32>
    %341 = vector.shape_cast %340 : vector<1xf32> to vector<1x1xf32>
    %c5_i32 = arith.constant 5 : i32
    %342 = vector.broadcast %c5_i32 : i32 to vector<1x8xi32>
    %343 = arith.cmpi eq, %241, %342 : vector<1x8xi32>
    %cst_127 = arith.constant 0.000000e+00 : f32
    %344 = vector.shape_cast %341 : vector<1x1xf32> to vector<1x1xf32>
    %345 = vector.broadcast %344 : vector<1x1xf32> to vector<1x8xf32>
    %346 = vector.broadcast %cst_127 : f32 to vector<1x8xf32>
    %347 = arith.select %343, %345, %346 : vector<1x8xi1>, vector<1x8xf32>
    %348 = arith.addf %334, %347 : vector<1x8xf32>
    %c6 = arith.constant 6 : index
    %c0_128 = arith.constant 0 : index
    %c0_129 = arith.constant 0 : index
    %349 = vector.load %arg27[%c6, %c0_128, %c0_129] : memref<8x16x16xf32, #tpu.memory_space<vmem>>, vector<1x16x16xf32>
    %350 = vector.shape_cast %349 : vector<1x16x16xf32> to vector<16x16xf32>
    %351 = arith.mulf %263, %350 : vector<16x16xf32>
    %cst_130 = arith.constant dense<0.000000e+00> : vector<16xf32>
    %352 = vector.multi_reduction <add>, %351, %cst_130 [1] : vector<16x16xf32> to vector<16xf32>
    %353 = vector.shape_cast %352 : vector<16xf32> to vector<16x1xf32>
    %cst_131 = arith.constant dense<0.000000e+00> : vector<1xf32>
    %354 = vector.multi_reduction <add>, %353, %cst_131 [0] : vector<16x1xf32> to vector<1xf32>
    %355 = vector.shape_cast %354 : vector<1xf32> to vector<1x1xf32>
    %c6_i32 = arith.constant 6 : i32
    %356 = vector.broadcast %c6_i32 : i32 to vector<1x8xi32>
    %357 = arith.cmpi eq, %241, %356 : vector<1x8xi32>
    %cst_132 = arith.constant 0.000000e+00 : f32
    %358 = vector.shape_cast %355 : vector<1x1xf32> to vector<1x1xf32>
    %359 = vector.broadcast %358 : vector<1x1xf32> to vector<1x8xf32>
    %360 = vector.broadcast %cst_132 : f32 to vector<1x8xf32>
    %361 = arith.select %357, %359, %360 : vector<1x8xi1>, vector<1x8xf32>
    %362 = arith.addf %348, %361 : vector<1x8xf32>
    %c7 = arith.constant 7 : index
    %c0_133 = arith.constant 0 : index
    %c0_134 = arith.constant 0 : index
    %363 = vector.load %arg27[%c7, %c0_133, %c0_134] : memref<8x16x16xf32, #tpu.memory_space<vmem>>, vector<1x16x16xf32>
    %364 = vector.shape_cast %363 : vector<1x16x16xf32> to vector<16x16xf32>
    %365 = arith.mulf %263, %364 : vector<16x16xf32>
    %cst_135 = arith.constant dense<0.000000e+00> : vector<16xf32>
    %366 = vector.multi_reduction <add>, %365, %cst_135 [1] : vector<16x16xf32> to vector<16xf32>
    %367 = vector.shape_cast %366 : vector<16xf32> to vector<16x1xf32>
    %cst_136 = arith.constant dense<0.000000e+00> : vector<1xf32>
    %368 = vector.multi_reduction <add>, %367, %cst_136 [0] : vector<16x1xf32> to vector<1xf32>
    %369 = vector.shape_cast %368 : vector<1xf32> to vector<1x1xf32>
    %c7_i32 = arith.constant 7 : i32
    %370 = vector.broadcast %c7_i32 : i32 to vector<1x8xi32>
    %371 = arith.cmpi eq, %241, %370 : vector<1x8xi32>
    %cst_137 = arith.constant 0.000000e+00 : f32
    %372 = vector.shape_cast %369 : vector<1x1xf32> to vector<1x1xf32>
    %373 = vector.broadcast %372 : vector<1x1xf32> to vector<1x8xf32>
    %374 = vector.broadcast %cst_137 : f32 to vector<1x8xf32>
    %375 = arith.select %371, %373, %374 : vector<1x8xi1>, vector<1x8xf32>
    %376 = arith.addf %362, %375 : vector<1x8xf32>
    %cst_138 = arith.constant dense<0xFF800000> : vector<1xf32>
    %377 = vector.multi_reduction <maximumf>, %376, %cst_138 [1] : vector<1x8xf32> to vector<1xf32>
    %378 = vector.shape_cast %377 : vector<1xf32> to vector<1x1xf32>
    %379 = vector.broadcast %378 : vector<1x1xf32> to vector<1x8xf32>
    %380 = arith.subf %376, %379 : vector<1x8xf32>
    %381 = math.exp %380 : vector<1x8xf32>
    %cst_139 = arith.constant dense<0.000000e+00> : vector<1xf32>
    %382 = vector.multi_reduction <add>, %381, %cst_139 [1] : vector<1x8xf32> to vector<1xf32>
    %383 = vector.shape_cast %382 : vector<1xf32> to vector<1x1xf32>
    %384 = tpu.reciprocal %383 {approx = true} : vector<1x1xf32> -> vector<1x1xf32>
    %385 = vector.broadcast %384 : vector<1x1xf32> to vector<1x8xf32>
    %386 = arith.mulf %381, %385 : vector<1x8xf32>
    %cst_140 = arith.constant 0.000000e+00 : f32
    %387 = vector.broadcast %cst_140 : f32 to vector<8x1xf32>
    %388 = tpu.concatenate %387, %59, %387 in 0 : vector<8x1xf32>, vector<16x1xf32>, vector<8x1xf32> -> vector<32x1xf32>
    %389 = vector.extract_strided_slice %388 {offsets = [3, 0], sizes = [16, 1], strides = [1, 1]} : vector<32x1xf32> to vector<16x1xf32>
    %390 = vector.extract_strided_slice %388 {offsets = [4, 0], sizes = [16, 1], strides = [1, 1]} : vector<32x1xf32> to vector<16x1xf32>
    %391 = vector.extract_strided_slice %388 {offsets = [5, 0], sizes = [16, 1], strides = [1, 1]} : vector<32x1xf32> to vector<16x1xf32>
    %392 = vector.extract_strided_slice %388 {offsets = [6, 0], sizes = [16, 1], strides = [1, 1]} : vector<32x1xf32> to vector<16x1xf32>
    %393 = vector.extract_strided_slice %388 {offsets = [7, 0], sizes = [16, 1], strides = [1, 1]} : vector<32x1xf32> to vector<16x1xf32>
    %394 = vector.extract_strided_slice %388 {offsets = [8, 0], sizes = [16, 1], strides = [1, 1]} : vector<32x1xf32> to vector<16x1xf32>
    %395 = vector.extract_strided_slice %388 {offsets = [9, 0], sizes = [16, 1], strides = [1, 1]} : vector<32x1xf32> to vector<16x1xf32>
    %396 = vector.extract_strided_slice %388 {offsets = [10, 0], sizes = [16, 1], strides = [1, 1]} : vector<32x1xf32> to vector<16x1xf32>
    %397 = vector.extract_strided_slice %388 {offsets = [11, 0], sizes = [16, 1], strides = [1, 1]} : vector<32x1xf32> to vector<16x1xf32>
    %398 = vector.extract_strided_slice %388 {offsets = [12, 0], sizes = [16, 1], strides = [1, 1]} : vector<32x1xf32> to vector<16x1xf32>
    %399 = vector.extract_strided_slice %388 {offsets = [13, 0], sizes = [16, 1], strides = [1, 1]} : vector<32x1xf32> to vector<16x1xf32>
    %400 = tpu.concatenate %389, %390, %391, %392, %393, %394, %395, %396, %397, %398, %399 in 1 : vector<16x1xf32>, vector<16x1xf32>, vector<16x1xf32>, vector<16x1xf32>, vector<16x1xf32>, vector<16x1xf32>, vector<16x1xf32>, vector<16x1xf32>, vector<16x1xf32>, vector<16x1xf32>, vector<16x1xf32> -> vector<16x11xf32>
    %401 = arith.truncf %400 : vector<16x11xf32> to vector<16x11xbf16>
    %c0_141 = arith.constant 0 : index
    %c0_142 = arith.constant 0 : index
    %402 = vector.load %arg29[%c0_141, %c0_142] : memref<11x16xbf16, #tpu.memory_space<vmem>>, vector<11x16xbf16>
    %cst_143 = arith.constant dense<0.000000e+00> : vector<16x16xf32>
    %403 = tpu.matmul %401, %402, %cst_143 {dimension_numbers = #tpu.dot_dimension_numbers<[1], [0], [0], [1], [0, 0, 1, 1], [], []>} : vector<16x11xbf16>, vector<11x16xbf16>, vector<16x16xf32> -> vector<16x16xf32>
    %c0_144 = arith.constant 0 : index
    %c0_145 = arith.constant 0 : index
    %404 = vector.load %arg30[%c0_144, %c0_145] : memref<1x16xf32, #tpu.memory_space<vmem>>, vector<1x16xf32>
    %405 = vector.broadcast %404 : vector<1x16xf32> to vector<16x16xf32>
    %406 = arith.addf %403, %405 : vector<16x16xf32>
    %cst_146 = arith.constant 0.000000e+00 : f32
    %407 = vector.broadcast %cst_146 : f32 to vector<16x16xf32>
    %408 = arith.maximumf %406, %407 : vector<16x16xf32>
    %c0_147 = arith.constant 0 : index
    %c0_148 = arith.constant 0 : index
    %409 = vector.load %arg32[%c0_147, %c0_148] : memref<1x8xf32, #tpu.memory_space<vmem>>, vector<1x8xf32>
    %c0_149 = arith.constant 0 : index
    %c0_150 = arith.constant 0 : index
    %c0_151 = arith.constant 0 : index
    %410 = vector.load %arg31[%c0_149, %c0_150, %c0_151] : memref<8x16x16xf32, #tpu.memory_space<vmem>>, vector<1x16x16xf32>
    %411 = vector.shape_cast %410 : vector<1x16x16xf32> to vector<16x16xf32>
    %412 = arith.mulf %408, %411 : vector<16x16xf32>
    %cst_152 = arith.constant dense<0.000000e+00> : vector<16xf32>
    %413 = vector.multi_reduction <add>, %412, %cst_152 [1] : vector<16x16xf32> to vector<16xf32>
    %414 = vector.shape_cast %413 : vector<16xf32> to vector<16x1xf32>
    %cst_153 = arith.constant dense<0.000000e+00> : vector<1xf32>
    %415 = vector.multi_reduction <add>, %414, %cst_153 [0] : vector<16x1xf32> to vector<1xf32>
    %416 = vector.shape_cast %415 : vector<1xf32> to vector<1x1xf32>
    %c0_i32_154 = arith.constant 0 : i32
    %417 = vector.broadcast %c0_i32_154 : i32 to vector<1x8xi32>
    %418 = arith.cmpi eq, %241, %417 : vector<1x8xi32>
    %cst_155 = arith.constant 0.000000e+00 : f32
    %419 = vector.shape_cast %416 : vector<1x1xf32> to vector<1x1xf32>
    %420 = vector.broadcast %419 : vector<1x1xf32> to vector<1x8xf32>
    %421 = vector.broadcast %cst_155 : f32 to vector<1x8xf32>
    %422 = arith.select %418, %420, %421 : vector<1x8xi1>, vector<1x8xf32>
    %423 = arith.addf %409, %422 : vector<1x8xf32>
    %c1_156 = arith.constant 1 : index
    %c0_157 = arith.constant 0 : index
    %c0_158 = arith.constant 0 : index
    %424 = vector.load %arg31[%c1_156, %c0_157, %c0_158] : memref<8x16x16xf32, #tpu.memory_space<vmem>>, vector<1x16x16xf32>
    %425 = vector.shape_cast %424 : vector<1x16x16xf32> to vector<16x16xf32>
    %426 = arith.mulf %408, %425 : vector<16x16xf32>
    %cst_159 = arith.constant dense<0.000000e+00> : vector<16xf32>
    %427 = vector.multi_reduction <add>, %426, %cst_159 [1] : vector<16x16xf32> to vector<16xf32>
    %428 = vector.shape_cast %427 : vector<16xf32> to vector<16x1xf32>
    %cst_160 = arith.constant dense<0.000000e+00> : vector<1xf32>
    %429 = vector.multi_reduction <add>, %428, %cst_160 [0] : vector<16x1xf32> to vector<1xf32>
    %430 = vector.shape_cast %429 : vector<1xf32> to vector<1x1xf32>
    %c1_i32_161 = arith.constant 1 : i32
    %431 = vector.broadcast %c1_i32_161 : i32 to vector<1x8xi32>
    %432 = arith.cmpi eq, %241, %431 : vector<1x8xi32>
    %cst_162 = arith.constant 0.000000e+00 : f32
    %433 = vector.shape_cast %430 : vector<1x1xf32> to vector<1x1xf32>
    %434 = vector.broadcast %433 : vector<1x1xf32> to vector<1x8xf32>
    %435 = vector.broadcast %cst_162 : f32 to vector<1x8xf32>
    %436 = arith.select %432, %434, %435 : vector<1x8xi1>, vector<1x8xf32>
    %437 = arith.addf %423, %436 : vector<1x8xf32>
    %c2_163 = arith.constant 2 : index
    %c0_164 = arith.constant 0 : index
    %c0_165 = arith.constant 0 : index
    %438 = vector.load %arg31[%c2_163, %c0_164, %c0_165] : memref<8x16x16xf32, #tpu.memory_space<vmem>>, vector<1x16x16xf32>
    %439 = vector.shape_cast %438 : vector<1x16x16xf32> to vector<16x16xf32>
    %440 = arith.mulf %408, %439 : vector<16x16xf32>
    %cst_166 = arith.constant dense<0.000000e+00> : vector<16xf32>
    %441 = vector.multi_reduction <add>, %440, %cst_166 [1] : vector<16x16xf32> to vector<16xf32>
    %442 = vector.shape_cast %441 : vector<16xf32> to vector<16x1xf32>
    %cst_167 = arith.constant dense<0.000000e+00> : vector<1xf32>
    %443 = vector.multi_reduction <add>, %442, %cst_167 [0] : vector<16x1xf32> to vector<1xf32>
    %444 = vector.shape_cast %443 : vector<1xf32> to vector<1x1xf32>
    %c2_i32_168 = arith.constant 2 : i32
    %445 = vector.broadcast %c2_i32_168 : i32 to vector<1x8xi32>
    %446 = arith.cmpi eq, %241, %445 : vector<1x8xi32>
    %cst_169 = arith.constant 0.000000e+00 : f32
    %447 = vector.shape_cast %444 : vector<1x1xf32> to vector<1x1xf32>
    %448 = vector.broadcast %447 : vector<1x1xf32> to vector<1x8xf32>
    %449 = vector.broadcast %cst_169 : f32 to vector<1x8xf32>
    %450 = arith.select %446, %448, %449 : vector<1x8xi1>, vector<1x8xf32>
    %451 = arith.addf %437, %450 : vector<1x8xf32>
    %c3_170 = arith.constant 3 : index
    %c0_171 = arith.constant 0 : index
    %c0_172 = arith.constant 0 : index
    %452 = vector.load %arg31[%c3_170, %c0_171, %c0_172] : memref<8x16x16xf32, #tpu.memory_space<vmem>>, vector<1x16x16xf32>
    %453 = vector.shape_cast %452 : vector<1x16x16xf32> to vector<16x16xf32>
    %454 = arith.mulf %408, %453 : vector<16x16xf32>
    %cst_173 = arith.constant dense<0.000000e+00> : vector<16xf32>
    %455 = vector.multi_reduction <add>, %454, %cst_173 [1] : vector<16x16xf32> to vector<16xf32>
    %456 = vector.shape_cast %455 : vector<16xf32> to vector<16x1xf32>
    %cst_174 = arith.constant dense<0.000000e+00> : vector<1xf32>
    %457 = vector.multi_reduction <add>, %456, %cst_174 [0] : vector<16x1xf32> to vector<1xf32>
    %458 = vector.shape_cast %457 : vector<1xf32> to vector<1x1xf32>
    %c3_i32_175 = arith.constant 3 : i32
    %459 = vector.broadcast %c3_i32_175 : i32 to vector<1x8xi32>
    %460 = arith.cmpi eq, %241, %459 : vector<1x8xi32>
    %cst_176 = arith.constant 0.000000e+00 : f32
    %461 = vector.shape_cast %458 : vector<1x1xf32> to vector<1x1xf32>
    %462 = vector.broadcast %461 : vector<1x1xf32> to vector<1x8xf32>
    %463 = vector.broadcast %cst_176 : f32 to vector<1x8xf32>
    %464 = arith.select %460, %462, %463 : vector<1x8xi1>, vector<1x8xf32>
    %465 = arith.addf %451, %464 : vector<1x8xf32>
    %c4_177 = arith.constant 4 : index
    %c0_178 = arith.constant 0 : index
    %c0_179 = arith.constant 0 : index
    %466 = vector.load %arg31[%c4_177, %c0_178, %c0_179] : memref<8x16x16xf32, #tpu.memory_space<vmem>>, vector<1x16x16xf32>
    %467 = vector.shape_cast %466 : vector<1x16x16xf32> to vector<16x16xf32>
    %468 = arith.mulf %408, %467 : vector<16x16xf32>
    %cst_180 = arith.constant dense<0.000000e+00> : vector<16xf32>
    %469 = vector.multi_reduction <add>, %468, %cst_180 [1] : vector<16x16xf32> to vector<16xf32>
    %470 = vector.shape_cast %469 : vector<16xf32> to vector<16x1xf32>
    %cst_181 = arith.constant dense<0.000000e+00> : vector<1xf32>
    %471 = vector.multi_reduction <add>, %470, %cst_181 [0] : vector<16x1xf32> to vector<1xf32>
    %472 = vector.shape_cast %471 : vector<1xf32> to vector<1x1xf32>
    %c4_i32_182 = arith.constant 4 : i32
    %473 = vector.broadcast %c4_i32_182 : i32 to vector<1x8xi32>
    %474 = arith.cmpi eq, %241, %473 : vector<1x8xi32>
    %cst_183 = arith.constant 0.000000e+00 : f32
    %475 = vector.shape_cast %472 : vector<1x1xf32> to vector<1x1xf32>
    %476 = vector.broadcast %475 : vector<1x1xf32> to vector<1x8xf32>
    %477 = vector.broadcast %cst_183 : f32 to vector<1x8xf32>
    %478 = arith.select %474, %476, %477 : vector<1x8xi1>, vector<1x8xf32>
    %479 = arith.addf %465, %478 : vector<1x8xf32>
    %c5_184 = arith.constant 5 : index
    %c0_185 = arith.constant 0 : index
    %c0_186 = arith.constant 0 : index
    %480 = vector.load %arg31[%c5_184, %c0_185, %c0_186] : memref<8x16x16xf32, #tpu.memory_space<vmem>>, vector<1x16x16xf32>
    %481 = vector.shape_cast %480 : vector<1x16x16xf32> to vector<16x16xf32>
    %482 = arith.mulf %408, %481 : vector<16x16xf32>
    %cst_187 = arith.constant dense<0.000000e+00> : vector<16xf32>
    %483 = vector.multi_reduction <add>, %482, %cst_187 [1] : vector<16x16xf32> to vector<16xf32>
    %484 = vector.shape_cast %483 : vector<16xf32> to vector<16x1xf32>
    %cst_188 = arith.constant dense<0.000000e+00> : vector<1xf32>
    %485 = vector.multi_reduction <add>, %484, %cst_188 [0] : vector<16x1xf32> to vector<1xf32>
    %486 = vector.shape_cast %485 : vector<1xf32> to vector<1x1xf32>
    %c5_i32_189 = arith.constant 5 : i32
    %487 = vector.broadcast %c5_i32_189 : i32 to vector<1x8xi32>
    %488 = arith.cmpi eq, %241, %487 : vector<1x8xi32>
    %cst_190 = arith.constant 0.000000e+00 : f32
    %489 = vector.shape_cast %486 : vector<1x1xf32> to vector<1x1xf32>
    %490 = vector.broadcast %489 : vector<1x1xf32> to vector<1x8xf32>
    %491 = vector.broadcast %cst_190 : f32 to vector<1x8xf32>
    %492 = arith.select %488, %490, %491 : vector<1x8xi1>, vector<1x8xf32>
    %493 = arith.addf %479, %492 : vector<1x8xf32>
    %c6_191 = arith.constant 6 : index
    %c0_192 = arith.constant 0 : index
    %c0_193 = arith.constant 0 : index
    %494 = vector.load %arg31[%c6_191, %c0_192, %c0_193] : memref<8x16x16xf32, #tpu.memory_space<vmem>>, vector<1x16x16xf32>
    %495 = vector.shape_cast %494 : vector<1x16x16xf32> to vector<16x16xf32>
    %496 = arith.mulf %408, %495 : vector<16x16xf32>
    %cst_194 = arith.constant dense<0.000000e+00> : vector<16xf32>
    %497 = vector.multi_reduction <add>, %496, %cst_194 [1] : vector<16x16xf32> to vector<16xf32>
    %498 = vector.shape_cast %497 : vector<16xf32> to vector<16x1xf32>
    %cst_195 = arith.constant dense<0.000000e+00> : vector<1xf32>
    %499 = vector.multi_reduction <add>, %498, %cst_195 [0] : vector<16x1xf32> to vector<1xf32>
    %500 = vector.shape_cast %499 : vector<1xf32> to vector<1x1xf32>
    %c6_i32_196 = arith.constant 6 : i32
    %501 = vector.broadcast %c6_i32_196 : i32 to vector<1x8xi32>
    %502 = arith.cmpi eq, %241, %501 : vector<1x8xi32>
    %cst_197 = arith.constant 0.000000e+00 : f32
    %503 = vector.shape_cast %500 : vector<1x1xf32> to vector<1x1xf32>
    %504 = vector.broadcast %503 : vector<1x1xf32> to vector<1x8xf32>
    %505 = vector.broadcast %cst_197 : f32 to vector<1x8xf32>
    %506 = arith.select %502, %504, %505 : vector<1x8xi1>, vector<1x8xf32>
    %507 = arith.addf %493, %506 : vector<1x8xf32>
    %c7_198 = arith.constant 7 : index
    %c0_199 = arith.constant 0 : index
    %c0_200 = arith.constant 0 : index
    %508 = vector.load %arg31[%c7_198, %c0_199, %c0_200] : memref<8x16x16xf32, #tpu.memory_space<vmem>>, vector<1x16x16xf32>
    %509 = vector.shape_cast %508 : vector<1x16x16xf32> to vector<16x16xf32>
    %510 = arith.mulf %408, %509 : vector<16x16xf32>
    %cst_201 = arith.constant dense<0.000000e+00> : vector<16xf32>
    %511 = vector.multi_reduction <add>, %510, %cst_201 [1] : vector<16x16xf32> to vector<16xf32>
    %512 = vector.shape_cast %511 : vector<16xf32> to vector<16x1xf32>
    %cst_202 = arith.constant dense<0.000000e+00> : vector<1xf32>
    %513 = vector.multi_reduction <add>, %512, %cst_202 [0] : vector<16x1xf32> to vector<1xf32>
    %514 = vector.shape_cast %513 : vector<1xf32> to vector<1x1xf32>
    %c7_i32_203 = arith.constant 7 : i32
    %515 = vector.broadcast %c7_i32_203 : i32 to vector<1x8xi32>
    %516 = arith.cmpi eq, %241, %515 : vector<1x8xi32>
    %cst_204 = arith.constant 0.000000e+00 : f32
    %517 = vector.shape_cast %514 : vector<1x1xf32> to vector<1x1xf32>
    %518 = vector.broadcast %517 : vector<1x1xf32> to vector<1x8xf32>
    %519 = vector.broadcast %cst_204 : f32 to vector<1x8xf32>
    %520 = arith.select %516, %518, %519 : vector<1x8xi1>, vector<1x8xf32>
    %521 = arith.addf %507, %520 : vector<1x8xf32>
    %cst_205 = arith.constant dense<0xFF800000> : vector<1xf32>
    %522 = vector.multi_reduction <maximumf>, %521, %cst_205 [1] : vector<1x8xf32> to vector<1xf32>
    %523 = vector.shape_cast %522 : vector<1xf32> to vector<1x1xf32>
    %524 = vector.broadcast %523 : vector<1x1xf32> to vector<1x8xf32>
    %525 = arith.subf %521, %524 : vector<1x8xf32>
    %526 = math.exp %525 : vector<1x8xf32>
    %cst_206 = arith.constant dense<0.000000e+00> : vector<1xf32>
    %527 = vector.multi_reduction <add>, %526, %cst_206 [1] : vector<1x8xf32> to vector<1xf32>
    %528 = vector.shape_cast %527 : vector<1xf32> to vector<1x1xf32>
    %529 = tpu.reciprocal %528 {approx = true} : vector<1x1xf32> -> vector<1x1xf32>
    %530 = vector.broadcast %529 : vector<1x1xf32> to vector<1x8xf32>
    %531 = arith.mulf %526, %530 : vector<1x8xf32>
    %cst_207 = arith.constant 0.000000e+00 : f32
    %532 = vector.broadcast %cst_207 : f32 to vector<8x1xf32>
    %533 = tpu.concatenate %532, %88, %532 in 0 : vector<8x1xf32>, vector<16x1xf32>, vector<8x1xf32> -> vector<32x1xf32>
    %534 = vector.extract_strided_slice %533 {offsets = [3, 0], sizes = [16, 1], strides = [1, 1]} : vector<32x1xf32> to vector<16x1xf32>
    %535 = vector.extract_strided_slice %533 {offsets = [4, 0], sizes = [16, 1], strides = [1, 1]} : vector<32x1xf32> to vector<16x1xf32>
    %536 = vector.extract_strided_slice %533 {offsets = [5, 0], sizes = [16, 1], strides = [1, 1]} : vector<32x1xf32> to vector<16x1xf32>
    %537 = vector.extract_strided_slice %533 {offsets = [6, 0], sizes = [16, 1], strides = [1, 1]} : vector<32x1xf32> to vector<16x1xf32>
    %538 = vector.extract_strided_slice %533 {offsets = [7, 0], sizes = [16, 1], strides = [1, 1]} : vector<32x1xf32> to vector<16x1xf32>
    %539 = vector.extract_strided_slice %533 {offsets = [8, 0], sizes = [16, 1], strides = [1, 1]} : vector<32x1xf32> to vector<16x1xf32>
    %540 = vector.extract_strided_slice %533 {offsets = [9, 0], sizes = [16, 1], strides = [1, 1]} : vector<32x1xf32> to vector<16x1xf32>
    %541 = vector.extract_strided_slice %533 {offsets = [10, 0], sizes = [16, 1], strides = [1, 1]} : vector<32x1xf32> to vector<16x1xf32>
    %542 = vector.extract_strided_slice %533 {offsets = [11, 0], sizes = [16, 1], strides = [1, 1]} : vector<32x1xf32> to vector<16x1xf32>
    %543 = vector.extract_strided_slice %533 {offsets = [12, 0], sizes = [16, 1], strides = [1, 1]} : vector<32x1xf32> to vector<16x1xf32>
    %544 = vector.extract_strided_slice %533 {offsets = [13, 0], sizes = [16, 1], strides = [1, 1]} : vector<32x1xf32> to vector<16x1xf32>
    %545 = tpu.concatenate %534, %535, %536, %537, %538, %539, %540, %541, %542, %543, %544 in 1 : vector<16x1xf32>, vector<16x1xf32>, vector<16x1xf32>, vector<16x1xf32>, vector<16x1xf32>, vector<16x1xf32>, vector<16x1xf32>, vector<16x1xf32>, vector<16x1xf32>, vector<16x1xf32>, vector<16x1xf32> -> vector<16x11xf32>
    %546 = arith.truncf %545 : vector<16x11xf32> to vector<16x11xbf16>
    %c0_208 = arith.constant 0 : index
    %c0_209 = arith.constant 0 : index
    %547 = vector.load %arg33[%c0_208, %c0_209] : memref<11x16xbf16, #tpu.memory_space<vmem>>, vector<11x16xbf16>
    %cst_210 = arith.constant dense<0.000000e+00> : vector<16x16xf32>
    %548 = tpu.matmul %546, %547, %cst_210 {dimension_numbers = #tpu.dot_dimension_numbers<[1], [0], [0], [1], [0, 0, 1, 1], [], []>} : vector<16x11xbf16>, vector<11x16xbf16>, vector<16x16xf32> -> vector<16x16xf32>
    %c0_211 = arith.constant 0 : index
    %c0_212 = arith.constant 0 : index
    %549 = vector.load %arg34[%c0_211, %c0_212] : memref<1x16xf32, #tpu.memory_space<vmem>>, vector<1x16xf32>
    %550 = vector.broadcast %549 : vector<1x16xf32> to vector<16x16xf32>
    %551 = arith.addf %548, %550 : vector<16x16xf32>
    %cst_213 = arith.constant 0.000000e+00 : f32
    %552 = vector.broadcast %cst_213 : f32 to vector<16x16xf32>
    %553 = arith.maximumf %551, %552 : vector<16x16xf32>
    %c0_214 = arith.constant 0 : index
    %c0_215 = arith.constant 0 : index
    %554 = vector.load %arg36[%c0_214, %c0_215] : memref<1x8xf32, #tpu.memory_space<vmem>>, vector<1x8xf32>
    %c0_216 = arith.constant 0 : index
    %c0_217 = arith.constant 0 : index
    %c0_218 = arith.constant 0 : index
    %555 = vector.load %arg35[%c0_216, %c0_217, %c0_218] : memref<8x16x16xf32, #tpu.memory_space<vmem>>, vector<1x16x16xf32>
    %556 = vector.shape_cast %555 : vector<1x16x16xf32> to vector<16x16xf32>
    %557 = arith.mulf %553, %556 : vector<16x16xf32>
    %cst_219 = arith.constant dense<0.000000e+00> : vector<16xf32>
    %558 = vector.multi_reduction <add>, %557, %cst_219 [1] : vector<16x16xf32> to vector<16xf32>
    %559 = vector.shape_cast %558 : vector<16xf32> to vector<16x1xf32>
    %cst_220 = arith.constant dense<0.000000e+00> : vector<1xf32>
    %560 = vector.multi_reduction <add>, %559, %cst_220 [0] : vector<16x1xf32> to vector<1xf32>
    %561 = vector.shape_cast %560 : vector<1xf32> to vector<1x1xf32>
    %c0_i32_221 = arith.constant 0 : i32
    %562 = vector.broadcast %c0_i32_221 : i32 to vector<1x8xi32>
    %563 = arith.cmpi eq, %241, %562 : vector<1x8xi32>
    %cst_222 = arith.constant 0.000000e+00 : f32
    %564 = vector.shape_cast %561 : vector<1x1xf32> to vector<1x1xf32>
    %565 = vector.broadcast %564 : vector<1x1xf32> to vector<1x8xf32>
    %566 = vector.broadcast %cst_222 : f32 to vector<1x8xf32>
    %567 = arith.select %563, %565, %566 : vector<1x8xi1>, vector<1x8xf32>
    %568 = arith.addf %554, %567 : vector<1x8xf32>
    %c1_223 = arith.constant 1 : index
    %c0_224 = arith.constant 0 : index
    %c0_225 = arith.constant 0 : index
    %569 = vector.load %arg35[%c1_223, %c0_224, %c0_225] : memref<8x16x16xf32, #tpu.memory_space<vmem>>, vector<1x16x16xf32>
    %570 = vector.shape_cast %569 : vector<1x16x16xf32> to vector<16x16xf32>
    %571 = arith.mulf %553, %570 : vector<16x16xf32>
    %cst_226 = arith.constant dense<0.000000e+00> : vector<16xf32>
    %572 = vector.multi_reduction <add>, %571, %cst_226 [1] : vector<16x16xf32> to vector<16xf32>
    %573 = vector.shape_cast %572 : vector<16xf32> to vector<16x1xf32>
    %cst_227 = arith.constant dense<0.000000e+00> : vector<1xf32>
    %574 = vector.multi_reduction <add>, %573, %cst_227 [0] : vector<16x1xf32> to vector<1xf32>
    %575 = vector.shape_cast %574 : vector<1xf32> to vector<1x1xf32>
    %c1_i32_228 = arith.constant 1 : i32
    %576 = vector.broadcast %c1_i32_228 : i32 to vector<1x8xi32>
    %577 = arith.cmpi eq, %241, %576 : vector<1x8xi32>
    %cst_229 = arith.constant 0.000000e+00 : f32
    %578 = vector.shape_cast %575 : vector<1x1xf32> to vector<1x1xf32>
    %579 = vector.broadcast %578 : vector<1x1xf32> to vector<1x8xf32>
    %580 = vector.broadcast %cst_229 : f32 to vector<1x8xf32>
    %581 = arith.select %577, %579, %580 : vector<1x8xi1>, vector<1x8xf32>
    %582 = arith.addf %568, %581 : vector<1x8xf32>
    %c2_230 = arith.constant 2 : index
    %c0_231 = arith.constant 0 : index
    %c0_232 = arith.constant 0 : index
    %583 = vector.load %arg35[%c2_230, %c0_231, %c0_232] : memref<8x16x16xf32, #tpu.memory_space<vmem>>, vector<1x16x16xf32>
    %584 = vector.shape_cast %583 : vector<1x16x16xf32> to vector<16x16xf32>
    %585 = arith.mulf %553, %584 : vector<16x16xf32>
    %cst_233 = arith.constant dense<0.000000e+00> : vector<16xf32>
    %586 = vector.multi_reduction <add>, %585, %cst_233 [1] : vector<16x16xf32> to vector<16xf32>
    %587 = vector.shape_cast %586 : vector<16xf32> to vector<16x1xf32>
    %cst_234 = arith.constant dense<0.000000e+00> : vector<1xf32>
    %588 = vector.multi_reduction <add>, %587, %cst_234 [0] : vector<16x1xf32> to vector<1xf32>
    %589 = vector.shape_cast %588 : vector<1xf32> to vector<1x1xf32>
    %c2_i32_235 = arith.constant 2 : i32
    %590 = vector.broadcast %c2_i32_235 : i32 to vector<1x8xi32>
    %591 = arith.cmpi eq, %241, %590 : vector<1x8xi32>
    %cst_236 = arith.constant 0.000000e+00 : f32
    %592 = vector.shape_cast %589 : vector<1x1xf32> to vector<1x1xf32>
    %593 = vector.broadcast %592 : vector<1x1xf32> to vector<1x8xf32>
    %594 = vector.broadcast %cst_236 : f32 to vector<1x8xf32>
    %595 = arith.select %591, %593, %594 : vector<1x8xi1>, vector<1x8xf32>
    %596 = arith.addf %582, %595 : vector<1x8xf32>
    %c3_237 = arith.constant 3 : index
    %c0_238 = arith.constant 0 : index
    %c0_239 = arith.constant 0 : index
    %597 = vector.load %arg35[%c3_237, %c0_238, %c0_239] : memref<8x16x16xf32, #tpu.memory_space<vmem>>, vector<1x16x16xf32>
    %598 = vector.shape_cast %597 : vector<1x16x16xf32> to vector<16x16xf32>
    %599 = arith.mulf %553, %598 : vector<16x16xf32>
    %cst_240 = arith.constant dense<0.000000e+00> : vector<16xf32>
    %600 = vector.multi_reduction <add>, %599, %cst_240 [1] : vector<16x16xf32> to vector<16xf32>
    %601 = vector.shape_cast %600 : vector<16xf32> to vector<16x1xf32>
    %cst_241 = arith.constant dense<0.000000e+00> : vector<1xf32>
    %602 = vector.multi_reduction <add>, %601, %cst_241 [0] : vector<16x1xf32> to vector<1xf32>
    %603 = vector.shape_cast %602 : vector<1xf32> to vector<1x1xf32>
    %c3_i32_242 = arith.constant 3 : i32
    %604 = vector.broadcast %c3_i32_242 : i32 to vector<1x8xi32>
    %605 = arith.cmpi eq, %241, %604 : vector<1x8xi32>
    %cst_243 = arith.constant 0.000000e+00 : f32
    %606 = vector.shape_cast %603 : vector<1x1xf32> to vector<1x1xf32>
    %607 = vector.broadcast %606 : vector<1x1xf32> to vector<1x8xf32>
    %608 = vector.broadcast %cst_243 : f32 to vector<1x8xf32>
    %609 = arith.select %605, %607, %608 : vector<1x8xi1>, vector<1x8xf32>
    %610 = arith.addf %596, %609 : vector<1x8xf32>
    %c4_244 = arith.constant 4 : index
    %c0_245 = arith.constant 0 : index
    %c0_246 = arith.constant 0 : index
    %611 = vector.load %arg35[%c4_244, %c0_245, %c0_246] : memref<8x16x16xf32, #tpu.memory_space<vmem>>, vector<1x16x16xf32>
    %612 = vector.shape_cast %611 : vector<1x16x16xf32> to vector<16x16xf32>
    %613 = arith.mulf %553, %612 : vector<16x16xf32>
    %cst_247 = arith.constant dense<0.000000e+00> : vector<16xf32>
    %614 = vector.multi_reduction <add>, %613, %cst_247 [1] : vector<16x16xf32> to vector<16xf32>
    %615 = vector.shape_cast %614 : vector<16xf32> to vector<16x1xf32>
    %cst_248 = arith.constant dense<0.000000e+00> : vector<1xf32>
    %616 = vector.multi_reduction <add>, %615, %cst_248 [0] : vector<16x1xf32> to vector<1xf32>
    %617 = vector.shape_cast %616 : vector<1xf32> to vector<1x1xf32>
    %c4_i32_249 = arith.constant 4 : i32
    %618 = vector.broadcast %c4_i32_249 : i32 to vector<1x8xi32>
    %619 = arith.cmpi eq, %241, %618 : vector<1x8xi32>
    %cst_250 = arith.constant 0.000000e+00 : f32
    %620 = vector.shape_cast %617 : vector<1x1xf32> to vector<1x1xf32>
    %621 = vector.broadcast %620 : vector<1x1xf32> to vector<1x8xf32>
    %622 = vector.broadcast %cst_250 : f32 to vector<1x8xf32>
    %623 = arith.select %619, %621, %622 : vector<1x8xi1>, vector<1x8xf32>
    %624 = arith.addf %610, %623 : vector<1x8xf32>
    %c5_251 = arith.constant 5 : index
    %c0_252 = arith.constant 0 : index
    %c0_253 = arith.constant 0 : index
    %625 = vector.load %arg35[%c5_251, %c0_252, %c0_253] : memref<8x16x16xf32, #tpu.memory_space<vmem>>, vector<1x16x16xf32>
    %626 = vector.shape_cast %625 : vector<1x16x16xf32> to vector<16x16xf32>
    %627 = arith.mulf %553, %626 : vector<16x16xf32>
    %cst_254 = arith.constant dense<0.000000e+00> : vector<16xf32>
    %628 = vector.multi_reduction <add>, %627, %cst_254 [1] : vector<16x16xf32> to vector<16xf32>
    %629 = vector.shape_cast %628 : vector<16xf32> to vector<16x1xf32>
    %cst_255 = arith.constant dense<0.000000e+00> : vector<1xf32>
    %630 = vector.multi_reduction <add>, %629, %cst_255 [0] : vector<16x1xf32> to vector<1xf32>
    %631 = vector.shape_cast %630 : vector<1xf32> to vector<1x1xf32>
    %c5_i32_256 = arith.constant 5 : i32
    %632 = vector.broadcast %c5_i32_256 : i32 to vector<1x8xi32>
    %633 = arith.cmpi eq, %241, %632 : vector<1x8xi32>
    %cst_257 = arith.constant 0.000000e+00 : f32
    %634 = vector.shape_cast %631 : vector<1x1xf32> to vector<1x1xf32>
    %635 = vector.broadcast %634 : vector<1x1xf32> to vector<1x8xf32>
    %636 = vector.broadcast %cst_257 : f32 to vector<1x8xf32>
    %637 = arith.select %633, %635, %636 : vector<1x8xi1>, vector<1x8xf32>
    %638 = arith.addf %624, %637 : vector<1x8xf32>
    %c6_258 = arith.constant 6 : index
    %c0_259 = arith.constant 0 : index
    %c0_260 = arith.constant 0 : index
    %639 = vector.load %arg35[%c6_258, %c0_259, %c0_260] : memref<8x16x16xf32, #tpu.memory_space<vmem>>, vector<1x16x16xf32>
    %640 = vector.shape_cast %639 : vector<1x16x16xf32> to vector<16x16xf32>
    %641 = arith.mulf %553, %640 : vector<16x16xf32>
    %cst_261 = arith.constant dense<0.000000e+00> : vector<16xf32>
    %642 = vector.multi_reduction <add>, %641, %cst_261 [1] : vector<16x16xf32> to vector<16xf32>
    %643 = vector.shape_cast %642 : vector<16xf32> to vector<16x1xf32>
    %cst_262 = arith.constant dense<0.000000e+00> : vector<1xf32>
    %644 = vector.multi_reduction <add>, %643, %cst_262 [0] : vector<16x1xf32> to vector<1xf32>
    %645 = vector.shape_cast %644 : vector<1xf32> to vector<1x1xf32>
    %c6_i32_263 = arith.constant 6 : i32
    %646 = vector.broadcast %c6_i32_263 : i32 to vector<1x8xi32>
    %647 = arith.cmpi eq, %241, %646 : vector<1x8xi32>
    %cst_264 = arith.constant 0.000000e+00 : f32
    %648 = vector.shape_cast %645 : vector<1x1xf32> to vector<1x1xf32>
    %649 = vector.broadcast %648 : vector<1x1xf32> to vector<1x8xf32>
    %650 = vector.broadcast %cst_264 : f32 to vector<1x8xf32>
    %651 = arith.select %647, %649, %650 : vector<1x8xi1>, vector<1x8xf32>
    %652 = arith.addf %638, %651 : vector<1x8xf32>
    %c7_265 = arith.constant 7 : index
    %c0_266 = arith.constant 0 : index
    %c0_267 = arith.constant 0 : index
    %653 = vector.load %arg35[%c7_265, %c0_266, %c0_267] : memref<8x16x16xf32, #tpu.memory_space<vmem>>, vector<1x16x16xf32>
    %654 = vector.shape_cast %653 : vector<1x16x16xf32> to vector<16x16xf32>
    %655 = arith.mulf %553, %654 : vector<16x16xf32>
    %cst_268 = arith.constant dense<0.000000e+00> : vector<16xf32>
    %656 = vector.multi_reduction <add>, %655, %cst_268 [1] : vector<16x16xf32> to vector<16xf32>
    %657 = vector.shape_cast %656 : vector<16xf32> to vector<16x1xf32>
    %cst_269 = arith.constant dense<0.000000e+00> : vector<1xf32>
    %658 = vector.multi_reduction <add>, %657, %cst_269 [0] : vector<16x1xf32> to vector<1xf32>
    %659 = vector.shape_cast %658 : vector<1xf32> to vector<1x1xf32>
    %c7_i32_270 = arith.constant 7 : i32
    %660 = vector.broadcast %c7_i32_270 : i32 to vector<1x8xi32>
    %661 = arith.cmpi eq, %241, %660 : vector<1x8xi32>
    %cst_271 = arith.constant 0.000000e+00 : f32
    %662 = vector.shape_cast %659 : vector<1x1xf32> to vector<1x1xf32>
    %663 = vector.broadcast %662 : vector<1x1xf32> to vector<1x8xf32>
    %664 = vector.broadcast %cst_271 : f32 to vector<1x8xf32>
    %665 = arith.select %661, %663, %664 : vector<1x8xi1>, vector<1x8xf32>
    %666 = arith.addf %652, %665 : vector<1x8xf32>
    %cst_272 = arith.constant dense<0xFF800000> : vector<1xf32>
    %667 = vector.multi_reduction <maximumf>, %666, %cst_272 [1] : vector<1x8xf32> to vector<1xf32>
    %668 = vector.shape_cast %667 : vector<1xf32> to vector<1x1xf32>
    %669 = vector.broadcast %668 : vector<1x1xf32> to vector<1x8xf32>
    %670 = arith.subf %666, %669 : vector<1x8xf32>
    %671 = math.exp %670 : vector<1x8xf32>
    %cst_273 = arith.constant dense<0.000000e+00> : vector<1xf32>
    %672 = vector.multi_reduction <add>, %671, %cst_273 [1] : vector<1x8xf32> to vector<1xf32>
    %673 = vector.shape_cast %672 : vector<1xf32> to vector<1x1xf32>
    %674 = tpu.reciprocal %673 {approx = true} : vector<1x1xf32> -> vector<1x1xf32>
    %675 = vector.broadcast %674 : vector<1x1xf32> to vector<1x8xf32>
    %676 = arith.mulf %671, %675 : vector<1x8xf32>
    %677 = tpu.concatenate %386, %531, %676, %240 in 0 : vector<1x8xf32>, vector<1x8xf32>, vector<1x8xf32>, vector<1x8xf32> -> vector<4x8xf32>
    %c0_274 = arith.constant 0 : index
    %c0_275 = arith.constant 0 : index
    %c0_276 = arith.constant 0 : index
    %678 = vector.load %arg37[%c0_274, %c0_275, %c0_276] : memref<1x4x8xf32, #tpu.memory_space<vmem>>, vector<1x4x8xf32>
    %679 = vector.shape_cast %678 : vector<1x4x8xf32> to vector<4x8xf32>
    %680 = vector.shape_cast %677 : vector<4x8xf32> to vector<1x4x8xf32>
    tpu.vector_store %arg37[%c0_274, %c0_275, %c0_276], %680 {strides = array<i32>} : memref<1x4x8xf32, #tpu.memory_space<vmem>>, vector<1x4x8xf32>,
    return
  }
  func.func @transform_0(%arg0: i32) -> (i32, i32, i32) {
    %c0_i32 = arith.constant 0 : i32
    %c0_i32_0 = arith.constant 0 : i32
    %c0_i32_1 = arith.constant 0 : i32
    return %arg0, %c0_i32, %c0_i32_0 : i32, i32, i32
  }
  func.func @transform_1(%arg0: i32) -> (i32, i32, i32) {
    %c0_i32 = arith.constant 0 : i32
    %c0_i32_0 = arith.constant 0 : i32
    %c0_i32_1 = arith.constant 0 : i32
    return %arg0, %c0_i32, %c0_i32_0 : i32, i32, i32
  }
  func.func @transform_2(%arg0: i32) -> (i32, i32, i32) {
    %c0_i32 = arith.constant 0 : i32
    %c0_i32_0 = arith.constant 0 : i32
    %c0_i32_1 = arith.constant 0 : i32
    return %arg0, %c0_i32, %c0_i32_0 : i32, i32, i32
  }
  func.func @transform_3(%arg0: i32) -> (i32, i32, i32) {
    %c0_i32 = arith.constant 0 : i32
    %c0_i32_0 = arith.constant 0 : i32
    %c0_i32_1 = arith.constant 0 : i32
    return %arg0, %c0_i32, %c0_i32_0 : i32, i32, i32
  }
  func.func @transform_4(%arg0: i32) -> (i32, i32) {
    %c0_i32 = arith.constant 0 : i32
    %c0_i32_0 = arith.constant 0 : i32
    %c0_i32_1 = arith.constant 0 : i32
    return %c0_i32, %c0_i32_0 : i32, i32
  }
  func.func @transform_5(%arg0: i32) -> (i32, i32) {
    %c0_i32 = arith.constant 0 : i32
    %c0_i32_0 = arith.constant 0 : i32
    %c0_i32_1 = arith.constant 0 : i32
    return %c0_i32, %c0_i32_0 : i32, i32
  }
  func.func @transform_6(%arg0: i32) -> (i32, i32) {
    %c0_i32 = arith.constant 0 : i32
    %c0_i32_0 = arith.constant 0 : i32
    %c0_i32_1 = arith.constant 0 : i32
    return %c0_i32, %c0_i32_0 : i32, i32
  }
  func.func @transform_7(%arg0: i32) -> (i32, i32) {
    %c0_i32 = arith.constant 0 : i32
    %c0_i32_0 = arith.constant 0 : i32
    %c0_i32_1 = arith.constant 0 : i32
    return %c0_i32, %c0_i32_0 : i32, i32
  }
  func.func @transform_8(%arg0: i32) -> (i32, i32) {
    %c0_i32 = arith.constant 0 : i32
    %c0_i32_0 = arith.constant 0 : i32
    %c0_i32_1 = arith.constant 0 : i32
    return %c0_i32, %c0_i32_0 : i32, i32
  }
  func.func @transform_9(%arg0: i32) -> (i32, i32) {
    %c0_i32 = arith.constant 0 : i32
    %c0_i32_0 = arith.constant 0 : i32
    %c0_i32_1 = arith.constant 0 : i32
    return %c0_i32, %c0_i32_0 : i32, i32
  }
  func.func @transform_10(%arg0: i32) -> (i32, i32) {
    %c0_i32 = arith.constant 0 : i32
    %c0_i32_0 = arith.constant 0 : i32
    %c0_i32_1 = arith.constant 0 : i32
    return %c0_i32, %c0_i32_0 : i32, i32
  }
  func.func @transform_11(%arg0: i32) -> (i32, i32) {
    %c0_i32 = arith.constant 0 : i32
    %c0_i32_0 = arith.constant 0 : i32
    %c0_i32_1 = arith.constant 0 : i32
    return %c0_i32, %c0_i32_0 : i32, i32
  }
  func.func @transform_12(%arg0: i32) -> (i32, i32) {
    %c0_i32 = arith.constant 0 : i32
    %c0_i32_0 = arith.constant 0 : i32
    %c0_i32_1 = arith.constant 0 : i32
    return %c0_i32, %c0_i32_0 : i32, i32
  }
  func.func @transform_13(%arg0: i32) -> (i32, i32) {
    %c0_i32 = arith.constant 0 : i32
    %c0_i32_0 = arith.constant 0 : i32
    %c0_i32_1 = arith.constant 0 : i32
    return %c0_i32, %c0_i32_0 : i32, i32
  }
  func.func @transform_14(%arg0: i32) -> (i32, i32) {
    %c0_i32 = arith.constant 0 : i32
    %c0_i32_0 = arith.constant 0 : i32
    %c0_i32_1 = arith.constant 0 : i32
    return %c0_i32, %c0_i32_0 : i32, i32
  }
  func.func @transform_15(%arg0: i32) -> (i32, i32) {
    %c0_i32 = arith.constant 0 : i32
    %c0_i32_0 = arith.constant 0 : i32
    %c0_i32_1 = arith.constant 0 : i32
    return %c0_i32, %c0_i32_0 : i32, i32
  }
  func.func @transform_16(%arg0: i32) -> (i32, i32) {
    %c0_i32 = arith.constant 0 : i32
    %c0_i32_0 = arith.constant 0 : i32
    %c0_i32_1 = arith.constant 0 : i32
    return %c0_i32, %c0_i32_0 : i32, i32
  }
  func.func @transform_17(%arg0: i32) -> (i32, i32) {
    %c0_i32 = arith.constant 0 : i32
    %c0_i32_0 = arith.constant 0 : i32
    %c0_i32_1 = arith.constant 0 : i32
    return %c0_i32, %c0_i32_0 : i32, i32
  }
  func.func @transform_18(%arg0: i32) -> (i32, i32) {
    %c0_i32 = arith.constant 0 : i32
    %c0_i32_0 = arith.constant 0 : i32
    %c0_i32_1 = arith.constant 0 : i32
    return %c0_i32, %c0_i32_0 : i32, i32
  }
  func.func @transform_19(%arg0: i32) -> (i32, i32) {
    %c0_i32 = arith.constant 0 : i32
    %c0_i32_0 = arith.constant 0 : i32
    %c0_i32_1 = arith.constant 0 : i32
    return %c0_i32, %c0_i32_0 : i32, i32
  }
  func.func @transform_20(%arg0: i32) -> (i32, i32) {
    %c0_i32 = arith.constant 0 : i32
    %c0_i32_0 = arith.constant 0 : i32
    %c0_i32_1 = arith.constant 0 : i32
    return %c0_i32, %c0_i32_0 : i32, i32
  }
  func.func @transform_21(%arg0: i32) -> (i32, i32) {
    %c0_i32 = arith.constant 0 : i32
    %c0_i32_0 = arith.constant 0 : i32
    %c0_i32_1 = arith.constant 0 : i32
    return %c0_i32, %c0_i32_0 : i32, i32
  }
  func.func @transform_22(%arg0: i32) -> (i32, i32) {
    %c0_i32 = arith.constant 0 : i32
    %c0_i32_0 = arith.constant 0 : i32
    %c0_i32_1 = arith.constant 0 : i32
    return %c0_i32, %c0_i32_0 : i32, i32
  }
  func.func @transform_23(%arg0: i32) -> (i32, i32) {
    %c0_i32 = arith.constant 0 : i32
    %c0_i32_0 = arith.constant 0 : i32
    %c0_i32_1 = arith.constant 0 : i32
    return %c0_i32, %c0_i32_0 : i32, i32
  }
  func.func @transform_24(%arg0: i32) -> (i32, i32) {
    %c0_i32 = arith.constant 0 : i32
    %c0_i32_0 = arith.constant 0 : i32
    %c0_i32_1 = arith.constant 0 : i32
    return %c0_i32, %c0_i32_0 : i32, i32
  }
  func.func @transform_25(%arg0: i32) -> (i32, i32) {
    %c0_i32 = arith.constant 0 : i32
    %c0_i32_0 = arith.constant 0 : i32
    %c0_i32_1 = arith.constant 0 : i32
    return %c0_i32, %c0_i32_0 : i32, i32
  }
  func.func @transform_26(%arg0: i32) -> (i32, i32, i32) {
    %c0_i32 = arith.constant 0 : i32
    %c0_i32_0 = arith.constant 0 : i32
    %c0_i32_1 = arith.constant 0 : i32
    %c0_i32_2 = arith.constant 0 : i32
    return %c0_i32, %c0_i32_0, %c0_i32_1 : i32, i32, i32
  }
  func.func @transform_27(%arg0: i32) -> (i32, i32) {
    %c0_i32 = arith.constant 0 : i32
    %c0_i32_0 = arith.constant 0 : i32
    %c0_i32_1 = arith.constant 0 : i32
    return %c0_i32, %c0_i32_0 : i32, i32
  }
  func.func @transform_28(%arg0: i32) -> (i32, i32) {
    %c0_i32 = arith.constant 0 : i32
    %c0_i32_0 = arith.constant 0 : i32
    %c0_i32_1 = arith.constant 0 : i32
    return %c0_i32, %c0_i32_0 : i32, i32
  }
  func.func @transform_29(%arg0: i32) -> (i32, i32) {
    %c0_i32 = arith.constant 0 : i32
    %c0_i32_0 = arith.constant 0 : i32
    %c0_i32_1 = arith.constant 0 : i32
    return %c0_i32, %c0_i32_0 : i32, i32
  }
  func.func @transform_30(%arg0: i32) -> (i32, i32, i32) {
    %c0_i32 = arith.constant 0 : i32
    %c0_i32_0 = arith.constant 0 : i32
    %c0_i32_1 = arith.constant 0 : i32
    %c0_i32_2 = arith.constant 0 : i32
    return %c0_i32, %c0_i32_0, %c0_i32_1 : i32, i32, i32
  }
  func.func @transform_31(%arg0: i32) -> (i32, i32) {
    %c0_i32 = arith.constant 0 : i32
    %c0_i32_0 = arith.constant 0 : i32
    %c0_i32_1 = arith.constant 0 : i32
    return %c0_i32, %c0_i32_0 : i32, i32
  }
  func.func @transform_32(%arg0: i32) -> (i32, i32) {
    %c0_i32 = arith.constant 0 : i32
    %c0_i32_0 = arith.constant 0 : i32
    %c0_i32_1 = arith.constant 0 : i32
    return %c0_i32, %c0_i32_0 : i32, i32
  }
  func.func @transform_33(%arg0: i32) -> (i32, i32) {
    %c0_i32 = arith.constant 0 : i32
    %c0_i32_0 = arith.constant 0 : i32
    %c0_i32_1 = arith.constant 0 : i32
    return %c0_i32, %c0_i32_0 : i32, i32
  }
  func.func @transform_34(%arg0: i32) -> (i32, i32, i32) {
    %c0_i32 = arith.constant 0 : i32
    %c0_i32_0 = arith.constant 0 : i32
    %c0_i32_1 = arith.constant 0 : i32
    %c0_i32_2 = arith.constant 0 : i32
    return %c0_i32, %c0_i32_0, %c0_i32_1 : i32, i32, i32
  }
  func.func @transform_35(%arg0: i32) -> (i32, i32) {
    %c0_i32 = arith.constant 0 : i32
    %c0_i32_0 = arith.constant 0 : i32
    %c0_i32_1 = arith.constant 0 : i32
    return %c0_i32, %c0_i32_0 : i32, i32
  }
  func.func @transform_36(%arg0: i32) -> (i32, i32, i32) {
    %c0_i32 = arith.constant 0 : i32
    %c0_i32_0 = arith.constant 0 : i32
    %c0_i32_1 = arith.constant 0 : i32
    return %arg0, %c0_i32, %c0_i32_0 : i32, i32, i32
  }
}

</mosaic_0001>

<llo_original>
// kernel: tpu_custom_call.1
$region0: #{tpu_custom_call.1}
  #allocation0 [shape = 'u32[]', space=smem, size = 0x4, offset = 0x4, fixed_abs, tag = 'smem constant byte address 0x4 - core index']
  #allocation1 [shape = 'u32[72,128]{1,0:T(1,128)}', space=vmem, size = 0x9000, scoped, tag = 'internal scratch']
  #allocation2 [shape = 'f32[1,1]{1,0:T(1,128)S(1)}', space=vmem, size = 0x200, scoped, tag = 'scoped memory for tpu_custom_call.1']
  #allocation3 [shape = 'f32[1,1]{1,0:T(1,128)S(1)}', space=vmem, size = 0x200, scoped, tag = 'scoped memory for tpu_custom_call.1']
  #allocation4 [shape = 'f32[1,1]{1,0:T(1,128)S(1)}', space=vmem, size = 0x200, scoped, tag = 'scoped memory for tpu_custom_call.1']
  %s0 = inlined_call_operand.smem [shape: u32[37], index: -1, kind: input, shape index: {}]
  %s1 = sld [smem:[%s0]]
  %s2 = scalar_lea.smem %s0, 1
  %s3 = sld [smem:[%s2]]
  %s4 = scalar_lea.smem %s0, 2
  %s5 = sld [smem:[%s4]]
  %s6 = scalar_lea.smem %s0, 3
  %s7 = sld [smem:[%s6]]
  %s8 = scalar_lea.smem %s0, 4
  %s9 = sld [smem:[%s8]]
  %s10 = scalar_lea.smem %s0, 5
  %s11 = sld [smem:[%s10]]
  %s12 = scalar_lea.smem %s0, 6
  %s13 = sld [smem:[%s12]]
  %s14 = scalar_lea.smem %s0, 7
  %s15 = sld [smem:[%s14]]
  %s16 = scalar_lea.smem %s0, 8
  %s17 = sld [smem:[%s16]]
  %s18 = scalar_lea.smem %s0, 9
  %s19 = sld [smem:[%s18]]
  %s20 = scalar_lea.smem %s0, 10
  %s21 = sld [smem:[%s20]]
  %s22 = scalar_lea.smem %s0, 11
  %s23 = sld [smem:[%s22]]
  %s24 = scalar_lea.smem %s0, 12
  %s25 = sld [smem:[%s24]]
  %s26 = scalar_lea.smem %s0, 13
  %s27 = sld [smem:[%s26]]
  %s28 = scalar_lea.smem %s0, 14
  %s29 = sld [smem:[%s28]]
  %s30 = scalar_lea.smem %s0, 15
  %s31 = sld [smem:[%s30]]
  %s32 = scalar_lea.smem %s0, 16
  %s33 = sld [smem:[%s32]]
  %s34 = scalar_lea.smem %s0, 17
  %s35 = sld [smem:[%s34]]
  %s36 = scalar_lea.smem %s0, 18
  %s37 = sld [smem:[%s36]]
  %s38 = scalar_lea.smem %s0, 19
  %s39 = sld [smem:[%s38]]
  %s40 = scalar_lea.smem %s0, 20
  %s41 = sld [smem:[%s40]]
  %s42 = scalar_lea.smem %s0, 21
  %s43 = sld [smem:[%s42]]
  %s44 = scalar_lea.smem %s0, 22
  %s45 = sld [smem:[%s44]]
  %s46 = scalar_lea.smem %s0, 23
  %s47 = sld [smem:[%s46]]
  %s48 = scalar_lea.smem %s0, 24
  %s49 = sld [smem:[%s48]]
  %s50 = scalar_lea.smem %s0, 25
  %s51 = sld [smem:[%s50]]
  %s52 = scalar_lea.smem %s0, 26
  %s53 = sld [smem:[%s52]]
  %s54 = scalar_lea.smem %s0, 27
  %s55 = sld [smem:[%s54]]
  %s56 = scalar_lea.smem %s0, 28
  %s57 = sld [smem:[%s56]]
  %s58 = scalar_lea.smem %s0, 29
  %s59 = sld [smem:[%s58]]
  %s60 = scalar_lea.smem %s0, 30
  %s61 = sld [smem:[%s60]]
  %s62 = scalar_lea.smem %s0, 31
  %s63 = sld [smem:[%s62]]
  %s64 = scalar_lea.smem %s0, 32
  %s65 = sld [smem:[%s64]]
  %s66 = scalar_lea.smem %s0, 33
  %s67 = sld [smem:[%s66]]
  %s68 = scalar_lea.smem %s0, 34
  %s69 = sld [smem:[%s68]]
  %s70 = scalar_lea.smem %s0, 35
  %s71 = sld [smem:[%s70]]
  %s72 = scalar_lea.smem %s0, 36
  %s73 = sld [smem:[%s72]]
  %s74 = sld [smem:[#allocation0]]
  $region185: #{tpu_custom_call.1} parent=0
    _
  %s76 = ssub.s32 1, %s74
  %s77 = scalar_select 0, %s76, %s74
  %v78 = vstv %s11
  %79 = vst [vmem:[#allocation2] sm:$0x1] %v78
  %v80 = vstv %s15
  %81 = vst [vmem:[#allocation3] sm:$0x1] %v80
  %v82 = vstv %s19
  %83 = vst [vmem:[#allocation4] sm:$0x1] %v82
  $region1: #{tpu_custom_call.1} parent=0
    #allocation5 [shape = 'u8[327680]{0}', space=vmem, size = 0x50000, scoped, tag = 'input window, operand 18, single buffered']
    #allocation6 [shape = 's32[2]{0}', space=sflag, size = 0x8, scoped, tag = 'scoped memory for tpu_custom_call.1']
    #allocation7 [shape = 's32[2]{0}', space=sflag, size = 0x8, scoped, tag = 'scoped memory for tpu_custom_call.1']
    #allocation8 [shape = 'u8[196608]{0}', space=vmem, size = 0x30000, scoped, tag = 'input window, operand 20, single buffered']
    #allocation9 [shape = 's32[1]{0}', space=sflag, size = 0x4, scoped, tag = 'scoped memory for tpu_custom_call.1']
    #allocation10 [shape = 'u8[4096]{0}', space=vmem, size = 0x1000, scoped, tag = 'output window, operand 0']
    %84 = vsyncpa [#allocation6], 0
    %85 = vsyncpa [#allocation9], 0
    %86 = vsyncpa [#allocation7], 0
    %s87 = scalar_lea.sflag [#allocation7], 1
    %88 = vsyncpa %s87, 0
    loop: start=0, step=1, limit=4
    $region2: #{tpu_custom_call.1} parent=1 // loop_pre_header
      _
    $region3: #{tpu_custom_call.1} parent=1 // loop_header
      %s90 = sphi 0, %s94
      %p91 = scmp.ge.s32.totalorder %s90, 4
      %s100 = sphi 0, %s102
      %s103 = sphi 0, %s100
      %s104 = sphi 0, %s103
      %s120 = sphi 0, %s104
      %s126 = sphi 0, %s128
      %s129 = sphi 0, %s126
      %s130 = sphi 0, %s129
      %s146 = sphi 0, %s130
      %s152 = sphi 0, %s154
      %s155 = sphi 0, %s152
      %s156 = sphi 0, %s155
      %s172 = sphi 0, %s156
      %s178 = sphi 0, %s180
      %s181 = sphi 0, %s178
      %s182 = sphi 0, %s181
      %s198 = sphi 0, %s182
      %s202 = sphi 0, %s202
      %s204 = sphi 0, %s202
      %s205 = sphi 0, %s204
      %s219 = sphi 0, %s205
      %s223 = sphi 0, %s223
      %s225 = sphi 0, %s223
      %s226 = sphi 0, %s225
      %s240 = sphi 0, %s226
      %s244 = sphi 0, %s244
      %s246 = sphi 0, %s244
      %s247 = sphi 0, %s246
      %s261 = sphi 0, %s247
      %s265 = sphi 0, %s265
      %s267 = sphi 0, %s265
      %s268 = sphi 0, %s267
      %s282 = sphi 0, %s268
      %s286 = sphi 0, %s286
      %s288 = sphi 0, %s286
      %s289 = sphi 0, %s288
      %s303 = sphi 0, %s289
      %s307 = sphi 0, %s307
      %s309 = sphi 0, %s307
      %s310 = sphi 0, %s309
      %s324 = sphi 0, %s310
      %s328 = sphi 0, %s328
      %s330 = sphi 0, %s328
      %s331 = sphi 0, %s330
      %s345 = sphi 0, %s331
      %s349 = sphi 0, %s349
      %s351 = sphi 0, %s349
      %s352 = sphi 0, %s351
      %s366 = sphi 0, %s352
      %s370 = sphi 0, %s370
      %s372 = sphi 0, %s370
      %s373 = sphi 0, %s372
      %s387 = sphi 0, %s373
      %s391 = sphi 0, %s391
      %s393 = sphi 0, %s391
      %s394 = sphi 0, %s393
      %s408 = sphi 0, %s394
      %s412 = sphi 0, %s412
      %s414 = sphi 0, %s412
      %s415 = sphi 0, %s414
      %s429 = sphi 0, %s415
      %s433 = sphi 0, %s433
      %s435 = sphi 0, %s433
      %s436 = sphi 0, %s435
      %s450 = sphi 0, %s436
      %s454 = sphi 0, %s454
      %s456 = sphi 0, %s454
      %s457 = sphi 0, %s456
      %s471 = sphi 0, %s457
      %s475 = sphi 0, %s475
      %s477 = sphi 0, %s475
      %s478 = sphi 0, %s477
      %s492 = sphi 0, %s478
      %s496 = sphi 0, %s496
      %s498 = sphi 0, %s496
      %s499 = sphi 0, %s498
      %s513 = sphi 0, %s499
      %s517 = sphi 0, %s517
      %s519 = sphi 0, %s517
      %s520 = sphi 0, %s519
      %s534 = sphi 0, %s520
      %s538 = sphi 0, %s538
      %s540 = sphi 0, %s538
      %s541 = sphi 0, %s540
      %s555 = sphi 0, %s541
      %s559 = sphi 0, %s559
      %s561 = sphi 0, %s559
      %s562 = sphi 0, %s561
      %s576 = sphi 0, %s562
      %s580 = sphi 0, %s580
      %s582 = sphi 0, %s580
      %s583 = sphi 0, %s582
      %s597 = sphi 0, %s583
      %s601 = sphi 0, %s601
      %s603 = sphi 0, %s601
      %s604 = sphi 0, %s603
      %s618 = sphi 0, %s604
      %s622 = sphi 0, %s622
      %s624 = sphi 0, %s622
      %s625 = sphi 0, %s624
      %s639 = sphi 0, %s625
      %s643 = sphi 0, %s643
      %s645 = sphi 0, %s643
      %s646 = sphi 0, %s645
      %s660 = sphi 0, %s646
      %s664 = sphi 0, %s664
      %s666 = sphi 0, %s664
      %s667 = sphi 0, %s666
      %s681 = sphi 0, %s667
      %s685 = sphi 0, %s685
      %s687 = sphi 0, %s685
      %s688 = sphi 0, %s687
      %s702 = sphi 0, %s688
      %s706 = sphi 0, %s706
      %s708 = sphi 0, %s706
      %s709 = sphi 0, %s708
      %s723 = sphi 0, %s709
      %s727 = sphi 0, %s727
      %s729 = sphi 0, %s727
      %s730 = sphi 0, %s729
      %s744 = sphi 0, %s730
      %s748 = sphi 0, %s748
      %s750 = sphi 0, %s748
      %s751 = sphi 0, %s750
      %s765 = sphi 0, %s751
      %s769 = sphi 0, %s769
      %s771 = sphi 0, %s769
      %s772 = sphi 0, %s771
      %s786 = sphi 0, %s772
      %s790 = sphi 0, %s790
      %s792 = sphi 0, %s790
      %s793 = sphi 0, %s792
      %s807 = sphi 0, %s793
      %s811 = sphi 0, %s811
      %s813 = sphi 0, %s811
      %s814 = sphi 0, %s813
      %s828 = sphi 0, %s814
      %s832 = sphi 0, %s832
      %s834 = sphi 0, %s832
      %s835 = sphi 0, %s834
      %s849 = sphi 0, %s835
      %s853 = sphi 0, %s853
      %s855 = sphi 0, %s853
      %s856 = sphi 0, %s855
      %s870 = sphi 0, %s856
      %s876 = sphi 0, %s878
      %s879 = sphi 0, %s876
      %s880 = sphi 0, %s879
      %s896 = sphi 0, %s880
    $region4: #{tpu_custom_call.1} parent=1 // loop_header_branch
      %93 = sbr.rel (%p91) target = $region8
    $region5: #{tpu_custom_call.1} parent=1 // loop_body
      %s95 = ssub.s32 %s90, 1
      %s96 = ssub.s32 %s90, 2
      %s97 = sadd.s32 %s90, 1
      %s98 = ssub.s32 %s90, %s97
      %p99 = scmp.eq.s32.totalorder %s98, 0
      %s101 = sadd.s32 %s100, 1
      %s102 = scalar_select %p99, %s100, %s101
      %p105 = pneg %p99
      %p106 = scmp.eq.s32.totalorder %s90, 1
      %p107 = por %p105, %p106
      %p108 = scmp.ne.s32.totalorder %s100, %s103
      %p109 = scmp.eq.s32.totalorder %s90, 0
      %p110 = por %p108, %p109
      %p111 = scmp.ne.s32.totalorder %s100, %s103
      %p112 = scmp.eq.s32.totalorder %s95, 1
      %p113 = por %p111, %p112
      %p114 = scmp.ne.s32.totalorder %s103, %s104
      %p115 = scmp.eq.s32.totalorder %s95, 0
      %p116 = por %p114, %p115
      %p117 = scmp.ne.s32.totalorder %s103, %s104
      %p118 = scmp.eq.s32.totalorder %s96, 1
      %p119 = por %p117, %p118
      %p121 = scmp.ne.s32.totalorder %s104, %s120
      %p122 = scmp.eq.s32.totalorder %s96, 0
      %p123 = por %p121, %p122
      %s124 = ssub.s32 %s90, %s97
      %p125 = scmp.eq.s32.totalorder %s124, 0
      %s127 = sadd.s32 %s126, 1
      %s128 = scalar_select %p125, %s126, %s127
      %p131 = pneg %p125
      %p132 = scmp.eq.s32.totalorder %s90, 1
      %p133 = por %p131, %p132
      %p134 = scmp.ne.s32.totalorder %s126, %s129
      %p135 = scmp.eq.s32.totalorder %s90, 0
      %p136 = por %p134, %p135
      %p137 = scmp.ne.s32.totalorder %s126, %s129
      %p138 = scmp.eq.s32.totalorder %s95, 1
      %p139 = por %p137, %p138
      %p140 = scmp.ne.s32.totalorder %s129, %s130
      %p141 = scmp.eq.s32.totalorder %s95, 0
      %p142 = por %p140, %p141
      %p143 = scmp.ne.s32.totalorder %s129, %s130
      %p144 = scmp.eq.s32.totalorder %s96, 1
      %p145 = por %p143, %p144
      %p147 = scmp.ne.s32.totalorder %s130, %s146
      %p148 = scmp.eq.s32.totalorder %s96, 0
      %p149 = por %p147, %p148
      %s150 = ssub.s32 %s90, %s97
      %p151 = scmp.eq.s32.totalorder %s150, 0
      %s153 = sadd.s32 %s152, 1
      %s154 = scalar_select %p151, %s152, %s153
      %p157 = pneg %p151
      %p158 = scmp.eq.s32.totalorder %s90, 1
      %p159 = por %p157, %p158
      %p160 = scmp.ne.s32.totalorder %s152, %s155
      %p161 = scmp.eq.s32.totalorder %s90, 0
      %p162 = por %p160, %p161
      %p163 = scmp.ne.s32.totalorder %s152, %s155
      %p164 = scmp.eq.s32.totalorder %s95, 1
      %p165 = por %p163, %p164
      %p166 = scmp.ne.s32.totalorder %s155, %s156
      %p167 = scmp.eq.s32.totalorder %s95, 0
      %p168 = por %p166, %p167
      %p169 = scmp.ne.s32.totalorder %s155, %s156
      %p170 = scmp.eq.s32.totalorder %s96, 1
      %p171 = por %p169, %p170
      %p173 = scmp.ne.s32.totalorder %s156, %s172
      %p174 = scmp.eq.s32.totalorder %s96, 0
      %p175 = por %p173, %p174
      %s176 = ssub.s32 %s90, %s97
      %p177 = scmp.eq.s32.totalorder %s176, 0
      %s179 = sadd.s32 %s178, 1
      %s180 = scalar_select %p177, %s178, %s179
      %p183 = pneg %p177
      %p184 = scmp.eq.s32.totalorder %s90, 1
      %p185 = por %p183, %p184
      %p186 = scmp.ne.s32.totalorder %s178, %s181
      %p187 = scmp.eq.s32.totalorder %s90, 0
      %p188 = por %p186, %p187
      %p189 = scmp.ne.s32.totalorder %s178, %s181
      %p190 = scmp.eq.s32.totalorder %s95, 1
      %p191 = por %p189, %p190
      %p192 = scmp.ne.s32.totalorder %s181, %s182
      %p193 = scmp.eq.s32.totalorder %s95, 0
      %p194 = por %p192, %p193
      %p195 = scmp.ne.s32.totalorder %s181, %s182
      %p196 = scmp.eq.s32.totalorder %s96, 1
      %p197 = por %p195, %p196
      %p199 = scmp.ne.s32.totalorder %s182, %s198
      %p200 = scmp.eq.s32.totalorder %s96, 0
      %p201 = por %p199, %p200
      %s203 = sadd.s32 %s202, 1
      %p206 = scmp.eq.s32.totalorder %s90, 1
      %p207 = scmp.ne.s32.totalorder %s202, %s204
      %p208 = scmp.eq.s32.totalorder %s90, 0
      %p209 = por %p207, %p208
      %p210 = scmp.ne.s32.totalorder %s202, %s204
      %p211 = scmp.eq.s32.totalorder %s95, 1
      %p212 = por %p210, %p211
      %p213 = scmp.ne.s32.totalorder %s204, %s205
      %p214 = scmp.eq.s32.totalorder %s95, 0
      %p215 = por %p213, %p214
      %p216 = scmp.ne.s32.totalorder %s204, %s205
      %p217 = scmp.eq.s32.totalorder %s96, 1
      %p218 = por %p216, %p217
      %p220 = scmp.ne.s32.totalorder %s205, %s219
      %p221 = scmp.eq.s32.totalorder %s96, 0
      %p222 = por %p220, %p221
      %s224 = sadd.s32 %s223, 1
      %p227 = scmp.eq.s32.totalorder %s90, 1
      %p228 = scmp.ne.s32.totalorder %s223, %s225
      %p229 = scmp.eq.s32.totalorder %s90, 0
      %p230 = por %p228, %p229
      %p231 = scmp.ne.s32.totalorder %s223, %s225
      %p232 = scmp.eq.s32.totalorder %s95, 1
      %p233 = por %p231, %p232
      %p234 = scmp.ne.s32.totalorder %s225, %s226
      %p235 = scmp.eq.s32.totalorder %s95, 0
      %p236 = por %p234, %p235
      %p237 = scmp.ne.s32.totalorder %s225, %s226
      %p238 = scmp.eq.s32.totalorder %s96, 1
      %p239 = por %p237, %p238
      %p241 = scmp.ne.s32.totalorder %s226, %s240
      %p242 = scmp.eq.s32.totalorder %s96, 0
      %p243 = por %p241, %p242
      %s245 = sadd.s32 %s244, 1
      %p248 = scmp.eq.s32.totalorder %s90, 1
      %p249 = scmp.ne.s32.totalorder %s244, %s246
      %p250 = scmp.eq.s32.totalorder %s90, 0
      %p251 = por %p249, %p250
      %p252 = scmp.ne.s32.totalorder %s244, %s246
      %p253 = scmp.eq.s32.totalorder %s95, 1
      %p254 = por %p252, %p253
      %p255 = scmp.ne.s32.totalorder %s246, %s247
      %p256 = scmp.eq.s32.totalorder %s95, 0
      %p257 = por %p255, %p256
      %p258 = scmp.ne.s32.totalorder %s246, %s247
      %p259 = scmp.eq.s32.totalorder %s96, 1
      %p260 = por %p258, %p259
      %p262 = scmp.ne.s32.totalorder %s247, %s261
      %p263 = scmp.eq.s32.totalorder %s96, 0
      %p264 = por %p262, %p263
      %s266 = sadd.s32 %s265, 1
      %p269 = scmp.eq.s32.totalorder %s90, 1
      %p270 = scmp.ne.s32.totalorder %s265, %s267
      %p271 = scmp.eq.s32.totalorder %s90, 0
      %p272 = por %p270, %p271
      %p273 = scmp.ne.s32.totalorder %s265, %s267
      %p274 = scmp.eq.s32.totalorder %s95, 1
      %p275 = por %p273, %p274
      %p276 = scmp.ne.s32.totalorder %s267, %s268
      %p277 = scmp.eq.s32.totalorder %s95, 0
      %p278 = por %p276, %p277
      %p279 = scmp.ne.s32.totalorder %s267, %s268
      %p280 = scmp.eq.s32.totalorder %s96, 1
      %p281 = por %p279, %p280
      %p283 = scmp.ne.s32.totalorder %s268, %s282
      %p284 = scmp.eq.s32.totalorder %s96, 0
      %p285 = por %p283, %p284
      %s287 = sadd.s32 %s286, 1
      %p290 = scmp.eq.s32.totalorder %s90, 1
      %p291 = scmp.ne.s32.totalorder %s286, %s288
      %p292 = scmp.eq.s32.totalorder %s90, 0
      %p293 = por %p291, %p292
      %p294 = scmp.ne.s32.totalorder %s286, %s288
      %p295 = scmp.eq.s32.totalorder %s95, 1
      %p296 = por %p294, %p295
      %p297 = scmp.ne.s32.totalorder %s288, %s289
      %p298 = scmp.eq.s32.totalorder %s95, 0
      %p299 = por %p297, %p298
      %p300 = scmp.ne.s32.totalorder %s288, %s289
      %p301 = scmp.eq.s32.totalorder %s96, 1
      %p302 = por %p300, %p301
      %p304 = scmp.ne.s32.totalorder %s289, %s303
      %p305 = scmp.eq.s32.totalorder %s96, 0
      %p306 = por %p304, %p305
      %s308 = sadd.s32 %s307, 1
      %p311 = scmp.eq.s32.totalorder %s90, 1
      %p312 = scmp.ne.s32.totalorder %s307, %s309
      %p313 = scmp.eq.s32.totalorder %s90, 0
      %p314 = por %p312, %p313
      %p315 = scmp.ne.s32.totalorder %s307, %s309
      %p316 = scmp.eq.s32.totalorder %s95, 1
      %p317 = por %p315, %p316
      %p318 = scmp.ne.s32.totalorder %s309, %s310
      %p319 = scmp.eq.s32.totalorder %s95, 0
      %p320 = por %p318, %p319
      %p321 = scmp.ne.s32.totalorder %s309, %s310
      %p322 = scmp.eq.s32.totalorder %s96, 1
      %p323 = por %p321, %p322
      %p325 = scmp.ne.s32.totalorder %s310, %s324
      %p326 = scmp.eq.s32.totalorder %s96, 0
      %p327 = por %p325, %p326
      %s329 = sadd.s32 %s328, 1
      %p332 = scmp.eq.s32.totalorder %s90, 1
      %p333 = scmp.ne.s32.totalorder %s328, %s330
      %p334 = scmp.eq.s32.totalorder %s90, 0
      %p335 = por %p333, %p334
      %p336 = scmp.ne.s32.totalorder %s328, %s330
      %p337 = scmp.eq.s32.totalorder %s95, 1
      %p338 = por %p336, %p337
      %p339 = scmp.ne.s32.totalorder %s330, %s331
      %p340 = scmp.eq.s32.totalorder %s95, 0
      %p341 = por %p339, %p340
      %p342 = scmp.ne.s32.totalorder %s330, %s331
      %p343 = scmp.eq.s32.totalorder %s96, 1
      %p344 = por %p342, %p343
      %p346 = scmp.ne.s32.totalorder %s331, %s345
      %p347 = scmp.eq.s32.totalorder %s96, 0
      %p348 = por %p346, %p347
      %s350 = sadd.s32 %s349, 1
      %p353 = scmp.eq.s32.totalorder %s90, 1
      %p354 = scmp.ne.s32.totalorder %s349, %s351
      %p355 = scmp.eq.s32.totalorder %s90, 0
      %p356 = por %p354, %p355
      %p357 = scmp.ne.s32.totalorder %s349, %s351
      %p358 = scmp.eq.s32.totalorder %s95, 1
      %p359 = por %p357, %p358
      %p360 = scmp.ne.s32.totalorder %s351, %s352
      %p361 = scmp.eq.s32.totalorder %s95, 0
      %p362 = por %p360, %p361
      %p363 = scmp.ne.s32.totalorder %s351, %s352
      %p364 = scmp.eq.s32.totalorder %s96, 1
      %p365 = por %p363, %p364
      %p367 = scmp.ne.s32.totalorder %s352, %s366
      %p368 = scmp.eq.s32.totalorder %s96, 0
      %p369 = por %p367, %p368
      %s371 = sadd.s32 %s370, 1
      %p374 = scmp.eq.s32.totalorder %s90, 1
      %p375 = scmp.ne.s32.totalorder %s370, %s372
      %p376 = scmp.eq.s32.totalorder %s90, 0
      %p377 = por %p375, %p376
      %p378 = scmp.ne.s32.totalorder %s370, %s372
      %p379 = scmp.eq.s32.totalorder %s95, 1
      %p380 = por %p378, %p379
      %p381 = scmp.ne.s32.totalorder %s372, %s373
      %p382 = scmp.eq.s32.totalorder %s95, 0
      %p383 = por %p381, %p382
      %p384 = scmp.ne.s32.totalorder %s372, %s373
      %p385 = scmp.eq.s32.totalorder %s96, 1
      %p386 = por %p384, %p385
      %p388 = scmp.ne.s32.totalorder %s373, %s387
      %p389 = scmp.eq.s32.totalorder %s96, 0
      %p390 = por %p388, %p389
      %s392 = sadd.s32 %s391, 1
      %p395 = scmp.eq.s32.totalorder %s90, 1
      %p396 = scmp.ne.s32.totalorder %s391, %s393
      %p397 = scmp.eq.s32.totalorder %s90, 0
      %p398 = por %p396, %p397
      %p399 = scmp.ne.s32.totalorder %s391, %s393
      %p400 = scmp.eq.s32.totalorder %s95, 1
      %p401 = por %p399, %p400
      %p402 = scmp.ne.s32.totalorder %s393, %s394
      %p403 = scmp.eq.s32.totalorder %s95, 0
      %p404 = por %p402, %p403
      %p405 = scmp.ne.s32.totalorder %s393, %s394
      %p406 = scmp.eq.s32.totalorder %s96, 1
      %p407 = por %p405, %p406
      %p409 = scmp.ne.s32.totalorder %s394, %s408
      %p410 = scmp.eq.s32.totalorder %s96, 0
      %p411 = por %p409, %p410
      %s413 = sadd.s32 %s412, 1
      %p416 = scmp.eq.s32.totalorder %s90, 1
      %p417 = scmp.ne.s32.totalorder %s412, %s414
      %p418 = scmp.eq.s32.totalorder %s90, 0
      %p419 = por %p417, %p418
      %p420 = scmp.ne.s32.totalorder %s412, %s414
      %p421 = scmp.eq.s32.totalorder %s95, 1
      %p422 = por %p420, %p421
      %p423 = scmp.ne.s32.totalorder %s414, %s415
      %p424 = scmp.eq.s32.totalorder %s95, 0
      %p425 = por %p423, %p424
      %p426 = scmp.ne.s32.totalorder %s414, %s415
      %p427 = scmp.eq.s32.totalorder %s96, 1
      %p428 = por %p426, %p427
      %p430 = scmp.ne.s32.totalorder %s415, %s429
      %p431 = scmp.eq.s32.totalorder %s96, 0
      %p432 = por %p430, %p431
      %s434 = sadd.s32 %s433, 1
      %p437 = scmp.eq.s32.totalorder %s90, 1
      %p438 = scmp.ne.s32.totalorder %s433, %s435
      %p439 = scmp.eq.s32.totalorder %s90, 0
      %p440 = por %p438, %p439
      %p441 = scmp.ne.s32.totalorder %s433, %s435
      %p442 = scmp.eq.s32.totalorder %s95, 1
      %p443 = por %p441, %p442
      %p444 = scmp.ne.s32.totalorder %s435, %s436
      %p445 = scmp.eq.s32.totalorder %s95, 0
      %p446 = por %p444, %p445
      %p447 = scmp.ne.s32.totalorder %s435, %s436
      %p448 = scmp.eq.s32.totalorder %s96, 1
      %p449 = por %p447, %p448
      %p451 = scmp.ne.s32.totalorder %s436, %s450
      %p452 = scmp.eq.s32.totalorder %s96, 0
      %p453 = por %p451, %p452
      %s455 = sadd.s32 %s454, 1
      %p458 = scmp.eq.s32.totalorder %s90, 1
      %p459 = scmp.ne.s32.totalorder %s454, %s456
      %p460 = scmp.eq.s32.totalorder %s90, 0
      %p461 = por %p459, %p460
      %p462 = scmp.ne.s32.totalorder %s454, %s456
      %p463 = scmp.eq.s32.totalorder %s95, 1
      %p464 = por %p462, %p463
      %p465 = scmp.ne.s32.totalorder %s456, %s457
      %p466 = scmp.eq.s32.totalorder %s95, 0
      %p467 = por %p465, %p466
      %p468 = scmp.ne.s32.totalorder %s456, %s457
      %p469 = scmp.eq.s32.totalorder %s96, 1
      %p470 = por %p468, %p469
      %p472 = scmp.ne.s32.totalorder %s457, %s471
      %p473 = scmp.eq.s32.totalorder %s96, 0
      %p474 = por %p472, %p473
      %s476 = sadd.s32 %s475, 1
      %p479 = scmp.eq.s32.totalorder %s90, 1
      %p480 = scmp.ne.s32.totalorder %s475, %s477
      %p481 = scmp.eq.s32.totalorder %s90, 0
      %p482 = por %p480, %p481
      %p483 = scmp.ne.s32.totalorder %s475, %s477
      %p484 = scmp.eq.s32.totalorder %s95, 1
      %p485 = por %p483, %p484
      %p486 = scmp.ne.s32.totalorder %s477, %s478
      %p487 = scmp.eq.s32.totalorder %s95, 0
      %p488 = por %p486, %p487
      %p489 = scmp.ne.s32.totalorder %s477, %s478
      %p490 = scmp.eq.s32.totalorder %s96, 1
      %p491 = por %p489, %p490
      %p493 = scmp.ne.s32.totalorder %s478, %s492
      %p494 = scmp.eq.s32.totalorder %s96, 0
      %p495 = por %p493, %p494
      %s497 = sadd.s32 %s496, 1
      %p500 = scmp.eq.s32.totalorder %s90, 1
      %p501 = scmp.ne.s32.totalorder %s496, %s498
      %p502 = scmp.eq.s32.totalorder %s90, 0
      %p503 = por %p501, %p502
      %p504 = scmp.ne.s32.totalorder %s496, %s498
      %p505 = scmp.eq.s32.totalorder %s95, 1
      %p506 = por %p504, %p505
      %p507 = scmp.ne.s32.totalorder %s498, %s499
      %p508 = scmp.eq.s32.totalorder %s95, 0
      %p509 = por %p507, %p508
      %p510 = scmp.ne.s32.totalorder %s498, %s499
      %p511 = scmp.eq.s32.totalorder %s96, 1
      %p512 = por %p510, %p511
      %p514 = scmp.ne.s32.totalorder %s499, %s513
      %p515 = scmp.eq.s32.totalorder %s96, 0
      %p516 = por %p514, %p515
      %s518 = sadd.s32 %s517, 1
      %p521 = scmp.eq.s32.totalorder %s90, 1
      %p522 = scmp.ne.s32.totalorder %s517, %s519
      %p523 = scmp.eq.s32.totalorder %s90, 0
      %p524 = por %p522, %p523
      %p525 = scmp.ne.s32.totalorder %s517, %s519
      %p526 = scmp.eq.s32.totalorder %s95, 1
      %p527 = por %p525, %p526
      %p528 = scmp.ne.s32.totalorder %s519, %s520
      %p529 = scmp.eq.s32.totalorder %s95, 0
      %p530 = por %p528, %p529
      %p531 = scmp.ne.s32.totalorder %s519, %s520
      %p532 = scmp.eq.s32.totalorder %s96, 1
      %p533 = por %p531, %p532
      %p535 = scmp.ne.s32.totalorder %s520, %s534
      %p536 = scmp.eq.s32.totalorder %s96, 0
      %p537 = por %p535, %p536
      %s539 = sadd.s32 %s538, 1
      %p542 = scmp.eq.s32.totalorder %s90, 1
      %p543 = scmp.ne.s32.totalorder %s538, %s540
      %p544 = scmp.eq.s32.totalorder %s90, 0
      %p545 = por %p543, %p544
      %p546 = scmp.ne.s32.totalorder %s538, %s540
      %p547 = scmp.eq.s32.totalorder %s95, 1
      %p548 = por %p546, %p547
      %p549 = scmp.ne.s32.totalorder %s540, %s541
      %p550 = scmp.eq.s32.totalorder %s95, 0
      %p551 = por %p549, %p550
      %p552 = scmp.ne.s32.totalorder %s540, %s541
      %p553 = scmp.eq.s32.totalorder %s96, 1
      %p554 = por %p552, %p553
      %p556 = scmp.ne.s32.totalorder %s541, %s555
      %p557 = scmp.eq.s32.totalorder %s96, 0
      %p558 = por %p556, %p557
      %s560 = sadd.s32 %s559, 1
      %p563 = scmp.eq.s32.totalorder %s90, 1
      %p564 = scmp.ne.s32.totalorder %s559, %s561
      %p565 = scmp.eq.s32.totalorder %s90, 0
      %p566 = por %p564, %p565
      %p567 = scmp.ne.s32.totalorder %s559, %s561
      %p568 = scmp.eq.s32.totalorder %s95, 1
      %p569 = por %p567, %p568
      %p570 = scmp.ne.s32.totalorder %s561, %s562
      %p571 = scmp.eq.s32.totalorder %s95, 0
      %p572 = por %p570, %p571
      %p573 = scmp.ne.s32.totalorder %s561, %s562
      %p574 = scmp.eq.s32.totalorder %s96, 1
      %p575 = por %p573, %p574
      %p577 = scmp.ne.s32.totalorder %s562, %s576
      %p578 = scmp.eq.s32.totalorder %s96, 0
      %p579 = por %p577, %p578
      %s581 = sadd.s32 %s580, 1
      %p584 = scmp.eq.s32.totalorder %s90, 1
      %p585 = scmp.ne.s32.totalorder %s580, %s582
      %p586 = scmp.eq.s32.totalorder %s90, 0
      %p587 = por %p585, %p586
      %p588 = scmp.ne.s32.totalorder %s580, %s582
      %p589 = scmp.eq.s32.totalorder %s95, 1
      %p590 = por %p588, %p589
      %p591 = scmp.ne.s32.totalorder %s582, %s583
      %p592 = scmp.eq.s32.totalorder %s95, 0
      %p593 = por %p591, %p592
      %p594 = scmp.ne.s32.totalorder %s582, %s583
      %p595 = scmp.eq.s32.totalorder %s96, 1
      %p596 = por %p594, %p595
      %p598 = scmp.ne.s32.totalorder %s583, %s597
      %p599 = scmp.eq.s32.totalorder %s96, 0
      %p600 = por %p598, %p599
      %s602 = sadd.s32 %s601, 1
      %p605 = scmp.eq.s32.totalorder %s90, 1
      %p606 = scmp.ne.s32.totalorder %s601, %s603
      %p607 = scmp.eq.s32.totalorder %s90, 0
      %p608 = por %p606, %p607
      %p609 = scmp.ne.s32.totalorder %s601, %s603
      %p610 = scmp.eq.s32.totalorder %s95, 1
      %p611 = por %p609, %p610
      %p612 = scmp.ne.s32.totalorder %s603, %s604
      %p613 = scmp.eq.s32.totalorder %s95, 0
      %p614 = por %p612, %p613
      %p615 = scmp.ne.s32.totalorder %s603, %s604
      %p616 = scmp.eq.s32.totalorder %s96, 1
      %p617 = por %p615, %p616
      %p619 = scmp.ne.s32.totalorder %s604, %s618
      %p620 = scmp.eq.s32.totalorder %s96, 0
      %p621 = por %p619, %p620
      %s623 = sadd.s32 %s622, 1
      %p626 = scmp.eq.s32.totalorder %s90, 1
      %p627 = scmp.ne.s32.totalorder %s622, %s624
      %p628 = scmp.eq.s32.totalorder %s90, 0
      %p629 = por %p627, %p628
      %p630 = scmp.ne.s32.totalorder %s622, %s624
      %p631 = scmp.eq.s32.totalorder %s95, 1
      %p632 = por %p630, %p631
      %p633 = scmp.ne.s32.totalorder %s624, %s625
      %p634 = scmp.eq.s32.totalorder %s95, 0
      %p635 = por %p633, %p634
      %p636 = scmp.ne.s32.totalorder %s624, %s625
      %p637 = scmp.eq.s32.totalorder %s96, 1
      %p638 = por %p636, %p637
      %p640 = scmp.ne.s32.totalorder %s625, %s639
      %p641 = scmp.eq.s32.totalorder %s96, 0
      %p642 = por %p640, %p641
      %s644 = sadd.s32 %s643, 1
      %p647 = scmp.eq.s32.totalorder %s90, 1
      %p648 = scmp.ne.s32.totalorder %s643, %s645
      %p649 = scmp.eq.s32.totalorder %s90, 0
      %p650 = por %p648, %p649
      %p651 = scmp.ne.s32.totalorder %s643, %s645
      %p652 = scmp.eq.s32.totalorder %s95, 1
      %p653 = por %p651, %p652
      %p654 = scmp.ne.s32.totalorder %s645, %s646
      %p655 = scmp.eq.s32.totalorder %s95, 0
      %p656 = por %p654, %p655
      %p657 = scmp.ne.s32.totalorder %s645, %s646
      %p658 = scmp.eq.s32.totalorder %s96, 1
      %p659 = por %p657, %p658
      %p661 = scmp.ne.s32.totalorder %s646, %s660
      %p662 = scmp.eq.s32.totalorder %s96, 0
      %p663 = por %p661, %p662
      %s665 = sadd.s32 %s664, 1
      %p668 = scmp.eq.s32.totalorder %s90, 1
      %p669 = scmp.ne.s32.totalorder %s664, %s666
      %p670 = scmp.eq.s32.totalorder %s90, 0
      %p671 = por %p669, %p670
      %p672 = scmp.ne.s32.totalorder %s664, %s666
      %p673 = scmp.eq.s32.totalorder %s95, 1
      %p674 = por %p672, %p673
      %p675 = scmp.ne.s32.totalorder %s666, %s667
      %p676 = scmp.eq.s32.totalorder %s95, 0
      %p677 = por %p675, %p676
      %p678 = scmp.ne.s32.totalorder %s666, %s667
      %p679 = scmp.eq.s32.totalorder %s96, 1
      %p680 = por %p678, %p679
      %p682 = scmp.ne.s32.totalorder %s667, %s681
      %p683 = scmp.eq.s32.totalorder %s96, 0
      %p684 = por %p682, %p683
      %s686 = sadd.s32 %s685, 1
      %p689 = scmp.eq.s32.totalorder %s90, 1
      %p690 = scmp.ne.s32.totalorder %s685, %s687
      %p691 = scmp.eq.s32.totalorder %s90, 0
      %p692 = por %p690, %p691
      %p693 = scmp.ne.s32.totalorder %s685, %s687
      %p694 = scmp.eq.s32.totalorder %s95, 1
      %p695 = por %p693, %p694
      %p696 = scmp.ne.s32.totalorder %s687, %s688
      %p697 = scmp.eq.s32.totalorder %s95, 0
      %p698 = por %p696, %p697
      %p699 = scmp.ne.s32.totalorder %s687, %s688
      %p700 = scmp.eq.s32.totalorder %s96, 1
      %p701 = por %p699, %p700
      %p703 = scmp.ne.s32.totalorder %s688, %s702
      %p704 = scmp.eq.s32.totalorder %s96, 0
      %p705 = por %p703, %p704
      %s707 = sadd.s32 %s706, 1
      %p710 = scmp.eq.s32.totalorder %s90, 1
      %p711 = scmp.ne.s32.totalorder %s706, %s708
      %p712 = scmp.eq.s32.totalorder %s90, 0
      %p713 = por %p711, %p712
      %p714 = scmp.ne.s32.totalorder %s706, %s708
      %p715 = scmp.eq.s32.totalorder %s95, 1
      %p716 = por %p714, %p715
      %p717 = scmp.ne.s32.totalorder %s708, %s709
      %p718 = scmp.eq.s32.totalorder %s95, 0
      %p719 = por %p717, %p718
      %p720 = scmp.ne.s32.totalorder %s708, %s709
      %p721 = scmp.eq.s32.totalorder %s96, 1
      %p722 = por %p720, %p721
      %p724 = scmp.ne.s32.totalorder %s709, %s723
      %p725 = scmp.eq.s32.totalorder %s96, 0
      %p726 = por %p724, %p725
      %s728 = sadd.s32 %s727, 1
      %p731 = scmp.eq.s32.totalorder %s90, 1
      %p732 = scmp.ne.s32.totalorder %s727, %s729
      %p733 = scmp.eq.s32.totalorder %s90, 0
      %p734 = por %p732, %p733
      %p735 = scmp.ne.s32.totalorder %s727, %s729
      %p736 = scmp.eq.s32.totalorder %s95, 1
      %p737 = por %p735, %p736
      %p738 = scmp.ne.s32.totalorder %s729, %s730
      %p739 = scmp.eq.s32.totalorder %s95, 0
      %p740 = por %p738, %p739
      %p741 = scmp.ne.s32.totalorder %s729, %s730
      %p742 = scmp.eq.s32.totalorder %s96, 1
      %p743 = por %p741, %p742
      %p745 = scmp.ne.s32.totalorder %s730, %s744
      %p746 = scmp.eq.s32.totalorder %s96, 0
      %p747 = por %p745, %p746
      %s749 = sadd.s32 %s748, 1
      %p752 = scmp.eq.s32.totalorder %s90, 1
      %p753 = scmp.ne.s32.totalorder %s748, %s750
      %p754 = scmp.eq.s32.totalorder %s90, 0
      %p755 = por %p753, %p754
      %p756 = scmp.ne.s32.totalorder %s748, %s750
      %p757 = scmp.eq.s32.totalorder %s95, 1
      %p758 = por %p756, %p757
      %p759 = scmp.ne.s32.totalorder %s750, %s751
      %p760 = scmp.eq.s32.totalorder %s95, 0
      %p761 = por %p759, %p760
      %p762 = scmp.ne.s32.totalorder %s750, %s751
      %p763 = scmp.eq.s32.totalorder %s96, 1
      %p764 = por %p762, %p763
      %p766 = scmp.ne.s32.totalorder %s751, %s765
      %p767 = scmp.eq.s32.totalorder %s96, 0
      %p768 = por %p766, %p767
      %s770 = sadd.s32 %s769, 1
      %p773 = scmp.eq.s32.totalorder %s90, 1
      %p774 = scmp.ne.s32.totalorder %s769, %s771
      %p775 = scmp.eq.s32.totalorder %s90, 0
      %p776 = por %p774, %p775
      %p777 = scmp.ne.s32.totalorder %s769, %s771
      %p778 = scmp.eq.s32.totalorder %s95, 1
      %p779 = por %p777, %p778
      %p780 = scmp.ne.s32.totalorder %s771, %s772
      %p781 = scmp.eq.s32.totalorder %s95, 0
      %p782 = por %p780, %p781
      %p783 = scmp.ne.s32.totalorder %s771, %s772
      %p784 = scmp.eq.s32.totalorder %s96, 1
      %p785 = por %p783, %p784
      %p787 = scmp.ne.s32.totalorder %s772, %s786
      %p788 = scmp.eq.s32.totalorder %s96, 0
      %p789 = por %p787, %p788
      %s791 = sadd.s32 %s790, 1
      %p794 = scmp.eq.s32.totalorder %s90, 1
      %p795 = scmp.ne.s32.totalorder %s790, %s792
      %p796 = scmp.eq.s32.totalorder %s90, 0
      %p797 = por %p795, %p796
      %p798 = scmp.ne.s32.totalorder %s790, %s792
      %p799 = scmp.eq.s32.totalorder %s95, 1
      %p800 = por %p798, %p799
      %p801 = scmp.ne.s32.totalorder %s792, %s793
      %p802 = scmp.eq.s32.totalorder %s95, 0
      %p803 = por %p801, %p802
      %p804 = scmp.ne.s32.totalorder %s792, %s793
      %p805 = scmp.eq.s32.totalorder %s96, 1
      %p806 = por %p804, %p805
      %p808 = scmp.ne.s32.totalorder %s793, %s807
      %p809 = scmp.eq.s32.totalorder %s96, 0
      %p810 = por %p808, %p809
      %s812 = sadd.s32 %s811, 1
      %p815 = scmp.eq.s32.totalorder %s90, 1
      %p816 = scmp.ne.s32.totalorder %s811, %s813
      %p817 = scmp.eq.s32.totalorder %s90, 0
      %p818 = por %p816, %p817
      %p819 = scmp.ne.s32.totalorder %s811, %s813
      %p820 = scmp.eq.s32.totalorder %s95, 1
      %p821 = por %p819, %p820
      %p822 = scmp.ne.s32.totalorder %s813, %s814
      %p823 = scmp.eq.s32.totalorder %s95, 0
      %p824 = por %p822, %p823
      %p825 = scmp.ne.s32.totalorder %s813, %s814
      %p826 = scmp.eq.s32.totalorder %s96, 1
      %p827 = por %p825, %p826
      %p829 = scmp.ne.s32.totalorder %s814, %s828
      %p830 = scmp.eq.s32.totalorder %s96, 0
      %p831 = por %p829, %p830
      %s833 = sadd.s32 %s832, 1
      %p836 = scmp.eq.s32.totalorder %s90, 1
      %p837 = scmp.ne.s32.totalorder %s832, %s834
      %p838 = scmp.eq.s32.totalorder %s90, 0
      %p839 = por %p837, %p838
      %p840 = scmp.ne.s32.totalorder %s832, %s834
      %p841 = scmp.eq.s32.totalorder %s95, 1
      %p842 = por %p840, %p841
      %p843 = scmp.ne.s32.totalorder %s834, %s835
      %p844 = scmp.eq.s32.totalorder %s95, 0
      %p845 = por %p843, %p844
      %p846 = scmp.ne.s32.totalorder %s834, %s835
      %p847 = scmp.eq.s32.totalorder %s96, 1
      %p848 = por %p846, %p847
      %p850 = scmp.ne.s32.totalorder %s835, %s849
      %p851 = scmp.eq.s32.totalorder %s96, 0
      %p852 = por %p850, %p851
      %s854 = sadd.s32 %s853, 1
      %p857 = scmp.eq.s32.totalorder %s90, 1
      %p858 = scmp.ne.s32.totalorder %s853, %s855
      %p859 = scmp.eq.s32.totalorder %s90, 0
      %p860 = por %p858, %p859
      %p861 = scmp.ne.s32.totalorder %s853, %s855
      %p862 = scmp.eq.s32.totalorder %s95, 1
      %p863 = por %p861, %p862
      %p864 = scmp.ne.s32.totalorder %s855, %s856
      %p865 = scmp.eq.s32.totalorder %s95, 0
      %p866 = por %p864, %p865
      %p867 = scmp.ne.s32.totalorder %s855, %s856
      %p868 = scmp.eq.s32.totalorder %s96, 1
      %p869 = por %p867, %p868
      %p871 = scmp.ne.s32.totalorder %s856, %s870
      %p872 = scmp.eq.s32.totalorder %s96, 0
      %p873 = por %p871, %p872
      %s874 = ssub.s32 %s90, %s97
      %p875 = scmp.eq.s32.totalorder %s874, 0
      %s877 = sadd.s32 %s876, 1
      %s878 = scalar_select %p875, %s876, %s877
      %p881 = pneg %p875
      %p882 = scmp.eq.s32.totalorder %s90, 1
      %p883 = por %p881, %p882
      %p884 = scmp.ne.s32.totalorder %s876, %s879
      %p885 = scmp.eq.s32.totalorder %s90, 0
      %p886 = por %p884, %p885
      %p887 = scmp.ne.s32.totalorder %s876, %s879
      %p888 = scmp.eq.s32.totalorder %s95, 1
      %p889 = por %p887, %p888
      %p890 = scmp.ne.s32.totalorder %s879, %s880
      %p891 = scmp.eq.s32.totalorder %s95, 0
      %p892 = por %p890, %p891
      %p893 = scmp.ne.s32.totalorder %s879, %s880
      %p894 = scmp.eq.s32.totalorder %s96, 1
      %p895 = por %p893, %p894
      %p897 = scmp.ne.s32.totalorder %s880, %s896
      %p898 = scmp.eq.s32.totalorder %s96, 0
      %p899 = por %p897, %p898
      %p900 = scmp.le.s32.totalorder 1, %s90
      %p901 = scmp.lt.s32.totalorder %s90, 3
      %p902 = pnand %p900, %p901
      %p903 = pneg %p902
      // Predicated region
      $region9: #{tpu_custom_call.1} parent=5 // pred_check
        _
      $region10: #{tpu_custom_call.1} parent=5 // pred_check_branch
        %905 = sbr.rel (%p902) target = $region12
      $region11: #{tpu_custom_call.1} parent=5 // pred_region
        %s906 = ssub.s32 %s90, 1
        // Predicated region
        $region13: #{tpu_custom_call.1} parent=11 // pred_check
          %p907 = pneg %p215
        $region14: #{tpu_custom_call.1} parent=11 // pred_check_branch
          %909 = sbr.rel (%p907) target = $region16
        $region15: #{tpu_custom_call.1} parent=11 // pred_region
          _
        $region16: #{tpu_custom_call.1} parent=11 // pred_fallthru
          _
        // Predicated region
        $region17: #{tpu_custom_call.1} parent=11 // pred_check
          %p910 = pneg %p236
        $region18: #{tpu_custom_call.1} parent=11 // pred_check_branch
          %912 = sbr.rel (%p910) target = $region20
        $region19: #{tpu_custom_call.1} parent=11 // pred_region
          _
        $region20: #{tpu_custom_call.1} parent=11 // pred_fallthru
          _
        // Predicated region
        $region21: #{tpu_custom_call.1} parent=11 // pred_check
          %p913 = pneg %p257
        $region22: #{tpu_custom_call.1} parent=11 // pred_check_branch
          %915 = sbr.rel (%p913) target = $region24
        $region23: #{tpu_custom_call.1} parent=11 // pred_region
          _
        $region24: #{tpu_custom_call.1} parent=11 // pred_fallthru
          _
        // Predicated region
        $region25: #{tpu_custom_call.1} parent=11 // pred_check
          %p916 = pneg %p278
        $region26: #{tpu_custom_call.1} parent=11 // pred_check_branch
          %918 = sbr.rel (%p916) target = $region28
        $region27: #{tpu_custom_call.1} parent=11 // pred_region
          _
        $region28: #{tpu_custom_call.1} parent=11 // pred_fallthru
          _
        // Predicated region
        $region29: #{tpu_custom_call.1} parent=11 // pred_check
          %p919 = pneg %p299
        $region30: #{tpu_custom_call.1} parent=11 // pred_check_branch
          %921 = sbr.rel (%p919) target = $region32
        $region31: #{tpu_custom_call.1} parent=11 // pred_region
          _
        $region32: #{tpu_custom_call.1} parent=11 // pred_fallthru
          _
        // Predicated region
        $region33: #{tpu_custom_call.1} parent=11 // pred_check
          %p922 = pneg %p320
        $region34: #{tpu_custom_call.1} parent=11 // pred_check_branch
          %924 = sbr.rel (%p922) target = $region36
        $region35: #{tpu_custom_call.1} parent=11 // pred_region
          _
        $region36: #{tpu_custom_call.1} parent=11 // pred_fallthru
          _
        // Predicated region
        $region37: #{tpu_custom_call.1} parent=11 // pred_check
          %p925 = pneg %p341
        $region38: #{tpu_custom_call.1} parent=11 // pred_check_branch
          %927 = sbr.rel (%p925) target = $region40
        $region39: #{tpu_custom_call.1} parent=11 // pred_region
          _
        $region40: #{tpu_custom_call.1} parent=11 // pred_fallthru
          _
        // Predicated region
        $region41: #{tpu_custom_call.1} parent=11 // pred_check
          %p928 = pneg %p362
        $region42: #{tpu_custom_call.1} parent=11 // pred_check_branch
          %930 = sbr.rel (%p928) target = $region44
        $region43: #{tpu_custom_call.1} parent=11 // pred_region
          _
        $region44: #{tpu_custom_call.1} parent=11 // pred_fallthru
          _
        // Predicated region
        $region45: #{tpu_custom_call.1} parent=11 // pred_check
          %p931 = pneg %p383
        $region46: #{tpu_custom_call.1} parent=11 // pred_check_branch
          %933 = sbr.rel (%p931) target = $region48
        $region47: #{tpu_custom_call.1} parent=11 // pred_region
          _
        $region48: #{tpu_custom_call.1} parent=11 // pred_fallthru
          _
        // Predicated region
        $region49: #{tpu_custom_call.1} parent=11 // pred_check
          %p934 = pneg %p404
        $region50: #{tpu_custom_call.1} parent=11 // pred_check_branch
          %936 = sbr.rel (%p934) target = $region52
        $region51: #{tpu_custom_call.1} parent=11 // pred_region
          _
        $region52: #{tpu_custom_call.1} parent=11 // pred_fallthru
          _
        // Predicated region
        $region53: #{tpu_custom_call.1} parent=11 // pred_check
          %p937 = pneg %p425
        $region54: #{tpu_custom_call.1} parent=11 // pred_check_branch
          %939 = sbr.rel (%p937) target = $region56
        $region55: #{tpu_custom_call.1} parent=11 // pred_region
          _
        $region56: #{tpu_custom_call.1} parent=11 // pred_fallthru
          _
        // Predicated region
        $region57: #{tpu_custom_call.1} parent=11 // pred_check
          %p940 = pneg %p446
        $region58: #{tpu_custom_call.1} parent=11 // pred_check_branch
          %942 = sbr.rel (%p940) target = $region60
        $region59: #{tpu_custom_call.1} parent=11 // pred_region
          _
        $region60: #{tpu_custom_call.1} parent=11 // pred_fallthru
          _
        // Predicated region
        $region61: #{tpu_custom_call.1} parent=11 // pred_check
          %p943 = pneg %p467
        $region62: #{tpu_custom_call.1} parent=11 // pred_check_branch
          %945 = sbr.rel (%p943) target = $region64
        $region63: #{tpu_custom_call.1} parent=11 // pred_region
          _
        $region64: #{tpu_custom_call.1} parent=11 // pred_fallthru
          _
        // Predicated region
        $region65: #{tpu_custom_call.1} parent=11 // pred_check
          %p946 = pneg %p488
        $region66: #{tpu_custom_call.1} parent=11 // pred_check_branch
          %948 = sbr.rel (%p946) target = $region68
        $region67: #{tpu_custom_call.1} parent=11 // pred_region
          _
        $region68: #{tpu_custom_call.1} parent=11 // pred_fallthru
          _
        // Predicated region
        $region69: #{tpu_custom_call.1} parent=11 // pred_check
          %p949 = pneg %p509
        $region70: #{tpu_custom_call.1} parent=11 // pred_check_branch
          %951 = sbr.rel (%p949) target = $region72
        $region71: #{tpu_custom_call.1} parent=11 // pred_region
          %953 = vsyncadd [#allocation6], 0
          %s954 = sshll.u32 %s37, 4
          %s955 = int_to_ptr.hbm [resolvable:$true] %s954
          %s956 = sshll.u32 [#allocation5], 4
          %s957 = int_to_ptr.vmem [resolvable:$true] %s956
          %962 = dma.hbm_to_vmem [thread:$0]  %s955, 10240, %s957, [#allocation6], 128, 128, 8
        $region72: #{tpu_custom_call.1} parent=11 // pred_fallthru
          _
        // Predicated region
        $region73: #{tpu_custom_call.1} parent=11 // pred_check
          %p963 = pneg %p530
        $region74: #{tpu_custom_call.1} parent=11 // pred_check_branch
          %965 = sbr.rel (%p963) target = $region76
        $region75: #{tpu_custom_call.1} parent=11 // pred_region
          _
        $region76: #{tpu_custom_call.1} parent=11 // pred_fallthru
          _
        // Predicated region
        $region77: #{tpu_custom_call.1} parent=11 // pred_check
          %p966 = pneg %p551
        $region78: #{tpu_custom_call.1} parent=11 // pred_check_branch
          %968 = sbr.rel (%p966) target = $region80
        $region79: #{tpu_custom_call.1} parent=11 // pred_region
          %970 = vsyncadd [#allocation9], 0
          %s971 = sshll.u32 %s41, 4
          %s972 = int_to_ptr.hbm [resolvable:$true] %s971
          %s973 = sshll.u32 [#allocation8], 4
          %s974 = int_to_ptr.vmem [resolvable:$true] %s973
          %979 = dma.hbm_to_vmem [thread:$0]  %s972, 6144, %s974, [#allocation9], 64, 64, 4
        $region80: #{tpu_custom_call.1} parent=11 // pred_fallthru
          _
        // Predicated region
        $region81: #{tpu_custom_call.1} parent=11 // pred_check
          %p980 = pneg %p572
        $region82: #{tpu_custom_call.1} parent=11 // pred_check_branch
          %982 = sbr.rel (%p980) target = $region84
        $region83: #{tpu_custom_call.1} parent=11 // pred_region
          _
        $region84: #{tpu_custom_call.1} parent=11 // pred_fallthru
          _
        // Predicated region
        $region85: #{tpu_custom_call.1} parent=11 // pred_check
          %p983 = pneg %p593
        $region86: #{tpu_custom_call.1} parent=11 // pred_check_branch
          %985 = sbr.rel (%p983) target = $region88
        $region87: #{tpu_custom_call.1} parent=11 // pred_region
          _
        $region88: #{tpu_custom_call.1} parent=11 // pred_fallthru
          _
        // Predicated region
        $region89: #{tpu_custom_call.1} parent=11 // pred_check
          %p986 = pneg %p614
        $region90: #{tpu_custom_call.1} parent=11 // pred_check_branch
          %988 = sbr.rel (%p986) target = $region92
        $region91: #{tpu_custom_call.1} parent=11 // pred_region
          _
        $region92: #{tpu_custom_call.1} parent=11 // pred_fallthru
          _
        // Predicated region
        $region93: #{tpu_custom_call.1} parent=11 // pred_check
          %p989 = pneg %p635
        $region94: #{tpu_custom_call.1} parent=11 // pred_check_branch
          %991 = sbr.rel (%p989) target = $region96
        $region95: #{tpu_custom_call.1} parent=11 // pred_region
          _
        $region96: #{tpu_custom_call.1} parent=11 // pred_fallthru
          _
        // Predicated region
        $region97: #{tpu_custom_call.1} parent=11 // pred_check
          %p992 = pneg %p656
        $region98: #{tpu_custom_call.1} parent=11 // pred_check_branch
          %994 = sbr.rel (%p992) target = $region100
        $region99: #{tpu_custom_call.1} parent=11 // pred_region
          _
        $region100: #{tpu_custom_call.1} parent=11 // pred_fallthru
          _
        // Predicated region
        $region101: #{tpu_custom_call.1} parent=11 // pred_check
          %p995 = pneg %p677
        $region102: #{tpu_custom_call.1} parent=11 // pred_check_branch
          %997 = sbr.rel (%p995) target = $region104
        $region103: #{tpu_custom_call.1} parent=11 // pred_region
          _
        $region104: #{tpu_custom_call.1} parent=11 // pred_fallthru
          _
        // Predicated region
        $region105: #{tpu_custom_call.1} parent=11 // pred_check
          %p998 = pneg %p698
        $region106: #{tpu_custom_call.1} parent=11 // pred_check_branch
          %1000 = sbr.rel (%p998) target = $region108
        $region107: #{tpu_custom_call.1} parent=11 // pred_region
          _
        $region108: #{tpu_custom_call.1} parent=11 // pred_fallthru
          _
        // Predicated region
        $region109: #{tpu_custom_call.1} parent=11 // pred_check
          %p1001 = pneg %p719
        $region110: #{tpu_custom_call.1} parent=11 // pred_check_branch
          %1003 = sbr.rel (%p1001) target = $region112
        $region111: #{tpu_custom_call.1} parent=11 // pred_region
          _
        $region112: #{tpu_custom_call.1} parent=11 // pred_fallthru
          _
        // Predicated region
        $region113: #{tpu_custom_call.1} parent=11 // pred_check
          %p1004 = pneg %p740
        $region114: #{tpu_custom_call.1} parent=11 // pred_check_branch
          %1006 = sbr.rel (%p1004) target = $region116
        $region115: #{tpu_custom_call.1} parent=11 // pred_region
          _
        $region116: #{tpu_custom_call.1} parent=11 // pred_fallthru
          _
        // Predicated region
        $region117: #{tpu_custom_call.1} parent=11 // pred_check
          %p1007 = pneg %p761
        $region118: #{tpu_custom_call.1} parent=11 // pred_check_branch
          %1009 = sbr.rel (%p1007) target = $region120
        $region119: #{tpu_custom_call.1} parent=11 // pred_region
          _
        $region120: #{tpu_custom_call.1} parent=11 // pred_fallthru
          _
        // Predicated region
        $region121: #{tpu_custom_call.1} parent=11 // pred_check
          %p1010 = pneg %p782
        $region122: #{tpu_custom_call.1} parent=11 // pred_check_branch
          %1012 = sbr.rel (%p1010) target = $region124
        $region123: #{tpu_custom_call.1} parent=11 // pred_region
          _
        $region124: #{tpu_custom_call.1} parent=11 // pred_fallthru
          _
        // Predicated region
        $region125: #{tpu_custom_call.1} parent=11 // pred_check
          %p1013 = pneg %p803
        $region126: #{tpu_custom_call.1} parent=11 // pred_check_branch
          %1015 = sbr.rel (%p1013) target = $region128
        $region127: #{tpu_custom_call.1} parent=11 // pred_region
          _
        $region128: #{tpu_custom_call.1} parent=11 // pred_fallthru
          _
        // Predicated region
        $region129: #{tpu_custom_call.1} parent=11 // pred_check
          %p1016 = pneg %p824
        $region130: #{tpu_custom_call.1} parent=11 // pred_check_branch
          %1018 = sbr.rel (%p1016) target = $region132
        $region131: #{tpu_custom_call.1} parent=11 // pred_region
          _
        $region132: #{tpu_custom_call.1} parent=11 // pred_fallthru
          _
        // Predicated region
        $region133: #{tpu_custom_call.1} parent=11 // pred_check
          %p1019 = pneg %p845
        $region134: #{tpu_custom_call.1} parent=11 // pred_check_branch
          %1021 = sbr.rel (%p1019) target = $region136
        $region135: #{tpu_custom_call.1} parent=11 // pred_region
          _
        $region136: #{tpu_custom_call.1} parent=11 // pred_fallthru
          _
        // Predicated region
        $region137: #{tpu_custom_call.1} parent=11 // pred_check
          %p1022 = pneg %p866
        $region138: #{tpu_custom_call.1} parent=11 // pred_check_branch
          %1024 = sbr.rel (%p1022) target = $region140
        $region139: #{tpu_custom_call.1} parent=11 // pred_region
          _
        $region140: #{tpu_custom_call.1} parent=11 // pred_fallthru
          _
      $region12: #{tpu_custom_call.1} parent=5 // pred_fallthru
        _
      %p1025 = scmp.lt.s32.totalorder %s90, 2
      // Predicated region
      $region141: #{tpu_custom_call.1} parent=5 // pred_check
        %p1026 = pneg %p1025
      $region142: #{tpu_custom_call.1} parent=5 // pred_check_branch
        %1028 = sbr.rel (%p1026) target = $region144
      $region143: #{tpu_custom_call.1} parent=5 // pred_region
        // Predicated region
        $region145: #{tpu_custom_call.1} parent=143 // pred_check
          %p1029 = pneg %p110
        $region146: #{tpu_custom_call.1} parent=143 // pred_check_branch
          %1031 = sbr.rel (%p1029) target = $region148
        $region147: #{tpu_custom_call.1} parent=143 // pred_region
          %p1032 = scmp.lt.s32.totalorder %s90, 1
          %s1033 = scalar_select %p1032, %s90, 1
          %s1034 = smul.addr %s1033, 2
          %s1035 = smul.addr %s1034, 8
          %s1036 = scalar_lea.vmem %s1, %s1035
        $region148: #{tpu_custom_call.1} parent=143 // pred_fallthru
          _
        // Predicated region
        $region149: #{tpu_custom_call.1} parent=143 // pred_check
          %p1037 = pneg %p136
        $region150: #{tpu_custom_call.1} parent=143 // pred_check_branch
          %1039 = sbr.rel (%p1037) target = $region152
        $region151: #{tpu_custom_call.1} parent=143 // pred_region
          %p1040 = scmp.lt.s32.totalorder %s90, 1
          %s1041 = scalar_select %p1040, %s90, 1
          %s1042 = smul.addr %s1041, 2
          %s1043 = smul.addr %s1042, 8
          %s1044 = scalar_lea.vmem %s3, %s1043
        $region152: #{tpu_custom_call.1} parent=143 // pred_fallthru
          _
        // Predicated region
        $region153: #{tpu_custom_call.1} parent=143 // pred_check
          %p1045 = pneg %p162
        $region154: #{tpu_custom_call.1} parent=143 // pred_check_branch
          %1047 = sbr.rel (%p1045) target = $region156
        $region155: #{tpu_custom_call.1} parent=143 // pred_region
          %p1048 = scmp.lt.s32.totalorder %s90, 1
          %s1049 = scalar_select %p1048, %s90, 1
          %s1050 = smul.addr %s1049, 2
          %s1051 = smul.addr %s1050, 8
          %s1052 = scalar_lea.vmem %s5, %s1051
        $region156: #{tpu_custom_call.1} parent=143 // pred_fallthru
          _
        // Predicated region
        $region157: #{tpu_custom_call.1} parent=143 // pred_check
          %p1053 = pneg %p188
        $region158: #{tpu_custom_call.1} parent=143 // pred_check_branch
          %1055 = sbr.rel (%p1053) target = $region160
        $region159: #{tpu_custom_call.1} parent=143 // pred_region
          %p1056 = scmp.lt.s32.totalorder %s90, 1
          %s1057 = scalar_select %p1056, %s90, 1
          %s1058 = smul.addr %s1057, 2
          %s1059 = smul.addr %s1058, 8
          %s1060 = scalar_lea.vmem %s7, %s1059
        $region160: #{tpu_custom_call.1} parent=143 // pred_fallthru
          _
      $region144: #{tpu_custom_call.1} parent=5 // pred_fallthru
        _
      %p1061 = scmp.le.s32.totalorder 1, %s90
      %p1062 = scmp.lt.s32.totalorder %s90, 3
      %p1063 = pnand %p1061, %p1062
      %p1064 = pneg %p1063
      // Predicated region
      $region161: #{tpu_custom_call.1} parent=5 // pred_check
        _
      $region162: #{tpu_custom_call.1} parent=5 // pred_check_branch
        %1066 = sbr.rel (%p1063) target = $region164
      $region163: #{tpu_custom_call.1} parent=5 // pred_region
        %s1067 = ssub.s32 %s90, 1
        // Predicated region
        $region165: #{tpu_custom_call.1} parent=163 // pred_check
          %p1068 = pneg %p509
        $region166: #{tpu_custom_call.1} parent=163 // pred_check_branch
          %1070 = sbr.rel (%p1068) target = $region168
        $region167: #{tpu_custom_call.1} parent=163 // pred_region
          %1072 = dma.done [#allocation6], 10240
        $region168: #{tpu_custom_call.1} parent=163 // pred_fallthru
          _
        // Predicated region
        $region169: #{tpu_custom_call.1} parent=163 // pred_check
          %p1073 = pneg %p551
        $region170: #{tpu_custom_call.1} parent=163 // pred_check_branch
          %1075 = sbr.rel (%p1073) target = $region172
        $region171: #{tpu_custom_call.1} parent=163 // pred_region
          %1077 = dma.done [#allocation9], 6144
        $region172: #{tpu_custom_call.1} parent=163 // pred_fallthru
          _
        %p1078 = scmp.lt.s32.totalorder %s95, 1
        %s1079 = scalar_select %p1078, %s95, 1
        %s1080 = smul.addr %s1079, 2
        %s1081 = smul.addr %s1080, 8
        %s1082 = scalar_lea.vmem %s1, %s1081
        %p1083 = pneg %p116
        %p1084 = pneg %p113
        %p1085 = scmp.lt.s32.totalorder %s95, 1
        %s1086 = scalar_select %p1085, %s95, 1
        %s1087 = smul.addr %s1086, 2
        %s1088 = smul.addr %s1087, 8
        %s1089 = scalar_lea.vmem %s3, %s1088
        %p1090 = pneg %p142
        %p1091 = pneg %p139
        %p1092 = scmp.lt.s32.totalorder %s95, 1
        %s1093 = scalar_select %p1092, %s95, 1
        %s1094 = smul.addr %s1093, 2
        %s1095 = smul.addr %s1094, 8
        %s1096 = scalar_lea.vmem %s5, %s1095
        %p1097 = pneg %p168
        %p1098 = pneg %p165
        %p1099 = scmp.lt.s32.totalorder %s95, 1
        %s1100 = scalar_select %p1099, %s95, 1
        %s1101 = smul.addr %s1100, 2
        %s1102 = smul.addr %s1101, 8
        %s1103 = scalar_lea.vmem %s7, %s1102
        %p1104 = pneg %p194
        %p1105 = pneg %p191
        %p1106 = pneg %p215
        %p1107 = pneg %p212
        %p1108 = pneg %p236
        %p1109 = pneg %p233
        %p1110 = pneg %p257
        %p1111 = pneg %p254
        %p1112 = pneg %p278
        %p1113 = pneg %p275
        %p1114 = pneg %p299
        %p1115 = pneg %p296
        %p1116 = pneg %p320
        %p1117 = pneg %p317
        %p1118 = pneg %p341
        %p1119 = pneg %p338
        %p1120 = pneg %p362
        %p1121 = pneg %p359
        %p1122 = pneg %p383
        %p1123 = pneg %p380
        %p1124 = pneg %p404
        %p1125 = pneg %p401
        %p1126 = pneg %p425
        %p1127 = pneg %p422
        %p1128 = pneg %p446
        %p1129 = pneg %p443
        %p1130 = pneg %p467
        %p1131 = pneg %p464
        %p1132 = pneg %p488
        %p1133 = pneg %p485
        %p1134 = pneg %p509
        %p1135 = pneg %p506
        %p1136 = pneg %p530
        %p1137 = pneg %p527
        %p1138 = pneg %p551
        %p1139 = pneg %p548
        %p1140 = pneg %p572
        %p1141 = pneg %p569
        %p1142 = pneg %p593
        %p1143 = pneg %p590
        %p1144 = pneg %p614
        %p1145 = pneg %p611
        %p1146 = pneg %p635
        %p1147 = pneg %p632
        %p1148 = pneg %p656
        %p1149 = pneg %p653
        %p1150 = pneg %p677
        %p1151 = pneg %p674
        %p1152 = pneg %p698
        %p1153 = pneg %p695
        %p1154 = pneg %p719
        %p1155 = pneg %p716
        %p1156 = pneg %p740
        %p1157 = pneg %p737
        %p1158 = pneg %p761
        %p1159 = pneg %p758
        %p1160 = pneg %p782
        %p1161 = pneg %p779
        %p1162 = pneg %p803
        %p1163 = pneg %p800
        %p1164 = pneg %p824
        %p1165 = pneg %p821
        %p1166 = pneg %p845
        %p1167 = pneg %p842
        %p1168 = pneg %p866
        %p1169 = pneg %p863
        %p1170 = pneg %p892
        %p1171 = pneg %p889
        %s1172 = sand.u32 %s879, 1
        %s1173 = scalar_lea.sflag [#allocation7], %s1172
        %s1174 = sand.u32 %s879, 1
        %s1175 = smul.addr %s1174, 4
        %s1176 = scalar_lea.vmem [#allocation10], %s1175
        %p1177 = scmp.lt.s32.totalorder %s95, 1
        %s1178 = scalar_select %p1177, %s95, 1
        %s1179 = smul.addr %s1178, 2
        %s1180 = smul.addr %s1179, 8
        %s1181 = scalar_lea.vmem %s1, %s1180
        %p1182 = scmp.lt.s32.totalorder %s95, 1
        %s1183 = scalar_select %p1182, %s95, 1
        %s1184 = smul.addr %s1183, 2
        %s1185 = smul.addr %s1184, 8
        %s1186 = scalar_lea.vmem %s3, %s1185
        %p1187 = scmp.lt.s32.totalorder %s95, 1
        %s1188 = scalar_select %p1187, %s95, 1
        %s1189 = smul.addr %s1188, 2
        %s1190 = smul.addr %s1189, 8
        %s1191 = scalar_lea.vmem %s5, %s1190
        %p1192 = scmp.lt.s32.totalorder %s95, 1
        %s1193 = scalar_select %p1192, %s95, 1
        %s1194 = smul.addr %s1193, 2
        %s1195 = smul.addr %s1194, 8
        %s1196 = scalar_lea.vmem %s7, %s1195
        %v1198 = vld [vmem:[%s1181] sm:$0xff]
        %v1199 = vld [vmem:[%s1181 + $0x8] sm:$0xff]
        %v1200 = vld [vmem:[%s1186] sm:$0xff]
        %v1201 = vld [vmem:[%s1186 + $0x8] sm:$0xff]
        %vm1205 = vcmask 1046528
        %v1206 = vrot.slane 0.0, 1
        %v1207 = vrot.slane %v1200, 1
        %v1208 = vsel %vm1205, %v1206, %v1207
        %v1209 = vrot.slane %v1201, 1
        %v1210 = vsel %vm1205, %v1207, %v1209
        %1211 = vrot.lane.b32.xlu0 %v1208, 4
        %v1212 = vpop.permute.xlu0 %1211
        %1213 = vrot.lane.b32.xlu0 %v1210, 4
        %v1214 = vpop.permute.xlu0 %1213
        %1215 = vrot.lane.b32.xlu0 %v1209, 4
        %v1216 = vpop.permute.xlu0 %1215
        %vm1220 = vcmask 1045504
        %v1221 = vrot.slane 0.0, 2
        %v1222 = vrot.slane %v1200, 2
        %v1223 = vsel %vm1220, %v1221, %v1222
        %v1224 = vrot.slane %v1201, 2
        %v1225 = vsel %vm1220, %v1222, %v1224
        %1226 = vrot.lane.b32.xlu0 %v1223, 8
        %v1227 = vpop.permute.xlu0 %1226
        %1228 = vrot.lane.b32.xlu0 %v1225, 8
        %v1229 = vpop.permute.xlu0 %1228
        %1230 = vrot.lane.b32.xlu0 %v1224, 8
        %v1231 = vpop.permute.xlu0 %1230
        %vm1235 = vcmask 1044480
        %v1236 = vrot.slane 0.0, 3
        %v1237 = vrot.slane %v1200, 3
        %v1238 = vsel %vm1235, %v1236, %v1237
        %v1239 = vrot.slane %v1201, 3
        %v1240 = vsel %vm1235, %v1237, %v1239
        %1241 = vrot.lane.b32.xlu0 %v1238, 12
        %v1242 = vpop.permute.xlu0 %1241
        %1243 = vrot.lane.b32.xlu0 %v1240, 12
        %v1244 = vpop.permute.xlu0 %1243
        %1245 = vrot.lane.b32.xlu0 %v1239, 12
        %v1246 = vpop.permute.xlu0 %1245
        %vm1250 = vcmask 1043456
        %v1251 = vrot.slane 0.0, 4
        %v1252 = vrot.slane %v1200, 4
        %v1253 = vsel %vm1250, %v1251, %v1252
        %v1254 = vrot.slane %v1201, 4
        %v1255 = vsel %vm1250, %v1252, %v1254
        %1256 = vrot.lane.b32.xlu0 %v1253, 16
        %v1257 = vpop.permute.xlu0 %1256
        %1258 = vrot.lane.b32.xlu0 %v1255, 16
        %v1259 = vpop.permute.xlu0 %1258
        %1260 = vrot.lane.b32.xlu0 %v1254, 16
        %v1261 = vpop.permute.xlu0 %1260
        %vm1265 = vcmask 1042432
        %v1266 = vrot.slane %v1200, 5
        %v1267 = vrot.slane %v1201, 5
        %v1268 = vsel %vm1265, %v1266, %v1267
        %1269 = vrot.lane.b32.xlu0 %v1266, 20
        %v1270 = vpop.permute.xlu0 %1269
        %1271 = vrot.lane.b32.xlu0 %v1268, 20
        %v1272 = vpop.permute.xlu0 %1271
        %1273 = vrot.lane.b32.xlu0 %v1267, 20
        %v1274 = vpop.permute.xlu0 %1273
        %vm1278 = vcmask 1041408
        %v1279 = vrot.slane %v1200, 6
        %v1280 = vrot.slane %v1201, 6
        %v1281 = vsel %vm1278, %v1279, %v1280
        %v1282 = vrot.slane 0.0, 6
        %v1283 = vsel %vm1278, %v1280, %v1282
        %1284 = vrot.lane.b32.xlu0 %v1279, 24
        %v1285 = vpop.permute.xlu0 %1284
        %1286 = vrot.lane.b32.xlu0 %v1281, 24
        %v1287 = vpop.permute.xlu0 %1286
        %1288 = vrot.lane.b32.xlu0 %v1283, 24
        %v1289 = vpop.permute.xlu0 %1288
        %vm1293 = vcmask 1040384
        %v1294 = vrot.slane %v1200, 7
        %v1295 = vrot.slane %v1201, 7
        %v1296 = vsel %vm1293, %v1294, %v1295
        %v1297 = vrot.slane 0.0, 7
        %v1298 = vsel %vm1293, %v1295, %v1297
        %1299 = vrot.lane.b32.xlu0 %v1294, 28
        %v1300 = vpop.permute.xlu0 %1299
        %1301 = vrot.lane.b32.xlu0 %v1296, 28
        %v1302 = vpop.permute.xlu0 %1301
        %1303 = vrot.lane.b32.xlu0 %v1298, 28
        %v1304 = vpop.permute.xlu0 %1303
        %1308 = vrot.lane.b32.xlu0 %v1200, 32
        %v1309 = vpop.permute.xlu0 %1308
        %1310 = vrot.lane.b32.xlu0 %v1201, 32
        %v1311 = vpop.permute.xlu0 %1310
        %1312 = vrot.lane.b32.xlu0 0.0, 32
        %v1313 = vpop.permute.xlu0 %1312
        %v1317 = vsel %vm1205, %v1209, %v1206
        %1318 = vrot.lane.b32.xlu0 %v1210, 36
        %v1319 = vpop.permute.xlu0 %1318
        %1320 = vrot.lane.b32.xlu0 %v1317, 36
        %v1321 = vpop.permute.xlu0 %1320
        %1322 = vrot.lane.b32.xlu0 %v1206, 36
        %v1323 = vpop.permute.xlu0 %1322
        %v1327 = vsel %vm1220, %v1224, %v1221
        %1328 = vrot.lane.b32.xlu0 %v1225, 40
        %v1329 = vpop.permute.xlu0 %1328
        %1330 = vrot.lane.b32.xlu0 %v1327, 40
        %v1331 = vpop.permute.xlu0 %1330
        %1332 = vrot.lane.b32.xlu0 %v1221, 40
        %v1333 = vpop.permute.xlu0 %1332
        %vm1337 = vcmask 31744
        %v1338 = vsel %vm1337, 0.0, %v1212
        %v1339 = vsel %vm1337, %v1200, %v1214
        %v1340 = vsel %vm1337, %v1201, %v1216
        %vm1341 = vcmask 64512
        %v1342 = vsel %vm1341, %v1338, %v1227
        %v1343 = vsel %vm1341, %v1339, %v1229
        %v1344 = vsel %vm1341, %v1340, %v1231
        %vm1345 = vcmask 97280
        %v1346 = vsel %vm1345, %v1342, %v1242
        %v1347 = vsel %vm1345, %v1343, %v1244
        %v1348 = vsel %vm1345, %v1344, %v1246
        %vm1349 = vcmask 130048
        %v1350 = vsel %vm1349, %v1346, %v1257
        %v1351 = vsel %vm1349, %v1347, %v1259
        %v1352 = vsel %vm1349, %v1348, %v1261
        %vm1353 = vcmask 162816
        %v1354 = vsel %vm1353, %v1350, %v1270
        %v1355 = vsel %vm1353, %v1351, %v1272
        %v1356 = vsel %vm1353, %v1352, %v1274
        %vm1357 = vcmask 195584
        %v1358 = vsel %vm1357, %v1354, %v1285
        %v1359 = vsel %vm1357, %v1355, %v1287
        %v1360 = vsel %vm1357, %v1356, %v1289
        %vm1361 = vcmask 228352
        %v1362 = vsel %vm1361, %v1358, %v1300
        %v1363 = vsel %vm1361, %v1359, %v1302
        %v1364 = vsel %vm1361, %v1360, %v1304
        %vm1365 = vcmask 261120
        %v1366 = vsel %vm1365, %v1362, %v1309
        %v1367 = vsel %vm1365, %v1363, %v1311
        %v1368 = vsel %vm1365, %v1364, %v1313
        %vm1369 = vcmask 293888
        %v1370 = vsel %vm1369, %v1366, %v1319
        %v1371 = vsel %vm1369, %v1367, %v1321
        %v1372 = vsel %vm1369, %v1368, %v1323
        %vm1373 = vcmask 326656
        %v1374 = vsel %vm1373, %v1370, %v1329
        %v1375 = vsel %vm1373, %v1371, %v1331
        %v1376 = vsel %vm1373, %v1372, %v1333
        %v1377 = vpack.c.bf16 %v1375, %v1374
        %v1378 = vpack.c.bf16 %v1376, %v1376
        %v1379 = vld [vmem:[%s9] sm:$0xf]
        %v1380 = vld [vmem:[%s9 + $0x4] sm:$0xf]
        %v1381 = vld [vmem:[%s9 + $0x8] sm:$0xf]
        %v1382 = vld [vmem:[%s9 + $0xc] sm:$0xf]
        %v1383 = vld [vmem:[%s9 + $0x10] sm:$0xf]
        %v1384 = vld [vmem:[%s9 + $0x14] sm:$0x3]
        %v1385 = vld [vmem:[#allocation2] sm:$0x1]
        %v1387 = vperm.slane %v1385, 0
        %vm1389 = vsmask.f32 6400
        %v1391 = vshrl.u32 %v1377, 16
        %v1393 = vrot.slane %v1391, 1
        %v1394 = vshll.u32 %v1377, 16
        %v1396 = vrot.slane %v1394, 2
        %v1397 = vor.u32 %v1393, %v1396
        %v1399 = vshrl.u32 %v1378, 16
        %v1401 = vrot.slane %v1399, 1
        %v1402 = vshll.u32 %v1378, 16
        %v1404 = vrot.slane %v1402, 2
        %v1405 = vor.u32 %v1401, %v1404
        %v1406 = vsel %vm1389, %v1397, %v1405
        %v1413 = vunpack.c.l.b16 %v1379
        %v1414 = vunpack.c.l.b16 %v1380
        %v1415 = vunpack.c.l.b16 %v1381
        %v1416 = vunpack.c.l.b16 %v1382
        %v1417 = vunpack.c.l.b16 %v1383
        %v1418 = vunpack.c.l.b16 %v1384
        %v1419 = vpack.c.b16 %v1414, %v1413
        %v1420 = vpack.c.b16 %v1416, %v1415
        %v1421 = vpack.c.b16 %v1418, %v1417
        %vm1424 = vcmask 359424
        %v1426 = vsel %vm1424, %v1406, 0
        %v1429 = vsel %vm1220, %v1421, 0
        %1431 = vmatpush.bf16.msra.mxu0 0
        %1432 = vmatpush.bf16.msra.mxu0 0
        %1433 = vmatpush.bf16.msra.mxu0 0
        %1434 = vmatpush.bf16.msra.mxu0 0
        %1435 = vmatpush.bf16.msra.mxu0 0
        %1436 = vmatpush.bf16.msra.mxu0 %v1429
        %1437 = vmatpush.bf16.msra.mxu0 %v1420
        %1438 = vmatpush.bf16.msra.mxu0 %v1419
        %1439 = vmatmul.bf16.gmra.mxu0 %v1426
        %v1440 = vpop.f32.mrf.mxu0
        %v1441 = vadd.f32 %v1387, %v1440
        %v1442 = vpop.f32.mrf.mxu0
        %v1443 = vadd.f32 %v1387, %v1442
        %1444 = vdwg.mxu0
        %v1445 = vsub.f32 0.0, %v1441
        %v1446 = vsub.f32 0.0, %v1443
        %v1447 = vmul.f32 %v1445, 1.442695
        %v1448 = vpow.pop %v1447
        %v1449 = vmul.f32 %v1446, 1.442695
        %v1450 = vpow.pop %v1449
        %v1451 = vadd.f32 %v1448, 1.0
        %v1452 = vadd.f32 %v1450, 1.0
        %v1453 = vrcp.pop %v1451
        %v1454 = vmul.f32 %v1451, %v1453
        %v1455 = vsub.f32 1.0, %v1454
        %v1456 = vmul.f32 %v1453, %v1455
        %v1457 = vadd.f32 %v1453, %v1456
        %vm1458 = vweird.f32 %v1451
        %vm1459 = vweird.f32 %v1453
        %vm1460 = vmor %vm1458, %vm1459
        %v1461 = vsel %vm1460, %v1453, %v1457
        %v1462 = vand.u32 2147483647, %v1451
        %vm1463 = vcmp.eq.f32.partialorder %v1462, 8.507059e+37
        %v1464 = vand.u32 %v1451, 2147483648
        %v1465 = vor.u32 1.1754944e-38, %v1464
        %v1466 = vsel %vm1463, %v1465, %v1461
        %v1467 = vmul.f32 1.0, %v1466
        %v1468 = vrcp.pop %v1452
        %v1469 = vmul.f32 %v1452, %v1468
        %v1470 = vsub.f32 1.0, %v1469
        %v1471 = vmul.f32 %v1468, %v1470
        %v1472 = vadd.f32 %v1468, %v1471
        %vm1473 = vweird.f32 %v1452
        %vm1474 = vweird.f32 %v1468
        %vm1475 = vmor %vm1473, %vm1474
        %v1476 = vsel %vm1475, %v1468, %v1472
        %v1477 = vand.u32 2147483647, %v1452
        %vm1478 = vcmp.eq.f32.partialorder %v1477, 8.507059e+37
        %v1479 = vand.u32 %v1452, 2147483648
        %v1480 = vor.u32 1.1754944e-38, %v1479
        %v1481 = vsel %vm1478, %v1480, %v1476
        %v1482 = vmul.f32 1.0, %v1481
        %v1483 = vld [vmem:[%s1191] sm:$0xff]
        %v1484 = vld [vmem:[%s1191 + $0x8] sm:$0xff]
        %v1487 = vrot.slane %v1483, 1
        %v1488 = vsel %vm1205, %v1206, %v1487
        %v1489 = vrot.slane %v1484, 1
        %v1490 = vsel %vm1205, %v1487, %v1489
        %1491 = vrot.lane.b32.xlu0 %v1488, 4
        %v1492 = vpop.permute.xlu0 %1491
        %1493 = vrot.lane.b32.xlu0 %v1490, 4
        %v1494 = vpop.permute.xlu0 %1493
        %1495 = vrot.lane.b32.xlu0 %v1489, 4
        %v1496 = vpop.permute.xlu0 %1495
        %v1500 = vrot.slane %v1483, 2
        %v1501 = vsel %vm1220, %v1221, %v1500
        %v1502 = vrot.slane %v1484, 2
        %v1503 = vsel %vm1220, %v1500, %v1502
        %1504 = vrot.lane.b32.xlu0 %v1501, 8
        %v1505 = vpop.permute.xlu0 %1504
        %1506 = vrot.lane.b32.xlu0 %v1503, 8
        %v1507 = vpop.permute.xlu0 %1506
        %1508 = vrot.lane.b32.xlu0 %v1502, 8
        %v1509 = vpop.permute.xlu0 %1508
        %v1513 = vrot.slane %v1483, 3
        %v1514 = vsel %vm1235, %v1236, %v1513
        %v1515 = vrot.slane %v1484, 3
        %v1516 = vsel %vm1235, %v1513, %v1515
        %1517 = vrot.lane.b32.xlu0 %v1514, 12
        %v1518 = vpop.permute.xlu0 %1517
        %1519 = vrot.lane.b32.xlu0 %v1516, 12
        %v1520 = vpop.permute.xlu0 %1519
        %1521 = vrot.lane.b32.xlu0 %v1515, 12
        %v1522 = vpop.permute.xlu0 %1521
        %v1526 = vrot.slane %v1483, 4
        %v1527 = vsel %vm1250, %v1251, %v1526
        %v1528 = vrot.slane %v1484, 4
        %v1529 = vsel %vm1250, %v1526, %v1528
        %1530 = vrot.lane.b32.xlu0 %v1527, 16
        %v1531 = vpop.permute.xlu0 %1530
        %1532 = vrot.lane.b32.xlu0 %v1529, 16
        %v1533 = vpop.permute.xlu0 %1532
        %1534 = vrot.lane.b32.xlu0 %v1528, 16
        %v1535 = vpop.permute.xlu0 %1534
        %v1539 = vrot.slane %v1483, 5
        %v1540 = vrot.slane %v1484, 5
        %v1541 = vsel %vm1265, %v1539, %v1540
        %1542 = vrot.lane.b32.xlu0 %v1539, 20
        %v1543 = vpop.permute.xlu0 %1542
        %1544 = vrot.lane.b32.xlu0 %v1541, 20
        %v1545 = vpop.permute.xlu0 %1544
        %1546 = vrot.lane.b32.xlu0 %v1540, 20
        %v1547 = vpop.permute.xlu0 %1546
        %v1551 = vrot.slane %v1483, 6
        %v1552 = vrot.slane %v1484, 6
        %v1553 = vsel %vm1278, %v1551, %v1552
        %v1554 = vsel %vm1278, %v1552, %v1282
        %1555 = vrot.lane.b32.xlu0 %v1551, 24
        %v1556 = vpop.permute.xlu0 %1555
        %1557 = vrot.lane.b32.xlu0 %v1553, 24
        %v1558 = vpop.permute.xlu0 %1557
        %1559 = vrot.lane.b32.xlu0 %v1554, 24
        %v1560 = vpop.permute.xlu0 %1559
        %v1564 = vrot.slane %v1483, 7
        %v1565 = vrot.slane %v1484, 7
        %v1566 = vsel %vm1293, %v1564, %v1565
        %v1567 = vsel %vm1293, %v1565, %v1297
        %1568 = vrot.lane.b32.xlu0 %v1564, 28
        %v1569 = vpop.permute.xlu0 %1568
        %1570 = vrot.lane.b32.xlu0 %v1566, 28
        %v1571 = vpop.permute.xlu0 %1570
        %1572 = vrot.lane.b32.xlu0 %v1567, 28
        %v1573 = vpop.permute.xlu0 %1572
        %1577 = vrot.lane.b32.xlu0 %v1483, 32
        %v1578 = vpop.permute.xlu0 %1577
        %1579 = vrot.lane.b32.xlu0 %v1484, 32
        %v1580 = vpop.permute.xlu0 %1579
        %v1583 = vsel %vm1205, %v1489, %v1206
        %1584 = vrot.lane.b32.xlu0 %v1490, 36
        %v1585 = vpop.permute.xlu0 %1584
        %1586 = vrot.lane.b32.xlu0 %v1583, 36
        %v1587 = vpop.permute.xlu0 %1586
        %v1590 = vsel %vm1220, %v1502, %v1221
        %1591 = vrot.lane.b32.xlu0 %v1503, 40
        %v1592 = vpop.permute.xlu0 %1591
        %1593 = vrot.lane.b32.xlu0 %v1590, 40
        %v1594 = vpop.permute.xlu0 %1593
        %v1597 = vsel %vm1337, 0.0, %v1492
        %v1598 = vsel %vm1337, %v1483, %v1494
        %v1599 = vsel %vm1337, %v1484, %v1496
        %v1600 = vsel %vm1341, %v1597, %v1505
        %v1601 = vsel %vm1341, %v1598, %v1507
        %v1602 = vsel %vm1341, %v1599, %v1509
        %v1603 = vsel %vm1345, %v1600, %v1518
        %v1604 = vsel %vm1345, %v1601, %v1520
        %v1605 = vsel %vm1345, %v1602, %v1522
        %v1606 = vsel %vm1349, %v1603, %v1531
        %v1607 = vsel %vm1349, %v1604, %v1533
        %v1608 = vsel %vm1349, %v1605, %v1535
        %v1609 = vsel %vm1353, %v1606, %v1543
        %v1610 = vsel %vm1353, %v1607, %v1545
        %v1611 = vsel %vm1353, %v1608, %v1547
        %v1612 = vsel %vm1357, %v1609, %v1556
        %v1613 = vsel %vm1357, %v1610, %v1558
        %v1614 = vsel %vm1357, %v1611, %v1560
        %v1615 = vsel %vm1361, %v1612, %v1569
        %v1616 = vsel %vm1361, %v1613, %v1571
        %v1617 = vsel %vm1361, %v1614, %v1573
        %v1618 = vsel %vm1365, %v1615, %v1578
        %v1619 = vsel %vm1365, %v1616, %v1580
        %v1620 = vsel %vm1365, %v1617, %v1313
        %v1621 = vsel %vm1369, %v1618, %v1585
        %v1622 = vsel %vm1369, %v1619, %v1587
        %v1623 = vsel %vm1369, %v1620, %v1323
        %v1624 = vsel %vm1373, %v1621, %v1592
        %v1625 = vsel %vm1373, %v1622, %v1594
        %v1626 = vsel %vm1373, %v1623, %v1333
        %v1627 = vpack.c.bf16 %v1625, %v1624
        %v1628 = vpack.c.bf16 %v1626, %v1626
        %v1629 = vld [vmem:[%s13] sm:$0xf]
        %v1630 = vld [vmem:[%s13 + $0x4] sm:$0xf]
        %v1631 = vld [vmem:[%s13 + $0x8] sm:$0xf]
        %v1632 = vld [vmem:[%s13 + $0xc] sm:$0xf]
        %v1633 = vld [vmem:[%s13 + $0x10] sm:$0xf]
        %v1634 = vld [vmem:[%s13 + $0x14] sm:$0x3]
        %v1635 = vld [vmem:[#allocation3] sm:$0x1]
        %v1637 = vperm.slane %v1635, 0
        %v1640 = vshrl.u32 %v1627, 16
        %v1642 = vrot.slane %v1640, 1
        %v1643 = vshll.u32 %v1627, 16
        %v1645 = vrot.slane %v1643, 2
        %v1646 = vor.u32 %v1642, %v1645
        %v1648 = vshrl.u32 %v1628, 16
        %v1650 = vrot.slane %v1648, 1
        %v1651 = vshll.u32 %v1628, 16
        %v1653 = vrot.slane %v1651, 2
        %v1654 = vor.u32 %v1650, %v1653
        %v1655 = vsel %vm1389, %v1646, %v1654
        %v1662 = vunpack.c.l.b16 %v1629
        %v1663 = vunpack.c.l.b16 %v1630
        %v1664 = vunpack.c.l.b16 %v1631
        %v1665 = vunpack.c.l.b16 %v1632
        %v1666 = vunpack.c.l.b16 %v1633
        %v1667 = vunpack.c.l.b16 %v1634
        %v1668 = vpack.c.b16 %v1663, %v1662
        %v1669 = vpack.c.b16 %v1665, %v1664
        %v1670 = vpack.c.b16 %v1667, %v1666
        %v1674 = vsel %vm1424, %v1655, 0
        %v1677 = vsel %vm1220, %v1670, 0
        %1679 = vmatpush.bf16.msra.mxu0 0
        %1680 = vmatpush.bf16.msra.mxu0 0
        %1681 = vmatpush.bf16.msra.mxu0 0
        %1682 = vmatpush.bf16.msra.mxu0 0
        %1683 = vmatpush.bf16.msra.mxu0 0
        %1684 = vmatpush.bf16.msra.mxu0 %v1677
        %1685 = vmatpush.bf16.msra.mxu0 %v1669
        %1686 = vmatpush.bf16.msra.mxu0 %v1668
        %1687 = vmatmul.bf16.gmra.mxu0 %v1674
        %v1688 = vpop.f32.mrf.mxu0
        %v1689 = vadd.f32 %v1637, %v1688
        %v1690 = vpop.f32.mrf.mxu0
        %v1691 = vadd.f32 %v1637, %v1690
        %1692 = vdwg.mxu0
        %v1693 = vsub.f32 0.0, %v1689
        %v1694 = vsub.f32 0.0, %v1691
        %v1695 = vmul.f32 %v1693, 1.442695
        %v1696 = vpow.pop %v1695
        %v1697 = vmul.f32 %v1694, 1.442695
        %v1698 = vpow.pop %v1697
        %v1699 = vadd.f32 %v1696, 1.0
        %v1700 = vadd.f32 %v1698, 1.0
        %v1701 = vrcp.pop %v1699
        %v1702 = vmul.f32 %v1699, %v1701
        %v1703 = vsub.f32 1.0, %v1702
        %v1704 = vmul.f32 %v1701, %v1703
        %v1705 = vadd.f32 %v1701, %v1704
        %vm1706 = vweird.f32 %v1699
        %vm1707 = vweird.f32 %v1701
        %vm1708 = vmor %vm1706, %vm1707
        %v1709 = vsel %vm1708, %v1701, %v1705
        %v1710 = vand.u32 2147483647, %v1699
        %vm1711 = vcmp.eq.f32.partialorder %v1710, 8.507059e+37
        %v1712 = vand.u32 %v1699, 2147483648
        %v1713 = vor.u32 1.1754944e-38, %v1712
        %v1714 = vsel %vm1711, %v1713, %v1709
        %v1715 = vmul.f32 1.0, %v1714
        %v1716 = vrcp.pop %v1700
        %v1717 = vmul.f32 %v1700, %v1716
        %v1718 = vsub.f32 1.0, %v1717
        %v1719 = vmul.f32 %v1716, %v1718
        %v1720 = vadd.f32 %v1716, %v1719
        %vm1721 = vweird.f32 %v1700
        %vm1722 = vweird.f32 %v1716
        %vm1723 = vmor %vm1721, %vm1722
        %v1724 = vsel %vm1723, %v1716, %v1720
        %v1725 = vand.u32 2147483647, %v1700
        %vm1726 = vcmp.eq.f32.partialorder %v1725, 8.507059e+37
        %v1727 = vand.u32 %v1700, 2147483648
        %v1728 = vor.u32 1.1754944e-38, %v1727
        %v1729 = vsel %vm1726, %v1728, %v1724
        %v1730 = vmul.f32 1.0, %v1729
        %v1731 = vld [vmem:[%s1196] sm:$0xff]
        %v1732 = vld [vmem:[%s1196 + $0x8] sm:$0xff]
        %v1735 = vrot.slane %v1731, 1
        %v1736 = vsel %vm1205, %v1206, %v1735
        %v1737 = vrot.slane %v1732, 1
        %v1738 = vsel %vm1205, %v1735, %v1737
        %1739 = vrot.lane.b32.xlu0 %v1736, 4
        %v1740 = vpop.permute.xlu0 %1739
        %1741 = vrot.lane.b32.xlu0 %v1738, 4
        %v1742 = vpop.permute.xlu0 %1741
        %1743 = vrot.lane.b32.xlu0 %v1737, 4
        %v1744 = vpop.permute.xlu0 %1743
        %v1748 = vrot.slane %v1731, 2
        %v1749 = vsel %vm1220, %v1221, %v1748
        %v1750 = vrot.slane %v1732, 2
        %v1751 = vsel %vm1220, %v1748, %v1750
        %1752 = vrot.lane.b32.xlu0 %v1749, 8
        %v1753 = vpop.permute.xlu0 %1752
        %1754 = vrot.lane.b32.xlu0 %v1751, 8
        %v1755 = vpop.permute.xlu0 %1754
        %1756 = vrot.lane.b32.xlu0 %v1750, 8
        %v1757 = vpop.permute.xlu0 %1756
        %v1761 = vrot.slane %v1731, 3
        %v1762 = vsel %vm1235, %v1236, %v1761
        %v1763 = vrot.slane %v1732, 3
        %v1764 = vsel %vm1235, %v1761, %v1763
        %1765 = vrot.lane.b32.xlu0 %v1762, 12
        %v1766 = vpop.permute.xlu0 %1765
        %1767 = vrot.lane.b32.xlu0 %v1764, 12
        %v1768 = vpop.permute.xlu0 %1767
        %1769 = vrot.lane.b32.xlu0 %v1763, 12
        %v1770 = vpop.permute.xlu0 %1769
        %v1774 = vrot.slane %v1731, 4
        %v1775 = vsel %vm1250, %v1251, %v1774
        %v1776 = vrot.slane %v1732, 4
        %v1777 = vsel %vm1250, %v1774, %v1776
        %1778 = vrot.lane.b32.xlu0 %v1775, 16
        %v1779 = vpop.permute.xlu0 %1778
        %1780 = vrot.lane.b32.xlu0 %v1777, 16
        %v1781 = vpop.permute.xlu0 %1780
        %1782 = vrot.lane.b32.xlu0 %v1776, 16
        %v1783 = vpop.permute.xlu0 %1782
        %v1787 = vrot.slane %v1731, 5
        %v1788 = vrot.slane %v1732, 5
        %v1789 = vsel %vm1265, %v1787, %v1788
        %1790 = vrot.lane.b32.xlu0 %v1787, 20
        %v1791 = vpop.permute.xlu0 %1790
        %1792 = vrot.lane.b32.xlu0 %v1789, 20
        %v1793 = vpop.permute.xlu0 %1792
        %1794 = vrot.lane.b32.xlu0 %v1788, 20
        %v1795 = vpop.permute.xlu0 %1794
        %v1799 = vrot.slane %v1731, 6
        %v1800 = vrot.slane %v1732, 6
        %v1801 = vsel %vm1278, %v1799, %v1800
        %v1802 = vsel %vm1278, %v1800, %v1282
        %1803 = vrot.lane.b32.xlu0 %v1799, 24
        %v1804 = vpop.permute.xlu0 %1803
        %1805 = vrot.lane.b32.xlu0 %v1801, 24
        %v1806 = vpop.permute.xlu0 %1805
        %1807 = vrot.lane.b32.xlu0 %v1802, 24
        %v1808 = vpop.permute.xlu0 %1807
        %v1812 = vrot.slane %v1731, 7
        %v1813 = vrot.slane %v1732, 7
        %v1814 = vsel %vm1293, %v1812, %v1813
        %v1815 = vsel %vm1293, %v1813, %v1297
        %1816 = vrot.lane.b32.xlu0 %v1812, 28
        %v1817 = vpop.permute.xlu0 %1816
        %1818 = vrot.lane.b32.xlu0 %v1814, 28
        %v1819 = vpop.permute.xlu0 %1818
        %1820 = vrot.lane.b32.xlu0 %v1815, 28
        %v1821 = vpop.permute.xlu0 %1820
        %1825 = vrot.lane.b32.xlu0 %v1731, 32
        %v1826 = vpop.permute.xlu0 %1825
        %1827 = vrot.lane.b32.xlu0 %v1732, 32
        %v1828 = vpop.permute.xlu0 %1827
        %v1831 = vsel %vm1205, %v1737, %v1206
        %1832 = vrot.lane.b32.xlu0 %v1738, 36
        %v1833 = vpop.permute.xlu0 %1832
        %1834 = vrot.lane.b32.xlu0 %v1831, 36
        %v1835 = vpop.permute.xlu0 %1834
        %v1838 = vsel %vm1220, %v1750, %v1221
        %1839 = vrot.lane.b32.xlu0 %v1751, 40
        %v1840 = vpop.permute.xlu0 %1839
        %1841 = vrot.lane.b32.xlu0 %v1838, 40
        %v1842 = vpop.permute.xlu0 %1841
        %v1845 = vsel %vm1337, 0.0, %v1740
        %v1846 = vsel %vm1337, %v1731, %v1742
        %v1847 = vsel %vm1337, %v1732, %v1744
        %v1848 = vsel %vm1341, %v1845, %v1753
        %v1849 = vsel %vm1341, %v1846, %v1755
        %v1850 = vsel %vm1341, %v1847, %v1757
        %v1851 = vsel %vm1345, %v1848, %v1766
        %v1852 = vsel %vm1345, %v1849, %v1768
        %v1853 = vsel %vm1345, %v1850, %v1770
        %v1854 = vsel %vm1349, %v1851, %v1779
        %v1855 = vsel %vm1349, %v1852, %v1781
        %v1856 = vsel %vm1349, %v1853, %v1783
        %v1857 = vsel %vm1353, %v1854, %v1791
        %v1858 = vsel %vm1353, %v1855, %v1793
        %v1859 = vsel %vm1353, %v1856, %v1795
        %v1860 = vsel %vm1357, %v1857, %v1804
        %v1861 = vsel %vm1357, %v1858, %v1806
        %v1862 = vsel %vm1357, %v1859, %v1808
        %v1863 = vsel %vm1361, %v1860, %v1817
        %v1864 = vsel %vm1361, %v1861, %v1819
        %v1865 = vsel %vm1361, %v1862, %v1821
        %v1866 = vsel %vm1365, %v1863, %v1826
        %v1867 = vsel %vm1365, %v1864, %v1828
        %v1868 = vsel %vm1365, %v1865, %v1313
        %v1869 = vsel %vm1369, %v1866, %v1833
        %v1870 = vsel %vm1369, %v1867, %v1835
        %v1871 = vsel %vm1369, %v1868, %v1323
        %v1872 = vsel %vm1373, %v1869, %v1840
        %v1873 = vsel %vm1373, %v1870, %v1842
        %v1874 = vsel %vm1373, %v1871, %v1333
        %v1875 = vpack.c.bf16 %v1873, %v1872
        %v1876 = vpack.c.bf16 %v1874, %v1874
        %v1877 = vld [vmem:[%s17] sm:$0xf]
        %v1878 = vld [vmem:[%s17 + $0x4] sm:$0xf]
        %v1879 = vld [vmem:[%s17 + $0x8] sm:$0xf]
        %v1880 = vld [vmem:[%s17 + $0xc] sm:$0xf]
        %v1881 = vld [vmem:[%s17 + $0x10] sm:$0xf]
        %v1882 = vld [vmem:[%s17 + $0x14] sm:$0x3]
        %v1883 = vld [vmem:[#allocation4] sm:$0x1]
        %v1885 = vperm.slane %v1883, 0
        %v1888 = vshrl.u32 %v1875, 16
        %v1890 = vrot.slane %v1888, 1
        %v1891 = vshll.u32 %v1875, 16
        %v1893 = vrot.slane %v1891, 2
        %v1894 = vor.u32 %v1890, %v1893
        %v1896 = vshrl.u32 %v1876, 16
        %v1898 = vrot.slane %v1896, 1
        %v1899 = vshll.u32 %v1876, 16
        %v1901 = vrot.slane %v1899, 2
        %v1902 = vor.u32 %v1898, %v1901
        %v1903 = vsel %vm1389, %v1894, %v1902
        %v1910 = vunpack.c.l.b16 %v1877
        %v1911 = vunpack.c.l.b16 %v1878
        %v1912 = vunpack.c.l.b16 %v1879
        %v1913 = vunpack.c.l.b16 %v1880
        %v1914 = vunpack.c.l.b16 %v1881
        %v1915 = vunpack.c.l.b16 %v1882
        %v1916 = vpack.c.b16 %v1911, %v1910
        %v1917 = vpack.c.b16 %v1913, %v1912
        %v1918 = vpack.c.b16 %v1915, %v1914
        %v1922 = vsel %vm1424, %v1903, 0
        %v1925 = vsel %vm1220, %v1918, 0
        %1927 = vmatpush.bf16.msra.mxu0 0
        %1928 = vmatpush.bf16.msra.mxu0 0
        %1929 = vmatpush.bf16.msra.mxu0 0
        %1930 = vmatpush.bf16.msra.mxu0 0
        %1931 = vmatpush.bf16.msra.mxu0 0
        %1932 = vmatpush.bf16.msra.mxu0 %v1925
        %1933 = vmatpush.bf16.msra.mxu0 %v1917
        %1934 = vmatpush.bf16.msra.mxu0 %v1916
        %1935 = vmatmul.bf16.gmra.mxu0 %v1922
        %v1936 = vpop.f32.mrf.mxu0
        %v1937 = vadd.f32 %v1885, %v1936
        %v1938 = vpop.f32.mrf.mxu0
        %v1939 = vadd.f32 %v1885, %v1938
        %1940 = vdwg.mxu0
        %v1941 = vsub.f32 0.0, %v1937
        %v1942 = vsub.f32 0.0, %v1939
        %v1943 = vmul.f32 %v1941, 1.442695
        %v1944 = vpow.pop %v1943
        %v1945 = vmul.f32 %v1942, 1.442695
        %v1946 = vpow.pop %v1945
        %v1947 = vadd.f32 %v1944, 1.0
        %v1948 = vadd.f32 %v1946, 1.0
        %v1949 = vrcp.pop %v1947
        %v1950 = vmul.f32 %v1947, %v1949
        %v1951 = vsub.f32 1.0, %v1950
        %v1952 = vmul.f32 %v1949, %v1951
        %v1953 = vadd.f32 %v1949, %v1952
        %vm1954 = vweird.f32 %v1947
        %vm1955 = vweird.f32 %v1949
        %vm1956 = vmor %vm1954, %vm1955
        %v1957 = vsel %vm1956, %v1949, %v1953
        %v1958 = vand.u32 2147483647, %v1947
        %vm1959 = vcmp.eq.f32.partialorder %v1958, 8.507059e+37
        %v1960 = vand.u32 %v1947, 2147483648
        %v1961 = vor.u32 1.1754944e-38, %v1960
        %v1962 = vsel %vm1959, %v1961, %v1957
        %v1963 = vmul.f32 1.0, %v1962
        %v1964 = vrcp.pop %v1948
        %v1965 = vmul.f32 %v1948, %v1964
        %v1966 = vsub.f32 1.0, %v1965
        %v1967 = vmul.f32 %v1964, %v1966
        %v1968 = vadd.f32 %v1964, %v1967
        %vm1969 = vweird.f32 %v1948
        %vm1970 = vweird.f32 %v1964
        %vm1971 = vmor %vm1969, %vm1970
        %v1972 = vsel %vm1971, %v1964, %v1968
        %v1973 = vand.u32 2147483647, %v1948
        %vm1974 = vcmp.eq.f32.partialorder %v1973, 8.507059e+37
        %v1975 = vand.u32 %v1948, 2147483648
        %v1976 = vor.u32 1.1754944e-38, %v1975
        %v1977 = vsel %vm1974, %v1976, %v1972
        %v1978 = vmul.f32 1.0, %v1977
        %v1981 = vrot.slane %v1198, 1
        %v1982 = vsel %vm1205, %v1206, %v1981
        %v1983 = vrot.slane %v1199, 1
        %v1984 = vsel %vm1205, %v1981, %v1983
        %1985 = vrot.lane.b32.xlu0 %v1982, 4
        %v1986 = vpop.permute.xlu0 %1985
        %1987 = vrot.lane.b32.xlu0 %v1984, 4
        %v1988 = vpop.permute.xlu0 %1987
        %1989 = vrot.lane.b32.xlu0 %v1983, 4
        %v1990 = vpop.permute.xlu0 %1989
        %v1994 = vrot.slane %v1198, 2
        %v1995 = vsel %vm1220, %v1221, %v1994
        %v1996 = vrot.slane %v1199, 2
        %v1997 = vsel %vm1220, %v1994, %v1996
        %1998 = vrot.lane.b32.xlu0 %v1995, 8
        %v1999 = vpop.permute.xlu0 %1998
        %2000 = vrot.lane.b32.xlu0 %v1997, 8
        %v2001 = vpop.permute.xlu0 %2000
        %2002 = vrot.lane.b32.xlu0 %v1996, 8
        %v2003 = vpop.permute.xlu0 %2002
        %v2007 = vrot.slane %v1198, 3
        %v2008 = vrot.slane %v1199, 3
        %v2009 = vsel %vm1235, %v2007, %v2008
        %2010 = vrot.lane.b32.xlu0 %v2007, 12
        %v2011 = vpop.permute.xlu0 %2010
        %2012 = vrot.lane.b32.xlu0 %v2009, 12
        %v2013 = vpop.permute.xlu0 %2012
        %2014 = vrot.lane.b32.xlu0 %v2008, 12
        %v2015 = vpop.permute.xlu0 %2014
        %v2019 = vrot.slane %v1198, 4
        %v2020 = vrot.slane %v1199, 4
        %v2021 = vsel %vm1250, %v2019, %v2020
        %v2022 = vsel %vm1250, %v2020, %v1251
        %2023 = vrot.lane.b32.xlu0 %v2019, 16
        %v2024 = vpop.permute.xlu0 %2023
        %2025 = vrot.lane.b32.xlu0 %v2021, 16
        %v2026 = vpop.permute.xlu0 %2025
        %2027 = vrot.lane.b32.xlu0 %v2022, 16
        %v2028 = vpop.permute.xlu0 %2027
        %v2032 = vrot.slane %v1198, 5
        %v2033 = vrot.slane %v1199, 5
        %v2034 = vsel %vm1265, %v2032, %v2033
        %v2035 = vrot.slane 0.0, 5
        %v2036 = vsel %vm1265, %v2033, %v2035
        %2037 = vrot.lane.b32.xlu0 %v2032, 20
        %v2038 = vpop.permute.xlu0 %2037
        %2039 = vrot.lane.b32.xlu0 %v2034, 20
        %v2040 = vpop.permute.xlu0 %2039
        %2041 = vrot.lane.b32.xlu0 %v2036, 20
        %v2042 = vpop.permute.xlu0 %2041
        %v2046 = vrot.slane %v1198, 6
        %v2047 = vrot.slane %v1199, 6
        %v2048 = vsel %vm1278, %v2046, %v2047
        %v2049 = vsel %vm1278, %v2047, %v1282
        %2050 = vrot.lane.b32.xlu0 %v2046, 24
        %v2051 = vpop.permute.xlu0 %2050
        %2052 = vrot.lane.b32.xlu0 %v2048, 24
        %v2053 = vpop.permute.xlu0 %2052
        %2054 = vrot.lane.b32.xlu0 %v2049, 24
        %v2055 = vpop.permute.xlu0 %2054
        %v2059 = vsel %vm1337, 0.0, %v1986
        %v2060 = vsel %vm1337, %v1198, %v1988
        %v2061 = vsel %vm1337, %v1199, %v1990
        %v2062 = vsel %vm1341, %v2059, %v1999
        %v2063 = vsel %vm1341, %v2060, %v2001
        %v2064 = vsel %vm1341, %v2061, %v2003
        %v2065 = vsel %vm1345, %v2062, %v2011
        %v2066 = vsel %vm1345, %v2063, %v2013
        %v2067 = vsel %vm1345, %v2064, %v2015
        %v2068 = vsel %vm1349, %v2065, %v2024
        %v2069 = vsel %vm1349, %v2066, %v2026
        %v2070 = vsel %vm1349, %v2067, %v2028
        %v2071 = vsel %vm1353, %v2068, %v2038
        %v2072 = vsel %vm1353, %v2069, %v2040
        %v2073 = vsel %vm1353, %v2070, %v2042
        %v2074 = vsel %vm1357, %v2071, %v2051
        %v2075 = vsel %vm1357, %v2072, %v2053
        %v2076 = vsel %vm1357, %v2073, %v2055
        %v2077 = vpack.c.bf16 %v2075, %v2074
        %v2078 = vpack.c.bf16 %v2076, %v2076
        %v2079 = vld [vmem:[%s21] sm:$0xf]
        %v2080 = vld [vmem:[%s21 + $0x4] sm:$0xf]
        %v2081 = vld [vmem:[%s21 + $0x8] sm:$0xf]
        %v2082 = vld [vmem:[%s21 + $0xc] sm:$0x3]
        %v2083 = vld [vmem:[%s23] sm:$0x1]
        %v2085 = vperm.slane %v2083, 0
        %vm2087 = vsmask.f32 5376
        %v2089 = vshrl.u32 %v2077, 16
        %v2091 = vrot.slane %v2089, 2
        %v2092 = vshll.u32 %v2077, 16
        %v2094 = vrot.slane %v2092, 3
        %v2095 = vor.u32 %v2091, %v2094
        %v2097 = vshrl.u32 %v2078, 16
        %v2099 = vrot.slane %v2097, 2
        %v2100 = vshll.u32 %v2078, 16
        %v2102 = vrot.slane %v2100, 3
        %v2103 = vor.u32 %v2099, %v2102
        %v2104 = vsel %vm2087, %v2095, %v2103
        %v2109 = vunpack.c.l.b16 %v2079
        %v2110 = vunpack.c.l.b16 %v2080
        %v2111 = vunpack.c.l.b16 %v2081
        %v2112 = vunpack.c.l.b16 %v2082
        %v2113 = vpack.c.b16 %v2110, %v2109
        %v2114 = vpack.c.b16 %v2112, %v2111
        %v2117 = vsel %vm1361, %v2104, 0
        %v2120 = vsel %vm1220, %v2114, 0
        %2122 = vmatpush.bf16.msra.mxu0 0
        %2123 = vmatpush.bf16.msra.mxu0 0
        %2124 = vmatpush.bf16.msra.mxu0 0
        %2125 = vmatpush.bf16.msra.mxu0 0
        %2126 = vmatpush.bf16.msra.mxu0 0
        %2127 = vmatpush.bf16.msra.mxu0 0
        %2128 = vmatpush.bf16.msra.mxu0 %v2120
        %2129 = vmatpush.bf16.msra.mxu0 %v2113
        %2130 = vmatmul.bf16.gmra.mxu0 %v2117
        %v2131 = vpop.f32.mrf.mxu0
        %v2132 = vadd.f32 %v2085, %v2131
        %v2133 = vpop.f32.mrf.mxu0
        %v2134 = vadd.f32 %v2085, %v2133
        %2135 = vdwg.mxu0
        %v2136 = vmul.f32 %v2132, 1.442695
        %v2137 = vpow.pop %v2136
        %v2138 = vmul.f32 %v2134, 1.442695
        %v2139 = vpow.pop %v2138
        %v2140 = vadd.f32 %v2137, 1.0
        %v2141 = vadd.f32 %v2139, 1.0
        %v2142 = vlog2.pop %v2140
        %v2143 = vmul.f32 %v2142, 0.6931472
        %v2144 = vlog2.pop %v2141
        %v2145 = vmul.f32 %v2144, 0.6931472
        %v2146 = vtanh.pop %v2143
        %v2147 = vtanh.pop %v2145
        %v2148 = vmul.f32 %v2132, %v2146
        %v2149 = vmul.f32 %v2134, %v2147
        %2151 = vset.pattern.permute.xlu0 0
        %2152 = vperm.xlu0 %2151, %v1467
        %v2153 = vpop.permute.xlu0 %2152
        %2156 = vset.pattern.permute.xlu0 0
        %2157 = vperm.xlu0 %2156, %v1482
        %v2158 = vpop.permute.xlu0 %2157
        %v2160 = vmul.f32 %v2148, %v2153
        %v2161 = vmul.f32 %v2149, %v2158
        %v2164 = vrot.slane %v2160, 1
        %v2165 = vsel %vm1205, %v1206, %v2164
        %v2166 = vrot.slane %v2161, 1
        %v2167 = vsel %vm1205, %v2164, %v2166
        %2168 = vrot.lane.b32.xlu0 %v2165, 32
        %v2169 = vpop.permute.xlu0 %2168
        %2170 = vrot.lane.b32.xlu0 %v2167, 32
        %v2171 = vpop.permute.xlu0 %2170
        %2172 = vrot.lane.b32.xlu0 %v2166, 32
        %v2173 = vpop.permute.xlu0 %2172
        %v2177 = vrot.slane %v2160, 2
        %v2178 = vsel %vm1220, %v1221, %v2177
        %v2179 = vrot.slane %v2161, 2
        %v2180 = vsel %vm1220, %v2177, %v2179
        %2181 = vrot.lane.b32.xlu0 %v2178, 64
        %v2182 = vpop.permute.xlu0 %2181
        %2183 = vrot.lane.b32.xlu0 %v2180, 64
        %v2184 = vpop.permute.xlu0 %2183
        %2185 = vrot.lane.b32.xlu0 %v2179, 64
        %v2186 = vpop.permute.xlu0 %2185
        %v2190 = vrot.slane %v2160, 3
        %v2191 = vrot.slane %v2161, 3
        %v2192 = vsel %vm1235, %v2190, %v2191
        %2193 = vrot.lane.b32.xlu0 %v2190, 96
        %v2194 = vpop.permute.xlu0 %2193
        %2195 = vrot.lane.b32.xlu0 %v2192, 96
        %v2196 = vpop.permute.xlu0 %2195
        %2197 = vrot.lane.b32.xlu0 %v2191, 96
        %v2198 = vpop.permute.xlu0 %2197
        %v2202 = vrot.slane %v2160, 4
        %v2203 = vrot.slane %v2161, 4
        %v2204 = vsel %vm1250, %v2202, %v2203
        %v2205 = vsel %vm1250, %v2203, %v1251
        %v2209 = vrot.slane %v2160, 5
        %v2210 = vrot.slane %v2161, 5
        %v2211 = vsel %vm1265, %v2209, %v2210
        %v2212 = vsel %vm1265, %v2210, %v2035
        %2213 = vrot.lane.b32.xlu0 %v2209, 32
        %v2214 = vpop.permute.xlu0 %2213
        %2215 = vrot.lane.b32.xlu0 %v2211, 32
        %v2216 = vpop.permute.xlu0 %2215
        %2217 = vrot.lane.b32.xlu0 %v2212, 32
        %v2218 = vpop.permute.xlu0 %2217
        %v2222 = vrot.slane %v2160, 6
        %v2223 = vrot.slane %v2161, 6
        %v2224 = vsel %vm1278, %v2222, %v2223
        %v2225 = vsel %vm1278, %v2223, %v1282
        %2226 = vrot.lane.b32.xlu0 %v2222, 64
        %v2227 = vpop.permute.xlu0 %2226
        %2228 = vrot.lane.b32.xlu0 %v2224, 64
        %v2229 = vpop.permute.xlu0 %2228
        %2230 = vrot.lane.b32.xlu0 %v2225, 64
        %v2231 = vpop.permute.xlu0 %2230
        %v2235 = vsel %vm1365, 0.0, %v2169
        %v2236 = vsel %vm1365, %v2160, %v2171
        %v2237 = vsel %vm1365, %v2161, %v2173
        %vm2238 = vcmask 523264
        %v2239 = vsel %vm2238, %v2235, %v2182
        %v2240 = vsel %vm2238, %v2236, %v2184
        %v2241 = vsel %vm2238, %v2237, %v2186
        %vm2242 = vcmask 785408
        %v2243 = vsel %vm2242, %v2239, %v2194
        %v2244 = vsel %vm2242, %v2240, %v2196
        %v2245 = vsel %vm2242, %v2241, %v2198
        %v2246 = vsel %vm1365, %v2202, %v2214
        %v2247 = vsel %vm1365, %v2204, %v2216
        %v2248 = vsel %vm1365, %v2205, %v2218
        %v2249 = vsel %vm2238, %v2246, %v2227
        %v2250 = vsel %vm2238, %v2247, %v2229
        %v2251 = vsel %vm2238, %v2248, %v2231
        %v2252 = vpack.c.bf16 %v2244, %v2243
        %v2253 = vpack.c.bf16 %v2250, %v2249
        %v2254 = vpack.c.bf16 %v2245, %v2245
        %v2255 = vpack.c.bf16 %v2251, %v2251
        %v2256 = vld [vmem:[%s25] sm:$0xf]
        %v2257 = vld [vmem:[%s25 + $0x4] sm:$0xf]
        %v2258 = vld [vmem:[%s25 + $0x8] sm:$0xf]
        %v2259 = vld [vmem:[%s25 + $0xc] sm:$0xf]
        %v2260 = vld [vmem:[%s25 + $0x10] sm:$0xf]
        %v2261 = vld [vmem:[%s25 + $0x14] sm:$0xf]
        %v2262 = vld [vmem:[%s25 + $0x18] sm:$0xf]
        %v2263 = vld [vmem:[%s25 + $0x1c] sm:$0xf]
        %v2264 = vld [vmem:[%s25 + $0x20] sm:$0xf]
        %v2265 = vld [vmem:[%s25 + $0x24] sm:$0xf]
        %v2266 = vld [vmem:[%s25 + $0x28] sm:$0xf]
        %v2267 = vld [vmem:[%s25 + $0x2c] sm:$0xf]
        %v2268 = vld [vmem:[%s25 + $0x30] sm:$0xf]
        %v2269 = vld [vmem:[%s25 + $0x34] sm:$0xf]
        %v2270 = vld [vmem:[%s25 + $0x38] sm:$0xf]
        %v2271 = vld [vmem:[%s25 + $0x3c] sm:$0xf]
        %v2272 = vld [vmem:[%s25 + $0x40] sm:$0xf]
        %v2273 = vld [vmem:[%s25 + $0x44] sm:$0xf]
        %v2274 = vld [vmem:[%s25 + $0x48] sm:$0xf]
        %v2275 = vld [vmem:[%s25 + $0x4c] sm:$0xf]
        %v2276 = vld [vmem:[%s25 + $0x50] sm:$0xf]
        %v2277 = vld [vmem:[%s25 + $0x54] sm:$0xf]
        %v2278 = vld [vmem:[%s25 + $0x58] sm:$0xf]
        %v2279 = vld [vmem:[%s25 + $0x5c] sm:$0xf]
        %v2280 = vld [vmem:[%s25 + $0x60] sm:$0xf]
        %v2281 = vld [vmem:[%s25 + $0x64] sm:$0xf]
        %v2282 = vld [vmem:[%s25 + $0x68] sm:$0xf]
        %v2283 = vld [vmem:[%s25 + $0x6c] sm:$0xf]
        %v2284 = vld [vmem:[%s27] sm:$0x1]
        %v2286 = vperm.slane %v2284, 0
        %v2289 = vshrl.u32 %v2252, 16
        %v2291 = vrot.slane %v2289, 2
        %v2292 = vshll.u32 %v2252, 16
        %v2294 = vrot.slane %v2292, 3
        %v2295 = vor.u32 %v2291, %v2294
        %v2297 = vshrl.u32 %v2254, 16
        %v2299 = vrot.slane %v2297, 2
        %v2300 = vshll.u32 %v2254, 16
        %v2302 = vrot.slane %v2300, 3
        %v2303 = vor.u32 %v2299, %v2302
        %v2304 = vsel %vm2087, %v2295, %v2303
        %v2306 = vshrl.u32 %v2253, 16
        %v2308 = vrot.slane %v2306, 2
        %v2309 = vshll.u32 %v2253, 16
        %v2311 = vrot.slane %v2309, 3
        %v2312 = vor.u32 %v2308, %v2311
        %v2314 = vshrl.u32 %v2255, 16
        %v2316 = vrot.slane %v2314, 2
        %v2317 = vshll.u32 %v2255, 16
        %v2319 = vrot.slane %v2317, 3
        %v2320 = vor.u32 %v2316, %v2319
        %v2321 = vsel %vm2087, %v2312, %v2320
        %v2351 = vunpack.c.l.b16 %v2256
        %v2352 = vunpack.c.l.b16 %v2257
        %v2353 = vunpack.c.l.b16 %v2258
        %v2354 = vunpack.c.l.b16 %v2259
        %v2355 = vunpack.c.l.b16 %v2260
        %v2356 = vunpack.c.l.b16 %v2261
        %v2357 = vunpack.c.l.b16 %v2262
        %v2358 = vunpack.c.l.b16 %v2263
        %v2359 = vunpack.c.l.b16 %v2264
        %v2360 = vunpack.c.l.b16 %v2265
        %v2361 = vunpack.c.l.b16 %v2266
        %v2362 = vunpack.c.l.b16 %v2267
        %v2363 = vunpack.c.l.b16 %v2268
        %v2364 = vunpack.c.l.b16 %v2269
        %v2365 = vunpack.c.l.b16 %v2270
        %v2366 = vunpack.c.l.b16 %v2271
        %v2367 = vunpack.c.l.b16 %v2272
        %v2368 = vunpack.c.l.b16 %v2273
        %v2369 = vunpack.c.l.b16 %v2274
        %v2370 = vunpack.c.l.b16 %v2275
        %v2371 = vunpack.c.l.b16 %v2276
        %v2372 = vunpack.c.l.b16 %v2277
        %v2373 = vunpack.c.l.b16 %v2278
        %v2374 = vunpack.c.l.b16 %v2279
        %v2375 = vunpack.c.l.b16 %v2280
        %v2376 = vunpack.c.l.b16 %v2281
        %v2377 = vunpack.c.l.b16 %v2282
        %v2378 = vunpack.c.l.b16 %v2283
        %v2379 = vpack.c.b16 %v2352, %v2351
        %v2380 = vpack.c.b16 %v2354, %v2353
        %v2381 = vpack.c.b16 %v2356, %v2355
        %v2382 = vpack.c.b16 %v2358, %v2357
        %v2383 = vpack.c.b16 %v2360, %v2359
        %v2384 = vpack.c.b16 %v2362, %v2361
        %v2385 = vpack.c.b16 %v2364, %v2363
        %v2386 = vpack.c.b16 %v2366, %v2365
        %v2387 = vpack.c.b16 %v2368, %v2367
        %v2388 = vpack.c.b16 %v2370, %v2369
        %v2389 = vpack.c.b16 %v2372, %v2371
        %v2390 = vpack.c.b16 %v2374, %v2373
        %v2391 = vpack.c.b16 %v2376, %v2375
        %v2392 = vpack.c.b16 %v2378, %v2377
        %v2408 = vsel %vm2242, %v2321, 0
        %2410 = vmatpush.bf16.msra.mxu0 %v2386
        %2411 = vmatpush.bf16.msra.mxu0 %v2385
        %2412 = vmatpush.bf16.msra.mxu0 %v2384
        %2413 = vmatpush.bf16.msra.mxu0 %v2383
        %2414 = vmatpush.bf16.msra.mxu0 %v2382
        %2415 = vmatpush.bf16.msra.mxu0 %v2381
        %2416 = vmatpush.bf16.msra.mxu0 %v2380
        %2417 = vmatpush.bf16.msra.mxu0 %v2379
        %2418 = vmatmul.bf16.gmra.mxu0 %v2304
        %v2419 = vpop.f32.mrf.mxu0
        %v2420 = vadd.f32 %v2286, %v2419
        %v2421 = vpop.f32.mrf.mxu0
        %v2422 = vadd.f32 %v2286, %v2421
        %2423 = vdwg.mxu0
        %2424 = vmatpush.bf16.msra.mxu0 0
        %2425 = vmatpush.bf16.msra.mxu0 0
        %2426 = vmatpush.bf16.msra.mxu0 %v2392
        %2427 = vmatpush.bf16.msra.mxu0 %v2391
        %2428 = vmatpush.bf16.msra.mxu0 %v2390
        %2429 = vmatpush.bf16.msra.mxu0 %v2389
        %2430 = vmatpush.bf16.msra.mxu0 %v2388
        %2431 = vmatpush.bf16.msra.mxu0 %v2387
        %2432 = vmatmul.bf16.gmra.mxu0 %v2408
        %v2433 = vpop.f32.mrf.mxu0
        %v2434 = vadd.f32 %v2420, %v2433
        %v2435 = vpop.f32.mrf.mxu0
        %v2436 = vadd.f32 %v2422, %v2435
        %2437 = vdwg.mxu0
        %v2438 = vmul.f32 %v2434, 1.442695
        %v2439 = vpow.pop %v2438
        %v2440 = vmul.f32 %v2436, 1.442695
        %v2441 = vpow.pop %v2440
        %v2442 = vadd.f32 %v2439, 1.0
        %v2443 = vadd.f32 %v2441, 1.0
        %v2444 = vlog2.pop %v2442
        %v2445 = vmul.f32 %v2444, 0.6931472
        %v2446 = vlog2.pop %v2443
        %v2447 = vmul.f32 %v2446, 0.6931472
        %v2448 = vtanh.pop %v2445
        %v2449 = vtanh.pop %v2447
        %v2450 = vmul.f32 %v2434, %v2448
        %v2451 = vmul.f32 %v2436, %v2449
        %2453 = vset.pattern.permute.xlu0 0
        %2454 = vperm.xlu0 %2453, %v1715
        %v2455 = vpop.permute.xlu0 %2454
        %2458 = vset.pattern.permute.xlu0 0
        %2459 = vperm.xlu0 %2458, %v1730
        %v2460 = vpop.permute.xlu0 %2459
        %v2462 = vmul.f32 %v2450, %v2455
        %v2463 = vmul.f32 %v2451, %v2460
        %v2466 = vrot.slane %v2462, 1
        %v2467 = vsel %vm1205, %v1206, %v2466
        %v2468 = vrot.slane %v2463, 1
        %v2469 = vsel %vm1205, %v2466, %v2468
        %2470 = vrot.lane.b32.xlu0 %v2467, 32
        %v2471 = vpop.permute.xlu0 %2470
        %2472 = vrot.lane.b32.xlu0 %v2469, 32
        %v2473 = vpop.permute.xlu0 %2472
        %2474 = vrot.lane.b32.xlu0 %v2468, 32
        %v2475 = vpop.permute.xlu0 %2474
        %v2479 = vrot.slane %v2462, 2
        %v2480 = vsel %vm1220, %v1221, %v2479
        %v2481 = vrot.slane %v2463, 2
        %v2482 = vsel %vm1220, %v2479, %v2481
        %2483 = vrot.lane.b32.xlu0 %v2480, 64
        %v2484 = vpop.permute.xlu0 %2483
        %2485 = vrot.lane.b32.xlu0 %v2482, 64
        %v2486 = vpop.permute.xlu0 %2485
        %2487 = vrot.lane.b32.xlu0 %v2481, 64
        %v2488 = vpop.permute.xlu0 %2487
        %v2492 = vrot.slane %v2462, 3
        %v2493 = vrot.slane %v2463, 3
        %v2494 = vsel %vm1235, %v2492, %v2493
        %2495 = vrot.lane.b32.xlu0 %v2492, 96
        %v2496 = vpop.permute.xlu0 %2495
        %2497 = vrot.lane.b32.xlu0 %v2494, 96
        %v2498 = vpop.permute.xlu0 %2497
        %2499 = vrot.lane.b32.xlu0 %v2493, 96
        %v2500 = vpop.permute.xlu0 %2499
        %v2504 = vrot.slane %v2462, 4
        %v2505 = vrot.slane %v2463, 4
        %v2506 = vsel %vm1250, %v2504, %v2505
        %v2507 = vsel %vm1250, %v2505, %v1251
        %v2511 = vrot.slane %v2462, 5
        %v2512 = vrot.slane %v2463, 5
        %v2513 = vsel %vm1265, %v2511, %v2512
        %v2514 = vsel %vm1265, %v2512, %v2035
        %2515 = vrot.lane.b32.xlu0 %v2511, 32
        %v2516 = vpop.permute.xlu0 %2515
        %2517 = vrot.lane.b32.xlu0 %v2513, 32
        %v2518 = vpop.permute.xlu0 %2517
        %2519 = vrot.lane.b32.xlu0 %v2514, 32
        %v2520 = vpop.permute.xlu0 %2519
        %v2524 = vrot.slane %v2462, 6
        %v2525 = vrot.slane %v2463, 6
        %v2526 = vsel %vm1278, %v2524, %v2525
        %v2527 = vsel %vm1278, %v2525, %v1282
        %2528 = vrot.lane.b32.xlu0 %v2524, 64
        %v2529 = vpop.permute.xlu0 %2528
        %2530 = vrot.lane.b32.xlu0 %v2526, 64
        %v2531 = vpop.permute.xlu0 %2530
        %2532 = vrot.lane.b32.xlu0 %v2527, 64
        %v2533 = vpop.permute.xlu0 %2532
        %v2537 = vsel %vm1365, 0.0, %v2471
        %v2538 = vsel %vm1365, %v2462, %v2473
        %v2539 = vsel %vm1365, %v2463, %v2475
        %v2540 = vsel %vm2238, %v2537, %v2484
        %v2541 = vsel %vm2238, %v2538, %v2486
        %v2542 = vsel %vm2238, %v2539, %v2488
        %v2543 = vsel %vm2242, %v2540, %v2496
        %v2544 = vsel %vm2242, %v2541, %v2498
        %v2545 = vsel %vm2242, %v2542, %v2500
        %v2546 = vsel %vm1365, %v2504, %v2516
        %v2547 = vsel %vm1365, %v2506, %v2518
        %v2548 = vsel %vm1365, %v2507, %v2520
        %v2549 = vsel %vm2238, %v2546, %v2529
        %v2550 = vsel %vm2238, %v2547, %v2531
        %v2551 = vsel %vm2238, %v2548, %v2533
        %v2552 = vpack.c.bf16 %v2544, %v2543
        %v2553 = vpack.c.bf16 %v2550, %v2549
        %v2554 = vpack.c.bf16 %v2545, %v2545
        %v2555 = vpack.c.bf16 %v2551, %v2551
        %v2556 = vld [vmem:[%s29] sm:$0xf]
        %v2557 = vld [vmem:[%s29 + $0x4] sm:$0xf]
        %v2558 = vld [vmem:[%s29 + $0x8] sm:$0xf]
        %v2559 = vld [vmem:[%s29 + $0xc] sm:$0xf]
        %v2560 = vld [vmem:[%s29 + $0x10] sm:$0xf]
        %v2561 = vld [vmem:[%s29 + $0x14] sm:$0xf]
        %v2562 = vld [vmem:[%s29 + $0x18] sm:$0xf]
        %v2563 = vld [vmem:[%s29 + $0x1c] sm:$0xf]
        %v2564 = vld [vmem:[%s29 + $0x20] sm:$0xf]
        %v2565 = vld [vmem:[%s29 + $0x24] sm:$0xf]
        %v2566 = vld [vmem:[%s29 + $0x28] sm:$0xf]
        %v2567 = vld [vmem:[%s29 + $0x2c] sm:$0xf]
        %v2568 = vld [vmem:[%s29 + $0x30] sm:$0xf]
        %v2569 = vld [vmem:[%s29 + $0x34] sm:$0xf]
        %v2570 = vld [vmem:[%s29 + $0x38] sm:$0xf]
        %v2571 = vld [vmem:[%s29 + $0x3c] sm:$0xf]
        %v2572 = vld [vmem:[%s29 + $0x40] sm:$0xf]
        %v2573 = vld [vmem:[%s29 + $0x44] sm:$0xf]
        %v2574 = vld [vmem:[%s29 + $0x48] sm:$0xf]
        %v2575 = vld [vmem:[%s29 + $0x4c] sm:$0xf]
        %v2576 = vld [vmem:[%s29 + $0x50] sm:$0xf]
        %v2577 = vld [vmem:[%s29 + $0x54] sm:$0xf]
        %v2578 = vld [vmem:[%s29 + $0x58] sm:$0xf]
        %v2579 = vld [vmem:[%s29 + $0x5c] sm:$0xf]
        %v2580 = vld [vmem:[%s29 + $0x60] sm:$0xf]
        %v2581 = vld [vmem:[%s29 + $0x64] sm:$0xf]
        %v2582 = vld [vmem:[%s29 + $0x68] sm:$0xf]
        %v2583 = vld [vmem:[%s29 + $0x6c] sm:$0xf]
        %v2584 = vld [vmem:[%s31] sm:$0x1]
        %v2586 = vperm.slane %v2584, 0
        %v2589 = vshrl.u32 %v2552, 16
        %v2591 = vrot.slane %v2589, 2
        %v2592 = vshll.u32 %v2552, 16
        %v2594 = vrot.slane %v2592, 3
        %v2595 = vor.u32 %v2591, %v2594
        %v2597 = vshrl.u32 %v2554, 16
        %v2599 = vrot.slane %v2597, 2
        %v2600 = vshll.u32 %v2554, 16
        %v2602 = vrot.slane %v2600, 3
        %v2603 = vor.u32 %v2599, %v2602
        %v2604 = vsel %vm2087, %v2595, %v2603
        %v2606 = vshrl.u32 %v2553, 16
        %v2608 = vrot.slane %v2606, 2
        %v2609 = vshll.u32 %v2553, 16
        %v2611 = vrot.slane %v2609, 3
        %v2612 = vor.u32 %v2608, %v2611
        %v2614 = vshrl.u32 %v2555, 16
        %v2616 = vrot.slane %v2614, 2
        %v2617 = vshll.u32 %v2555, 16
        %v2619 = vrot.slane %v2617, 3
        %v2620 = vor.u32 %v2616, %v2619
        %v2621 = vsel %vm2087, %v2612, %v2620
        %v2651 = vunpack.c.l.b16 %v2556
        %v2652 = vunpack.c.l.b16 %v2557
        %v2653 = vunpack.c.l.b16 %v2558
        %v2654 = vunpack.c.l.b16 %v2559
        %v2655 = vunpack.c.l.b16 %v2560
        %v2656 = vunpack.c.l.b16 %v2561
        %v2657 = vunpack.c.l.b16 %v2562
        %v2658 = vunpack.c.l.b16 %v2563
        %v2659 = vunpack.c.l.b16 %v2564
        %v2660 = vunpack.c.l.b16 %v2565
        %v2661 = vunpack.c.l.b16 %v2566
        %v2662 = vunpack.c.l.b16 %v2567
        %v2663 = vunpack.c.l.b16 %v2568
        %v2664 = vunpack.c.l.b16 %v2569
        %v2665 = vunpack.c.l.b16 %v2570
        %v2666 = vunpack.c.l.b16 %v2571
        %v2667 = vunpack.c.l.b16 %v2572
        %v2668 = vunpack.c.l.b16 %v2573
        %v2669 = vunpack.c.l.b16 %v2574
        %v2670 = vunpack.c.l.b16 %v2575
        %v2671 = vunpack.c.l.b16 %v2576
        %v2672 = vunpack.c.l.b16 %v2577
        %v2673 = vunpack.c.l.b16 %v2578
        %v2674 = vunpack.c.l.b16 %v2579
        %v2675 = vunpack.c.l.b16 %v2580
        %v2676 = vunpack.c.l.b16 %v2581
        %v2677 = vunpack.c.l.b16 %v2582
        %v2678 = vunpack.c.l.b16 %v2583
        %v2679 = vpack.c.b16 %v2652, %v2651
        %v2680 = vpack.c.b16 %v2654, %v2653
        %v2681 = vpack.c.b16 %v2656, %v2655
        %v2682 = vpack.c.b16 %v2658, %v2657
        %v2683 = vpack.c.b16 %v2660, %v2659
        %v2684 = vpack.c.b16 %v2662, %v2661
        %v2685 = vpack.c.b16 %v2664, %v2663
        %v2686 = vpack.c.b16 %v2666, %v2665
        %v2687 = vpack.c.b16 %v2668, %v2667
        %v2688 = vpack.c.b16 %v2670, %v2669
        %v2689 = vpack.c.b16 %v2672, %v2671
        %v2690 = vpack.c.b16 %v2674, %v2673
        %v2691 = vpack.c.b16 %v2676, %v2675
        %v2692 = vpack.c.b16 %v2678, %v2677
        %v2708 = vsel %vm2242, %v2621, 0
        %2710 = vmatpush.bf16.msra.mxu0 %v2686
        %2711 = vmatpush.bf16.msra.mxu0 %v2685
        %2712 = vmatpush.bf16.msra.mxu0 %v2684
        %2713 = vmatpush.bf16.msra.mxu0 %v2683
        %2714 = vmatpush.bf16.msra.mxu0 %v2682
        %2715 = vmatpush.bf16.msra.mxu0 %v2681
        %2716 = vmatpush.bf16.msra.mxu0 %v2680
        %2717 = vmatpush.bf16.msra.mxu0 %v2679
        %2718 = vmatmul.bf16.gmra.mxu0 %v2604
        %v2719 = vpop.f32.mrf.mxu0
        %v2720 = vadd.f32 %v2586, %v2719
        %v2721 = vpop.f32.mrf.mxu0
        %v2722 = vadd.f32 %v2586, %v2721
        %2723 = vdwg.mxu0
        %2724 = vmatpush.bf16.msra.mxu0 0
        %2725 = vmatpush.bf16.msra.mxu0 0
        %2726 = vmatpush.bf16.msra.mxu0 %v2692
        %2727 = vmatpush.bf16.msra.mxu0 %v2691
        %2728 = vmatpush.bf16.msra.mxu0 %v2690
        %2729 = vmatpush.bf16.msra.mxu0 %v2689
        %2730 = vmatpush.bf16.msra.mxu0 %v2688
        %2731 = vmatpush.bf16.msra.mxu0 %v2687
        %2732 = vmatmul.bf16.gmra.mxu0 %v2708
        %v2733 = vpop.f32.mrf.mxu0
        %v2734 = vadd.f32 %v2720, %v2733
        %v2735 = vpop.f32.mrf.mxu0
        %v2736 = vadd.f32 %v2722, %v2735
        %2737 = vdwg.mxu0
        %v2738 = vmul.f32 %v2734, 1.442695
        %v2739 = vpow.pop %v2738
        %v2740 = vmul.f32 %v2736, 1.442695
        %v2741 = vpow.pop %v2740
        %v2742 = vadd.f32 %v2739, 1.0
        %v2743 = vadd.f32 %v2741, 1.0
        %v2744 = vlog2.pop %v2742
        %v2745 = vmul.f32 %v2744, 0.6931472
        %v2746 = vlog2.pop %v2743
        %v2747 = vmul.f32 %v2746, 0.6931472
        %v2748 = vtanh.pop %v2745
        %v2749 = vtanh.pop %v2747
        %v2750 = vmul.f32 %v2734, %v2748
        %v2751 = vmul.f32 %v2736, %v2749
        %2753 = vset.pattern.permute.xlu0 0
        %2754 = vperm.xlu0 %2753, %v1963
        %v2755 = vpop.permute.xlu0 %2754
        %2758 = vset.pattern.permute.xlu0 0
        %2759 = vperm.xlu0 %2758, %v1978
        %v2760 = vpop.permute.xlu0 %2759
        %v2762 = vmul.f32 %v2750, %v2755
        %v2763 = vmul.f32 %v2751, %v2760
        %v2766 = vrot.slane %v2762, 1
        %v2767 = vsel %vm1205, %v1206, %v2766
        %v2768 = vrot.slane %v2763, 1
        %v2769 = vsel %vm1205, %v2766, %v2768
        %2770 = vrot.lane.b32.xlu0 %v2767, 32
        %v2771 = vpop.permute.xlu0 %2770
        %2772 = vrot.lane.b32.xlu0 %v2769, 32
        %v2773 = vpop.permute.xlu0 %2772
        %2774 = vrot.lane.b32.xlu0 %v2768, 32
        %v2775 = vpop.permute.xlu0 %2774
        %v2779 = vrot.slane %v2762, 2
        %v2780 = vsel %vm1220, %v1221, %v2779
        %v2781 = vrot.slane %v2763, 2
        %v2782 = vsel %vm1220, %v2779, %v2781
        %2783 = vrot.lane.b32.xlu0 %v2780, 64
        %v2784 = vpop.permute.xlu0 %2783
        %2785 = vrot.lane.b32.xlu0 %v2782, 64
        %v2786 = vpop.permute.xlu0 %2785
        %2787 = vrot.lane.b32.xlu0 %v2781, 64
        %v2788 = vpop.permute.xlu0 %2787
        %v2792 = vrot.slane %v2762, 3
        %v2793 = vrot.slane %v2763, 3
        %v2794 = vsel %vm1235, %v2792, %v2793
        %2795 = vrot.lane.b32.xlu0 %v2792, 96
        %v2796 = vpop.permute.xlu0 %2795
        %2797 = vrot.lane.b32.xlu0 %v2794, 96
        %v2798 = vpop.permute.xlu0 %2797
        %2799 = vrot.lane.b32.xlu0 %v2793, 96
        %v2800 = vpop.permute.xlu0 %2799
        %v2804 = vrot.slane %v2762, 4
        %v2805 = vrot.slane %v2763, 4
        %v2806 = vsel %vm1250, %v2804, %v2805
        %v2807 = vsel %vm1250, %v2805, %v1251
        %v2811 = vrot.slane %v2762, 5
        %v2812 = vrot.slane %v2763, 5
        %v2813 = vsel %vm1265, %v2811, %v2812
        %v2814 = vsel %vm1265, %v2812, %v2035
        %2815 = vrot.lane.b32.xlu0 %v2811, 32
        %v2816 = vpop.permute.xlu0 %2815
        %2817 = vrot.lane.b32.xlu0 %v2813, 32
        %v2818 = vpop.permute.xlu0 %2817
        %2819 = vrot.lane.b32.xlu0 %v2814, 32
        %v2820 = vpop.permute.xlu0 %2819
        %v2824 = vrot.slane %v2762, 6
        %v2825 = vrot.slane %v2763, 6
        %v2826 = vsel %vm1278, %v2824, %v2825
        %v2827 = vsel %vm1278, %v2825, %v1282
        %2828 = vrot.lane.b32.xlu0 %v2824, 64
        %v2829 = vpop.permute.xlu0 %2828
        %2830 = vrot.lane.b32.xlu0 %v2826, 64
        %v2831 = vpop.permute.xlu0 %2830
        %2832 = vrot.lane.b32.xlu0 %v2827, 64
        %v2833 = vpop.permute.xlu0 %2832
        %v2837 = vsel %vm1365, 0.0, %v2771
        %v2838 = vsel %vm1365, %v2762, %v2773
        %v2839 = vsel %vm1365, %v2763, %v2775
        %v2840 = vsel %vm2238, %v2837, %v2784
        %v2841 = vsel %vm2238, %v2838, %v2786
        %v2842 = vsel %vm2238, %v2839, %v2788
        %v2843 = vsel %vm2242, %v2840, %v2796
        %v2844 = vsel %vm2242, %v2841, %v2798
        %v2845 = vsel %vm2242, %v2842, %v2800
        %v2846 = vsel %vm1365, %v2804, %v2816
        %v2847 = vsel %vm1365, %v2806, %v2818
        %v2848 = vsel %vm1365, %v2807, %v2820
        %v2849 = vsel %vm2238, %v2846, %v2829
        %v2850 = vsel %vm2238, %v2847, %v2831
        %v2851 = vsel %vm2238, %v2848, %v2833
        %v2852 = vpack.c.bf16 %v2844, %v2843
        %v2853 = vpack.c.bf16 %v2850, %v2849
        %v2854 = vpack.c.bf16 %v2845, %v2845
        %v2855 = vpack.c.bf16 %v2851, %v2851
        %v2856 = vld [vmem:[%s33] sm:$0xf]
        %v2857 = vld [vmem:[%s33 + $0x4] sm:$0xf]
        %v2858 = vld [vmem:[%s33 + $0x8] sm:$0xf]
        %v2859 = vld [vmem:[%s33 + $0xc] sm:$0xf]
        %v2860 = vld [vmem:[%s33 + $0x10] sm:$0xf]
        %v2861 = vld [vmem:[%s33 + $0x14] sm:$0xf]
        %v2862 = vld [vmem:[%s33 + $0x18] sm:$0xf]
        %v2863 = vld [vmem:[%s33 + $0x1c] sm:$0xf]
        %v2864 = vld [vmem:[%s33 + $0x20] sm:$0xf]
        %v2865 = vld [vmem:[%s33 + $0x24] sm:$0xf]
        %v2866 = vld [vmem:[%s33 + $0x28] sm:$0xf]
        %v2867 = vld [vmem:[%s33 + $0x2c] sm:$0xf]
        %v2868 = vld [vmem:[%s33 + $0x30] sm:$0xf]
        %v2869 = vld [vmem:[%s33 + $0x34] sm:$0xf]
        %v2870 = vld [vmem:[%s33 + $0x38] sm:$0xf]
        %v2871 = vld [vmem:[%s33 + $0x3c] sm:$0xf]
        %v2872 = vld [vmem:[%s33 + $0x40] sm:$0xf]
        %v2873 = vld [vmem:[%s33 + $0x44] sm:$0xf]
        %v2874 = vld [vmem:[%s33 + $0x48] sm:$0xf]
        %v2875 = vld [vmem:[%s33 + $0x4c] sm:$0xf]
        %v2876 = vld [vmem:[%s33 + $0x50] sm:$0xf]
        %v2877 = vld [vmem:[%s33 + $0x54] sm:$0xf]
        %v2878 = vld [vmem:[%s33 + $0x58] sm:$0xf]
        %v2879 = vld [vmem:[%s33 + $0x5c] sm:$0xf]
        %v2880 = vld [vmem:[%s33 + $0x60] sm:$0xf]
        %v2881 = vld [vmem:[%s33 + $0x64] sm:$0xf]
        %v2882 = vld [vmem:[%s33 + $0x68] sm:$0xf]
        %v2883 = vld [vmem:[%s33 + $0x6c] sm:$0xf]
        %v2884 = vld [vmem:[%s35] sm:$0x1]
        %v2886 = vperm.slane %v2884, 0
        %v2889 = vshrl.u32 %v2852, 16
        %v2891 = vrot.slane %v2889, 2
        %v2892 = vshll.u32 %v2852, 16
        %v2894 = vrot.slane %v2892, 3
        %v2895 = vor.u32 %v2891, %v2894
        %v2897 = vshrl.u32 %v2854, 16
        %v2899 = vrot.slane %v2897, 2
        %v2900 = vshll.u32 %v2854, 16
        %v2902 = vrot.slane %v2900, 3
        %v2903 = vor.u32 %v2899, %v2902
        %v2904 = vsel %vm2087, %v2895, %v2903
        %v2906 = vshrl.u32 %v2853, 16
        %v2908 = vrot.slane %v2906, 2
        %v2909 = vshll.u32 %v2853, 16
        %v2911 = vrot.slane %v2909, 3
        %v2912 = vor.u32 %v2908, %v2911
        %v2914 = vshrl.u32 %v2855, 16
        %v2916 = vrot.slane %v2914, 2
        %v2917 = vshll.u32 %v2855, 16
        %v2919 = vrot.slane %v2917, 3
        %v2920 = vor.u32 %v2916, %v2919
        %v2921 = vsel %vm2087, %v2912, %v2920
        %v2951 = vunpack.c.l.b16 %v2856
        %v2952 = vunpack.c.l.b16 %v2857
        %v2953 = vunpack.c.l.b16 %v2858
        %v2954 = vunpack.c.l.b16 %v2859
        %v2955 = vunpack.c.l.b16 %v2860
        %v2956 = vunpack.c.l.b16 %v2861
        %v2957 = vunpack.c.l.b16 %v2862
        %v2958 = vunpack.c.l.b16 %v2863
        %v2959 = vunpack.c.l.b16 %v2864
        %v2960 = vunpack.c.l.b16 %v2865
        %v2961 = vunpack.c.l.b16 %v2866
        %v2962 = vunpack.c.l.b16 %v2867
        %v2963 = vunpack.c.l.b16 %v2868
        %v2964 = vunpack.c.l.b16 %v2869
        %v2965 = vunpack.c.l.b16 %v2870
        %v2966 = vunpack.c.l.b16 %v2871
        %v2967 = vunpack.c.l.b16 %v2872
        %v2968 = vunpack.c.l.b16 %v2873
        %v2969 = vunpack.c.l.b16 %v2874
        %v2970 = vunpack.c.l.b16 %v2875
        %v2971 = vunpack.c.l.b16 %v2876
        %v2972 = vunpack.c.l.b16 %v2877
        %v2973 = vunpack.c.l.b16 %v2878
        %v2974 = vunpack.c.l.b16 %v2879
        %v2975 = vunpack.c.l.b16 %v2880
        %v2976 = vunpack.c.l.b16 %v2881
        %v2977 = vunpack.c.l.b16 %v2882
        %v2978 = vunpack.c.l.b16 %v2883
        %v2979 = vpack.c.b16 %v2952, %v2951
        %v2980 = vpack.c.b16 %v2954, %v2953
        %v2981 = vpack.c.b16 %v2956, %v2955
        %v2982 = vpack.c.b16 %v2958, %v2957
        %v2983 = vpack.c.b16 %v2960, %v2959
        %v2984 = vpack.c.b16 %v2962, %v2961
        %v2985 = vpack.c.b16 %v2964, %v2963
        %v2986 = vpack.c.b16 %v2966, %v2965
        %v2987 = vpack.c.b16 %v2968, %v2967
        %v2988 = vpack.c.b16 %v2970, %v2969
        %v2989 = vpack.c.b16 %v2972, %v2971
        %v2990 = vpack.c.b16 %v2974, %v2973
        %v2991 = vpack.c.b16 %v2976, %v2975
        %v2992 = vpack.c.b16 %v2978, %v2977
        %v3008 = vsel %vm2242, %v2921, 0
        %3010 = vmatpush.bf16.msra.mxu0 %v2986
        %3011 = vmatpush.bf16.msra.mxu0 %v2985
        %3012 = vmatpush.bf16.msra.mxu0 %v2984
        %3013 = vmatpush.bf16.msra.mxu0 %v2983
        %3014 = vmatpush.bf16.msra.mxu0 %v2982
        %3015 = vmatpush.bf16.msra.mxu0 %v2981
        %3016 = vmatpush.bf16.msra.mxu0 %v2980
        %3017 = vmatpush.bf16.msra.mxu0 %v2979
        %3018 = vmatmul.bf16.gmra.mxu0 %v2904
        %v3019 = vpop.f32.mrf.mxu0
        %v3020 = vadd.f32 %v2886, %v3019
        %v3021 = vpop.f32.mrf.mxu0
        %v3022 = vadd.f32 %v2886, %v3021
        %3023 = vdwg.mxu0
        %3024 = vmatpush.bf16.msra.mxu0 0
        %3025 = vmatpush.bf16.msra.mxu0 0
        %3026 = vmatpush.bf16.msra.mxu0 %v2992
        %3027 = vmatpush.bf16.msra.mxu0 %v2991
        %3028 = vmatpush.bf16.msra.mxu0 %v2990
        %3029 = vmatpush.bf16.msra.mxu0 %v2989
        %3030 = vmatpush.bf16.msra.mxu0 %v2988
        %3031 = vmatpush.bf16.msra.mxu0 %v2987
        %3032 = vmatmul.bf16.gmra.mxu0 %v3008
        %v3033 = vpop.f32.mrf.mxu0
        %v3034 = vadd.f32 %v3020, %v3033
        %v3035 = vpop.f32.mrf.mxu0
        %v3036 = vadd.f32 %v3022, %v3035
        %3037 = vdwg.mxu0
        %v3038 = vmul.f32 %v3034, 1.442695
        %v3039 = vpow.pop %v3038
        %v3040 = vmul.f32 %v3036, 1.442695
        %v3041 = vpow.pop %v3040
        %v3042 = vadd.f32 %v3039, 1.0
        %v3043 = vadd.f32 %v3041, 1.0
        %v3044 = vlog2.pop %v3042
        %v3045 = vmul.f32 %v3044, 0.6931472
        %v3046 = vlog2.pop %v3043
        %v3047 = vmul.f32 %v3046, 0.6931472
        %v3048 = vtanh.pop %v3045
        %v3049 = vtanh.pop %v3047
        %v3050 = vmul.f32 %v3034, %v3048
        %v3051 = vmul.f32 %v3036, %v3049
        %3054 = vrot.lane.b32.xlu0 %v2450, 32
        %v3055 = vpop.permute.xlu0 %3054
        %3056 = vrot.lane.b32.xlu0 %v2451, 32
        %v3057 = vpop.permute.xlu0 %3056
        %3062 = vrot.lane.b32.xlu0 %v2750, 64
        %v3063 = vpop.permute.xlu0 %3062
        %3064 = vrot.lane.b32.xlu0 %v2751, 64
        %v3065 = vpop.permute.xlu0 %3064
        %3070 = vrot.lane.b32.xlu0 %v3050, 96
        %v3071 = vpop.permute.xlu0 %3070
        %3072 = vrot.lane.b32.xlu0 %v3051, 96
        %v3073 = vpop.permute.xlu0 %3072
        %v3076 = vsel %vm1365, %v2148, %v3055
        %v3077 = vsel %vm1365, %v2149, %v3057
        %v3078 = vsel %vm2238, %v3076, %v3063
        %v3079 = vsel %vm2238, %v3077, %v3065
        %v3080 = vsel %vm2242, %v3078, %v3071
        %v3081 = vsel %vm2242, %v3079, %v3073
        %v3084 = vrot.slane %v3080, 1
        %v3085 = vsel %vm1205, %v1206, %v3084
        %v3086 = vrot.slane %v3081, 1
        %v3087 = vsel %vm1205, %v3084, %v3086
        %v3091 = vrot.slane %v3080, 2
        %v3092 = vrot.slane %v3081, 2
        %v3093 = vsel %vm1220, %v3091, %v3092
        %v3097 = vrot.slane %v3080, 3
        %v3098 = vrot.slane %v3081, 3
        %v3099 = vsel %vm1235, %v3097, %v3098
        %v3100 = vsel %vm1235, %v3098, %v1236
        %v3104 = vrot.slane %v3080, 4
        %v3105 = vrot.slane %v3081, 4
        %v3106 = vsel %vm1250, %v3104, %v3105
        %v3107 = vsel %vm1250, %v3105, %v1251
        %v3111 = vpack.c.bf16 %v3080, 0.0
        %v3112 = vpack.c.bf16 %v3087, %v3085
        %v3113 = vpack.c.bf16 %v3093, %v3091
        %v3114 = vpack.c.bf16 %v3099, %v3097
        %v3115 = vpack.c.bf16 %v3106, %v3104
        %v3116 = vpack.c.bf16 %v3081, %v3081
        %v3117 = vpack.c.bf16 %v3086, %v3086
        %v3118 = vpack.c.bf16 %v3092, %v3092
        %v3119 = vpack.c.bf16 %v3100, %v3100
        %v3120 = vpack.c.bf16 %v3107, %v3107
        %v3121 = vld [vmem:[#allocation5] sm:$0xff]
        %v3122 = vld [vmem:[#allocation5 + $0x8] sm:$0xff]
        %v3123 = vld [vmem:[#allocation5 + $0x10] sm:$0xff]
        %v3124 = vld [vmem:[#allocation5 + $0x18] sm:$0xff]
        %v3125 = vld [vmem:[#allocation5 + $0x20] sm:$0xff]
        %v3126 = vld [vmem:[#allocation5 + $0x28] sm:$0xff]
        %v3127 = vld [vmem:[#allocation5 + $0x30] sm:$0xff]
        %v3128 = vld [vmem:[#allocation5 + $0x38] sm:$0xff]
        %v3129 = vld [vmem:[#allocation5 + $0x40] sm:$0xff]
        %v3130 = vld [vmem:[#allocation5 + $0x48] sm:$0xff]
        %v3131 = vld [vmem:[#allocation5 + $0x50] sm:$0xff]
        %v3132 = vld [vmem:[#allocation5 + $0x58] sm:$0xff]
        %v3133 = vld [vmem:[#allocation5 + $0x60] sm:$0xff]
        %v3134 = vld [vmem:[#allocation5 + $0x68] sm:$0xff]
        %v3135 = vld [vmem:[#allocation5 + $0x70] sm:$0xff]
        %v3136 = vld [vmem:[#allocation5 + $0x78] sm:$0xff]
        %v3137 = vld [vmem:[#allocation5 + $0x80] sm:$0xff]
        %v3138 = vld [vmem:[#allocation5 + $0x88] sm:$0xff]
        %v3139 = vld [vmem:[#allocation5 + $0x90] sm:$0xff]
        %v3140 = vld [vmem:[#allocation5 + $0x98] sm:$0xff]
        %v3141 = vld [vmem:[#allocation5 + $0xa0] sm:$0xff]
        %v3142 = vld [vmem:[#allocation5 + $0xa8] sm:$0xff]
        %v3143 = vld [vmem:[#allocation5 + $0xb0] sm:$0xff]
        %v3144 = vld [vmem:[#allocation5 + $0xb8] sm:$0xff]
        %v3145 = vld [vmem:[#allocation5 + $0xc0] sm:$0xff]
        %v3146 = vld [vmem:[#allocation5 + $0xc8] sm:$0xff]
        %v3147 = vld [vmem:[#allocation5 + $0xd0] sm:$0xff]
        %v3148 = vld [vmem:[#allocation5 + $0xd8] sm:$0xff]
        %v3149 = vld [vmem:[#allocation5 + $0xe0] sm:$0xff]
        %v3150 = vld [vmem:[#allocation5 + $0xe8] sm:$0xff]
        %v3151 = vld [vmem:[#allocation5 + $0xf0] sm:$0xff]
        %v3152 = vld [vmem:[#allocation5 + $0xf8] sm:$0xff]
        %v3153 = vld [vmem:[#allocation5 + $0x100] sm:$0xff]
        %v3154 = vld [vmem:[#allocation5 + $0x108] sm:$0xff]
        %v3155 = vld [vmem:[#allocation5 + $0x110] sm:$0xff]
        %v3156 = vld [vmem:[#allocation5 + $0x118] sm:$0xff]
        %v3157 = vld [vmem:[#allocation5 + $0x120] sm:$0xff]
        %v3158 = vld [vmem:[#allocation5 + $0x128] sm:$0xff]
        %v3159 = vld [vmem:[#allocation5 + $0x130] sm:$0xff]
        %v3160 = vld [vmem:[#allocation5 + $0x138] sm:$0xff]
        %v3161 = vld [vmem:[#allocation5 + $0x140] sm:$0xff]
        %v3162 = vld [vmem:[#allocation5 + $0x148] sm:$0xff]
        %v3163 = vld [vmem:[#allocation5 + $0x150] sm:$0xff]
        %v3164 = vld [vmem:[#allocation5 + $0x158] sm:$0xff]
        %v3165 = vld [vmem:[#allocation5 + $0x160] sm:$0xff]
        %v3166 = vld [vmem:[#allocation5 + $0x168] sm:$0xff]
        %v3167 = vld [vmem:[#allocation5 + $0x170] sm:$0xff]
        %v3168 = vld [vmem:[#allocation5 + $0x178] sm:$0xff]
        %v3169 = vld [vmem:[#allocation5 + $0x180] sm:$0xff]
        %v3170 = vld [vmem:[#allocation5 + $0x188] sm:$0xff]
        %v3171 = vld [vmem:[#allocation5 + $0x190] sm:$0xff]
        %v3172 = vld [vmem:[#allocation5 + $0x198] sm:$0xff]
        %v3173 = vld [vmem:[#allocation5 + $0x1a0] sm:$0xff]
        %v3174 = vld [vmem:[#allocation5 + $0x1a8] sm:$0xff]
        %v3175 = vld [vmem:[#allocation5 + $0x1b0] sm:$0xff]
        %v3176 = vld [vmem:[#allocation5 + $0x1b8] sm:$0xff]
        %v3177 = vld [vmem:[#allocation5 + $0x1c0] sm:$0xff]
        %v3178 = vld [vmem:[#allocation5 + $0x1c8] sm:$0xff]
        %v3179 = vld [vmem:[#allocation5 + $0x1d0] sm:$0xff]
        %v3180 = vld [vmem:[#allocation5 + $0x1d8] sm:$0xff]
        %v3181 = vld [vmem:[#allocation5 + $0x1e0] sm:$0xff]
        %v3182 = vld [vmem:[#allocation5 + $0x1e8] sm:$0xff]
        %v3183 = vld [vmem:[#allocation5 + $0x1f0] sm:$0xff]
        %v3184 = vld [vmem:[#allocation5 + $0x1f8] sm:$0xff]
        %v3185 = vld [vmem:[#allocation5 + $0x200] sm:$0xff]
        %v3186 = vld [vmem:[#allocation5 + $0x208] sm:$0xff]
        %v3187 = vld [vmem:[#allocation5 + $0x210] sm:$0xff]
        %v3188 = vld [vmem:[#allocation5 + $0x218] sm:$0xff]
        %v3189 = vld [vmem:[#allocation5 + $0x220] sm:$0xff]
        %v3190 = vld [vmem:[#allocation5 + $0x228] sm:$0xff]
        %v3191 = vld [vmem:[#allocation5 + $0x230] sm:$0xff]
        %v3192 = vld [vmem:[#allocation5 + $0x238] sm:$0xff]
        %v3193 = vld [vmem:[#allocation5 + $0x240] sm:$0xff]
        %v3194 = vld [vmem:[#allocation5 + $0x248] sm:$0xff]
        %v3195 = vld [vmem:[#allocation5 + $0x250] sm:$0xff]
        %v3196 = vld [vmem:[#allocation5 + $0x258] sm:$0xff]
        %v3197 = vld [vmem:[#allocation5 + $0x260] sm:$0xff]
        %v3198 = vld [vmem:[#allocation5 + $0x268] sm:$0xff]
        %v3199 = vld [vmem:[#allocation5 + $0x270] sm:$0xff]
        %v3200 = vld [vmem:[#allocation5 + $0x278] sm:$0xff]
        %v3201 = vld [vmem:[%s39] sm:$0x3]
        %v3203 = vperm.slane %v3201, 0
        %v3204 = vperm.slane %v3201, 1
        %vm3217 = vcmask 1044480
        %v3218 = vrot.slane %v3111, 3
        %v3219 = vrot.slane %v3116, 3
        %v3220 = vsel %vm3217, %v3218, %v3219
        %v3221 = vrot.slane %v3112, 3
        %v3222 = vrot.slane %v3117, 3
        %v3223 = vsel %vm3217, %v3221, %v3222
        %v3224 = vrot.slane %v3113, 3
        %v3225 = vrot.slane %v3118, 3
        %v3226 = vsel %vm3217, %v3224, %v3225
        %v3227 = vrot.slane %v3114, 3
        %v3228 = vrot.slane %v3119, 3
        %v3229 = vsel %vm3217, %v3227, %v3228
        %v3230 = vrot.slane %v3115, 3
        %v3231 = vrot.slane %v3120, 3
        %v3232 = vsel %vm3217, %v3230, %v3231
        %v3318 = vunpack.c.l.b16 %v3121
        %v3319 = vunpack.c.h.b16 %v3121
        %v3320 = vunpack.c.l.b16 %v3122
        %v3321 = vunpack.c.h.b16 %v3122
        %v3322 = vunpack.c.l.b16 %v3123
        %v3323 = vunpack.c.h.b16 %v3123
        %v3324 = vunpack.c.l.b16 %v3124
        %v3325 = vunpack.c.h.b16 %v3124
        %v3326 = vunpack.c.l.b16 %v3125
        %v3327 = vunpack.c.h.b16 %v3125
        %v3328 = vunpack.c.l.b16 %v3126
        %v3329 = vunpack.c.h.b16 %v3126
        %v3330 = vunpack.c.l.b16 %v3127
        %v3331 = vunpack.c.h.b16 %v3127
        %v3332 = vunpack.c.l.b16 %v3128
        %v3333 = vunpack.c.h.b16 %v3128
        %v3334 = vunpack.c.l.b16 %v3129
        %v3335 = vunpack.c.h.b16 %v3129
        %v3336 = vunpack.c.l.b16 %v3130
        %v3337 = vunpack.c.h.b16 %v3130
        %v3338 = vunpack.c.l.b16 %v3131
        %v3339 = vunpack.c.h.b16 %v3131
        %v3340 = vunpack.c.l.b16 %v3132
        %v3341 = vunpack.c.h.b16 %v3132
        %v3342 = vunpack.c.l.b16 %v3133
        %v3343 = vunpack.c.h.b16 %v3133
        %v3344 = vunpack.c.l.b16 %v3134
        %v3345 = vunpack.c.h.b16 %v3134
        %v3346 = vunpack.c.l.b16 %v3135
        %v3347 = vunpack.c.h.b16 %v3135
        %v3348 = vunpack.c.l.b16 %v3136
        %v3349 = vunpack.c.h.b16 %v3136
        %v3350 = vunpack.c.l.b16 %v3137
        %v3351 = vunpack.c.h.b16 %v3137
        %v3352 = vunpack.c.l.b16 %v3138
        %v3353 = vunpack.c.h.b16 %v3138
        %v3354 = vunpack.c.l.b16 %v3139
        %v3355 = vunpack.c.h.b16 %v3139
        %v3356 = vunpack.c.l.b16 %v3140
        %v3357 = vunpack.c.h.b16 %v3140
        %v3358 = vunpack.c.l.b16 %v3141
        %v3359 = vunpack.c.h.b16 %v3141
        %v3360 = vunpack.c.l.b16 %v3142
        %v3361 = vunpack.c.h.b16 %v3142
        %v3362 = vunpack.c.l.b16 %v3143
        %v3363 = vunpack.c.h.b16 %v3143
        %v3364 = vunpack.c.l.b16 %v3144
        %v3365 = vunpack.c.h.b16 %v3144
        %v3366 = vunpack.c.l.b16 %v3145
        %v3367 = vunpack.c.h.b16 %v3145
        %v3368 = vunpack.c.l.b16 %v3146
        %v3369 = vunpack.c.h.b16 %v3146
        %v3370 = vunpack.c.l.b16 %v3147
        %v3371 = vunpack.c.h.b16 %v3147
        %v3372 = vunpack.c.l.b16 %v3148
        %v3373 = vunpack.c.h.b16 %v3148
        %v3374 = vunpack.c.l.b16 %v3149
        %v3375 = vunpack.c.h.b16 %v3149
        %v3376 = vunpack.c.l.b16 %v3150
        %v3377 = vunpack.c.h.b16 %v3150
        %v3378 = vunpack.c.l.b16 %v3151
        %v3379 = vunpack.c.h.b16 %v3151
        %v3380 = vunpack.c.l.b16 %v3152
        %v3381 = vunpack.c.h.b16 %v3152
        %v3382 = vunpack.c.l.b16 %v3153
        %v3383 = vunpack.c.h.b16 %v3153
        %v3384 = vunpack.c.l.b16 %v3154
        %v3385 = vunpack.c.h.b16 %v3154
        %v3386 = vunpack.c.l.b16 %v3155
        %v3387 = vunpack.c.h.b16 %v3155
        %v3388 = vunpack.c.l.b16 %v3156
        %v3389 = vunpack.c.h.b16 %v3156
        %v3390 = vunpack.c.l.b16 %v3157
        %v3391 = vunpack.c.h.b16 %v3157
        %v3392 = vunpack.c.l.b16 %v3158
        %v3393 = vunpack.c.h.b16 %v3158
        %v3394 = vunpack.c.l.b16 %v3159
        %v3395 = vunpack.c.h.b16 %v3159
        %v3396 = vunpack.c.l.b16 %v3160
        %v3397 = vunpack.c.h.b16 %v3160
        %v3398 = vunpack.c.l.b16 %v3161
        %v3399 = vunpack.c.h.b16 %v3161
        %v3400 = vunpack.c.l.b16 %v3162
        %v3401 = vunpack.c.h.b16 %v3162
        %v3402 = vunpack.c.l.b16 %v3163
        %v3403 = vunpack.c.h.b16 %v3163
        %v3404 = vunpack.c.l.b16 %v3164
        %v3405 = vunpack.c.h.b16 %v3164
        %v3406 = vunpack.c.l.b16 %v3165
        %v3407 = vunpack.c.h.b16 %v3165
        %v3408 = vunpack.c.l.b16 %v3166
        %v3409 = vunpack.c.h.b16 %v3166
        %v3410 = vunpack.c.l.b16 %v3167
        %v3411 = vunpack.c.h.b16 %v3167
        %v3412 = vunpack.c.l.b16 %v3168
        %v3413 = vunpack.c.h.b16 %v3168
        %v3414 = vunpack.c.l.b16 %v3169
        %v3415 = vunpack.c.h.b16 %v3169
        %v3416 = vunpack.c.l.b16 %v3170
        %v3417 = vunpack.c.h.b16 %v3170
        %v3418 = vunpack.c.l.b16 %v3171
        %v3419 = vunpack.c.h.b16 %v3171
        %v3420 = vunpack.c.l.b16 %v3172
        %v3421 = vunpack.c.h.b16 %v3172
        %v3422 = vunpack.c.l.b16 %v3173
        %v3423 = vunpack.c.h.b16 %v3173
        %v3424 = vunpack.c.l.b16 %v3174
        %v3425 = vunpack.c.h.b16 %v3174
        %v3426 = vunpack.c.l.b16 %v3175
        %v3427 = vunpack.c.h.b16 %v3175
        %v3428 = vunpack.c.l.b16 %v3176
        %v3429 = vunpack.c.h.b16 %v3176
        %v3430 = vunpack.c.l.b16 %v3177
        %v3431 = vunpack.c.h.b16 %v3177
        %v3432 = vunpack.c.l.b16 %v3178
        %v3433 = vunpack.c.h.b16 %v3178
        %v3434 = vunpack.c.l.b16 %v3179
        %v3435 = vunpack.c.h.b16 %v3179
        %v3436 = vunpack.c.l.b16 %v3180
        %v3437 = vunpack.c.h.b16 %v3180
        %v3438 = vunpack.c.l.b16 %v3181
        %v3439 = vunpack.c.h.b16 %v3181
        %v3440 = vunpack.c.l.b16 %v3182
        %v3441 = vunpack.c.h.b16 %v3182
        %v3442 = vunpack.c.l.b16 %v3183
        %v3443 = vunpack.c.h.b16 %v3183
        %v3444 = vunpack.c.l.b16 %v3184
        %v3445 = vunpack.c.h.b16 %v3184
        %v3446 = vunpack.c.l.b16 %v3185
        %v3447 = vunpack.c.h.b16 %v3185
        %v3448 = vunpack.c.l.b16 %v3186
        %v3449 = vunpack.c.h.b16 %v3186
        %v3450 = vunpack.c.l.b16 %v3187
        %v3451 = vunpack.c.h.b16 %v3187
        %v3452 = vunpack.c.l.b16 %v3188
        %v3453 = vunpack.c.h.b16 %v3188
        %v3454 = vunpack.c.l.b16 %v3189
        %v3455 = vunpack.c.h.b16 %v3189
        %v3456 = vunpack.c.l.b16 %v3190
        %v3457 = vunpack.c.h.b16 %v3190
        %v3458 = vunpack.c.l.b16 %v3191
        %v3459 = vunpack.c.h.b16 %v3191
        %v3460 = vunpack.c.l.b16 %v3192
        %v3461 = vunpack.c.h.b16 %v3192
        %v3462 = vunpack.c.l.b16 %v3193
        %v3463 = vunpack.c.h.b16 %v3193
        %v3464 = vunpack.c.l.b16 %v3194
        %v3465 = vunpack.c.h.b16 %v3194
        %v3466 = vunpack.c.l.b16 %v3195
        %v3467 = vunpack.c.h.b16 %v3195
        %v3468 = vunpack.c.l.b16 %v3196
        %v3469 = vunpack.c.h.b16 %v3196
        %v3470 = vunpack.c.l.b16 %v3197
        %v3471 = vunpack.c.h.b16 %v3197
        %v3472 = vunpack.c.l.b16 %v3198
        %v3473 = vunpack.c.h.b16 %v3198
        %v3474 = vunpack.c.l.b16 %v3199
        %v3475 = vunpack.c.h.b16 %v3199
        %v3476 = vunpack.c.l.b16 %v3200
        %v3477 = vunpack.c.h.b16 %v3200
        %v3478 = vpack.c.b16 %v3320, %v3318
        %v3479 = vpack.c.b16 %v3321, %v3319
        %v3480 = vpack.c.b16 %v3324, %v3322
        %v3481 = vpack.c.b16 %v3325, %v3323
        %v3482 = vpack.c.b16 %v3328, %v3326
        %v3483 = vpack.c.b16 %v3329, %v3327
        %v3484 = vpack.c.b16 %v3332, %v3330
        %v3485 = vpack.c.b16 %v3333, %v3331
        %v3486 = vpack.c.b16 %v3336, %v3334
        %v3487 = vpack.c.b16 %v3337, %v3335
        %v3488 = vpack.c.b16 %v3340, %v3338
        %v3489 = vpack.c.b16 %v3341, %v3339
        %v3490 = vpack.c.b16 %v3344, %v3342
        %v3491 = vpack.c.b16 %v3345, %v3343
        %v3492 = vpack.c.b16 %v3348, %v3346
        %v3493 = vpack.c.b16 %v3349, %v3347
        %v3494 = vpack.c.b16 %v3352, %v3350
        %v3495 = vpack.c.b16 %v3353, %v3351
        %v3496 = vpack.c.b16 %v3356, %v3354
        %v3497 = vpack.c.b16 %v3357, %v3355
        %v3498 = vpack.c.b16 %v3360, %v3358
        %v3499 = vpack.c.b16 %v3361, %v3359
        %v3500 = vpack.c.b16 %v3364, %v3362
        %v3501 = vpack.c.b16 %v3365, %v3363
        %v3502 = vpack.c.b16 %v3368, %v3366
        %v3503 = vpack.c.b16 %v3369, %v3367
        %v3504 = vpack.c.b16 %v3372, %v3370
        %v3505 = vpack.c.b16 %v3373, %v3371
        %v3506 = vpack.c.b16 %v3376, %v3374
        %v3507 = vpack.c.b16 %v3377, %v3375
        %v3508 = vpack.c.b16 %v3380, %v3378
        %v3509 = vpack.c.b16 %v3381, %v3379
        %v3510 = vpack.c.b16 %v3384, %v3382
        %v3511 = vpack.c.b16 %v3385, %v3383
        %v3512 = vpack.c.b16 %v3388, %v3386
        %v3513 = vpack.c.b16 %v3389, %v3387
        %v3514 = vpack.c.b16 %v3392, %v3390
        %v3515 = vpack.c.b16 %v3393, %v3391
        %v3516 = vpack.c.b16 %v3396, %v3394
        %v3517 = vpack.c.b16 %v3397, %v3395
        %v3518 = vpack.c.b16 %v3400, %v3398
        %v3519 = vpack.c.b16 %v3401, %v3399
        %v3520 = vpack.c.b16 %v3404, %v3402
        %v3521 = vpack.c.b16 %v3405, %v3403
        %v3522 = vpack.c.b16 %v3408, %v3406
        %v3523 = vpack.c.b16 %v3409, %v3407
        %v3524 = vpack.c.b16 %v3412, %v3410
        %v3525 = vpack.c.b16 %v3413, %v3411
        %v3526 = vpack.c.b16 %v3416, %v3414
        %v3527 = vpack.c.b16 %v3417, %v3415
        %v3528 = vpack.c.b16 %v3420, %v3418
        %v3529 = vpack.c.b16 %v3421, %v3419
        %v3530 = vpack.c.b16 %v3424, %v3422
        %v3531 = vpack.c.b16 %v3425, %v3423
        %v3532 = vpack.c.b16 %v3428, %v3426
        %v3533 = vpack.c.b16 %v3429, %v3427
        %v3534 = vpack.c.b16 %v3432, %v3430
        %v3535 = vpack.c.b16 %v3433, %v3431
        %v3536 = vpack.c.b16 %v3436, %v3434
        %v3537 = vpack.c.b16 %v3437, %v3435
        %v3538 = vpack.c.b16 %v3440, %v3438
        %v3539 = vpack.c.b16 %v3441, %v3439
        %v3540 = vpack.c.b16 %v3444, %v3442
        %v3541 = vpack.c.b16 %v3445, %v3443
        %v3542 = vpack.c.b16 %v3448, %v3446
        %v3543 = vpack.c.b16 %v3449, %v3447
        %v3544 = vpack.c.b16 %v3452, %v3450
        %v3545 = vpack.c.b16 %v3453, %v3451
        %v3546 = vpack.c.b16 %v3456, %v3454
        %v3547 = vpack.c.b16 %v3457, %v3455
        %v3548 = vpack.c.b16 %v3460, %v3458
        %v3549 = vpack.c.b16 %v3461, %v3459
        %v3550 = vpack.c.b16 %v3464, %v3462
        %v3551 = vpack.c.b16 %v3465, %v3463
        %v3552 = vpack.c.b16 %v3468, %v3466
        %v3553 = vpack.c.b16 %v3469, %v3467
        %v3554 = vpack.c.b16 %v3472, %v3470
        %v3555 = vpack.c.b16 %v3473, %v3471
        %v3556 = vpack.c.b16 %v3476, %v3474
        %v3557 = vpack.c.b16 %v3477, %v3475
        %3638 = vmatpush.bf16.msra.mxu0 %v3492
        %3639 = vmatpush.bf16.msra.mxu0 %v3490
        %3640 = vmatpush.bf16.msra.mxu0 %v3488
        %3641 = vmatpush.bf16.msra.mxu0 %v3486
        %3642 = vmatpush.bf16.msra.mxu0 %v3484
        %3643 = vmatpush.bf16.msra.mxu0 %v3482
        %3644 = vmatpush.bf16.msra.mxu0 %v3480
        %3645 = vmatpush.bf16.msra.mxu0 %v3478
        %3646 = vmatmul.bf16.gmra.mxu0 %v3220
        %v3647 = vpop.f32.mrf.mxu0
        %v3648 = vadd.f32 %v3203, %v3647
        %v3649 = vpop.f32.mrf.mxu0
        %v3650 = vadd.f32 %v3203, %v3649
        %3651 = vdwg.mxu0
        %3652 = vmatpush.bf16.msra.mxu0 %v3508
        %3653 = vmatpush.bf16.msra.mxu0 %v3506
        %3654 = vmatpush.bf16.msra.mxu0 %v3504
        %3655 = vmatpush.bf16.msra.mxu0 %v3502
        %3656 = vmatpush.bf16.msra.mxu0 %v3500
        %3657 = vmatpush.bf16.msra.mxu0 %v3498
        %3658 = vmatpush.bf16.msra.mxu0 %v3496
        %3659 = vmatpush.bf16.msra.mxu0 %v3494
        %3660 = vmatmul.bf16.gmra.mxu0 %v3223
        %v3661 = vpop.f32.mrf.mxu0
        %v3662 = vadd.f32 %v3648, %v3661
        %v3663 = vpop.f32.mrf.mxu0
        %v3664 = vadd.f32 %v3650, %v3663
        %3665 = vdwg.mxu0
        %3666 = vmatpush.bf16.msra.mxu0 %v3524
        %3667 = vmatpush.bf16.msra.mxu0 %v3522
        %3668 = vmatpush.bf16.msra.mxu0 %v3520
        %3669 = vmatpush.bf16.msra.mxu0 %v3518
        %3670 = vmatpush.bf16.msra.mxu0 %v3516
        %3671 = vmatpush.bf16.msra.mxu0 %v3514
        %3672 = vmatpush.bf16.msra.mxu0 %v3512
        %3673 = vmatpush.bf16.msra.mxu0 %v3510
        %3674 = vmatmul.bf16.gmra.mxu0 %v3226
        %v3675 = vpop.f32.mrf.mxu0
        %v3676 = vadd.f32 %v3662, %v3675
        %v3677 = vpop.f32.mrf.mxu0
        %v3678 = vadd.f32 %v3664, %v3677
        %3679 = vdwg.mxu0
        %3680 = vmatpush.bf16.msra.mxu0 %v3540
        %3681 = vmatpush.bf16.msra.mxu0 %v3538
        %3682 = vmatpush.bf16.msra.mxu0 %v3536
        %3683 = vmatpush.bf16.msra.mxu0 %v3534
        %3684 = vmatpush.bf16.msra.mxu0 %v3532
        %3685 = vmatpush.bf16.msra.mxu0 %v3530
        %3686 = vmatpush.bf16.msra.mxu0 %v3528
        %3687 = vmatpush.bf16.msra.mxu0 %v3526
        %3688 = vmatmul.bf16.gmra.mxu0 %v3229
        %v3689 = vpop.f32.mrf.mxu0
        %v3690 = vadd.f32 %v3676, %v3689
        %v3691 = vpop.f32.mrf.mxu0
        %v3692 = vadd.f32 %v3678, %v3691
        %3693 = vdwg.mxu0
        %3694 = vmatpush.bf16.msra.mxu0 %v3556
        %3695 = vmatpush.bf16.msra.mxu0 %v3554
        %3696 = vmatpush.bf16.msra.mxu0 %v3552
        %3697 = vmatpush.bf16.msra.mxu0 %v3550
        %3698 = vmatpush.bf16.msra.mxu0 %v3548
        %3699 = vmatpush.bf16.msra.mxu0 %v3546
        %3700 = vmatpush.bf16.msra.mxu0 %v3544
        %3701 = vmatpush.bf16.msra.mxu0 %v3542
        %3702 = vmatmul.bf16.gmra.mxu0 %v3232
        %v3703 = vpop.f32.mrf.mxu0
        %v3704 = vadd.f32 %v3690, %v3703
        %v3705 = vpop.f32.mrf.mxu0
        %v3706 = vadd.f32 %v3692, %v3705
        %3707 = vdwg.mxu0
        %3708 = vmatpush.bf16.msra.mxu0 %v3493
        %3709 = vmatpush.bf16.msra.mxu0 %v3491
        %3710 = vmatpush.bf16.msra.mxu0 %v3489
        %3711 = vmatpush.bf16.msra.mxu0 %v3487
        %3712 = vmatpush.bf16.msra.mxu0 %v3485
        %3713 = vmatpush.bf16.msra.mxu0 %v3483
        %3714 = vmatpush.bf16.msra.mxu0 %v3481
        %3715 = vmatpush.bf16.msra.mxu0 %v3479
        %3716 = vmatmul.bf16.gmra.mxu0 %v3220
        %v3717 = vpop.f32.mrf.mxu0
        %v3718 = vadd.f32 %v3204, %v3717
        %v3719 = vpop.f32.mrf.mxu0
        %v3720 = vadd.f32 %v3204, %v3719
        %3721 = vdwg.mxu0
        %3722 = vmatpush.bf16.msra.mxu0 %v3509
        %3723 = vmatpush.bf16.msra.mxu0 %v3507
        %3724 = vmatpush.bf16.msra.mxu0 %v3505
        %3725 = vmatpush.bf16.msra.mxu0 %v3503
        %3726 = vmatpush.bf16.msra.mxu0 %v3501
        %3727 = vmatpush.bf16.msra.mxu0 %v3499
        %3728 = vmatpush.bf16.msra.mxu0 %v3497
        %3729 = vmatpush.bf16.msra.mxu0 %v3495
        %3730 = vmatmul.bf16.gmra.mxu0 %v3223
        %v3731 = vpop.f32.mrf.mxu0
        %v3732 = vadd.f32 %v3718, %v3731
        %v3733 = vpop.f32.mrf.mxu0
        %v3734 = vadd.f32 %v3720, %v3733
        %3735 = vdwg.mxu0
        %3736 = vmatpush.bf16.msra.mxu0 %v3525
        %3737 = vmatpush.bf16.msra.mxu0 %v3523
        %3738 = vmatpush.bf16.msra.mxu0 %v3521
        %3739 = vmatpush.bf16.msra.mxu0 %v3519
        %3740 = vmatpush.bf16.msra.mxu0 %v3517
        %3741 = vmatpush.bf16.msra.mxu0 %v3515
        %3742 = vmatpush.bf16.msra.mxu0 %v3513
        %3743 = vmatpush.bf16.msra.mxu0 %v3511
        %3744 = vmatmul.bf16.gmra.mxu0 %v3226
        %v3745 = vpop.f32.mrf.mxu0
        %v3746 = vadd.f32 %v3732, %v3745
        %v3747 = vpop.f32.mrf.mxu0
        %v3748 = vadd.f32 %v3734, %v3747
        %3749 = vdwg.mxu0
        %3750 = vmatpush.bf16.msra.mxu0 %v3541
        %3751 = vmatpush.bf16.msra.mxu0 %v3539
        %3752 = vmatpush.bf16.msra.mxu0 %v3537
        %3753 = vmatpush.bf16.msra.mxu0 %v3535
        %3754 = vmatpush.bf16.msra.mxu0 %v3533
        %3755 = vmatpush.bf16.msra.mxu0 %v3531
        %3756 = vmatpush.bf16.msra.mxu0 %v3529
        %3757 = vmatpush.bf16.msra.mxu0 %v3527
        %3758 = vmatmul.bf16.gmra.mxu0 %v3229
        %v3759 = vpop.f32.mrf.mxu0
        %v3760 = vadd.f32 %v3746, %v3759
        %v3761 = vpop.f32.mrf.mxu0
        %v3762 = vadd.f32 %v3748, %v3761
        %3763 = vdwg.mxu0
        %3764 = vmatpush.bf16.msra.mxu0 %v3557
        %3765 = vmatpush.bf16.msra.mxu0 %v3555
        %3766 = vmatpush.bf16.msra.mxu0 %v3553
        %3767 = vmatpush.bf16.msra.mxu0 %v3551
        %3768 = vmatpush.bf16.msra.mxu0 %v3549
        %3769 = vmatpush.bf16.msra.mxu0 %v3547
        %3770 = vmatpush.bf16.msra.mxu0 %v3545
        %3771 = vmatpush.bf16.msra.mxu0 %v3543
        %3772 = vmatmul.bf16.gmra.mxu0 %v3232
        %v3773 = vpop.f32.mrf.mxu0
        %v3774 = vadd.f32 %v3760, %v3773
        %v3775 = vpop.f32.mrf.mxu0
        %v3776 = vadd.f32 %v3762, %v3775
        %3777 = vdwg.mxu0
        %v3778 = vmul.f32 %v3704, 1.442695
        %v3779 = vpow.pop %v3778
        %v3780 = vmul.f32 %v3774, 1.442695
        %v3781 = vpow.pop %v3780
        %v3782 = vmul.f32 %v3706, 1.442695
        %v3783 = vpow.pop %v3782
        %v3784 = vmul.f32 %v3776, 1.442695
        %v3785 = vpow.pop %v3784
        %v3786 = vadd.f32 %v3779, 1.0
        %v3787 = vadd.f32 %v3781, 1.0
        %v3788 = vadd.f32 %v3783, 1.0
        %v3789 = vadd.f32 %v3785, 1.0
        %v3790 = vlog2.pop %v3786
        %v3791 = vmul.f32 %v3790, 0.6931472
        %v3792 = vlog2.pop %v3787
        %v3793 = vmul.f32 %v3792, 0.6931472
        %v3794 = vlog2.pop %v3788
        %v3795 = vmul.f32 %v3794, 0.6931472
        %v3796 = vlog2.pop %v3789
        %v3797 = vmul.f32 %v3796, 0.6931472
        %v3798 = vtanh.pop %v3791
        %v3799 = vtanh.pop %v3793
        %v3800 = vtanh.pop %v3795
        %v3801 = vtanh.pop %v3797
        %v3802 = vmul.f32 %v3704, %v3798
        %v3803 = vmul.f32 %v3774, %v3799
        %v3804 = vmul.f32 %v3706, %v3800
        %v3805 = vmul.f32 %v3776, %v3801
        %v3810 = vrot.slane %v3802, 1
        %v3811 = vrot.slane %v3803, 1
        %v3812 = vrot.slane %v3804, 1
        %v3813 = vsel %vm1205, %v3810, %v3812
        %v3814 = vrot.slane %v3805, 1
        %v3815 = vsel %vm1205, %v3811, %v3814
        %v3822 = vrot.slane %v3802, 2
        %v3823 = vrot.slane %v3803, 2
        %v3824 = vrot.slane %v3804, 2
        %v3825 = vsel %vm1220, %v3822, %v3824
        %v3826 = vrot.slane %v3805, 2
        %v3827 = vsel %vm1220, %v3823, %v3826
        %v3828 = vsel %vm1220, %v3824, %v1221
        %v3829 = vsel %vm1220, %v3826, %v1221
        %v3836 = vpack.c.bf16 %v3802, 0.0
        %v3837 = vpack.c.bf16 %v3803, 0.0
        %v3838 = vpack.c.bf16 %v3813, %v3810
        %v3839 = vpack.c.bf16 %v3815, %v3811
        %v3840 = vpack.c.bf16 %v3825, %v3822
        %v3841 = vpack.c.bf16 %v3827, %v3823
        %v3842 = vpack.c.bf16 %v3804, %v3804
        %v3843 = vpack.c.bf16 %v3805, %v3805
        %v3844 = vpack.c.bf16 %v3812, %v3812
        %v3845 = vpack.c.bf16 %v3814, %v3814
        %v3846 = vpack.c.bf16 %v3828, %v3828
        %v3847 = vpack.c.bf16 %v3829, %v3829
        %v3848 = vld [vmem:[#allocation8] sm:$0xf]
        %v3849 = vld [vmem:[#allocation8 + $0x4] sm:$0xf]
        %v3850 = vld [vmem:[#allocation8 + $0x8] sm:$0xf]
        %v3851 = vld [vmem:[#allocation8 + $0xc] sm:$0xf]
        %v3852 = vld [vmem:[#allocation8 + $0x10] sm:$0xf]
        %v3853 = vld [vmem:[#allocation8 + $0x14] sm:$0xf]
        %v3854 = vld [vmem:[#allocation8 + $0x18] sm:$0xf]
        %v3855 = vld [vmem:[#allocation8 + $0x1c] sm:$0xf]
        %v3856 = vld [vmem:[#allocation8 + $0x20] sm:$0xf]
        %v3857 = vld [vmem:[#allocation8 + $0x24] sm:$0xf]
        %v3858 = vld [vmem:[#allocation8 + $0x28] sm:$0xf]
        %v3859 = vld [vmem:[#allocation8 + $0x2c] sm:$0xf]
        %v3860 = vld [vmem:[#allocation8 + $0x30] sm:$0xf]
        %v3861 = vld [vmem:[#allocation8 + $0x34] sm:$0xf]
        %v3862 = vld [vmem:[#allocation8 + $0x38] sm:$0xf]
        %v3863 = vld [vmem:[#allocation8 + $0x3c] sm:$0xf]
        %v3864 = vld [vmem:[#allocation8 + $0x40] sm:$0xf]
        %v3865 = vld [vmem:[#allocation8 + $0x44] sm:$0xf]
        %v3866 = vld [vmem:[#allocation8 + $0x48] sm:$0xf]
        %v3867 = vld [vmem:[#allocation8 + $0x4c] sm:$0xf]
        %v3868 = vld [vmem:[#allocation8 + $0x50] sm:$0xf]
        %v3869 = vld [vmem:[#allocation8 + $0x54] sm:$0xf]
        %v3870 = vld [vmem:[#allocation8 + $0x58] sm:$0xf]
        %v3871 = vld [vmem:[#allocation8 + $0x5c] sm:$0xf]
        %v3872 = vld [vmem:[#allocation8 + $0x60] sm:$0xf]
        %v3873 = vld [vmem:[#allocation8 + $0x64] sm:$0xf]
        %v3874 = vld [vmem:[#allocation8 + $0x68] sm:$0xf]
        %v3875 = vld [vmem:[#allocation8 + $0x6c] sm:$0xf]
        %v3876 = vld [vmem:[#allocation8 + $0x70] sm:$0xf]
        %v3877 = vld [vmem:[#allocation8 + $0x74] sm:$0xf]
        %v3878 = vld [vmem:[#allocation8 + $0x78] sm:$0xf]
        %v3879 = vld [vmem:[#allocation8 + $0x7c] sm:$0xf]
        %v3880 = vld [vmem:[#allocation8 + $0x80] sm:$0xf]
        %v3881 = vld [vmem:[#allocation8 + $0x84] sm:$0xf]
        %v3882 = vld [vmem:[#allocation8 + $0x88] sm:$0xf]
        %v3883 = vld [vmem:[#allocation8 + $0x8c] sm:$0xf]
        %v3884 = vld [vmem:[#allocation8 + $0x90] sm:$0xf]
        %v3885 = vld [vmem:[#allocation8 + $0x94] sm:$0xf]
        %v3886 = vld [vmem:[#allocation8 + $0x98] sm:$0xf]
        %v3887 = vld [vmem:[#allocation8 + $0x9c] sm:$0xf]
        %v3888 = vld [vmem:[#allocation8 + $0xa0] sm:$0xf]
        %v3889 = vld [vmem:[#allocation8 + $0xa4] sm:$0xf]
        %v3890 = vld [vmem:[#allocation8 + $0xa8] sm:$0xf]
        %v3891 = vld [vmem:[#allocation8 + $0xac] sm:$0xf]
        %v3892 = vld [vmem:[#allocation8 + $0xb0] sm:$0xf]
        %v3893 = vld [vmem:[#allocation8 + $0xb4] sm:$0xf]
        %v3894 = vld [vmem:[#allocation8 + $0xb8] sm:$0xf]
        %v3895 = vld [vmem:[#allocation8 + $0xbc] sm:$0xf]
        %v3896 = vld [vmem:[#allocation8 + $0xc0] sm:$0xf]
        %v3897 = vld [vmem:[#allocation8 + $0xc4] sm:$0xf]
        %v3898 = vld [vmem:[#allocation8 + $0xc8] sm:$0xf]
        %v3899 = vld [vmem:[#allocation8 + $0xcc] sm:$0xf]
        %v3900 = vld [vmem:[#allocation8 + $0xd0] sm:$0xf]
        %v3901 = vld [vmem:[#allocation8 + $0xd4] sm:$0xf]
        %v3902 = vld [vmem:[#allocation8 + $0xd8] sm:$0xf]
        %v3903 = vld [vmem:[#allocation8 + $0xdc] sm:$0xf]
        %v3904 = vld [vmem:[#allocation8 + $0xe0] sm:$0xf]
        %v3905 = vld [vmem:[#allocation8 + $0xe4] sm:$0xf]
        %v3906 = vld [vmem:[#allocation8 + $0xe8] sm:$0xf]
        %v3907 = vld [vmem:[#allocation8 + $0xec] sm:$0xf]
        %v3908 = vld [vmem:[#allocation8 + $0xf0] sm:$0xf]
        %v3909 = vld [vmem:[#allocation8 + $0xf4] sm:$0xf]
        %v3910 = vld [vmem:[#allocation8 + $0xf8] sm:$0xf]
        %v3911 = vld [vmem:[#allocation8 + $0xfc] sm:$0xf]
        %v3912 = vld [vmem:[#allocation8 + $0x100] sm:$0xf]
        %v3913 = vld [vmem:[#allocation8 + $0x104] sm:$0xf]
        %v3914 = vld [vmem:[#allocation8 + $0x108] sm:$0xf]
        %v3915 = vld [vmem:[#allocation8 + $0x10c] sm:$0xf]
        %v3916 = vld [vmem:[#allocation8 + $0x110] sm:$0xf]
        %v3917 = vld [vmem:[#allocation8 + $0x114] sm:$0xf]
        %v3918 = vld [vmem:[#allocation8 + $0x118] sm:$0xf]
        %v3919 = vld [vmem:[#allocation8 + $0x11c] sm:$0xf]
        %v3920 = vld [vmem:[#allocation8 + $0x120] sm:$0xf]
        %v3921 = vld [vmem:[#allocation8 + $0x124] sm:$0xf]
        %v3922 = vld [vmem:[#allocation8 + $0x128] sm:$0xf]
        %v3923 = vld [vmem:[#allocation8 + $0x12c] sm:$0xf]
        %v3924 = vld [vmem:[#allocation8 + $0x130] sm:$0xf]
        %v3925 = vld [vmem:[#allocation8 + $0x134] sm:$0xf]
        %v3926 = vld [vmem:[#allocation8 + $0x138] sm:$0xf]
        %v3927 = vld [vmem:[#allocation8 + $0x13c] sm:$0xf]
        %v3928 = vld [vmem:[#allocation8 + $0x140] sm:$0xf]
        %v3929 = vld [vmem:[#allocation8 + $0x144] sm:$0xf]
        %v3930 = vld [vmem:[#allocation8 + $0x148] sm:$0xf]
        %v3931 = vld [vmem:[#allocation8 + $0x14c] sm:$0xf]
        %v3932 = vld [vmem:[#allocation8 + $0x150] sm:$0xf]
        %v3933 = vld [vmem:[#allocation8 + $0x154] sm:$0xf]
        %v3934 = vld [vmem:[#allocation8 + $0x158] sm:$0xf]
        %v3935 = vld [vmem:[#allocation8 + $0x15c] sm:$0xf]
        %v3936 = vld [vmem:[#allocation8 + $0x160] sm:$0xf]
        %v3937 = vld [vmem:[#allocation8 + $0x164] sm:$0xf]
        %v3938 = vld [vmem:[#allocation8 + $0x168] sm:$0xf]
        %v3939 = vld [vmem:[#allocation8 + $0x16c] sm:$0xf]
        %v3940 = vld [vmem:[#allocation8 + $0x170] sm:$0xf]
        %v3941 = vld [vmem:[#allocation8 + $0x174] sm:$0xf]
        %v3942 = vld [vmem:[#allocation8 + $0x178] sm:$0xf]
        %v3943 = vld [vmem:[#allocation8 + $0x17c] sm:$0xf]
        %v3944 = vld [vmem:[%s43] sm:$0x1]
        %v3946 = vperm.slane %v3944, 0
        %vm3948 = vsmask.f32 4352
        %v3950 = vshrl.u32 %v3836, 16
        %v3952 = vrot.slane %v3950, 3
        %v3953 = vshll.u32 %v3836, 16
        %v3955 = vrot.slane %v3953, 4
        %v3956 = vor.u32 %v3952, %v3955
        %v3958 = vshrl.u32 %v3842, 16
        %v3960 = vrot.slane %v3958, 3
        %v3961 = vshll.u32 %v3842, 16
        %v3963 = vrot.slane %v3961, 4
        %v3964 = vor.u32 %v3960, %v3963
        %v3965 = vsel %vm3948, %v3956, %v3964
        %v3967 = vshrl.u32 %v3837, 16
        %v3969 = vrot.slane %v3967, 3
        %v3970 = vshll.u32 %v3837, 16
        %v3972 = vrot.slane %v3970, 4
        %v3973 = vor.u32 %v3969, %v3972
        %v3975 = vshrl.u32 %v3843, 16
        %v3977 = vrot.slane %v3975, 3
        %v3978 = vshll.u32 %v3843, 16
        %v3980 = vrot.slane %v3978, 4
        %v3981 = vor.u32 %v3977, %v3980
        %v3982 = vsel %vm3948, %v3973, %v3981
        %v3984 = vshrl.u32 %v3838, 16
        %v3986 = vrot.slane %v3984, 3
        %v3987 = vshll.u32 %v3838, 16
        %v3989 = vrot.slane %v3987, 4
        %v3990 = vor.u32 %v3986, %v3989
        %v3992 = vshrl.u32 %v3844, 16
        %v3994 = vrot.slane %v3992, 3
        %v3995 = vshll.u32 %v3844, 16
        %v3997 = vrot.slane %v3995, 4
        %v3998 = vor.u32 %v3994, %v3997
        %v3999 = vsel %vm3948, %v3990, %v3998
        %v4001 = vshrl.u32 %v3839, 16
        %v4003 = vrot.slane %v4001, 3
        %v4004 = vshll.u32 %v3839, 16
        %v4006 = vrot.slane %v4004, 4
        %v4007 = vor.u32 %v4003, %v4006
        %v4009 = vshrl.u32 %v3845, 16
        %v4011 = vrot.slane %v4009, 3
        %v4012 = vshll.u32 %v3845, 16
        %v4014 = vrot.slane %v4012, 4
        %v4015 = vor.u32 %v4011, %v4014
        %v4016 = vsel %vm3948, %v4007, %v4015
        %v4018 = vshrl.u32 %v3840, 16
        %v4020 = vrot.slane %v4018, 3
        %v4021 = vshll.u32 %v3840, 16
        %v4023 = vrot.slane %v4021, 4
        %v4024 = vor.u32 %v4020, %v4023
        %v4026 = vshrl.u32 %v3846, 16
        %v4028 = vrot.slane %v4026, 3
        %v4029 = vshll.u32 %v3846, 16
        %v4031 = vrot.slane %v4029, 4
        %v4032 = vor.u32 %v4028, %v4031
        %v4033 = vsel %vm3948, %v4024, %v4032
        %v4035 = vshrl.u32 %v3841, 16
        %v4037 = vrot.slane %v4035, 3
        %v4038 = vshll.u32 %v3841, 16
        %v4040 = vrot.slane %v4038, 4
        %v4041 = vor.u32 %v4037, %v4040
        %v4043 = vshrl.u32 %v3847, 16
        %v4045 = vrot.slane %v4043, 3
        %v4046 = vshll.u32 %v3847, 16
        %v4048 = vrot.slane %v4046, 4
        %v4049 = vor.u32 %v4045, %v4048
        %v4050 = vsel %vm3948, %v4041, %v4049
        %v4153 = vunpack.c.l.b16 %v3848
        %v4154 = vunpack.c.l.b16 %v3849
        %v4155 = vunpack.c.l.b16 %v3850
        %v4156 = vunpack.c.l.b16 %v3851
        %v4157 = vunpack.c.l.b16 %v3852
        %v4158 = vunpack.c.l.b16 %v3853
        %v4159 = vunpack.c.l.b16 %v3854
        %v4160 = vunpack.c.l.b16 %v3855
        %v4161 = vunpack.c.l.b16 %v3856
        %v4162 = vunpack.c.l.b16 %v3857
        %v4163 = vunpack.c.l.b16 %v3858
        %v4164 = vunpack.c.l.b16 %v3859
        %v4165 = vunpack.c.l.b16 %v3860
        %v4166 = vunpack.c.l.b16 %v3861
        %v4167 = vunpack.c.l.b16 %v3862
        %v4168 = vunpack.c.l.b16 %v3863
        %v4169 = vunpack.c.l.b16 %v3864
        %v4170 = vunpack.c.l.b16 %v3865
        %v4171 = vunpack.c.l.b16 %v3866
        %v4172 = vunpack.c.l.b16 %v3867
        %v4173 = vunpack.c.l.b16 %v3868
        %v4174 = vunpack.c.l.b16 %v3869
        %v4175 = vunpack.c.l.b16 %v3870
        %v4176 = vunpack.c.l.b16 %v3871
        %v4177 = vunpack.c.l.b16 %v3872
        %v4178 = vunpack.c.l.b16 %v3873
        %v4179 = vunpack.c.l.b16 %v3874
        %v4180 = vunpack.c.l.b16 %v3875
        %v4181 = vunpack.c.l.b16 %v3876
        %v4182 = vunpack.c.l.b16 %v3877
        %v4183 = vunpack.c.l.b16 %v3878
        %v4184 = vunpack.c.l.b16 %v3879
        %v4185 = vunpack.c.l.b16 %v3880
        %v4186 = vunpack.c.l.b16 %v3881
        %v4187 = vunpack.c.l.b16 %v3882
        %v4188 = vunpack.c.l.b16 %v3883
        %v4189 = vunpack.c.l.b16 %v3884
        %v4190 = vunpack.c.l.b16 %v3885
        %v4191 = vunpack.c.l.b16 %v3886
        %v4192 = vunpack.c.l.b16 %v3887
        %v4193 = vunpack.c.l.b16 %v3888
        %v4194 = vunpack.c.l.b16 %v3889
        %v4195 = vunpack.c.l.b16 %v3890
        %v4196 = vunpack.c.l.b16 %v3891
        %v4197 = vunpack.c.l.b16 %v3892
        %v4198 = vunpack.c.l.b16 %v3893
        %v4199 = vunpack.c.l.b16 %v3894
        %v4200 = vunpack.c.l.b16 %v3895
        %v4201 = vunpack.c.l.b16 %v3896
        %v4202 = vunpack.c.l.b16 %v3897
        %v4203 = vunpack.c.l.b16 %v3898
        %v4204 = vunpack.c.l.b16 %v3899
        %v4205 = vunpack.c.l.b16 %v3900
        %v4206 = vunpack.c.l.b16 %v3901
        %v4207 = vunpack.c.l.b16 %v3902
        %v4208 = vunpack.c.l.b16 %v3903
        %v4209 = vunpack.c.l.b16 %v3904
        %v4210 = vunpack.c.l.b16 %v3905
        %v4211 = vunpack.c.l.b16 %v3906
        %v4212 = vunpack.c.l.b16 %v3907
        %v4213 = vunpack.c.l.b16 %v3908
        %v4214 = vunpack.c.l.b16 %v3909
        %v4215 = vunpack.c.l.b16 %v3910
        %v4216 = vunpack.c.l.b16 %v3911
        %v4217 = vunpack.c.l.b16 %v3912
        %v4218 = vunpack.c.l.b16 %v3913
        %v4219 = vunpack.c.l.b16 %v3914
        %v4220 = vunpack.c.l.b16 %v3915
        %v4221 = vunpack.c.l.b16 %v3916
        %v4222 = vunpack.c.l.b16 %v3917
        %v4223 = vunpack.c.l.b16 %v3918
        %v4224 = vunpack.c.l.b16 %v3919
        %v4225 = vunpack.c.l.b16 %v3920
        %v4226 = vunpack.c.l.b16 %v3921
        %v4227 = vunpack.c.l.b16 %v3922
        %v4228 = vunpack.c.l.b16 %v3923
        %v4229 = vunpack.c.l.b16 %v3924
        %v4230 = vunpack.c.l.b16 %v3925
        %v4231 = vunpack.c.l.b16 %v3926
        %v4232 = vunpack.c.l.b16 %v3927
        %v4233 = vunpack.c.l.b16 %v3928
        %v4234 = vunpack.c.l.b16 %v3929
        %v4235 = vunpack.c.l.b16 %v3930
        %v4236 = vunpack.c.l.b16 %v3931
        %v4237 = vunpack.c.l.b16 %v3932
        %v4238 = vunpack.c.l.b16 %v3933
        %v4239 = vunpack.c.l.b16 %v3934
        %v4240 = vunpack.c.l.b16 %v3935
        %v4241 = vunpack.c.l.b16 %v3936
        %v4242 = vunpack.c.l.b16 %v3937
        %v4243 = vunpack.c.l.b16 %v3938
        %v4244 = vunpack.c.l.b16 %v3939
        %v4245 = vunpack.c.l.b16 %v3940
        %v4246 = vunpack.c.l.b16 %v3941
        %v4247 = vunpack.c.l.b16 %v3942
        %v4248 = vunpack.c.l.b16 %v3943
        %v4249 = vpack.c.b16 %v4154, %v4153
        %v4250 = vpack.c.b16 %v4156, %v4155
        %v4251 = vpack.c.b16 %v4158, %v4157
        %v4252 = vpack.c.b16 %v4160, %v4159
        %v4253 = vpack.c.b16 %v4162, %v4161
        %v4254 = vpack.c.b16 %v4164, %v4163
        %v4255 = vpack.c.b16 %v4166, %v4165
        %v4256 = vpack.c.b16 %v4168, %v4167
        %v4257 = vpack.c.b16 %v4170, %v4169
        %v4258 = vpack.c.b16 %v4172, %v4171
        %v4259 = vpack.c.b16 %v4174, %v4173
        %v4260 = vpack.c.b16 %v4176, %v4175
        %v4261 = vpack.c.b16 %v4178, %v4177
        %v4262 = vpack.c.b16 %v4180, %v4179
        %v4263 = vpack.c.b16 %v4182, %v4181
        %v4264 = vpack.c.b16 %v4184, %v4183
        %v4265 = vpack.c.b16 %v4186, %v4185
        %v4266 = vpack.c.b16 %v4188, %v4187
        %v4267 = vpack.c.b16 %v4190, %v4189
        %v4268 = vpack.c.b16 %v4192, %v4191
        %v4269 = vpack.c.b16 %v4194, %v4193
        %v4270 = vpack.c.b16 %v4196, %v4195
        %v4271 = vpack.c.b16 %v4198, %v4197
        %v4272 = vpack.c.b16 %v4200, %v4199
        %v4273 = vpack.c.b16 %v4202, %v4201
        %v4274 = vpack.c.b16 %v4204, %v4203
        %v4275 = vpack.c.b16 %v4206, %v4205
        %v4276 = vpack.c.b16 %v4208, %v4207
        %v4277 = vpack.c.b16 %v4210, %v4209
        %v4278 = vpack.c.b16 %v4212, %v4211
        %v4279 = vpack.c.b16 %v4214, %v4213
        %v4280 = vpack.c.b16 %v4216, %v4215
        %v4281 = vpack.c.b16 %v4218, %v4217
        %v4282 = vpack.c.b16 %v4220, %v4219
        %v4283 = vpack.c.b16 %v4222, %v4221
        %v4284 = vpack.c.b16 %v4224, %v4223
        %v4285 = vpack.c.b16 %v4226, %v4225
        %v4286 = vpack.c.b16 %v4228, %v4227
        %v4287 = vpack.c.b16 %v4230, %v4229
        %v4288 = vpack.c.b16 %v4232, %v4231
        %v4289 = vpack.c.b16 %v4234, %v4233
        %v4290 = vpack.c.b16 %v4236, %v4235
        %v4291 = vpack.c.b16 %v4238, %v4237
        %v4292 = vpack.c.b16 %v4240, %v4239
        %v4293 = vpack.c.b16 %v4242, %v4241
        %v4294 = vpack.c.b16 %v4244, %v4243
        %v4295 = vpack.c.b16 %v4246, %v4245
        %v4296 = vpack.c.b16 %v4248, %v4247
        %4345 = vmatpush.bf16.msra.mxu0 %v4256
        %4346 = vmatpush.bf16.msra.mxu0 %v4255
        %4347 = vmatpush.bf16.msra.mxu0 %v4254
        %4348 = vmatpush.bf16.msra.mxu0 %v4253
        %4349 = vmatpush.bf16.msra.mxu0 %v4252
        %4350 = vmatpush.bf16.msra.mxu0 %v4251
        %4351 = vmatpush.bf16.msra.mxu0 %v4250
        %4352 = vmatpush.bf16.msra.mxu0 %v4249
        %4353 = vmatmul.bf16.gmra.mxu0 %v3965
        %v4354 = vpop.f32.mrf.mxu0
        %v4355 = vadd.f32 %v3946, %v4354
        %v4356 = vpop.f32.mrf.mxu0
        %v4357 = vadd.f32 %v3946, %v4356
        %4358 = vdwg.mxu0
        %4359 = vmatpush.bf16.msra.mxu0 %v4264
        %4360 = vmatpush.bf16.msra.mxu0 %v4263
        %4361 = vmatpush.bf16.msra.mxu0 %v4262
        %4362 = vmatpush.bf16.msra.mxu0 %v4261
        %4363 = vmatpush.bf16.msra.mxu0 %v4260
        %4364 = vmatpush.bf16.msra.mxu0 %v4259
        %4365 = vmatpush.bf16.msra.mxu0 %v4258
        %4366 = vmatpush.bf16.msra.mxu0 %v4257
        %4367 = vmatmul.bf16.gmra.mxu0 %v3982
        %v4368 = vpop.f32.mrf.mxu0
        %v4369 = vadd.f32 %v4355, %v4368
        %v4370 = vpop.f32.mrf.mxu0
        %v4371 = vadd.f32 %v4357, %v4370
        %4372 = vdwg.mxu0
        %4373 = vmatpush.bf16.msra.mxu0 %v4272
        %4374 = vmatpush.bf16.msra.mxu0 %v4271
        %4375 = vmatpush.bf16.msra.mxu0 %v4270
        %4376 = vmatpush.bf16.msra.mxu0 %v4269
        %4377 = vmatpush.bf16.msra.mxu0 %v4268
        %4378 = vmatpush.bf16.msra.mxu0 %v4267
        %4379 = vmatpush.bf16.msra.mxu0 %v4266
        %4380 = vmatpush.bf16.msra.mxu0 %v4265
        %4381 = vmatmul.bf16.gmra.mxu0 %v3999
        %v4382 = vpop.f32.mrf.mxu0
        %v4383 = vadd.f32 %v4369, %v4382
        %v4384 = vpop.f32.mrf.mxu0
        %v4385 = vadd.f32 %v4371, %v4384
        %4386 = vdwg.mxu0
        %4387 = vmatpush.bf16.msra.mxu0 %v4280
        %4388 = vmatpush.bf16.msra.mxu0 %v4279
        %4389 = vmatpush.bf16.msra.mxu0 %v4278
        %4390 = vmatpush.bf16.msra.mxu0 %v4277
        %4391 = vmatpush.bf16.msra.mxu0 %v4276
        %4392 = vmatpush.bf16.msra.mxu0 %v4275
        %4393 = vmatpush.bf16.msra.mxu0 %v4274
        %4394 = vmatpush.bf16.msra.mxu0 %v4273
        %4395 = vmatmul.bf16.gmra.mxu0 %v4016
        %v4396 = vpop.f32.mrf.mxu0
        %v4397 = vadd.f32 %v4383, %v4396
        %v4398 = vpop.f32.mrf.mxu0
        %v4399 = vadd.f32 %v4385, %v4398
        %4400 = vdwg.mxu0
        %4401 = vmatpush.bf16.msra.mxu0 %v4288
        %4402 = vmatpush.bf16.msra.mxu0 %v4287
        %4403 = vmatpush.bf16.msra.mxu0 %v4286
        %4404 = vmatpush.bf16.msra.mxu0 %v4285
        %4405 = vmatpush.bf16.msra.mxu0 %v4284
        %4406 = vmatpush.bf16.msra.mxu0 %v4283
        %4407 = vmatpush.bf16.msra.mxu0 %v4282
        %4408 = vmatpush.bf16.msra.mxu0 %v4281
        %4409 = vmatmul.bf16.gmra.mxu0 %v4033
        %v4410 = vpop.f32.mrf.mxu0
        %v4411 = vadd.f32 %v4397, %v4410
        %v4412 = vpop.f32.mrf.mxu0
        %v4413 = vadd.f32 %v4399, %v4412
        %4414 = vdwg.mxu0
        %4415 = vmatpush.bf16.msra.mxu0 %v4296
        %4416 = vmatpush.bf16.msra.mxu0 %v4295
        %4417 = vmatpush.bf16.msra.mxu0 %v4294
        %4418 = vmatpush.bf16.msra.mxu0 %v4293
        %4419 = vmatpush.bf16.msra.mxu0 %v4292
        %4420 = vmatpush.bf16.msra.mxu0 %v4291
        %4421 = vmatpush.bf16.msra.mxu0 %v4290
        %4422 = vmatpush.bf16.msra.mxu0 %v4289
        %4423 = vmatmul.bf16.gmra.mxu0 %v4050
        %v4424 = vpop.f32.mrf.mxu0
        %v4425 = vadd.f32 %v4411, %v4424
        %v4426 = vpop.f32.mrf.mxu0
        %v4427 = vadd.f32 %v4413, %v4426
        %4428 = vdwg.mxu0
        %v4429 = vmul.f32 %v4425, 1.442695
        %v4430 = vpow.pop %v4429
        %v4431 = vmul.f32 %v4427, 1.442695
        %v4432 = vpow.pop %v4431
        %v4433 = vadd.f32 %v4430, 1.0
        %v4434 = vadd.f32 %v4432, 1.0
        %v4435 = vlog2.pop %v4433
        %v4436 = vmul.f32 %v4435, 0.6931472
        %v4437 = vlog2.pop %v4434
        %v4438 = vmul.f32 %v4437, 0.6931472
        %v4439 = vtanh.pop %v4436
        %v4440 = vtanh.pop %v4438
        %v4441 = vmul.f32 %v4425, %v4439
        %v4442 = vmul.f32 %v4427, %v4440
        %v4443 = vadd.f32 %v4441, %v4442
        %v4444 = vrot.slane %v4443, 4
        %v4445 = vadd.f32 %v4443, %v4444
        %v4446 = vrot.slane %v4445, 2
        %v4447 = vadd.f32 %v4445, %v4446
        %v4448 = vrot.slane %v4447, 1
        %v4449 = vadd.f32 %v4447, %v4448
        %v4450 = vrcp.pop 16.0
        %v4451 = vmul.f32 16.0, %v4450
        %v4452 = vsub.f32 1.0, %v4451
        %v4453 = vmul.f32 %v4450, %v4452
        %v4454 = vadd.f32 %v4450, %v4453
        %vm4455 = vweird.f32 %v4450
        %v4456 = vsel %vm4455, %v4450, %v4454
        %v4457 = vmul.f32 %v4449, %v4456
        %v4458 = vpack.c.bf16 %v4457, %v4457
        %v4459 = vld [vmem:[%s45] sm:$0xf]
        %v4460 = vld [vmem:[%s45 + $0x4] sm:$0xf]
        %v4461 = vld [vmem:[%s45 + $0x8] sm:$0xf]
        %v4462 = vld [vmem:[%s45 + $0xc] sm:$0xf]
        %v4463 = vld [vmem:[%s45 + $0x10] sm:$0xf]
        %v4464 = vld [vmem:[%s45 + $0x14] sm:$0xf]
        %v4465 = vld [vmem:[%s45 + $0x18] sm:$0xf]
        %v4466 = vld [vmem:[%s45 + $0x1c] sm:$0xf]
        %v4467 = vld [vmem:[%s45 + $0x20] sm:$0xf]
        %v4468 = vld [vmem:[%s45 + $0x24] sm:$0xf]
        %v4469 = vld [vmem:[%s45 + $0x28] sm:$0xf]
        %v4470 = vld [vmem:[%s45 + $0x2c] sm:$0xf]
        %v4471 = vld [vmem:[%s45 + $0x30] sm:$0xf]
        %v4472 = vld [vmem:[%s45 + $0x34] sm:$0xf]
        %v4473 = vld [vmem:[%s45 + $0x38] sm:$0xf]
        %v4474 = vld [vmem:[%s45 + $0x3c] sm:$0xf]
        %v4475 = vld [vmem:[%s47] sm:$0x1]
        %v4492 = vunpack.c.l.b16 %v4459
        %v4493 = vunpack.c.l.b16 %v4460
        %v4494 = vunpack.c.l.b16 %v4461
        %v4495 = vunpack.c.l.b16 %v4462
        %v4496 = vunpack.c.l.b16 %v4463
        %v4497 = vunpack.c.l.b16 %v4464
        %v4498 = vunpack.c.l.b16 %v4465
        %v4499 = vunpack.c.l.b16 %v4466
        %v4500 = vunpack.c.l.b16 %v4467
        %v4501 = vunpack.c.l.b16 %v4468
        %v4502 = vunpack.c.l.b16 %v4469
        %v4503 = vunpack.c.l.b16 %v4470
        %v4504 = vunpack.c.l.b16 %v4471
        %v4505 = vunpack.c.l.b16 %v4472
        %v4506 = vunpack.c.l.b16 %v4473
        %v4507 = vunpack.c.l.b16 %v4474
        %v4508 = vpack.c.b16 %v4493, %v4492
        %v4509 = vpack.c.b16 %v4495, %v4494
        %v4510 = vpack.c.b16 %v4497, %v4496
        %v4511 = vpack.c.b16 %v4499, %v4498
        %v4512 = vpack.c.b16 %v4501, %v4500
        %v4513 = vpack.c.b16 %v4503, %v4502
        %v4514 = vpack.c.b16 %v4505, %v4504
        %v4515 = vpack.c.b16 %v4507, %v4506
        %4524 = vmatpush.bf16.msra.mxu0 %v4515
        %4525 = vmatpush.bf16.msra.mxu0 %v4514
        %4526 = vmatpush.bf16.msra.mxu0 %v4513
        %4527 = vmatpush.bf16.msra.mxu0 %v4512
        %4528 = vmatpush.bf16.msra.mxu0 %v4511
        %4529 = vmatpush.bf16.msra.mxu0 %v4510
        %4530 = vmatpush.bf16.msra.mxu0 %v4509
        %4531 = vmatpush.bf16.msra.mxu0 %v4508
        %4532 = vmatmul.bf16.gmra.mxu0 %v4458
        %v4533 = vpop.f32.mrf.mxu0
        %v4534 = vadd.f32 %v4475, %v4533
        %v4535 = vpop.f32.mrf.mxu0
        %4536 = vdwg.mxu0
        %vm4537 = vcmask 57344
        %v4538 = vsel %vm4537, %v4534, -inf
        %4539 = vmax.xlane.f32.xlu0 %v4538
        %v4540 = vpop.xlane.xlu0 %4539
        %v4541 = vsub.f32 %v4534, %v4540
        %v4542 = vmul.f32 %v4541, 1.442695
        %v4543 = vpow.pop %v4542
        %v4544 = vsel %vm4537, %v4543, 0.0
        %4545 = vadd.xlane.f32.xlu0 %v4544
        %v4546 = vpop.xlane.xlu0 %4545
        %v4547 = vrcp.pop %v4546
        %v4548 = vmul.f32 %v4543, %v4547
        %v4549 = vlaneseq
        %v4550 = vand.u32 %v4549, 127
        %v4551 = vrot.slane %v1467, 1
        %v4552 = vsel %vm1205, %v1206, %v4551
        %v4553 = vrot.slane %v1482, 1
        %v4554 = vsel %vm1205, %v4551, %v4553
        %4555 = vrot.lane.b32.xlu0 %v4552, 1
        %v4556 = vpop.permute.xlu0 %4555
        %4557 = vrot.lane.b32.xlu0 %v4554, 1
        %v4558 = vpop.permute.xlu0 %4557
        %4559 = vrot.lane.b32.xlu0 %v4553, 1
        %v4560 = vpop.permute.xlu0 %4559
        %v4564 = vrot.slane %v1467, 2
        %v4565 = vsel %vm1220, %v1221, %v4564
        %v4566 = vrot.slane %v1482, 2
        %v4567 = vsel %vm1220, %v4564, %v4566
        %4568 = vrot.lane.b32.xlu0 %v4565, 2
        %v4569 = vpop.permute.xlu0 %4568
        %4570 = vrot.lane.b32.xlu0 %v4567, 2
        %v4571 = vpop.permute.xlu0 %4570
        %4572 = vrot.lane.b32.xlu0 %v4566, 2
        %v4573 = vpop.permute.xlu0 %4572
        %v4577 = vrot.slane %v1467, 3
        %v4578 = vsel %vm1235, %v1236, %v4577
        %v4579 = vrot.slane %v1482, 3
        %v4580 = vsel %vm1235, %v4577, %v4579
        %4581 = vrot.lane.b32.xlu0 %v4578, 3
        %v4582 = vpop.permute.xlu0 %4581
        %4583 = vrot.lane.b32.xlu0 %v4580, 3
        %v4584 = vpop.permute.xlu0 %4583
        %4585 = vrot.lane.b32.xlu0 %v4579, 3
        %v4586 = vpop.permute.xlu0 %4585
        %v4590 = vrot.slane %v1467, 4
        %v4591 = vsel %vm1250, %v1251, %v4590
        %v4592 = vrot.slane %v1482, 4
        %v4593 = vsel %vm1250, %v4590, %v4592
        %4594 = vrot.lane.b32.xlu0 %v4591, 4
        %v4595 = vpop.permute.xlu0 %4594
        %4596 = vrot.lane.b32.xlu0 %v4593, 4
        %v4597 = vpop.permute.xlu0 %4596
        %4598 = vrot.lane.b32.xlu0 %v4592, 4
        %v4599 = vpop.permute.xlu0 %4598
        %v4603 = vrot.slane %v1467, 5
        %v4604 = vrot.slane %v1482, 5
        %v4605 = vsel %vm1265, %v4603, %v4604
        %4606 = vrot.lane.b32.xlu0 %v4603, 5
        %v4607 = vpop.permute.xlu0 %4606
        %4608 = vrot.lane.b32.xlu0 %v4605, 5
        %v4609 = vpop.permute.xlu0 %4608
        %4610 = vrot.lane.b32.xlu0 %v4604, 5
        %v4611 = vpop.permute.xlu0 %4610
        %v4615 = vrot.slane %v1467, 6
        %v4616 = vrot.slane %v1482, 6
        %v4617 = vsel %vm1278, %v4615, %v4616
        %v4618 = vsel %vm1278, %v4616, %v1282
        %4619 = vrot.lane.b32.xlu0 %v4615, 6
        %v4620 = vpop.permute.xlu0 %4619
        %4621 = vrot.lane.b32.xlu0 %v4617, 6
        %v4622 = vpop.permute.xlu0 %4621
        %4623 = vrot.lane.b32.xlu0 %v4618, 6
        %v4624 = vpop.permute.xlu0 %4623
        %v4628 = vrot.slane %v1467, 7
        %v4629 = vrot.slane %v1482, 7
        %v4630 = vsel %vm1293, %v4628, %v4629
        %v4631 = vsel %vm1293, %v4629, %v1297
        %4632 = vrot.lane.b32.xlu0 %v4628, 7
        %v4633 = vpop.permute.xlu0 %4632
        %4634 = vrot.lane.b32.xlu0 %v4630, 7
        %v4635 = vpop.permute.xlu0 %4634
        %4636 = vrot.lane.b32.xlu0 %v4631, 7
        %v4637 = vpop.permute.xlu0 %4636
        %4641 = vrot.lane.b32.xlu0 %v1467, 8
        %v4642 = vpop.permute.xlu0 %4641
        %4643 = vrot.lane.b32.xlu0 %v1482, 8
        %v4644 = vpop.permute.xlu0 %4643
        %4645 = vrot.lane.b32.xlu0 0.0, 8
        %v4646 = vpop.permute.xlu0 %4645
        %v4650 = vsel %vm1205, %v4553, %v1206
        %4651 = vrot.lane.b32.xlu0 %v4554, 9
        %v4652 = vpop.permute.xlu0 %4651
        %4653 = vrot.lane.b32.xlu0 %v4650, 9
        %v4654 = vpop.permute.xlu0 %4653
        %4655 = vrot.lane.b32.xlu0 %v1206, 9
        %v4656 = vpop.permute.xlu0 %4655
        %v4660 = vsel %vm1220, %v4566, %v1221
        %4661 = vrot.lane.b32.xlu0 %v4567, 10
        %v4662 = vpop.permute.xlu0 %4661
        %4663 = vrot.lane.b32.xlu0 %v4660, 10
        %v4664 = vpop.permute.xlu0 %4663
        %4665 = vrot.lane.b32.xlu0 %v1221, 10
        %v4666 = vpop.permute.xlu0 %4665
        %vm4670 = vcmask 7168
        %v4671 = vsel %vm4670, 0.0, %v4556
        %v4672 = vsel %vm4670, %v1467, %v4558
        %v4673 = vsel %vm4670, %v1482, %v4560
        %vm4674 = vcmask 15360
        %v4675 = vsel %vm4674, %v4671, %v4569
        %v4676 = vsel %vm4674, %v4672, %v4571
        %v4677 = vsel %vm4674, %v4673, %v4573
        %vm4678 = vcmask 23552
        %v4679 = vsel %vm4678, %v4675, %v4582
        %v4680 = vsel %vm4678, %v4676, %v4584
        %v4681 = vsel %vm4678, %v4677, %v4586
        %v4682 = vsel %vm1337, %v4679, %v4595
        %v4683 = vsel %vm1337, %v4680, %v4597
        %v4684 = vsel %vm1337, %v4681, %v4599
        %vm4685 = vcmask 39936
        %v4686 = vsel %vm4685, %v4682, %v4607
        %v4687 = vsel %vm4685, %v4683, %v4609
        %v4688 = vsel %vm4685, %v4684, %v4611
        %vm4689 = vcmask 48128
        %v4690 = vsel %vm4689, %v4686, %v4620
        %v4691 = vsel %vm4689, %v4687, %v4622
        %v4692 = vsel %vm4689, %v4688, %v4624
        %vm4693 = vcmask 56320
        %v4694 = vsel %vm4693, %v4690, %v4633
        %v4695 = vsel %vm4693, %v4691, %v4635
        %v4696 = vsel %vm4693, %v4692, %v4637
        %v4697 = vsel %vm1341, %v4694, %v4642
        %v4698 = vsel %vm1341, %v4695, %v4644
        %v4699 = vsel %vm1341, %v4696, %v4646
        %vm4700 = vcmask 72704
        %v4701 = vsel %vm4700, %v4697, %v4652
        %v4702 = vsel %vm4700, %v4698, %v4654
        %v4703 = vsel %vm4700, %v4699, %v4656
        %vm4704 = vcmask 80896
        %v4705 = vsel %vm4704, %v4701, %v4662
        %v4706 = vsel %vm4704, %v4702, %v4664
        %v4707 = vsel %vm4704, %v4703, %v4666
        %v4708 = vpack.c.bf16 %v4706, %v4705
        %v4709 = vpack.c.bf16 %v4707, %v4707
        %v4710 = vld [vmem:[%s49] sm:$0xf]
        %v4711 = vld [vmem:[%s49 + $0x4] sm:$0x3]
        %v4712 = vld [vmem:[%s51] sm:$0x1]
        %v4714 = vperm.slane %v4712, 0
        %v4717 = vshrl.u32 %v4708, 16
        %v4719 = vrot.slane %v4717, 1
        %v4720 = vshll.u32 %v4708, 16
        %v4722 = vrot.slane %v4720, 2
        %v4723 = vor.u32 %v4719, %v4722
        %v4725 = vshrl.u32 %v4709, 16
        %v4727 = vrot.slane %v4725, 1
        %v4728 = vshll.u32 %v4709, 16
        %v4730 = vrot.slane %v4728, 2
        %v4731 = vor.u32 %v4727, %v4730
        %v4732 = vsel %vm1389, %v4723, %v4731
        %v4735 = vunpack.c.l.b16 %v4710
        %v4736 = vunpack.c.l.b16 %v4711
        %v4737 = vpack.c.b16 %v4736, %v4735
        %vm4738 = vcmask 89088
        %v4740 = vsel %vm4738, %v4732, 0
        %v4742 = vsel %vm1235, 4294967295, 65535
        %v4743 = vsel %vm1220, %v4742, 0
        %v4745 = vand.u32 %v4737, %v4743
        %4747 = vmatpush.bf16.msra.mxu0 0
        %4748 = vmatpush.bf16.msra.mxu0 0
        %4749 = vmatpush.bf16.msra.mxu0 0
        %4750 = vmatpush.bf16.msra.mxu0 0
        %4751 = vmatpush.bf16.msra.mxu0 0
        %4752 = vmatpush.bf16.msra.mxu0 0
        %4753 = vmatpush.bf16.msra.mxu0 0
        %4754 = vmatpush.bf16.msra.mxu0 %v4745
        %4755 = vmatmul.bf16.gmra.mxu0 %v4740
        %v4756 = vpop.f32.mrf.mxu0
        %v4757 = vadd.f32 %v4714, %v4756
        %v4758 = vpop.f32.mrf.mxu0
        %v4759 = vadd.f32 %v4714, %v4758
        %4760 = vdwg.mxu0
        %v4761 = vmax.f32 %v4757, 0.0
        %v4762 = vmax.f32 %v4759, 0.0
        %v4763 = vld [vmem:[%s55] sm:$0x1]
        %v4764 = vld [vmem:[%s53] sm:$0xff]
        %v4765 = vld [vmem:[%s53 + $0x8] sm:$0xff]
        %v4766 = vmul.f32 %v4761, %v4764
        %v4767 = vmul.f32 %v4762, %v4765
        %v4768 = vsel %vm1349, %v4766, 0.0
        %4769 = vadd.xlane.f32.xlu0 %v4768
        %v4770 = vpop.xlane.xlu0 %4769
        %v4771 = vsel %vm1349, %v4767, 0.0
        %4772 = vadd.xlane.f32.xlu0 %v4771
        %v4773 = vpop.xlane.xlu0 %4772
        %v4774 = vadd.f32 %v4770, %v4773
        %v4775 = vrot.slane %v4774, 4
        %v4776 = vadd.f32 %v4774, %v4775
        %v4777 = vrot.slane %v4776, 2
        %v4778 = vadd.f32 %v4776, %v4777
        %v4779 = vrot.slane %v4778, 1
        %v4780 = vadd.f32 %v4778, %v4779
        %vm4781 = vcmp.eq.s32.totalorder %v4550, 0
        %v4782 = vsel %vm4781, %v4780, 0.0
        %v4783 = vadd.f32 %v4763, %v4782
        %s4784 = scalar_lea.vmem %s53, 16
        %v4785 = vld [vmem:[%s4784] sm:$0xff]
        %v4786 = vld [vmem:[%s4784 + $0x8] sm:$0xff]
        %v4787 = vmul.f32 %v4761, %v4785
        %v4788 = vmul.f32 %v4762, %v4786
        %v4789 = vsel %vm1349, %v4787, 0.0
        %4790 = vadd.xlane.f32.xlu0 %v4789
        %v4791 = vpop.xlane.xlu0 %4790
        %v4792 = vsel %vm1349, %v4788, 0.0
        %4793 = vadd.xlane.f32.xlu0 %v4792
        %v4794 = vpop.xlane.xlu0 %4793
        %v4795 = vadd.f32 %v4791, %v4794
        %v4796 = vrot.slane %v4795, 4
        %v4797 = vadd.f32 %v4795, %v4796
        %v4798 = vrot.slane %v4797, 2
        %v4799 = vadd.f32 %v4797, %v4798
        %v4800 = vrot.slane %v4799, 1
        %v4801 = vadd.f32 %v4799, %v4800
        %vm4802 = vcmp.eq.s32.totalorder %v4550, 1
        %v4803 = vsel %vm4802, %v4801, 0.0
        %v4804 = vadd.f32 %v4783, %v4803
        %s4805 = scalar_lea.vmem %s53, 32
        %v4806 = vld [vmem:[%s4805] sm:$0xff]
        %v4807 = vld [vmem:[%s4805 + $0x8] sm:$0xff]
        %v4808 = vmul.f32 %v4761, %v4806
        %v4809 = vmul.f32 %v4762, %v4807
        %v4810 = vsel %vm1349, %v4808, 0.0
        %4811 = vadd.xlane.f32.xlu0 %v4810
        %v4812 = vpop.xlane.xlu0 %4811
        %v4813 = vsel %vm1349, %v4809, 0.0
        %4814 = vadd.xlane.f32.xlu0 %v4813
        %v4815 = vpop.xlane.xlu0 %4814
        %v4816 = vadd.f32 %v4812, %v4815
        %v4817 = vrot.slane %v4816, 4
        %v4818 = vadd.f32 %v4816, %v4817
        %v4819 = vrot.slane %v4818, 2
        %v4820 = vadd.f32 %v4818, %v4819
        %v4821 = vrot.slane %v4820, 1
        %v4822 = vadd.f32 %v4820, %v4821
        %vm4823 = vcmp.eq.s32.totalorder %v4550, 2
        %v4824 = vsel %vm4823, %v4822, 0.0
        %v4825 = vadd.f32 %v4804, %v4824
        %s4826 = scalar_lea.vmem %s53, 48
        %v4827 = vld [vmem:[%s4826] sm:$0xff]
        %v4828 = vld [vmem:[%s4826 + $0x8] sm:$0xff]
        %v4829 = vmul.f32 %v4761, %v4827
        %v4830 = vmul.f32 %v4762, %v4828
        %v4831 = vsel %vm1349, %v4829, 0.0
        %4832 = vadd.xlane.f32.xlu0 %v4831
        %v4833 = vpop.xlane.xlu0 %4832
        %v4834 = vsel %vm1349, %v4830, 0.0
        %4835 = vadd.xlane.f32.xlu0 %v4834
        %v4836 = vpop.xlane.xlu0 %4835
        %v4837 = vadd.f32 %v4833, %v4836
        %v4838 = vrot.slane %v4837, 4
        %v4839 = vadd.f32 %v4837, %v4838
        %v4840 = vrot.slane %v4839, 2
        %v4841 = vadd.f32 %v4839, %v4840
        %v4842 = vrot.slane %v4841, 1
        %v4843 = vadd.f32 %v4841, %v4842
        %vm4844 = vcmp.eq.s32.totalorder %v4550, 3
        %v4845 = vsel %vm4844, %v4843, 0.0
        %v4846 = vadd.f32 %v4825, %v4845
        %s4847 = scalar_lea.vmem %s53, 64
        %v4848 = vld [vmem:[%s4847] sm:$0xff]
        %v4849 = vld [vmem:[%s4847 + $0x8] sm:$0xff]
        %v4850 = vmul.f32 %v4761, %v4848
        %v4851 = vmul.f32 %v4762, %v4849
        %v4852 = vsel %vm1349, %v4850, 0.0
        %4853 = vadd.xlane.f32.xlu0 %v4852
        %v4854 = vpop.xlane.xlu0 %4853
        %v4855 = vsel %vm1349, %v4851, 0.0
        %4856 = vadd.xlane.f32.xlu0 %v4855
        %v4857 = vpop.xlane.xlu0 %4856
        %v4858 = vadd.f32 %v4854, %v4857
        %v4859 = vrot.slane %v4858, 4
        %v4860 = vadd.f32 %v4858, %v4859
        %v4861 = vrot.slane %v4860, 2
        %v4862 = vadd.f32 %v4860, %v4861
        %v4863 = vrot.slane %v4862, 1
        %v4864 = vadd.f32 %v4862, %v4863
        %vm4865 = vcmp.eq.s32.totalorder %v4550, 4
        %v4866 = vsel %vm4865, %v4864, 0.0
        %v4867 = vadd.f32 %v4846, %v4866
        %s4868 = scalar_lea.vmem %s53, 80
        %v4869 = vld [vmem:[%s4868] sm:$0xff]
        %v4870 = vld [vmem:[%s4868 + $0x8] sm:$0xff]
        %v4871 = vmul.f32 %v4761, %v4869
        %v4872 = vmul.f32 %v4762, %v4870
        %v4873 = vsel %vm1349, %v4871, 0.0
        %4874 = vadd.xlane.f32.xlu0 %v4873
        %v4875 = vpop.xlane.xlu0 %4874
        %v4876 = vsel %vm1349, %v4872, 0.0
        %4877 = vadd.xlane.f32.xlu0 %v4876
        %v4878 = vpop.xlane.xlu0 %4877
        %v4879 = vadd.f32 %v4875, %v4878
        %v4880 = vrot.slane %v4879, 4
        %v4881 = vadd.f32 %v4879, %v4880
        %v4882 = vrot.slane %v4881, 2
        %v4883 = vadd.f32 %v4881, %v4882
        %v4884 = vrot.slane %v4883, 1
        %v4885 = vadd.f32 %v4883, %v4884
        %vm4886 = vcmp.eq.s32.totalorder %v4550, 5
        %v4887 = vsel %vm4886, %v4885, 0.0
        %v4888 = vadd.f32 %v4867, %v4887
        %s4889 = scalar_lea.vmem %s53, 96
        %v4890 = vld [vmem:[%s4889] sm:$0xff]
        %v4891 = vld [vmem:[%s4889 + $0x8] sm:$0xff]
        %v4892 = vmul.f32 %v4761, %v4890
        %v4893 = vmul.f32 %v4762, %v4891
        %v4894 = vsel %vm1349, %v4892, 0.0
        %4895 = vadd.xlane.f32.xlu0 %v4894
        %v4896 = vpop.xlane.xlu0 %4895
        %v4897 = vsel %vm1349, %v4893, 0.0
        %4898 = vadd.xlane.f32.xlu0 %v4897
        %v4899 = vpop.xlane.xlu0 %4898
        %v4900 = vadd.f32 %v4896, %v4899
        %v4901 = vrot.slane %v4900, 4
        %v4902 = vadd.f32 %v4900, %v4901
        %v4903 = vrot.slane %v4902, 2
        %v4904 = vadd.f32 %v4902, %v4903
        %v4905 = vrot.slane %v4904, 1
        %v4906 = vadd.f32 %v4904, %v4905
        %vm4907 = vcmp.eq.s32.totalorder %v4550, 6
        %v4908 = vsel %vm4907, %v4906, 0.0
        %v4909 = vadd.f32 %v4888, %v4908
        %s4910 = scalar_lea.vmem %s53, 112
        %v4911 = vld [vmem:[%s4910] sm:$0xff]
        %v4912 = vld [vmem:[%s4910 + $0x8] sm:$0xff]
        %v4913 = vmul.f32 %v4761, %v4911
        %v4914 = vmul.f32 %v4762, %v4912
        %v4915 = vsel %vm1349, %v4913, 0.0
        %4916 = vadd.xlane.f32.xlu0 %v4915
        %v4917 = vpop.xlane.xlu0 %4916
        %v4918 = vsel %vm1349, %v4914, 0.0
        %4919 = vadd.xlane.f32.xlu0 %v4918
        %v4920 = vpop.xlane.xlu0 %4919
        %v4921 = vadd.f32 %v4917, %v4920
        %v4922 = vrot.slane %v4921, 4
        %v4923 = vadd.f32 %v4921, %v4922
        %v4924 = vrot.slane %v4923, 2
        %v4925 = vadd.f32 %v4923, %v4924
        %v4926 = vrot.slane %v4925, 1
        %v4927 = vadd.f32 %v4925, %v4926
        %vm4928 = vcmp.eq.s32.totalorder %v4550, 7
        %v4929 = vsel %vm4928, %v4927, 0.0
        %v4930 = vadd.f32 %v4909, %v4929
        %v4931 = vsel %vm4537, %v4930, -inf
        %4932 = vmax.xlane.f32.xlu0 %v4931
        %v4933 = vpop.xlane.xlu0 %4932
        %v4934 = vsub.f32 %v4930, %v4933
        %v4935 = vmul.f32 %v4934, 1.442695
        %v4936 = vpow.pop %v4935
        %v4937 = vsel %vm4537, %v4936, 0.0
        %4938 = vadd.xlane.f32.xlu0 %v4937
        %v4939 = vpop.xlane.xlu0 %4938
        %v4940 = vrcp.pop %v4939
        %v4941 = vmul.f32 %v4936, %v4940
        %v4942 = vrot.slane %v1715, 1
        %v4943 = vsel %vm1205, %v1206, %v4942
        %v4944 = vrot.slane %v1730, 1
        %v4945 = vsel %vm1205, %v4942, %v4944
        %4946 = vrot.lane.b32.xlu0 %v4943, 1
        %v4947 = vpop.permute.xlu0 %4946
        %4948 = vrot.lane.b32.xlu0 %v4945, 1
        %v4949 = vpop.permute.xlu0 %4948
        %4950 = vrot.lane.b32.xlu0 %v4944, 1
        %v4951 = vpop.permute.xlu0 %4950
        %v4955 = vrot.slane %v1715, 2
        %v4956 = vsel %vm1220, %v1221, %v4955
        %v4957 = vrot.slane %v1730, 2
        %v4958 = vsel %vm1220, %v4955, %v4957
        %4959 = vrot.lane.b32.xlu0 %v4956, 2
        %v4960 = vpop.permute.xlu0 %4959
        %4961 = vrot.lane.b32.xlu0 %v4958, 2
        %v4962 = vpop.permute.xlu0 %4961
        %4963 = vrot.lane.b32.xlu0 %v4957, 2
        %v4964 = vpop.permute.xlu0 %4963
        %v4968 = vrot.slane %v1715, 3
        %v4969 = vsel %vm1235, %v1236, %v4968
        %v4970 = vrot.slane %v1730, 3
        %v4971 = vsel %vm1235, %v4968, %v4970
        %4972 = vrot.lane.b32.xlu0 %v4969, 3
        %v4973 = vpop.permute.xlu0 %4972
        %4974 = vrot.lane.b32.xlu0 %v4971, 3
        %v4975 = vpop.permute.xlu0 %4974
        %4976 = vrot.lane.b32.xlu0 %v4970, 3
        %v4977 = vpop.permute.xlu0 %4976
        %v4981 = vrot.slane %v1715, 4
        %v4982 = vsel %vm1250, %v1251, %v4981
        %v4983 = vrot.slane %v1730, 4
        %v4984 = vsel %vm1250, %v4981, %v4983
        %4985 = vrot.lane.b32.xlu0 %v4982, 4
        %v4986 = vpop.permute.xlu0 %4985
        %4987 = vrot.lane.b32.xlu0 %v4984, 4
        %v4988 = vpop.permute.xlu0 %4987
        %4989 = vrot.lane.b32.xlu0 %v4983, 4
        %v4990 = vpop.permute.xlu0 %4989
        %v4994 = vrot.slane %v1715, 5
        %v4995 = vrot.slane %v1730, 5
        %v4996 = vsel %vm1265, %v4994, %v4995
        %4997 = vrot.lane.b32.xlu0 %v4994, 5
        %v4998 = vpop.permute.xlu0 %4997
        %4999 = vrot.lane.b32.xlu0 %v4996, 5
        %v5000 = vpop.permute.xlu0 %4999
        %5001 = vrot.lane.b32.xlu0 %v4995, 5
        %v5002 = vpop.permute.xlu0 %5001
        %v5006 = vrot.slane %v1715, 6
        %v5007 = vrot.slane %v1730, 6
        %v5008 = vsel %vm1278, %v5006, %v5007
        %v5009 = vsel %vm1278, %v5007, %v1282
        %5010 = vrot.lane.b32.xlu0 %v5006, 6
        %v5011 = vpop.permute.xlu0 %5010
        %5012 = vrot.lane.b32.xlu0 %v5008, 6
        %v5013 = vpop.permute.xlu0 %5012
        %5014 = vrot.lane.b32.xlu0 %v5009, 6
        %v5015 = vpop.permute.xlu0 %5014
        %v5019 = vrot.slane %v1715, 7
        %v5020 = vrot.slane %v1730, 7
        %v5021 = vsel %vm1293, %v5019, %v5020
        %v5022 = vsel %vm1293, %v5020, %v1297
        %5023 = vrot.lane.b32.xlu0 %v5019, 7
        %v5024 = vpop.permute.xlu0 %5023
        %5025 = vrot.lane.b32.xlu0 %v5021, 7
        %v5026 = vpop.permute.xlu0 %5025
        %5027 = vrot.lane.b32.xlu0 %v5022, 7
        %v5028 = vpop.permute.xlu0 %5027
        %5032 = vrot.lane.b32.xlu0 %v1715, 8
        %v5033 = vpop.permute.xlu0 %5032
        %5034 = vrot.lane.b32.xlu0 %v1730, 8
        %v5035 = vpop.permute.xlu0 %5034
        %v5038 = vsel %vm1205, %v4944, %v1206
        %5039 = vrot.lane.b32.xlu0 %v4945, 9
        %v5040 = vpop.permute.xlu0 %5039
        %5041 = vrot.lane.b32.xlu0 %v5038, 9
        %v5042 = vpop.permute.xlu0 %5041
        %v5045 = vsel %vm1220, %v4957, %v1221
        %5046 = vrot.lane.b32.xlu0 %v4958, 10
        %v5047 = vpop.permute.xlu0 %5046
        %5048 = vrot.lane.b32.xlu0 %v5045, 10
        %v5049 = vpop.permute.xlu0 %5048
        %v5052 = vsel %vm4670, 0.0, %v4947
        %v5053 = vsel %vm4670, %v1715, %v4949
        %v5054 = vsel %vm4670, %v1730, %v4951
        %v5055 = vsel %vm4674, %v5052, %v4960
        %v5056 = vsel %vm4674, %v5053, %v4962
        %v5057 = vsel %vm4674, %v5054, %v4964
        %v5058 = vsel %vm4678, %v5055, %v4973
        %v5059 = vsel %vm4678, %v5056, %v4975
        %v5060 = vsel %vm4678, %v5057, %v4977
        %v5061 = vsel %vm1337, %v5058, %v4986
        %v5062 = vsel %vm1337, %v5059, %v4988
        %v5063 = vsel %vm1337, %v5060, %v4990
        %v5064 = vsel %vm4685, %v5061, %v4998
        %v5065 = vsel %vm4685, %v5062, %v5000
        %v5066 = vsel %vm4685, %v5063, %v5002
        %v5067 = vsel %vm4689, %v5064, %v5011
        %v5068 = vsel %vm4689, %v5065, %v5013
        %v5069 = vsel %vm4689, %v5066, %v5015
        %v5070 = vsel %vm4693, %v5067, %v5024
        %v5071 = vsel %vm4693, %v5068, %v5026
        %v5072 = vsel %vm4693, %v5069, %v5028
        %v5073 = vsel %vm1341, %v5070, %v5033
        %v5074 = vsel %vm1341, %v5071, %v5035
        %v5075 = vsel %vm1341, %v5072, %v4646
        %v5076 = vsel %vm4700, %v5073, %v5040
        %v5077 = vsel %vm4700, %v5074, %v5042
        %v5078 = vsel %vm4700, %v5075, %v4656
        %v5079 = vsel %vm4704, %v5076, %v5047
        %v5080 = vsel %vm4704, %v5077, %v5049
        %v5081 = vsel %vm4704, %v5078, %v4666
        %v5082 = vpack.c.bf16 %v5080, %v5079
        %v5083 = vpack.c.bf16 %v5081, %v5081
        %v5084 = vld [vmem:[%s57] sm:$0xf]
        %v5085 = vld [vmem:[%s57 + $0x4] sm:$0x3]
        %v5086 = vld [vmem:[%s59] sm:$0x1]
        %v5088 = vperm.slane %v5086, 0
        %v5091 = vshrl.u32 %v5082, 16
        %v5093 = vrot.slane %v5091, 1
        %v5094 = vshll.u32 %v5082, 16
        %v5096 = vrot.slane %v5094, 2
        %v5097 = vor.u32 %v5093, %v5096
        %v5099 = vshrl.u32 %v5083, 16
        %v5101 = vrot.slane %v5099, 1
        %v5102 = vshll.u32 %v5083, 16
        %v5104 = vrot.slane %v5102, 2
        %v5105 = vor.u32 %v5101, %v5104
        %v5106 = vsel %vm1389, %v5097, %v5105
        %v5109 = vunpack.c.l.b16 %v5084
        %v5110 = vunpack.c.l.b16 %v5085
        %v5111 = vpack.c.b16 %v5110, %v5109
        %v5113 = vsel %vm4738, %v5106, 0
        %v5116 = vand.u32 %v5111, %v4743
        %5118 = vmatpush.bf16.msra.mxu0 0
        %5119 = vmatpush.bf16.msra.mxu0 0
        %5120 = vmatpush.bf16.msra.mxu0 0
        %5121 = vmatpush.bf16.msra.mxu0 0
        %5122 = vmatpush.bf16.msra.mxu0 0
        %5123 = vmatpush.bf16.msra.mxu0 0
        %5124 = vmatpush.bf16.msra.mxu0 0
        %5125 = vmatpush.bf16.msra.mxu0 %v5116
        %5126 = vmatmul.bf16.gmra.mxu0 %v5113
        %v5127 = vpop.f32.mrf.mxu0
        %v5128 = vadd.f32 %v5088, %v5127
        %v5129 = vpop.f32.mrf.mxu0
        %v5130 = vadd.f32 %v5088, %v5129
        %5131 = vdwg.mxu0
        %v5132 = vmax.f32 %v5128, 0.0
        %v5133 = vmax.f32 %v5130, 0.0
        %v5134 = vld [vmem:[%s63] sm:$0x1]
        %v5135 = vld [vmem:[%s61] sm:$0xff]
        %v5136 = vld [vmem:[%s61 + $0x8] sm:$0xff]
        %v5137 = vmul.f32 %v5132, %v5135
        %v5138 = vmul.f32 %v5133, %v5136
        %v5139 = vsel %vm1349, %v5137, 0.0
        %5140 = vadd.xlane.f32.xlu0 %v5139
        %v5141 = vpop.xlane.xlu0 %5140
        %v5142 = vsel %vm1349, %v5138, 0.0
        %5143 = vadd.xlane.f32.xlu0 %v5142
        %v5144 = vpop.xlane.xlu0 %5143
        %v5145 = vadd.f32 %v5141, %v5144
        %v5146 = vrot.slane %v5145, 4
        %v5147 = vadd.f32 %v5145, %v5146
        %v5148 = vrot.slane %v5147, 2
        %v5149 = vadd.f32 %v5147, %v5148
        %v5150 = vrot.slane %v5149, 1
        %v5151 = vadd.f32 %v5149, %v5150
        %v5152 = vsel %vm4781, %v5151, 0.0
        %v5153 = vadd.f32 %v5134, %v5152
        %s5154 = scalar_lea.vmem %s61, 16
        %v5155 = vld [vmem:[%s5154] sm:$0xff]
        %v5156 = vld [vmem:[%s5154 + $0x8] sm:$0xff]
        %v5157 = vmul.f32 %v5132, %v5155
        %v5158 = vmul.f32 %v5133, %v5156
        %v5159 = vsel %vm1349, %v5157, 0.0
        %5160 = vadd.xlane.f32.xlu0 %v5159
        %v5161 = vpop.xlane.xlu0 %5160
        %v5162 = vsel %vm1349, %v5158, 0.0
        %5163 = vadd.xlane.f32.xlu0 %v5162
        %v5164 = vpop.xlane.xlu0 %5163
        %v5165 = vadd.f32 %v5161, %v5164
        %v5166 = vrot.slane %v5165, 4
        %v5167 = vadd.f32 %v5165, %v5166
        %v5168 = vrot.slane %v5167, 2
        %v5169 = vadd.f32 %v5167, %v5168
        %v5170 = vrot.slane %v5169, 1
        %v5171 = vadd.f32 %v5169, %v5170
        %v5172 = vsel %vm4802, %v5171, 0.0
        %v5173 = vadd.f32 %v5153, %v5172
        %s5174 = scalar_lea.vmem %s61, 32
        %v5175 = vld [vmem:[%s5174] sm:$0xff]
        %v5176 = vld [vmem:[%s5174 + $0x8] sm:$0xff]
        %v5177 = vmul.f32 %v5132, %v5175
        %v5178 = vmul.f32 %v5133, %v5176
        %v5179 = vsel %vm1349, %v5177, 0.0
        %5180 = vadd.xlane.f32.xlu0 %v5179
        %v5181 = vpop.xlane.xlu0 %5180
        %v5182 = vsel %vm1349, %v5178, 0.0
        %5183 = vadd.xlane.f32.xlu0 %v5182
        %v5184 = vpop.xlane.xlu0 %5183
        %v5185 = vadd.f32 %v5181, %v5184
        %v5186 = vrot.slane %v5185, 4
        %v5187 = vadd.f32 %v5185, %v5186
        %v5188 = vrot.slane %v5187, 2
        %v5189 = vadd.f32 %v5187, %v5188
        %v5190 = vrot.slane %v5189, 1
        %v5191 = vadd.f32 %v5189, %v5190
        %v5192 = vsel %vm4823, %v5191, 0.0
        %v5193 = vadd.f32 %v5173, %v5192
        %s5194 = scalar_lea.vmem %s61, 48
        %v5195 = vld [vmem:[%s5194] sm:$0xff]
        %v5196 = vld [vmem:[%s5194 + $0x8] sm:$0xff]
        %v5197 = vmul.f32 %v5132, %v5195
        %v5198 = vmul.f32 %v5133, %v5196
        %v5199 = vsel %vm1349, %v5197, 0.0
        %5200 = vadd.xlane.f32.xlu0 %v5199
        %v5201 = vpop.xlane.xlu0 %5200
        %v5202 = vsel %vm1349, %v5198, 0.0
        %5203 = vadd.xlane.f32.xlu0 %v5202
        %v5204 = vpop.xlane.xlu0 %5203
        %v5205 = vadd.f32 %v5201, %v5204
        %v5206 = vrot.slane %v5205, 4
        %v5207 = vadd.f32 %v5205, %v5206
        %v5208 = vrot.slane %v5207, 2
        %v5209 = vadd.f32 %v5207, %v5208
        %v5210 = vrot.slane %v5209, 1
        %v5211 = vadd.f32 %v5209, %v5210
        %v5212 = vsel %vm4844, %v5211, 0.0
        %v5213 = vadd.f32 %v5193, %v5212
        %s5214 = scalar_lea.vmem %s61, 64
        %v5215 = vld [vmem:[%s5214] sm:$0xff]
        %v5216 = vld [vmem:[%s5214 + $0x8] sm:$0xff]
        %v5217 = vmul.f32 %v5132, %v5215
        %v5218 = vmul.f32 %v5133, %v5216
        %v5219 = vsel %vm1349, %v5217, 0.0
        %5220 = vadd.xlane.f32.xlu0 %v5219
        %v5221 = vpop.xlane.xlu0 %5220
        %v5222 = vsel %vm1349, %v5218, 0.0
        %5223 = vadd.xlane.f32.xlu0 %v5222
        %v5224 = vpop.xlane.xlu0 %5223
        %v5225 = vadd.f32 %v5221, %v5224
        %v5226 = vrot.slane %v5225, 4
        %v5227 = vadd.f32 %v5225, %v5226
        %v5228 = vrot.slane %v5227, 2
        %v5229 = vadd.f32 %v5227, %v5228
        %v5230 = vrot.slane %v5229, 1
        %v5231 = vadd.f32 %v5229, %v5230
        %v5232 = vsel %vm4865, %v5231, 0.0
        %v5233 = vadd.f32 %v5213, %v5232
        %s5234 = scalar_lea.vmem %s61, 80
        %v5235 = vld [vmem:[%s5234] sm:$0xff]
        %v5236 = vld [vmem:[%s5234 + $0x8] sm:$0xff]
        %v5237 = vmul.f32 %v5132, %v5235
        %v5238 = vmul.f32 %v5133, %v5236
        %v5239 = vsel %vm1349, %v5237, 0.0
        %5240 = vadd.xlane.f32.xlu0 %v5239
        %v5241 = vpop.xlane.xlu0 %5240
        %v5242 = vsel %vm1349, %v5238, 0.0
        %5243 = vadd.xlane.f32.xlu0 %v5242
        %v5244 = vpop.xlane.xlu0 %5243
        %v5245 = vadd.f32 %v5241, %v5244
        %v5246 = vrot.slane %v5245, 4
        %v5247 = vadd.f32 %v5245, %v5246
        %v5248 = vrot.slane %v5247, 2
        %v5249 = vadd.f32 %v5247, %v5248
        %v5250 = vrot.slane %v5249, 1
        %v5251 = vadd.f32 %v5249, %v5250
        %v5252 = vsel %vm4886, %v5251, 0.0
        %v5253 = vadd.f32 %v5233, %v5252
        %s5254 = scalar_lea.vmem %s61, 96
        %v5255 = vld [vmem:[%s5254] sm:$0xff]
        %v5256 = vld [vmem:[%s5254 + $0x8] sm:$0xff]
        %v5257 = vmul.f32 %v5132, %v5255
        %v5258 = vmul.f32 %v5133, %v5256
        %v5259 = vsel %vm1349, %v5257, 0.0
        %5260 = vadd.xlane.f32.xlu0 %v5259
        %v5261 = vpop.xlane.xlu0 %5260
        %v5262 = vsel %vm1349, %v5258, 0.0
        %5263 = vadd.xlane.f32.xlu0 %v5262
        %v5264 = vpop.xlane.xlu0 %5263
        %v5265 = vadd.f32 %v5261, %v5264
        %v5266 = vrot.slane %v5265, 4
        %v5267 = vadd.f32 %v5265, %v5266
        %v5268 = vrot.slane %v5267, 2
        %v5269 = vadd.f32 %v5267, %v5268
        %v5270 = vrot.slane %v5269, 1
        %v5271 = vadd.f32 %v5269, %v5270
        %v5272 = vsel %vm4907, %v5271, 0.0
        %v5273 = vadd.f32 %v5253, %v5272
        %s5274 = scalar_lea.vmem %s61, 112
        %v5275 = vld [vmem:[%s5274] sm:$0xff]
        %v5276 = vld [vmem:[%s5274 + $0x8] sm:$0xff]
        %v5277 = vmul.f32 %v5132, %v5275
        %v5278 = vmul.f32 %v5133, %v5276
        %v5279 = vsel %vm1349, %v5277, 0.0
        %5280 = vadd.xlane.f32.xlu0 %v5279
        %v5281 = vpop.xlane.xlu0 %5280
        %v5282 = vsel %vm1349, %v5278, 0.0
        %5283 = vadd.xlane.f32.xlu0 %v5282
        %v5284 = vpop.xlane.xlu0 %5283
        %v5285 = vadd.f32 %v5281, %v5284
        %v5286 = vrot.slane %v5285, 4
        %v5287 = vadd.f32 %v5285, %v5286
        %v5288 = vrot.slane %v5287, 2
        %v5289 = vadd.f32 %v5287, %v5288
        %v5290 = vrot.slane %v5289, 1
        %v5291 = vadd.f32 %v5289, %v5290
        %v5292 = vsel %vm4928, %v5291, 0.0
        %v5293 = vadd.f32 %v5273, %v5292
        %v5294 = vsel %vm4537, %v5293, -inf
        %5295 = vmax.xlane.f32.xlu0 %v5294
        %v5296 = vpop.xlane.xlu0 %5295
        %v5297 = vsub.f32 %v5293, %v5296
        %v5298 = vmul.f32 %v5297, 1.442695
        %v5299 = vpow.pop %v5298
        %v5300 = vsel %vm4537, %v5299, 0.0
        %5301 = vadd.xlane.f32.xlu0 %v5300
        %v5302 = vpop.xlane.xlu0 %5301
        %v5303 = vrcp.pop %v5302
        %v5304 = vmul.f32 %v5299, %v5303
        %v5305 = vrot.slane %v1963, 1
        %v5306 = vsel %vm1205, %v1206, %v5305
        %v5307 = vrot.slane %v1978, 1
        %v5308 = vsel %vm1205, %v5305, %v5307
        %5309 = vrot.lane.b32.xlu0 %v5306, 1
        %v5310 = vpop.permute.xlu0 %5309
        %5311 = vrot.lane.b32.xlu0 %v5308, 1
        %v5312 = vpop.permute.xlu0 %5311
        %5313 = vrot.lane.b32.xlu0 %v5307, 1
        %v5314 = vpop.permute.xlu0 %5313
        %v5318 = vrot.slane %v1963, 2
        %v5319 = vsel %vm1220, %v1221, %v5318
        %v5320 = vrot.slane %v1978, 2
        %v5321 = vsel %vm1220, %v5318, %v5320
        %5322 = vrot.lane.b32.xlu0 %v5319, 2
        %v5323 = vpop.permute.xlu0 %5322
        %5324 = vrot.lane.b32.xlu0 %v5321, 2
        %v5325 = vpop.permute.xlu0 %5324
        %5326 = vrot.lane.b32.xlu0 %v5320, 2
        %v5327 = vpop.permute.xlu0 %5326
        %v5331 = vrot.slane %v1963, 3
        %v5332 = vsel %vm1235, %v1236, %v5331
        %v5333 = vrot.slane %v1978, 3
        %v5334 = vsel %vm1235, %v5331, %v5333
        %5335 = vrot.lane.b32.xlu0 %v5332, 3
        %v5336 = vpop.permute.xlu0 %5335
        %5337 = vrot.lane.b32.xlu0 %v5334, 3
        %v5338 = vpop.permute.xlu0 %5337
        %5339 = vrot.lane.b32.xlu0 %v5333, 3
        %v5340 = vpop.permute.xlu0 %5339
        %v5344 = vrot.slane %v1963, 4
        %v5345 = vsel %vm1250, %v1251, %v5344
        %v5346 = vrot.slane %v1978, 4
        %v5347 = vsel %vm1250, %v5344, %v5346
        %5348 = vrot.lane.b32.xlu0 %v5345, 4
        %v5349 = vpop.permute.xlu0 %5348
        %5350 = vrot.lane.b32.xlu0 %v5347, 4
        %v5351 = vpop.permute.xlu0 %5350
        %5352 = vrot.lane.b32.xlu0 %v5346, 4
        %v5353 = vpop.permute.xlu0 %5352
        %v5357 = vrot.slane %v1963, 5
        %v5358 = vrot.slane %v1978, 5
        %v5359 = vsel %vm1265, %v5357, %v5358
        %5360 = vrot.lane.b32.xlu0 %v5357, 5
        %v5361 = vpop.permute.xlu0 %5360
        %5362 = vrot.lane.b32.xlu0 %v5359, 5
        %v5363 = vpop.permute.xlu0 %5362
        %5364 = vrot.lane.b32.xlu0 %v5358, 5
        %v5365 = vpop.permute.xlu0 %5364
        %v5369 = vrot.slane %v1963, 6
        %v5370 = vrot.slane %v1978, 6
        %v5371 = vsel %vm1278, %v5369, %v5370
        %v5372 = vsel %vm1278, %v5370, %v1282
        %5373 = vrot.lane.b32.xlu0 %v5369, 6
        %v5374 = vpop.permute.xlu0 %5373
        %5375 = vrot.lane.b32.xlu0 %v5371, 6
        %v5376 = vpop.permute.xlu0 %5375
        %5377 = vrot.lane.b32.xlu0 %v5372, 6
        %v5378 = vpop.permute.xlu0 %5377
        %v5382 = vrot.slane %v1963, 7
        %v5383 = vrot.slane %v1978, 7
        %v5384 = vsel %vm1293, %v5382, %v5383
        %v5385 = vsel %vm1293, %v5383, %v1297
        %5386 = vrot.lane.b32.xlu0 %v5382, 7
        %v5387 = vpop.permute.xlu0 %5386
        %5388 = vrot.lane.b32.xlu0 %v5384, 7
        %v5389 = vpop.permute.xlu0 %5388
        %5390 = vrot.lane.b32.xlu0 %v5385, 7
        %v5391 = vpop.permute.xlu0 %5390
        %5395 = vrot.lane.b32.xlu0 %v1963, 8
        %v5396 = vpop.permute.xlu0 %5395
        %5397 = vrot.lane.b32.xlu0 %v1978, 8
        %v5398 = vpop.permute.xlu0 %5397
        %v5401 = vsel %vm1205, %v5307, %v1206
        %5402 = vrot.lane.b32.xlu0 %v5308, 9
        %v5403 = vpop.permute.xlu0 %5402
        %5404 = vrot.lane.b32.xlu0 %v5401, 9
        %v5405 = vpop.permute.xlu0 %5404
        %v5408 = vsel %vm1220, %v5320, %v1221
        %5409 = vrot.lane.b32.xlu0 %v5321, 10
        %v5410 = vpop.permute.xlu0 %5409
        %5411 = vrot.lane.b32.xlu0 %v5408, 10
        %v5412 = vpop.permute.xlu0 %5411
        %v5415 = vsel %vm4670, 0.0, %v5310
        %v5416 = vsel %vm4670, %v1963, %v5312
        %v5417 = vsel %vm4670, %v1978, %v5314
        %v5418 = vsel %vm4674, %v5415, %v5323
        %v5419 = vsel %vm4674, %v5416, %v5325
        %v5420 = vsel %vm4674, %v5417, %v5327
        %v5421 = vsel %vm4678, %v5418, %v5336
        %v5422 = vsel %vm4678, %v5419, %v5338
        %v5423 = vsel %vm4678, %v5420, %v5340
        %v5424 = vsel %vm1337, %v5421, %v5349
        %v5425 = vsel %vm1337, %v5422, %v5351
        %v5426 = vsel %vm1337, %v5423, %v5353
        %v5427 = vsel %vm4685, %v5424, %v5361
        %v5428 = vsel %vm4685, %v5425, %v5363
        %v5429 = vsel %vm4685, %v5426, %v5365
        %v5430 = vsel %vm4689, %v5427, %v5374
        %v5431 = vsel %vm4689, %v5428, %v5376
        %v5432 = vsel %vm4689, %v5429, %v5378
        %v5433 = vsel %vm4693, %v5430, %v5387
        %v5434 = vsel %vm4693, %v5431, %v5389
        %v5435 = vsel %vm4693, %v5432, %v5391
        %v5436 = vsel %vm1341, %v5433, %v5396
        %v5437 = vsel %vm1341, %v5434, %v5398
        %v5438 = vsel %vm1341, %v5435, %v4646
        %v5439 = vsel %vm4700, %v5436, %v5403
        %v5440 = vsel %vm4700, %v5437, %v5405
        %v5441 = vsel %vm4700, %v5438, %v4656
        %v5442 = vsel %vm4704, %v5439, %v5410
        %v5443 = vsel %vm4704, %v5440, %v5412
        %v5444 = vsel %vm4704, %v5441, %v4666
        %v5445 = vpack.c.bf16 %v5443, %v5442
        %v5446 = vpack.c.bf16 %v5444, %v5444
        %v5447 = vld [vmem:[%s65] sm:$0xf]
        %v5448 = vld [vmem:[%s65 + $0x4] sm:$0x3]
        %v5449 = vld [vmem:[%s67] sm:$0x1]
        %v5451 = vperm.slane %v5449, 0
        %v5454 = vshrl.u32 %v5445, 16
        %v5456 = vrot.slane %v5454, 1
        %v5457 = vshll.u32 %v5445, 16
        %v5459 = vrot.slane %v5457, 2
        %v5460 = vor.u32 %v5456, %v5459
        %v5462 = vshrl.u32 %v5446, 16
        %v5464 = vrot.slane %v5462, 1
        %v5465 = vshll.u32 %v5446, 16
        %v5467 = vrot.slane %v5465, 2
        %v5468 = vor.u32 %v5464, %v5467
        %v5469 = vsel %vm1389, %v5460, %v5468
        %v5472 = vunpack.c.l.b16 %v5447
        %v5473 = vunpack.c.l.b16 %v5448
        %v5474 = vpack.c.b16 %v5473, %v5472
        %v5476 = vsel %vm4738, %v5469, 0
        %v5479 = vand.u32 %v5474, %v4743
        %5481 = vmatpush.bf16.msra.mxu0 0
        %5482 = vmatpush.bf16.msra.mxu0 0
        %5483 = vmatpush.bf16.msra.mxu0 0
        %5484 = vmatpush.bf16.msra.mxu0 0
        %5485 = vmatpush.bf16.msra.mxu0 0
        %5486 = vmatpush.bf16.msra.mxu0 0
        %5487 = vmatpush.bf16.msra.mxu0 0
        %5488 = vmatpush.bf16.msra.mxu0 %v5479
        %5489 = vmatmul.bf16.gmra.mxu0 %v5476
        %v5490 = vpop.f32.mrf.mxu0
        %v5491 = vadd.f32 %v5451, %v5490
        %v5492 = vpop.f32.mrf.mxu0
        %v5493 = vadd.f32 %v5451, %v5492
        %5494 = vdwg.mxu0
        %v5495 = vmax.f32 %v5491, 0.0
        %v5496 = vmax.f32 %v5493, 0.0
        %v5497 = vld [vmem:[%s71] sm:$0x1]
        %v5498 = vld [vmem:[%s69] sm:$0xff]
        %v5499 = vld [vmem:[%s69 + $0x8] sm:$0xff]
        %v5500 = vmul.f32 %v5495, %v5498
        %v5501 = vmul.f32 %v5496, %v5499
        %v5502 = vsel %vm1349, %v5500, 0.0
        %5503 = vadd.xlane.f32.xlu0 %v5502
        %v5504 = vpop.xlane.xlu0 %5503
        %v5505 = vsel %vm1349, %v5501, 0.0
        %5506 = vadd.xlane.f32.xlu0 %v5505
        %v5507 = vpop.xlane.xlu0 %5506
        %v5508 = vadd.f32 %v5504, %v5507
        %v5509 = vrot.slane %v5508, 4
        %v5510 = vadd.f32 %v5508, %v5509
        %v5511 = vrot.slane %v5510, 2
        %v5512 = vadd.f32 %v5510, %v5511
        %v5513 = vrot.slane %v5512, 1
        %v5514 = vadd.f32 %v5512, %v5513
        %v5515 = vsel %vm4781, %v5514, 0.0
        %v5516 = vadd.f32 %v5497, %v5515
        %s5517 = scalar_lea.vmem %s69, 16
        %v5518 = vld [vmem:[%s5517] sm:$0xff]
        %v5519 = vld [vmem:[%s5517 + $0x8] sm:$0xff]
        %v5520 = vmul.f32 %v5495, %v5518
        %v5521 = vmul.f32 %v5496, %v5519
        %v5522 = vsel %vm1349, %v5520, 0.0
        %5523 = vadd.xlane.f32.xlu0 %v5522
        %v5524 = vpop.xlane.xlu0 %5523
        %v5525 = vsel %vm1349, %v5521, 0.0
        %5526 = vadd.xlane.f32.xlu0 %v5525
        %v5527 = vpop.xlane.xlu0 %5526
        %v5528 = vadd.f32 %v5524, %v5527
        %v5529 = vrot.slane %v5528, 4
        %v5530 = vadd.f32 %v5528, %v5529
        %v5531 = vrot.slane %v5530, 2
        %v5532 = vadd.f32 %v5530, %v5531
        %v5533 = vrot.slane %v5532, 1
        %v5534 = vadd.f32 %v5532, %v5533
        %v5535 = vsel %vm4802, %v5534, 0.0
        %v5536 = vadd.f32 %v5516, %v5535
        %s5537 = scalar_lea.vmem %s69, 32
        %v5538 = vld [vmem:[%s5537] sm:$0xff]
        %v5539 = vld [vmem:[%s5537 + $0x8] sm:$0xff]
        %v5540 = vmul.f32 %v5495, %v5538
        %v5541 = vmul.f32 %v5496, %v5539
        %v5542 = vsel %vm1349, %v5540, 0.0
        %5543 = vadd.xlane.f32.xlu0 %v5542
        %v5544 = vpop.xlane.xlu0 %5543
        %v5545 = vsel %vm1349, %v5541, 0.0
        %5546 = vadd.xlane.f32.xlu0 %v5545
        %v5547 = vpop.xlane.xlu0 %5546
        %v5548 = vadd.f32 %v5544, %v5547
        %v5549 = vrot.slane %v5548, 4
        %v5550 = vadd.f32 %v5548, %v5549
        %v5551 = vrot.slane %v5550, 2
        %v5552 = vadd.f32 %v5550, %v5551
        %v5553 = vrot.slane %v5552, 1
        %v5554 = vadd.f32 %v5552, %v5553
        %v5555 = vsel %vm4823, %v5554, 0.0
        %v5556 = vadd.f32 %v5536, %v5555
        %s5557 = scalar_lea.vmem %s69, 48
        %v5558 = vld [vmem:[%s5557] sm:$0xff]
        %v5559 = vld [vmem:[%s5557 + $0x8] sm:$0xff]
        %v5560 = vmul.f32 %v5495, %v5558
        %v5561 = vmul.f32 %v5496, %v5559
        %v5562 = vsel %vm1349, %v5560, 0.0
        %5563 = vadd.xlane.f32.xlu0 %v5562
        %v5564 = vpop.xlane.xlu0 %5563
        %v5565 = vsel %vm1349, %v5561, 0.0
        %5566 = vadd.xlane.f32.xlu0 %v5565
        %v5567 = vpop.xlane.xlu0 %5566
        %v5568 = vadd.f32 %v5564, %v5567
        %v5569 = vrot.slane %v5568, 4
        %v5570 = vadd.f32 %v5568, %v5569
        %v5571 = vrot.slane %v5570, 2
        %v5572 = vadd.f32 %v5570, %v5571
        %v5573 = vrot.slane %v5572, 1
        %v5574 = vadd.f32 %v5572, %v5573
        %v5575 = vsel %vm4844, %v5574, 0.0
        %v5576 = vadd.f32 %v5556, %v5575
        %s5577 = scalar_lea.vmem %s69, 64
        %v5578 = vld [vmem:[%s5577] sm:$0xff]
        %v5579 = vld [vmem:[%s5577 + $0x8] sm:$0xff]
        %v5580 = vmul.f32 %v5495, %v5578
        %v5581 = vmul.f32 %v5496, %v5579
        %v5582 = vsel %vm1349, %v5580, 0.0
        %5583 = vadd.xlane.f32.xlu0 %v5582
        %v5584 = vpop.xlane.xlu0 %5583
        %v5585 = vsel %vm1349, %v5581, 0.0
        %5586 = vadd.xlane.f32.xlu0 %v5585
        %v5587 = vpop.xlane.xlu0 %5586
        %v5588 = vadd.f32 %v5584, %v5587
        %v5589 = vrot.slane %v5588, 4
        %v5590 = vadd.f32 %v5588, %v5589
        %v5591 = vrot.slane %v5590, 2
        %v5592 = vadd.f32 %v5590, %v5591
        %v5593 = vrot.slane %v5592, 1
        %v5594 = vadd.f32 %v5592, %v5593
        %v5595 = vsel %vm4865, %v5594, 0.0
        %v5596 = vadd.f32 %v5576, %v5595
        %s5597 = scalar_lea.vmem %s69, 80
        %v5598 = vld [vmem:[%s5597] sm:$0xff]
        %v5599 = vld [vmem:[%s5597 + $0x8] sm:$0xff]
        %v5600 = vmul.f32 %v5495, %v5598
        %v5601 = vmul.f32 %v5496, %v5599
        %v5602 = vsel %vm1349, %v5600, 0.0
        %5603 = vadd.xlane.f32.xlu0 %v5602
        %v5604 = vpop.xlane.xlu0 %5603
        %v5605 = vsel %vm1349, %v5601, 0.0
        %5606 = vadd.xlane.f32.xlu0 %v5605
        %v5607 = vpop.xlane.xlu0 %5606
        %v5608 = vadd.f32 %v5604, %v5607
        %v5609 = vrot.slane %v5608, 4
        %v5610 = vadd.f32 %v5608, %v5609
        %v5611 = vrot.slane %v5610, 2
        %v5612 = vadd.f32 %v5610, %v5611
        %v5613 = vrot.slane %v5612, 1
        %v5614 = vadd.f32 %v5612, %v5613
        %v5615 = vsel %vm4886, %v5614, 0.0
        %v5616 = vadd.f32 %v5596, %v5615
        %s5617 = scalar_lea.vmem %s69, 96
        %v5618 = vld [vmem:[%s5617] sm:$0xff]
        %v5619 = vld [vmem:[%s5617 + $0x8] sm:$0xff]
        %v5620 = vmul.f32 %v5495, %v5618
        %v5621 = vmul.f32 %v5496, %v5619
        %v5622 = vsel %vm1349, %v5620, 0.0
        %5623 = vadd.xlane.f32.xlu0 %v5622
        %v5624 = vpop.xlane.xlu0 %5623
        %v5625 = vsel %vm1349, %v5621, 0.0
        %5626 = vadd.xlane.f32.xlu0 %v5625
        %v5627 = vpop.xlane.xlu0 %5626
        %v5628 = vadd.f32 %v5624, %v5627
        %v5629 = vrot.slane %v5628, 4
        %v5630 = vadd.f32 %v5628, %v5629
        %v5631 = vrot.slane %v5630, 2
        %v5632 = vadd.f32 %v5630, %v5631
        %v5633 = vrot.slane %v5632, 1
        %v5634 = vadd.f32 %v5632, %v5633
        %v5635 = vsel %vm4907, %v5634, 0.0
        %v5636 = vadd.f32 %v5616, %v5635
        %s5637 = scalar_lea.vmem %s69, 112
        %v5638 = vld [vmem:[%s5637] sm:$0xff]
        %v5639 = vld [vmem:[%s5637 + $0x8] sm:$0xff]
        %v5640 = vmul.f32 %v5495, %v5638
        %v5641 = vmul.f32 %v5496, %v5639
        %v5642 = vsel %vm1349, %v5640, 0.0
        %5643 = vadd.xlane.f32.xlu0 %v5642
        %v5644 = vpop.xlane.xlu0 %5643
        %v5645 = vsel %vm1349, %v5641, 0.0
        %5646 = vadd.xlane.f32.xlu0 %v5645
        %v5647 = vpop.xlane.xlu0 %5646
        %v5648 = vadd.f32 %v5644, %v5647
        %v5649 = vrot.slane %v5648, 4
        %v5650 = vadd.f32 %v5648, %v5649
        %v5651 = vrot.slane %v5650, 2
        %v5652 = vadd.f32 %v5650, %v5651
        %v5653 = vrot.slane %v5652, 1
        %v5654 = vadd.f32 %v5652, %v5653
        %v5655 = vsel %vm4928, %v5654, 0.0
        %v5656 = vadd.f32 %v5636, %v5655
        %v5657 = vsel %vm4537, %v5656, -inf
        %5658 = vmax.xlane.f32.xlu0 %v5657
        %v5659 = vpop.xlane.xlu0 %5658
        %v5660 = vsub.f32 %v5656, %v5659
        %v5661 = vmul.f32 %v5660, 1.442695
        %v5662 = vpow.pop %v5661
        %v5663 = vsel %vm4537, %v5662, 0.0
        %5664 = vadd.xlane.f32.xlu0 %v5663
        %v5665 = vpop.xlane.xlu0 %5664
        %v5666 = vrcp.pop %v5665
        %v5667 = vmul.f32 %v5662, %v5666
        %v5669 = vperm.slane %v5304, 0
        %v5672 = vperm.slane %v5667, 0
        %v5675 = vrot.slane %v4548, 5
        %v5677 = vsel %vm1293, %v4941, %v5669
        %v5678 = vsel %vm1278, %v5677, %v5672
        %v5679 = vsel %vm1265, %v5678, %v5675
        %vm5680 = vcmask 60416
        %5681 = vst.msk [vmem:[%s1176] sm:$0xf] %vm5680, %v5679
        %s5682 = sand.u32 %s879, 1
        %s5683 = scalar_lea.sflag [#allocation7], %s5682
        %s5684 = sand.u32 %s879, 1
        %s5685 = smul.addr %s5684, 4
        %s5686 = scalar_lea.vmem [#allocation10], %s5685
        // Predicated region
        $region173: #{tpu_custom_call.1} parent=163 // pred_check
          %p5687 = pneg %p889
        $region174: #{tpu_custom_call.1} parent=163 // pred_check_branch
          %5689 = sbr.rel (%p5687) target = $region176
        $region175: #{tpu_custom_call.1} parent=163 // pred_region
          %5691 = vsyncadd %s5683, 0
          %s5692 = smul.addr %s95, 4
          %s5693 = scalar_lea.hbm %s73, %s5692
          %s5695 = sshll.u32 %s5686, 4
          %s5696 = int_to_ptr.vmem [resolvable:$true] %s5695
          %s5697 = sshll.u32 %s5693, 4
          %s5698 = int_to_ptr.hbm [resolvable:$true] %s5697
          %5700 = dma.vmem_to_hbm [thread:$0]  %s5696, 64, %s5698, %s5683
        $region176: #{tpu_custom_call.1} parent=163 // pred_fallthru
          _
      $region164: #{tpu_custom_call.1} parent=5 // pred_fallthru
        _
      %p5701 = scmp.le.s32.totalorder 2, %s90
      // Predicated region
      $region177: #{tpu_custom_call.1} parent=5 // pred_check
        %p5702 = pneg %p5701
      $region178: #{tpu_custom_call.1} parent=5 // pred_check_branch
        %5704 = sbr.rel (%p5702) target = $region180
      $region179: #{tpu_custom_call.1} parent=5 // pred_region
        %s5705 = ssub.s32 %s90, 2
        // Predicated region
        $region181: #{tpu_custom_call.1} parent=179 // pred_check
          %p5706 = pneg %p895
        $region182: #{tpu_custom_call.1} parent=179 // pred_check_branch
          %5708 = sbr.rel (%p5706) target = $region184
        $region183: #{tpu_custom_call.1} parent=179 // pred_region
          %s5709 = sand.u32 %s880, 1
          %s5710 = scalar_lea.sflag [#allocation7], %s5709
          %s5711 = sand.u32 %s880, 1
          %s5712 = smul.addr %s5711, 4
          %s5713 = scalar_lea.vmem [#allocation10], %s5712
          %5715 = dma.done %s5710, 64
        $region184: #{tpu_custom_call.1} parent=179 // pred_fallthru
          _
      $region180: #{tpu_custom_call.1} parent=5 // pred_fallthru
        _
    $region6: #{tpu_custom_call.1} parent=1 // loop_footer
      %s94 = sadd.s32 1, %s90
    $region7: #{tpu_custom_call.1} parent=1 // loop_footer_branch
      %89 = sbr.rel target = $region3
    $region8: #{tpu_custom_call.1} parent=1 // loop_exit
      _
    %5716 = vsyncpa [#allocation6], 1
    %s5717 = scalar_lea.sflag [#allocation6], 1
    %5718 = vsyncpa %s5717, 1
    %5719 = vsyncpa [#allocation9], 1
    %5720 = vsyncpa [#allocation7], 1
    %s5721 = scalar_lea.sflag [#allocation7], 1
    %5722 = vsyncpa %s5721, 1

</llo_original>
